<compile_context>
chip_gen: v5e
topology: v5e:2x2
jax: 0.10.0
libtpu: 0.0.40
codegen_flags: <defaults>
</compile_context>

<pallas_src>
import functools
import math

import jax
import jax.numpy as jnp
from jax.experimental import pallas as pl
from jax.experimental.pallas import tpu as pltpu


# -----------------------------------------------------------------------------
# Logical / padded sizes
# -----------------------------------------------------------------------------
H = 180                 # logical embedding / LSTM hidden size
HP = 256                # padded hidden (lane aligned; gates at 0/256/512/768)
LOOP_F = 24             # loop feature size
LOOP_FP = 128           # padded loop feature size
COMP_SIZES = [600, 350, 200, 180]        # logical comp-embedding widths
REG_SIZES = [180, 200, 180]              # logical regression widths
CONCAT_SIZES = [2 * 180 + 24, 200, 180]  # logical concat widths
MXU_DTYPE = jnp.bfloat16                 # MXU input dtype (f32 accumulate)


def _pad128(n):
    return ((n + 127) // 128) * 128


# -----------------------------------------------------------------------------
# Parameter construction (deterministic, pre-padded, zero in the padding)
# -----------------------------------------------------------------------------
def _xavier(key, fan_in, fan_out):
    limit = math.sqrt(6.0 / (fan_in + fan_out))
    return jax.random.uniform(key, (fan_in, fan_out), jnp.float32, -limit, limit)


def _unif(key, bound, shape):
    return jax.random.uniform(key, shape, jnp.float32, -bound, bound)


def _pad_linear(w_log, b_log, in_pad, out_pad):
    w = jnp.zeros((in_pad, out_pad), jnp.float32)
    w = w.at[: w_log.shape[0], : w_log.shape[1]].set(w_log)
    b = jnp.zeros((1, out_pad), jnp.float32).at[:, : b_log.shape[1]].set(b_log)
    return w, b


def init_params(key, input_size):
    keys = iter(jax.random.split(key, 64))
    p = {}

    in_pad = _pad128(input_size)
    comp_log = [input_size] + COMP_SIZES
    comp_pad = [in_pad] + [_pad128(s) for s in COMP_SIZES]   # 128,640,384,256,256
    p["comp_embed"] = []
    for i in range(len(comp_log) - 1):
        w = _xavier(next(keys), comp_log[i], comp_log[i + 1])
        b = _unif(next(keys), 1.0 / math.sqrt(comp_log[i]), (1, comp_log[i + 1]))
        p["comp_embed"].append(_pad_linear(w, b, comp_pad[i], comp_pad[i + 1]))

    reg_pad = [_pad128(s) for s in REG_SIZES]
    p["regression"] = []
    for i in range(len(REG_SIZES) - 1):
        w = _xavier(next(keys), REG_SIZES[i], REG_SIZES[i + 1])
        b = _unif(next(keys), 1.0 / math.sqrt(REG_SIZES[i]), (1, REG_SIZES[i + 1]))
        p["regression"].append(_pad_linear(w, b, reg_pad[i], reg_pad[i + 1]))

    # Concat stack.  Layer-0 input is the SEGMENTED padded concat
    # [nodes_h(256) | comps_h(256) | loop(128)]; logical rows are scattered to
    #   [0:180] <- nodes_h, [256:436] <- comps_h, [512:536] <- loop.
    w0 = _xavier(next(keys), CONCAT_SIZES[0], CONCAT_SIZES[1])
    b0 = _unif(next(keys), 1.0 / math.sqrt(CONCAT_SIZES[0]), (1, CONCAT_SIZES[1]))
    c1p = _pad128(CONCAT_SIZES[1])
    w0_pad = jnp.zeros((2 * HP + LOOP_FP, c1p), jnp.float32)
    w0_pad = w0_pad.at[0:H, : CONCAT_SIZES[1]].set(w0[0:H])
    w0_pad = w0_pad.at[HP:HP + H, : CONCAT_SIZES[1]].set(w0[H:2 * H])
    w0_pad = w0_pad.at[2 * HP:2 * HP + LOOP_F, : CONCAT_SIZES[1]].set(w0[2 * H:2 * H + LOOP_F])
    b0_pad = jnp.zeros((1, c1p), jnp.float32).at[:, : CONCAT_SIZES[1]].set(b0)
    w1 = _xavier(next(keys), CONCAT_SIZES[1], CONCAT_SIZES[2])
    b1 = _unif(next(keys), 1.0 / math.sqrt(CONCAT_SIZES[1]), (1, CONCAT_SIZES[2]))
    p["concat"] = [(w0_pad, b0_pad),
                   _pad_linear(w1, b1, c1p, _pad128(CONCAT_SIZES[2]))]

    wp = _xavier(next(keys), REG_SIZES[-1], 1)
    bp = _unif(next(keys), 1.0 / math.sqrt(REG_SIZES[-1]), (1, 1))
    p["predict"] = _pad_linear(wp, bp, _pad128(REG_SIZES[-1]), 128)

    p["no_comps"] = jnp.zeros((1, HP), jnp.float32).at[:, :H].set(_xavier(next(keys), 1, H))
    p["no_nodes"] = jnp.zeros((1, HP), jnp.float32).at[:, :H].set(_xavier(next(keys), 1, H))

    def make_lstm():
        # PyTorch: weight_ih (4H,D), weight_hh (4H,H), biases b_ih, b_hh.
        # Stored transposed & SPLIT: wih (HP,4*HP), whh (HP,4*HP), bias (1,4*HP)
        # so the input projection x_t @ Wih can be batched over all timesteps
        # and only h @ Whh stays on the recurrent chain (gate order i,f,g,o).
        bound = 1.0 / math.sqrt(H)
        wih = _unif(next(keys), bound, (H, 4 * H))
        whh = _unif(next(keys), bound, (H, 4 * H))
        bias = _unif(next(keys), bound, (1, 4 * H)) + _unif(next(keys), bound, (1, 4 * H))
        wih_p = jnp.zeros((HP, 4 * HP), jnp.float32)
        whh_p = jnp.zeros((HP, 4 * HP), jnp.float32)
        b_p = jnp.zeros((1, 4 * HP), jnp.float32)
        for g in range(4):
            wih_p = wih_p.at[0:H, g * HP:g * HP + H].set(wih[:, g * H:(g + 1) * H])
            whh_p = whh_p.at[0:H, g * HP:g * HP + H].set(whh[:, g * H:(g + 1) * H])
            b_p = b_p.at[:, g * HP:g * HP + H].set(bias[:, g * H:(g + 1) * H])
        return wih_p, whh_p, b_p

    p["comps_lstm"] = make_lstm()
    p["nodes_lstm"] = make_lstm()
    return p


def _flatten_params(p):
    """Returns (flat weight list, matching in_specs list)."""
    vmem = pl.BlockSpec(memory_space=pltpu.MemorySpace.VMEM)
    hbm = pl.BlockSpec(memory_space=pl.ANY)   # LSTM mats: manual DMA overlap
    flat, specs = [], []

    def add(x, spec):
        flat.append(x)
        specs.append(spec)

    for w, b in p["comp_embed"]:
        add(w.astype(MXU_DTYPE), vmem); add(b, vmem)
    for w, b in p["concat"]:
        add(w.astype(MXU_DTYPE), vmem); add(b, vmem)
    for w, b in p["regression"]:
        add(w.astype(MXU_DTYPE), vmem); add(b, vmem)
    w, b = p["predict"]
    add(w.astype(MXU_DTYPE), vmem); add(b, vmem)
    wih, whh, b = p["comps_lstm"]
    add(wih.astype(MXU_DTYPE), hbm); add(whh.astype(MXU_DTYPE), hbm); add(b, vmem)
    wih, whh, b = p["nodes_lstm"]
    add(wih.astype(MXU_DTYPE), hbm); add(whh.astype(MXU_DTYPE), hbm); add(b, vmem)
    add(p["no_comps"], vmem)
    add(p["no_nodes"], vmem)
    return flat, specs


# -----------------------------------------------------------------------------
# Trace-time tree plan: nodes grouped bottom-up by level (height from leaves),
# so all sibling-independent work inside a level can be batched along rows.
# -----------------------------------------------------------------------------
def _plan_tree(tree):
    nodes = []

    def visit(node):
        nid = len(nodes)
        nodes.append(None)
        child_ids = [visit(c) for c in node["child_list"]]
        height = 1 + max((nodes[c]["height"] for c in child_ids), default=-1)
        comp_idx = ([int(i) for i in node["computations_indices"]]
                    if node["has_comps"] else [])
        nodes[nid] = dict(id=nid, child_ids=child_ids, height=height,
                          comp_idx=comp_idx, loop_index=int(node["loop_index"]))
        return nid

    root = visit(tree)
    levels = {}
    for n in nodes:
        levels.setdefault(n["height"], []).append(n)
    return dict(nodes=nodes, levels=[levels[h] for h in sorted(levels)], root=root)


# -----------------------------------------------------------------------------
# Fully fused forward kernel (single pallas_call for the whole model)
# -----------------------------------------------------------------------------
def _tree_forward_kernel(*refs, plan, B):
    (comps_ref, loops_ref,
     ce_w0, ce_b0, ce_w1, ce_b1, ce_w2, ce_b2, ce_w3, ce_b3,
     cc_w0, cc_b0, cc_w1, cc_b1,
     rg_w0, rg_b0, rg_w1, rg_b1,
     pr_w, pr_b,
     cl_wih_hbm, cl_whh_hbm, cl_b,
     nl_wih_hbm, nl_whh_hbm, nl_b,
     no_comps, no_nodes,
     out_ref,
     cl_wih, cl_whh, nl_wih, nl_whh, dma_sem) = refs

    f32 = jnp.float32

    # Kick off the LSTM-weight DMAs (HBM -> VMEM scratch); they overlap with
    # the comp-embedding MLP below, which only uses already-resident weights.
    copies = [
        pltpu.make_async_copy(cl_wih_hbm, cl_wih, dma_sem.at[0]),
        pltpu.make_async_copy(cl_whh_hbm, cl_whh, dma_sem.at[1]),
        pltpu.make_async_copy(nl_wih_hbm, nl_wih, dma_sem.at[2]),
        pltpu.make_async_copy(nl_whh_hbm, nl_whh, dma_sem.at[3]),
    ]
    for c in copies:
        c.start()

    def linear(x, w_ref, b_ref, elu):
        y = jnp.dot(x.astype(MXU_DTYPE), w_ref[...],
                    preferred_element_type=f32) + b_ref[...]
        if elu:
            # ELU(alpha=1); min() guards the untaken exp branch against overflow.
            y = jnp.where(y > 0.0, y, jnp.exp(jnp.minimum(y, 0.0)) - 1.0)
        return y

    # --- comp-embedding MLP over all computations at once (M = NC*B rows) ----
    x = comps_ref[...]                                   # (NC*B, F_pad), comp-major
    x = linear(x, ce_w0, ce_b0, True)
    x = linear(x, ce_w1, ce_b1, True)
    x = linear(x, ce_w2, ce_b2, True)
    x = linear(x, ce_w3, ce_b3, True)
    comps_emb = x                                        # (NC*B, HP)

    loops = loops_ref[...]                               # (NL*B, LOOP_FP), loop-major

    # LSTM weights must be resident before the tree walk starts.
    for c in copies:
        c.wait()

    def batch_rows(mat, idx):
        # item-major layout: item idx occupies contiguous rows [idx*B, (idx+1)*B)
        return mat[idx * B:(idx + 1) * B, :]

    def lstm_last_h(xs, wih_ref, whh_ref, b_ref):
        # xs: list of T timestep inputs, each (M, HP) f32; returns final h (M, HP).
        # Input projection for ALL timesteps is one batched matmul (+ bias,
        # broadcast once); only h @ Whh (K=256) remains on the serial chain.
        T = len(xs)
        M = xs[0].shape[0]
        x_all = jnp.concatenate(xs, axis=0) if T > 1 else xs[0]       # (T*M, HP)
        proj = jnp.dot(x_all.astype(MXU_DTYPE), wih_ref[...],
                       preferred_element_type=f32) + b_ref[...]       # (T*M, 4*HP)
        whh = whh_ref[...]
        h = jnp.zeros((M, HP), f32)
        c = jnp.zeros((M, HP), f32)
        for t in range(T):
            gates = proj[t * M:(t + 1) * M, :] + jnp.dot(
                h.astype(MXU_DTYPE), whh, preferred_element_type=f32)
            i_g = jax.nn.sigmoid(gates[:, 0 * HP:1 * HP])
            f_g = jax.nn.sigmoid(gates[:, 1 * HP:2 * HP])
            g_g = jnp.tanh(gates[:, 2 * HP:3 * HP])
            o_g = jax.nn.sigmoid(gates[:, 3 * HP:4 * HP])
            c = f_g * c + i_g * g_g
            h = o_g * jnp.tanh(c)
        return h

    # Hoisted broadcasts (reused by every childless / compless node).
    no_nodes_b = jnp.broadcast_to(no_nodes[...], (B, HP))
    no_comps_b = jnp.broadcast_to(no_comps[...], (B, HP))

    # --- level-by-level tree walk (unrolled at trace time), siblings batched -
    node_out = {}
    for level_nodes in plan["levels"]:
        nodes_h, comps_h = {}, {}

        # nodes_lstm: batch nodes of this level with equal child count.
        by_nc = {}
        for n in level_nodes:
            if n["child_ids"]:
                by_nc.setdefault(len(n["child_ids"]), []).append(n)
            else:
                nodes_h[n["id"]] = no_nodes_b
        for t_len in sorted(by_nc):
            group = by_nc[t_len]
            xs = []
            for t in range(t_len):
                rows = [node_out[n["child_ids"][t]] for n in group]
                xs.append(jnp.concatenate(rows, axis=0) if len(rows) > 1 else rows[0])
            h = lstm_last_h(xs, nl_wih, nl_whh, nl_b)                 # (G*B, HP)
            for gi, n in enumerate(group):
                nodes_h[n["id"]] = h[gi * B:(gi + 1) * B, :]

        # comps_lstm: batch nodes of this level with equal computation count.
        by_tc = {}
        for n in level_nodes:
            if n["comp_idx"]:
                by_tc.setdefault(len(n["comp_idx"]), []).append(n)
            else:
                comps_h[n["id"]] = no_comps_b
        for t_len in sorted(by_tc):
            group = by_tc[t_len]
            xs = []
            for t in range(t_len):
                rows = [batch_rows(comps_emb, n["comp_idx"][t]) for n in group]
                xs.append(jnp.concatenate(rows, axis=0) if len(rows) > 1 else rows[0])
            h = lstm_last_h(xs, cl_wih, cl_whh, cl_b)                 # (G*B, HP)
            for gi, n in enumerate(group):
                comps_h[n["id"]] = h[gi * B:(gi + 1) * B, :]

        # Concat stack: ALL nodes of the level through one pair of matmuls.
        rows = [jnp.concatenate([nodes_h[n["id"]], comps_h[n["id"]],
                                 batch_rows(loops, n["loop_index"])], axis=1)
                for n in level_nodes]                                 # each (B, 2*HP+128)
        xlvl = jnp.concatenate(rows, axis=0) if len(rows) > 1 else rows[0]
        xlvl = linear(xlvl, cc_w0, cc_b0, True)
        xlvl = linear(xlvl, cc_w1, cc_b1, True)                       # (L*B, HP)
        for li, n in enumerate(level_nodes):
            node_out[n["id"]] = xlvl[li * B:(li + 1) * B, :]

    prog = node_out[plan["root"]]                                     # (B, HP)
    y = linear(prog, rg_w0, rg_b0, True)
    y = linear(y, rg_w1, rg_b1, True)
    y = linear(y, pr_w, pr_b, False)                                  # (B, 128), col 0 valid
    out_ref[...] = y


# -----------------------------------------------------------------------------
# Cost estimate (advisory, helps XLA schedule the custom call)
# -----------------------------------------------------------------------------
def _estimate_cost(plan, flat_w, B, NC, NL, in_pad):
    comp_widths = [in_pad, 640, 384, 256, 256]
    flops, trans = 0, 0
    m = NC * B
    for a, b in zip(comp_widths[:-1], comp_widths[1:]):
        flops += 2 * m * a * b
        trans += m * b                     # ELU exp
    def lstm_cost(t, mrows):
        f = 2 * (t * mrows) * HP * 4 * HP  # batched Wih projection
        f += 2 * t * mrows * HP * 4 * HP   # recurrent Whh
        return f, t * mrows * 5 * HP       # sigmoid/tanh
    for level in plan["levels"]:
        for n in level:
            if n["child_ids"]:
                f, tr = lstm_cost(len(n["child_ids"]), B); flops += f; trans += tr
            if n["comp_idx"]:
                f, tr = lstm_cost(len(n["comp_idx"]), B); flops += f; trans += tr
            flops += 2 * B * ((2 * HP + LOOP_FP) * 256 + 256 * 256)
            trans += B * 512
    flops += 2 * B * (256 * 256 + 256 * 256 + 256 * 128)
    trans += B * 512
    bytes_accessed = sum(int(x.size) * x.dtype.itemsize for x in flat_w)
    bytes_accessed += (NC * B * in_pad + NL * B * LOOP_FP + B * 128) * 4
    return pl.CostEstimate(flops=int(flops), transcendentals=int(trans),
                           bytes_accessed=int(bytes_accessed))


# -----------------------------------------------------------------------------
# Wrapper
# -----------------------------------------------------------------------------
def make_forward_fn(params, tree, B, NC, NL, input_size):
    """Build a jitted forward(comps_tensor, loops_tensor) -> (B, 1)."""
    flat_w, w_specs = _flatten_params(params)
    in_pad = _pad128(input_size)
    plan = _plan_tree(tree)
    vmem = pl.BlockSpec(memory_space=pltpu.MemorySpace.VMEM)

    call = pl.pallas_call(
        functools.partial(_tree_forward_kernel, plan=plan, B=B),
        out_shape=jax.ShapeDtypeStruct((B, 128), jnp.float32),
        in_specs=[vmem, vmem] + w_specs,
        out_specs=vmem,
        scratch_shapes=[pltpu.VMEM((HP, 4 * HP), MXU_DTYPE) for _ in range(4)]
                       + [pltpu.SemaphoreType.DMA((4,))],
        # Total VMEM use is ~6 MB (weights + scratch), comfortably under the
        # 32 MiB scoped limit on all of v5e / v6e / v7x.
        compiler_params=pltpu.CompilerParams(vmem_limit_bytes=32 * 1024 * 1024),
        cost_estimate=_estimate_cost(plan, flat_w, B, NC, NL, in_pad),
    )

    def forward(comps_tensor, loops_tensor):
        # comps_tensor: (B, NC, input_size) f32 ; loops_tensor: (B, NL, 24) f32
        comps_cm = jnp.transpose(comps_tensor, (1, 0, 2)).reshape(NC * B, input_size)
        comps = jnp.pad(comps_cm, ((0, 0), (0, in_pad - input_size)))
        loops_lm = jnp.transpose(loops_tensor, (1, 0, 2)).reshape(NL * B, LOOP_F)
        loops = jnp.pad(loops_lm, ((0, 0), (0, LOOP_FP - LOOP_F)))
        out = call(comps, loops, *flat_w)
        return out[:, :1]                                              # == torch out[:, 0, :]

    return jax.jit(forward)


# -----------------------------------------------------------------------------
# Example run
# -----------------------------------------------------------------------------
if __name__ == "__main__":
    key = jax.random.PRNGKey(0)
    k_param, k_comps, k_loops = jax.random.split(key, 3)

    B = 2            # batch
    NC = 6           # number of computations
    NL = 4           # number of loops
    INPUT_SIZE = 64  # per-computation feature size

    params = init_params(k_param, INPUT_SIZE)

    comps_tensor = jax.random.normal(k_comps, (B, NC, INPUT_SIZE), jnp.float32)
    loops_tensor = jax.random.normal(k_loops, (B, NL, LOOP_F), jnp.float32)

    # Static synthetic program tree: root with three leaf children; the two
    # 2-computation leaves exercise the sibling batching path (comps_lstm and
    # the concat linears for the whole leaf level run as single batched matmuls).
    tree = {
        "child_list": [
            {"child_list": [], "has_comps": True,
             "computations_indices": [0, 1], "loop_index": 1},
            {"child_list": [], "has_comps": True,
             "computations_indices": [2, 3], "loop_index": 2},
            {"child_list": [], "has_comps": False,
             "computations_indices": [], "loop_index": 3},
        ],
        "has_comps": True,
        "computations_indices": [4, 5],
        "loop_index": 0,
    }

    fwd = make_forward_fn(params, tree, B, NC, NL, INPUT_SIZE)
    out = jax.block_until_ready(fwd(comps_tensor, loops_tensor))
    assert out.shape == (B, 1) and out.dtype == jnp.float32
    assert bool(jnp.all(jnp.isfinite(out)))
    print("KERNEL_OK")
</pallas_src>

<mosaic_0001>
module attributes {stable_mosaic.version = 11 : i64} {
  func.func @_tree_forward_kernel(%arg0: memref<12x128xf32, #tpu.memory_space<vmem>>, %arg1: memref<8x128xf32, #tpu.memory_space<vmem>>, %arg2: memref<128x640xbf16, #tpu.memory_space<vmem>>, %arg3: memref<1x640xf32, #tpu.memory_space<vmem>>, %arg4: memref<640x384xbf16, #tpu.memory_space<vmem>>, %arg5: memref<1x384xf32, #tpu.memory_space<vmem>>, %arg6: memref<384x256xbf16, #tpu.memory_space<vmem>>, %arg7: memref<1x256xf32, #tpu.memory_space<vmem>>, %arg8: memref<256x256xbf16, #tpu.memory_space<vmem>>, %arg9: memref<1x256xf32, #tpu.memory_space<vmem>>, %arg10: memref<640x256xbf16, #tpu.memory_space<vmem>>, %arg11: memref<1x256xf32, #tpu.memory_space<vmem>>, %arg12: memref<256x256xbf16, #tpu.memory_space<vmem>>, %arg13: memref<1x256xf32, #tpu.memory_space<vmem>>, %arg14: memref<256x256xbf16, #tpu.memory_space<vmem>>, %arg15: memref<1x256xf32, #tpu.memory_space<vmem>>, %arg16: memref<256x256xbf16, #tpu.memory_space<vmem>>, %arg17: memref<1x256xf32, #tpu.memory_space<vmem>>, %arg18: memref<256x128xbf16, #tpu.memory_space<vmem>>, %arg19: memref<1x128xf32, #tpu.memory_space<vmem>>, %arg20: memref<256x1024xbf16, #tpu.memory_space<any>>, %arg21: memref<256x1024xbf16, #tpu.memory_space<any>>, %arg22: memref<1x1024xf32, #tpu.memory_space<vmem>>, %arg23: memref<256x1024xbf16, #tpu.memory_space<any>>, %arg24: memref<256x1024xbf16, #tpu.memory_space<any>>, %arg25: memref<1x1024xf32, #tpu.memory_space<vmem>>, %arg26: memref<1x256xf32, #tpu.memory_space<vmem>>, %arg27: memref<1x256xf32, #tpu.memory_space<vmem>>, %arg28: memref<2x128xf32, #tpu.memory_space<vmem>>, %arg29: memref<256x1024xbf16, #tpu.memory_space<vmem>>, %arg30: memref<256x1024xbf16, #tpu.memory_space<vmem>>, %arg31: memref<256x1024xbf16, #tpu.memory_space<vmem>>, %arg32: memref<256x1024xbf16, #tpu.memory_space<vmem>>, %arg33: memref<4x!tpu.dma_semaphore, #tpu.memory_space<semaphore_mem>>) attributes {dimension_semantics = [], scalar_prefetch = 0 : i64, scratch_operands = 5 : i64, tpu.core_type = #tpu.core_type<tc>} {
    %c0_i32 = arith.constant 0 : i32
    %0 = tpu.memref_slice %arg33[%c0_i32] : memref<4x!tpu.dma_semaphore, #tpu.memory_space<semaphore_mem>> -> memref<1x!tpu.dma_semaphore, #tpu.memory_space<semaphore_mem>>
    %1 = tpu.memref_squeeze %0 : memref<1x!tpu.dma_semaphore, #tpu.memory_space<semaphore_mem>> -> memref<!tpu.dma_semaphore, #tpu.memory_space<semaphore_mem>>
    tpu.enqueue_dma source(%arg20 : memref<256x1024xbf16, #tpu.memory_space<any>>) target(%arg29 : memref<256x1024xbf16, #tpu.memory_space<vmem>>) target_semaphore(%1 : memref<!tpu.dma_semaphore, #tpu.memory_space<semaphore_mem>>)
    %c1_i32 = arith.constant 1 : i32
    %2 = tpu.memref_slice %arg33[%c1_i32] : memref<4x!tpu.dma_semaphore, #tpu.memory_space<semaphore_mem>> -> memref<1x!tpu.dma_semaphore, #tpu.memory_space<semaphore_mem>>
    %3 = tpu.memref_squeeze %2 : memref<1x!tpu.dma_semaphore, #tpu.memory_space<semaphore_mem>> -> memref<!tpu.dma_semaphore, #tpu.memory_space<semaphore_mem>>
    tpu.enqueue_dma source(%arg21 : memref<256x1024xbf16, #tpu.memory_space<any>>) target(%arg30 : memref<256x1024xbf16, #tpu.memory_space<vmem>>) target_semaphore(%3 : memref<!tpu.dma_semaphore, #tpu.memory_space<semaphore_mem>>)
    %c2_i32 = arith.constant 2 : i32
    %4 = tpu.memref_slice %arg33[%c2_i32] : memref<4x!tpu.dma_semaphore, #tpu.memory_space<semaphore_mem>> -> memref<1x!tpu.dma_semaphore, #tpu.memory_space<semaphore_mem>>
    %5 = tpu.memref_squeeze %4 : memref<1x!tpu.dma_semaphore, #tpu.memory_space<semaphore_mem>> -> memref<!tpu.dma_semaphore, #tpu.memory_space<semaphore_mem>>
    tpu.enqueue_dma source(%arg23 : memref<256x1024xbf16, #tpu.memory_space<any>>) target(%arg31 : memref<256x1024xbf16, #tpu.memory_space<vmem>>) target_semaphore(%5 : memref<!tpu.dma_semaphore, #tpu.memory_space<semaphore_mem>>)
    %c3_i32 = arith.constant 3 : i32
    %6 = tpu.memref_slice %arg33[%c3_i32] : memref<4x!tpu.dma_semaphore, #tpu.memory_space<semaphore_mem>> -> memref<1x!tpu.dma_semaphore, #tpu.memory_space<semaphore_mem>>
    %7 = tpu.memref_squeeze %6 : memref<1x!tpu.dma_semaphore, #tpu.memory_space<semaphore_mem>> -> memref<!tpu.dma_semaphore, #tpu.memory_space<semaphore_mem>>
    tpu.enqueue_dma source(%arg24 : memref<256x1024xbf16, #tpu.memory_space<any>>) target(%arg32 : memref<256x1024xbf16, #tpu.memory_space<vmem>>) target_semaphore(%7 : memref<!tpu.dma_semaphore, #tpu.memory_space<semaphore_mem>>)
    %c0 = arith.constant 0 : index
    %c0_0 = arith.constant 0 : index
    %8 = vector.load %arg0[%c0, %c0_0] : memref<12x128xf32, #tpu.memory_space<vmem>>, vector<12x128xf32>
    %9 = arith.truncf %8 : vector<12x128xf32> to vector<12x128xbf16>
    %c0_1 = arith.constant 0 : index
    %c0_2 = arith.constant 0 : index
    %10 = vector.load %arg2[%c0_1, %c0_2] : memref<128x640xbf16, #tpu.memory_space<vmem>>, vector<128x640xbf16>
    %cst = arith.constant dense<0.000000e+00> : vector<12x640xf32>
    %11 = tpu.matmul %9, %10, %cst {dimension_numbers = #tpu.dot_dimension_numbers<[1], [0], [0], [1], [0, 0, 1, 1], [], []>} : vector<12x128xbf16>, vector<128x640xbf16>, vector<12x640xf32> -> vector<12x640xf32>
    %c0_3 = arith.constant 0 : index
    %c0_4 = arith.constant 0 : index
    %12 = vector.load %arg3[%c0_3, %c0_4] : memref<1x640xf32, #tpu.memory_space<vmem>>, vector<1x640xf32>
    %13 = vector.broadcast %12 : vector<1x640xf32> to vector<12x640xf32>
    %14 = arith.addf %11, %13 : vector<12x640xf32>
    %cst_5 = arith.constant 0.000000e+00 : f32
    %15 = vector.broadcast %cst_5 : f32 to vector<12x640xf32>
    %16 = arith.cmpf ogt, %14, %15 : vector<12x640xf32>
    %cst_6 = arith.constant 0.000000e+00 : f32
    %17 = vector.broadcast %cst_6 : f32 to vector<12x640xf32>
    %18 = arith.minimumf %14, %17 : vector<12x640xf32>
    %19 = math.exp %18 : vector<12x640xf32>
    %cst_7 = arith.constant 1.000000e+00 : f32
    %20 = vector.broadcast %cst_7 : f32 to vector<12x640xf32>
    %21 = arith.subf %19, %20 : vector<12x640xf32>
    %22 = arith.select %16, %14, %21 : vector<12x640xi1>, vector<12x640xf32>
    %23 = arith.truncf %22 : vector<12x640xf32> to vector<12x640xbf16>
    %c0_8 = arith.constant 0 : index
    %c0_9 = arith.constant 0 : index
    %24 = vector.load %arg4[%c0_8, %c0_9] : memref<640x384xbf16, #tpu.memory_space<vmem>>, vector<640x384xbf16>
    %cst_10 = arith.constant dense<0.000000e+00> : vector<12x384xf32>
    %25 = tpu.matmul %23, %24, %cst_10 {dimension_numbers = #tpu.dot_dimension_numbers<[1], [0], [0], [1], [0, 0, 1, 1], [], []>} : vector<12x640xbf16>, vector<640x384xbf16>, vector<12x384xf32> -> vector<12x384xf32>
    %c0_11 = arith.constant 0 : index
    %c0_12 = arith.constant 0 : index
    %26 = vector.load %arg5[%c0_11, %c0_12] : memref<1x384xf32, #tpu.memory_space<vmem>>, vector<1x384xf32>
    %27 = vector.broadcast %26 : vector<1x384xf32> to vector<12x384xf32>
    %28 = arith.addf %25, %27 : vector<12x384xf32>
    %cst_13 = arith.constant 0.000000e+00 : f32
    %29 = vector.broadcast %cst_13 : f32 to vector<12x384xf32>
    %30 = arith.cmpf ogt, %28, %29 : vector<12x384xf32>
    %cst_14 = arith.constant 0.000000e+00 : f32
    %31 = vector.broadcast %cst_14 : f32 to vector<12x384xf32>
    %32 = arith.minimumf %28, %31 : vector<12x384xf32>
    %33 = math.exp %32 : vector<12x384xf32>
    %cst_15 = arith.constant 1.000000e+00 : f32
    %34 = vector.broadcast %cst_15 : f32 to vector<12x384xf32>
    %35 = arith.subf %33, %34 : vector<12x384xf32>
    %36 = arith.select %30, %28, %35 : vector<12x384xi1>, vector<12x384xf32>
    %37 = arith.truncf %36 : vector<12x384xf32> to vector<12x384xbf16>
    %c0_16 = arith.constant 0 : index
    %c0_17 = arith.constant 0 : index
    %38 = vector.load %arg6[%c0_16, %c0_17] : memref<384x256xbf16, #tpu.memory_space<vmem>>, vector<384x256xbf16>
    %cst_18 = arith.constant dense<0.000000e+00> : vector<12x256xf32>
    %39 = tpu.matmul %37, %38, %cst_18 {dimension_numbers = #tpu.dot_dimension_numbers<[1], [0], [0], [1], [0, 0, 1, 1], [], []>} : vector<12x384xbf16>, vector<384x256xbf16>, vector<12x256xf32> -> vector<12x256xf32>
    %c0_19 = arith.constant 0 : index
    %c0_20 = arith.constant 0 : index
    %40 = vector.load %arg7[%c0_19, %c0_20] : memref<1x256xf32, #tpu.memory_space<vmem>>, vector<1x256xf32>
    %41 = vector.broadcast %40 : vector<1x256xf32> to vector<12x256xf32>
    %42 = arith.addf %39, %41 : vector<12x256xf32>
    %cst_21 = arith.constant 0.000000e+00 : f32
    %43 = vector.broadcast %cst_21 : f32 to vector<12x256xf32>
    %44 = arith.cmpf ogt, %42, %43 : vector<12x256xf32>
    %cst_22 = arith.constant 0.000000e+00 : f32
    %45 = vector.broadcast %cst_22 : f32 to vector<12x256xf32>
    %46 = arith.minimumf %42, %45 : vector<12x256xf32>
    %47 = math.exp %46 : vector<12x256xf32>
    %cst_23 = arith.constant 1.000000e+00 : f32
    %48 = vector.broadcast %cst_23 : f32 to vector<12x256xf32>
    %49 = arith.subf %47, %48 : vector<12x256xf32>
    %50 = arith.select %44, %42, %49 : vector<12x256xi1>, vector<12x256xf32>
    %51 = arith.truncf %50 : vector<12x256xf32> to vector<12x256xbf16>
    %c0_24 = arith.constant 0 : index
    %c0_25 = arith.constant 0 : index
    %52 = vector.load %arg8[%c0_24, %c0_25] : memref<256x256xbf16, #tpu.memory_space<vmem>>, vector<256x256xbf16>
    %cst_26 = arith.constant dense<0.000000e+00> : vector<12x256xf32>
    %53 = tpu.matmul %51, %52, %cst_26 {dimension_numbers = #tpu.dot_dimension_numbers<[1], [0], [0], [1], [0, 0, 1, 1], [], []>} : vector<12x256xbf16>, vector<256x256xbf16>, vector<12x256xf32> -> vector<12x256xf32>
    %c0_27 = arith.constant 0 : index
    %c0_28 = arith.constant 0 : index
    %54 = vector.load %arg9[%c0_27, %c0_28] : memref<1x256xf32, #tpu.memory_space<vmem>>, vector<1x256xf32>
    %55 = vector.broadcast %54 : vector<1x256xf32> to vector<12x256xf32>
    %56 = arith.addf %53, %55 : vector<12x256xf32>
    %cst_29 = arith.constant 0.000000e+00 : f32
    %57 = vector.broadcast %cst_29 : f32 to vector<12x256xf32>
    %58 = arith.cmpf ogt, %56, %57 : vector<12x256xf32>
    %cst_30 = arith.constant 0.000000e+00 : f32
    %59 = vector.broadcast %cst_30 : f32 to vector<12x256xf32>
    %60 = arith.minimumf %56, %59 : vector<12x256xf32>
    %61 = math.exp %60 : vector<12x256xf32>
    %cst_31 = arith.constant 1.000000e+00 : f32
    %62 = vector.broadcast %cst_31 : f32 to vector<12x256xf32>
    %63 = arith.subf %61, %62 : vector<12x256xf32>
    %64 = arith.select %58, %56, %63 : vector<12x256xi1>, vector<12x256xf32>
    %c0_32 = arith.constant 0 : index
    %c0_33 = arith.constant 0 : index
    %65 = vector.load %arg1[%c0_32, %c0_33] : memref<8x128xf32, #tpu.memory_space<vmem>>, vector<8x128xf32>
    %c0_i32_34 = arith.constant 0 : i32
    %66 = tpu.memref_slice %arg33[%c0_i32_34] : memref<4x!tpu.dma_semaphore, #tpu.memory_space<semaphore_mem>> -> memref<1x!tpu.dma_semaphore, #tpu.memory_space<semaphore_mem>>
    %67 = tpu.memref_squeeze %66 : memref<1x!tpu.dma_semaphore, #tpu.memory_space<semaphore_mem>> -> memref<!tpu.dma_semaphore, #tpu.memory_space<semaphore_mem>>
    tpu.wait_dma2 semaphore(%67 : memref<!tpu.dma_semaphore, #tpu.memory_space<semaphore_mem>>) src(%arg20 : memref<256x1024xbf16, #tpu.memory_space<any>>) dst(%arg29 : memref<256x1024xbf16, #tpu.memory_space<vmem>>)
    %c1_i32_35 = arith.constant 1 : i32
    %68 = tpu.memref_slice %arg33[%c1_i32_35] : memref<4x!tpu.dma_semaphore, #tpu.memory_space<semaphore_mem>> -> memref<1x!tpu.dma_semaphore, #tpu.memory_space<semaphore_mem>>
    %69 = tpu.memref_squeeze %68 : memref<1x!tpu.dma_semaphore, #tpu.memory_space<semaphore_mem>> -> memref<!tpu.dma_semaphore, #tpu.memory_space<semaphore_mem>>
    tpu.wait_dma2 semaphore(%69 : memref<!tpu.dma_semaphore, #tpu.memory_space<semaphore_mem>>) src(%arg21 : memref<256x1024xbf16, #tpu.memory_space<any>>) dst(%arg30 : memref<256x1024xbf16, #tpu.memory_space<vmem>>)
    %c2_i32_36 = arith.constant 2 : i32
    %70 = tpu.memref_slice %arg33[%c2_i32_36] : memref<4x!tpu.dma_semaphore, #tpu.memory_space<semaphore_mem>> -> memref<1x!tpu.dma_semaphore, #tpu.memory_space<semaphore_mem>>
    %71 = tpu.memref_squeeze %70 : memref<1x!tpu.dma_semaphore, #tpu.memory_space<semaphore_mem>> -> memref<!tpu.dma_semaphore, #tpu.memory_space<semaphore_mem>>
    tpu.wait_dma2 semaphore(%71 : memref<!tpu.dma_semaphore, #tpu.memory_space<semaphore_mem>>) src(%arg23 : memref<256x1024xbf16, #tpu.memory_space<any>>) dst(%arg31 : memref<256x1024xbf16, #tpu.memory_space<vmem>>)
    %c3_i32_37 = arith.constant 3 : i32
    %72 = tpu.memref_slice %arg33[%c3_i32_37] : memref<4x!tpu.dma_semaphore, #tpu.memory_space<semaphore_mem>> -> memref<1x!tpu.dma_semaphore, #tpu.memory_space<semaphore_mem>>
    %73 = tpu.memref_squeeze %72 : memref<1x!tpu.dma_semaphore, #tpu.memory_space<semaphore_mem>> -> memref<!tpu.dma_semaphore, #tpu.memory_space<semaphore_mem>>
    tpu.wait_dma2 semaphore(%73 : memref<!tpu.dma_semaphore, #tpu.memory_space<semaphore_mem>>) src(%arg24 : memref<256x1024xbf16, #tpu.memory_space<any>>) dst(%arg32 : memref<256x1024xbf16, #tpu.memory_space<vmem>>)
    %c0_38 = arith.constant 0 : index
    %c0_39 = arith.constant 0 : index
    %74 = vector.load %arg27[%c0_38, %c0_39] : memref<1x256xf32, #tpu.memory_space<vmem>>, vector<1x256xf32>
    %75 = vector.shape_cast %74 : vector<1x256xf32> to vector<1x256xf32>
    %76 = vector.broadcast %75 : vector<1x256xf32> to vector<2x256xf32>
    %c0_40 = arith.constant 0 : index
    %c0_41 = arith.constant 0 : index
    %77 = vector.load %arg26[%c0_40, %c0_41] : memref<1x256xf32, #tpu.memory_space<vmem>>, vector<1x256xf32>
    %78 = vector.shape_cast %77 : vector<1x256xf32> to vector<1x256xf32>
    %79 = vector.broadcast %78 : vector<1x256xf32> to vector<2x256xf32>
    %80 = vector.extract_strided_slice %64 {offsets = [0, 0], sizes = [2, 256], strides = [1, 1]} : vector<12x256xf32> to vector<2x256xf32>
    %81 = vector.extract_strided_slice %64 {offsets = [4, 0], sizes = [2, 256], strides = [1, 1]} : vector<12x256xf32> to vector<2x256xf32>
    %82 = tpu.concatenate %80, %81 in 0 : vector<2x256xf32>, vector<2x256xf32> -> vector<4x256xf32>
    %83 = vector.extract_strided_slice %64 {offsets = [2, 0], sizes = [2, 256], strides = [1, 1]} : vector<12x256xf32> to vector<2x256xf32>
    %84 = vector.extract_strided_slice %64 {offsets = [6, 0], sizes = [2, 256], strides = [1, 1]} : vector<12x256xf32> to vector<2x256xf32>
    %85 = tpu.concatenate %83, %84 in 0 : vector<2x256xf32>, vector<2x256xf32> -> vector<4x256xf32>
    %86 = tpu.concatenate %82, %85 in 0 : vector<4x256xf32>, vector<4x256xf32> -> vector<8x256xf32>
    %87 = arith.truncf %86 : vector<8x256xf32> to vector<8x256xbf16>
    %c0_42 = arith.constant 0 : index
    %c0_43 = arith.constant 0 : index
    %88 = vector.load %arg29[%c0_42, %c0_43] : memref<256x1024xbf16, #tpu.memory_space<vmem>>, vector<256x1024xbf16>
    %cst_44 = arith.constant dense<0.000000e+00> : vector<8x1024xf32>
    %89 = tpu.matmul %87, %88, %cst_44 {dimension_numbers = #tpu.dot_dimension_numbers<[1], [0], [0], [1], [0, 0, 1, 1], [], []>} : vector<8x256xbf16>, vector<256x1024xbf16>, vector<8x1024xf32> -> vector<8x1024xf32>
    %c0_45 = arith.constant 0 : index
    %c0_46 = arith.constant 0 : index
    %90 = vector.load %arg22[%c0_45, %c0_46] : memref<1x1024xf32, #tpu.memory_space<vmem>>, vector<1x1024xf32>
    %91 = vector.broadcast %90 : vector<1x1024xf32> to vector<8x1024xf32>
    %92 = arith.addf %89, %91 : vector<8x1024xf32>
    %c0_47 = arith.constant 0 : index
    %c0_48 = arith.constant 0 : index
    %93 = vector.load %arg30[%c0_47, %c0_48] : memref<256x1024xbf16, #tpu.memory_space<vmem>>, vector<256x1024xbf16>
    %cst_49 = arith.constant 0.000000e+00 : f32
    %94 = vector.broadcast %cst_49 : f32 to vector<4x256xf32>
    %cst_50 = arith.constant 0.000000e+00 : f32
    %95 = vector.broadcast %cst_50 : f32 to vector<4x256xf32>
    %96 = vector.extract_strided_slice %92 {offsets = [0, 0], sizes = [4, 1024], strides = [1, 1]} : vector<8x1024xf32> to vector<4x1024xf32>
    %97 = arith.truncf %94 : vector<4x256xf32> to vector<4x256xbf16>
    %cst_51 = arith.constant dense<0.000000e+00> : vector<4x1024xf32>
    %98 = tpu.matmul %97, %93, %cst_51 {dimension_numbers = #tpu.dot_dimension_numbers<[1], [0], [0], [1], [0, 0, 1, 1], [], []>} : vector<4x256xbf16>, vector<256x1024xbf16>, vector<4x1024xf32> -> vector<4x1024xf32>
    %99 = arith.addf %96, %98 : vector<4x1024xf32>
    %100 = vector.extract_strided_slice %99 {offsets = [0, 0], sizes = [4, 256], strides = [1, 1]} : vector<4x1024xf32> to vector<4x256xf32>
    %101 = arith.negf %100 : vector<4x256xf32>
    %102 = math.exp %101 : vector<4x256xf32>
    %cst_52 = arith.constant 1.000000e+00 : f32
    %103 = vector.broadcast %cst_52 : f32 to vector<4x256xf32>
    %104 = arith.addf %103, %102 : vector<4x256xf32>
    %105 = arith.divf %103, %104 : vector<4x256xf32>
    %106 = vector.extract_strided_slice %99 {offsets = [0, 256], sizes = [4, 256], strides = [1, 1]} : vector<4x1024xf32> to vector<4x256xf32>
    %107 = arith.negf %106 : vector<4x256xf32>
    %108 = math.exp %107 : vector<4x256xf32>
    %cst_53 = arith.constant 1.000000e+00 : f32
    %109 = vector.broadcast %cst_53 : f32 to vector<4x256xf32>
    %110 = arith.addf %109, %108 : vector<4x256xf32>
    %111 = arith.divf %109, %110 : vector<4x256xf32>
    %112 = vector.extract_strided_slice %99 {offsets = [0, 512], sizes = [4, 256], strides = [1, 1]} : vector<4x1024xf32> to vector<4x256xf32>
    %113 = math.tanh %112 : vector<4x256xf32>
    %114 = vector.extract_strided_slice %99 {offsets = [0, 768], sizes = [4, 256], strides = [1, 1]} : vector<4x1024xf32> to vector<4x256xf32>
    %115 = arith.negf %114 : vector<4x256xf32>
    %116 = math.exp %115 : vector<4x256xf32>
    %cst_54 = arith.constant 1.000000e+00 : f32
    %117 = vector.broadcast %cst_54 : f32 to vector<4x256xf32>
    %118 = arith.addf %117, %116 : vector<4x256xf32>
    %119 = arith.divf %117, %118 : vector<4x256xf32>
    %120 = arith.mulf %111, %95 : vector<4x256xf32>
    %121 = arith.mulf %105, %113 : vector<4x256xf32>
    %122 = arith.addf %120, %121 : vector<4x256xf32>
    %123 = math.tanh %122 : vector<4x256xf32>
    %124 = arith.mulf %119, %123 : vector<4x256xf32>
    %125 = vector.extract_strided_slice %92 {offsets = [4, 0], sizes = [4, 1024], strides = [1, 1]} : vector<8x1024xf32> to vector<4x1024xf32>
    %126 = arith.truncf %124 : vector<4x256xf32> to vector<4x256xbf16>
    %cst_55 = arith.constant dense<0.000000e+00> : vector<4x1024xf32>
    %127 = tpu.matmul %126, %93, %cst_55 {dimension_numbers = #tpu.dot_dimension_numbers<[1], [0], [0], [1], [0, 0, 1, 1], [], []>} : vector<4x256xbf16>, vector<256x1024xbf16>, vector<4x1024xf32> -> vector<4x1024xf32>
    %128 = arith.addf %125, %127 : vector<4x1024xf32>
    %129 = vector.extract_strided_slice %128 {offsets = [0, 0], sizes = [4, 256], strides = [1, 1]} : vector<4x1024xf32> to vector<4x256xf32>
    %130 = arith.negf %129 : vector<4x256xf32>
    %131 = math.exp %130 : vector<4x256xf32>
    %cst_56 = arith.constant 1.000000e+00 : f32
    %132 = vector.broadcast %cst_56 : f32 to vector<4x256xf32>
    %133 = arith.addf %132, %131 : vector<4x256xf32>
    %134 = arith.divf %132, %133 : vector<4x256xf32>
    %135 = vector.extract_strided_slice %128 {offsets = [0, 256], sizes = [4, 256], strides = [1, 1]} : vector<4x1024xf32> to vector<4x256xf32>
    %136 = arith.negf %135 : vector<4x256xf32>
    %137 = math.exp %136 : vector<4x256xf32>
    %cst_57 = arith.constant 1.000000e+00 : f32
    %138 = vector.broadcast %cst_57 : f32 to vector<4x256xf32>
    %139 = arith.addf %138, %137 : vector<4x256xf32>
    %140 = arith.divf %138, %139 : vector<4x256xf32>
    %141 = vector.extract_strided_slice %128 {offsets = [0, 512], sizes = [4, 256], strides = [1, 1]} : vector<4x1024xf32> to vector<4x256xf32>
    %142 = math.tanh %141 : vector<4x256xf32>
    %143 = vector.extract_strided_slice %128 {offsets = [0, 768], sizes = [4, 256], strides = [1, 1]} : vector<4x1024xf32> to vector<4x256xf32>
    %144 = arith.negf %143 : vector<4x256xf32>
    %145 = math.exp %144 : vector<4x256xf32>
    %cst_58 = arith.constant 1.000000e+00 : f32
    %146 = vector.broadcast %cst_58 : f32 to vector<4x256xf32>
    %147 = arith.addf %146, %145 : vector<4x256xf32>
    %148 = arith.divf %146, %147 : vector<4x256xf32>
    %149 = arith.mulf %140, %122 : vector<4x256xf32>
    %150 = arith.mulf %134, %142 : vector<4x256xf32>
    %151 = arith.addf %149, %150 : vector<4x256xf32>
    %152 = math.tanh %151 : vector<4x256xf32>
    %153 = arith.mulf %148, %152 : vector<4x256xf32>
    %154 = vector.extract_strided_slice %153 {offsets = [0, 0], sizes = [2, 256], strides = [1, 1]} : vector<4x256xf32> to vector<2x256xf32>
    %155 = vector.extract_strided_slice %153 {offsets = [2, 0], sizes = [2, 256], strides = [1, 1]} : vector<4x256xf32> to vector<2x256xf32>
    %156 = vector.extract_strided_slice %65 {offsets = [2, 0], sizes = [2, 128], strides = [1, 1]} : vector<8x128xf32> to vector<2x128xf32>
    %157 = tpu.concatenate %76, %154, %156 in 1 : vector<2x256xf32>, vector<2x256xf32>, vector<2x128xf32> -> vector<2x640xf32>
    %158 = vector.extract_strided_slice %65 {offsets = [4, 0], sizes = [2, 128], strides = [1, 1]} : vector<8x128xf32> to vector<2x128xf32>
    %159 = tpu.concatenate %76, %155, %158 in 1 : vector<2x256xf32>, vector<2x256xf32>, vector<2x128xf32> -> vector<2x640xf32>
    %160 = vector.extract_strided_slice %65 {offsets = [6, 0], sizes = [2, 128], strides = [1, 1]} : vector<8x128xf32> to vector<2x128xf32>
    %161 = tpu.concatenate %76, %79, %160 in 1 : vector<2x256xf32>, vector<2x256xf32>, vector<2x128xf32> -> vector<2x640xf32>
    %162 = tpu.concatenate %157, %159, %161 in 0 : vector<2x640xf32>, vector<2x640xf32>, vector<2x640xf32> -> vector<6x640xf32>
    %163 = arith.truncf %162 : vector<6x640xf32> to vector<6x640xbf16>
    %c0_59 = arith.constant 0 : index
    %c0_60 = arith.constant 0 : index
    %164 = vector.load %arg10[%c0_59, %c0_60] : memref<640x256xbf16, #tpu.memory_space<vmem>>, vector<640x256xbf16>
    %cst_61 = arith.constant dense<0.000000e+00> : vector<6x256xf32>
    %165 = tpu.matmul %163, %164, %cst_61 {dimension_numbers = #tpu.dot_dimension_numbers<[1], [0], [0], [1], [0, 0, 1, 1], [], []>} : vector<6x640xbf16>, vector<640x256xbf16>, vector<6x256xf32> -> vector<6x256xf32>
    %c0_62 = arith.constant 0 : index
    %c0_63 = arith.constant 0 : index
    %166 = vector.load %arg11[%c0_62, %c0_63] : memref<1x256xf32, #tpu.memory_space<vmem>>, vector<1x256xf32>
    %167 = vector.broadcast %166 : vector<1x256xf32> to vector<6x256xf32>
    %168 = arith.addf %165, %167 : vector<6x256xf32>
    %cst_64 = arith.constant 0.000000e+00 : f32
    %169 = vector.broadcast %cst_64 : f32 to vector<6x256xf32>
    %170 = arith.cmpf ogt, %168, %169 : vector<6x256xf32>
    %cst_65 = arith.constant 0.000000e+00 : f32
    %171 = vector.broadcast %cst_65 : f32 to vector<6x256xf32>
    %172 = arith.minimumf %168, %171 : vector<6x256xf32>
    %173 = math.exp %172 : vector<6x256xf32>
    %cst_66 = arith.constant 1.000000e+00 : f32
    %174 = vector.broadcast %cst_66 : f32 to vector<6x256xf32>
    %175 = arith.subf %173, %174 : vector<6x256xf32>
    %176 = arith.select %170, %168, %175 : vector<6x256xi1>, vector<6x256xf32>
    %177 = arith.truncf %176 : vector<6x256xf32> to vector<6x256xbf16>
    %c0_67 = arith.constant 0 : index
    %c0_68 = arith.constant 0 : index
    %178 = vector.load %arg12[%c0_67, %c0_68] : memref<256x256xbf16, #tpu.memory_space<vmem>>, vector<256x256xbf16>
    %cst_69 = arith.constant dense<0.000000e+00> : vector<6x256xf32>
    %179 = tpu.matmul %177, %178, %cst_69 {dimension_numbers = #tpu.dot_dimension_numbers<[1], [0], [0], [1], [0, 0, 1, 1], [], []>} : vector<6x256xbf16>, vector<256x256xbf16>, vector<6x256xf32> -> vector<6x256xf32>
    %c0_70 = arith.constant 0 : index
    %c0_71 = arith.constant 0 : index
    %180 = vector.load %arg13[%c0_70, %c0_71] : memref<1x256xf32, #tpu.memory_space<vmem>>, vector<1x256xf32>
    %181 = vector.broadcast %180 : vector<1x256xf32> to vector<6x256xf32>
    %182 = arith.addf %179, %181 : vector<6x256xf32>
    %cst_72 = arith.constant 0.000000e+00 : f32
    %183 = vector.broadcast %cst_72 : f32 to vector<6x256xf32>
    %184 = arith.cmpf ogt, %182, %183 : vector<6x256xf32>
    %cst_73 = arith.constant 0.000000e+00 : f32
    %185 = vector.broadcast %cst_73 : f32 to vector<6x256xf32>
    %186 = arith.minimumf %182, %185 : vector<6x256xf32>
    %187 = math.exp %186 : vector<6x256xf32>
    %cst_74 = arith.constant 1.000000e+00 : f32
    %188 = vector.broadcast %cst_74 : f32 to vector<6x256xf32>
    %189 = arith.subf %187, %188 : vector<6x256xf32>
    %190 = arith.select %184, %182, %189 : vector<6x256xi1>, vector<6x256xf32>
    %191 = vector.extract_strided_slice %190 {offsets = [0, 0], sizes = [2, 256], strides = [1, 1]} : vector<6x256xf32> to vector<2x256xf32>
    %192 = vector.extract_strided_slice %190 {offsets = [2, 0], sizes = [2, 256], strides = [1, 1]} : vector<6x256xf32> to vector<2x256xf32>
    %193 = vector.extract_strided_slice %190 {offsets = [4, 0], sizes = [2, 256], strides = [1, 1]} : vector<6x256xf32> to vector<2x256xf32>
    %194 = tpu.concatenate %191, %192, %193 in 0 : vector<2x256xf32>, vector<2x256xf32>, vector<2x256xf32> -> vector<6x256xf32>
    %195 = arith.truncf %194 : vector<6x256xf32> to vector<6x256xbf16>
    %c0_75 = arith.constant 0 : index
    %c0_76 = arith.constant 0 : index
    %196 = vector.load %arg31[%c0_75, %c0_76] : memref<256x1024xbf16, #tpu.memory_space<vmem>>, vector<256x1024xbf16>
    %cst_77 = arith.constant dense<0.000000e+00> : vector<6x1024xf32>
    %197 = tpu.matmul %195, %196, %cst_77 {dimension_numbers = #tpu.dot_dimension_numbers<[1], [0], [0], [1], [0, 0, 1, 1], [], []>} : vector<6x256xbf16>, vector<256x1024xbf16>, vector<6x1024xf32> -> vector<6x1024xf32>
    %c0_78 = arith.constant 0 : index
    %c0_79 = arith.constant 0 : index
    %198 = vector.load %arg25[%c0_78, %c0_79] : memref<1x1024xf32, #tpu.memory_space<vmem>>, vector<1x1024xf32>
    %199 = vector.broadcast %198 : vector<1x1024xf32> to vector<6x1024xf32>
    %200 = arith.addf %197, %199 : vector<6x1024xf32>
    %c0_80 = arith.constant 0 : index
    %c0_81 = arith.constant 0 : index
    %201 = vector.load %arg32[%c0_80, %c0_81] : memref<256x1024xbf16, #tpu.memory_space<vmem>>, vector<256x1024xbf16>
    %cst_82 = arith.constant 0.000000e+00 : f32
    %202 = vector.broadcast %cst_82 : f32 to vector<2x256xf32>
    %cst_83 = arith.constant 0.000000e+00 : f32
    %203 = vector.broadcast %cst_83 : f32 to vector<2x256xf32>
    %204 = vector.extract_strided_slice %200 {offsets = [0, 0], sizes = [2, 1024], strides = [1, 1]} : vector<6x1024xf32> to vector<2x1024xf32>
    %205 = arith.truncf %202 : vector<2x256xf32> to vector<2x256xbf16>
    %cst_84 = arith.constant dense<0.000000e+00> : vector<2x1024xf32>
    %206 = tpu.matmul %205, %201, %cst_84 {dimension_numbers = #tpu.dot_dimension_numbers<[1], [0], [0], [1], [0, 0, 1, 1], [], []>} : vector<2x256xbf16>, vector<256x1024xbf16>, vector<2x1024xf32> -> vector<2x1024xf32>
    %207 = arith.addf %204, %206 : vector<2x1024xf32>
    %208 = vector.extract_strided_slice %207 {offsets = [0, 0], sizes = [2, 256], strides = [1, 1]} : vector<2x1024xf32> to vector<2x256xf32>
    %209 = arith.negf %208 : vector<2x256xf32>
    %210 = math.exp %209 : vector<2x256xf32>
    %cst_85 = arith.constant 1.000000e+00 : f32
    %211 = vector.broadcast %cst_85 : f32 to vector<2x256xf32>
    %212 = arith.addf %211, %210 : vector<2x256xf32>
    %213 = arith.divf %211, %212 : vector<2x256xf32>
    %214 = vector.extract_strided_slice %207 {offsets = [0, 256], sizes = [2, 256], strides = [1, 1]} : vector<2x1024xf32> to vector<2x256xf32>
    %215 = arith.negf %214 : vector<2x256xf32>
    %216 = math.exp %215 : vector<2x256xf32>
    %cst_86 = arith.constant 1.000000e+00 : f32
    %217 = vector.broadcast %cst_86 : f32 to vector<2x256xf32>
    %218 = arith.addf %217, %216 : vector<2x256xf32>
    %219 = arith.divf %217, %218 : vector<2x256xf32>
    %220 = vector.extract_strided_slice %207 {offsets = [0, 512], sizes = [2, 256], strides = [1, 1]} : vector<2x1024xf32> to vector<2x256xf32>
    %221 = math.tanh %220 : vector<2x256xf32>
    %222 = vector.extract_strided_slice %207 {offsets = [0, 768], sizes = [2, 256], strides = [1, 1]} : vector<2x1024xf32> to vector<2x256xf32>
    %223 = arith.negf %222 : vector<2x256xf32>
    %224 = math.exp %223 : vector<2x256xf32>
    %cst_87 = arith.constant 1.000000e+00 : f32
    %225 = vector.broadcast %cst_87 : f32 to vector<2x256xf32>
    %226 = arith.addf %225, %224 : vector<2x256xf32>
    %227 = arith.divf %225, %226 : vector<2x256xf32>
    %228 = arith.mulf %219, %203 : vector<2x256xf32>
    %229 = arith.mulf %213, %221 : vector<2x256xf32>
    %230 = arith.addf %228, %229 : vector<2x256xf32>
    %231 = math.tanh %230 : vector<2x256xf32>
    %232 = arith.mulf %227, %231 : vector<2x256xf32>
    %233 = vector.extract_strided_slice %200 {offsets = [2, 0], sizes = [2, 1024], strides = [1, 1]} : vector<6x1024xf32> to vector<2x1024xf32>
    %234 = arith.truncf %232 : vector<2x256xf32> to vector<2x256xbf16>
    %cst_88 = arith.constant dense<0.000000e+00> : vector<2x1024xf32>
    %235 = tpu.matmul %234, %201, %cst_88 {dimension_numbers = #tpu.dot_dimension_numbers<[1], [0], [0], [1], [0, 0, 1, 1], [], []>} : vector<2x256xbf16>, vector<256x1024xbf16>, vector<2x1024xf32> -> vector<2x1024xf32>
    %236 = arith.addf %233, %235 : vector<2x1024xf32>
    %237 = vector.extract_strided_slice %236 {offsets = [0, 0], sizes = [2, 256], strides = [1, 1]} : vector<2x1024xf32> to vector<2x256xf32>
    %238 = arith.negf %237 : vector<2x256xf32>
    %239 = math.exp %238 : vector<2x256xf32>
    %cst_89 = arith.constant 1.000000e+00 : f32
    %240 = vector.broadcast %cst_89 : f32 to vector<2x256xf32>
    %241 = arith.addf %240, %239 : vector<2x256xf32>
    %242 = arith.divf %240, %241 : vector<2x256xf32>
    %243 = vector.extract_strided_slice %236 {offsets = [0, 256], sizes = [2, 256], strides = [1, 1]} : vector<2x1024xf32> to vector<2x256xf32>
    %244 = arith.negf %243 : vector<2x256xf32>
    %245 = math.exp %244 : vector<2x256xf32>
    %cst_90 = arith.constant 1.000000e+00 : f32
    %246 = vector.broadcast %cst_90 : f32 to vector<2x256xf32>
    %247 = arith.addf %246, %245 : vector<2x256xf32>
    %248 = arith.divf %246, %247 : vector<2x256xf32>
    %249 = vector.extract_strided_slice %236 {offsets = [0, 512], sizes = [2, 256], strides = [1, 1]} : vector<2x1024xf32> to vector<2x256xf32>
    %250 = math.tanh %249 : vector<2x256xf32>
    %251 = vector.extract_strided_slice %236 {offsets = [0, 768], sizes = [2, 256], strides = [1, 1]} : vector<2x1024xf32> to vector<2x256xf32>
    %252 = arith.negf %251 : vector<2x256xf32>
    %253 = math.exp %252 : vector<2x256xf32>
    %cst_91 = arith.constant 1.000000e+00 : f32
    %254 = vector.broadcast %cst_91 : f32 to vector<2x256xf32>
    %255 = arith.addf %254, %253 : vector<2x256xf32>
    %256 = arith.divf %254, %255 : vector<2x256xf32>
    %257 = arith.mulf %248, %230 : vector<2x256xf32>
    %258 = arith.mulf %242, %250 : vector<2x256xf32>
    %259 = arith.addf %257, %258 : vector<2x256xf32>
    %260 = math.tanh %259 : vector<2x256xf32>
    %261 = arith.mulf %256, %260 : vector<2x256xf32>
    %262 = vector.extract_strided_slice %200 {offsets = [4, 0], sizes = [2, 1024], strides = [1, 1]} : vector<6x1024xf32> to vector<2x1024xf32>
    %263 = arith.truncf %261 : vector<2x256xf32> to vector<2x256xbf16>
    %cst_92 = arith.constant dense<0.000000e+00> : vector<2x1024xf32>
    %264 = tpu.matmul %263, %201, %cst_92 {dimension_numbers = #tpu.dot_dimension_numbers<[1], [0], [0], [1], [0, 0, 1, 1], [], []>} : vector<2x256xbf16>, vector<256x1024xbf16>, vector<2x1024xf32> -> vector<2x1024xf32>
    %265 = arith.addf %262, %264 : vector<2x1024xf32>
    %266 = vector.extract_strided_slice %265 {offsets = [0, 0], sizes = [2, 256], strides = [1, 1]} : vector<2x1024xf32> to vector<2x256xf32>
    %267 = arith.negf %266 : vector<2x256xf32>
    %268 = math.exp %267 : vector<2x256xf32>
    %cst_93 = arith.constant 1.000000e+00 : f32
    %269 = vector.broadcast %cst_93 : f32 to vector<2x256xf32>
    %270 = arith.addf %269, %268 : vector<2x256xf32>
    %271 = arith.divf %269, %270 : vector<2x256xf32>
    %272 = vector.extract_strided_slice %265 {offsets = [0, 256], sizes = [2, 256], strides = [1, 1]} : vector<2x1024xf32> to vector<2x256xf32>
    %273 = arith.negf %272 : vector<2x256xf32>
    %274 = math.exp %273 : vector<2x256xf32>
    %cst_94 = arith.constant 1.000000e+00 : f32
    %275 = vector.broadcast %cst_94 : f32 to vector<2x256xf32>
    %276 = arith.addf %275, %274 : vector<2x256xf32>
    %277 = arith.divf %275, %276 : vector<2x256xf32>
    %278 = vector.extract_strided_slice %265 {offsets = [0, 512], sizes = [2, 256], strides = [1, 1]} : vector<2x1024xf32> to vector<2x256xf32>
    %279 = math.tanh %278 : vector<2x256xf32>
    %280 = vector.extract_strided_slice %265 {offsets = [0, 768], sizes = [2, 256], strides = [1, 1]} : vector<2x1024xf32> to vector<2x256xf32>
    %281 = arith.negf %280 : vector<2x256xf32>
    %282 = math.exp %281 : vector<2x256xf32>
    %cst_95 = arith.constant 1.000000e+00 : f32
    %283 = vector.broadcast %cst_95 : f32 to vector<2x256xf32>
    %284 = arith.addf %283, %282 : vector<2x256xf32>
    %285 = arith.divf %283, %284 : vector<2x256xf32>
    %286 = arith.mulf %277, %259 : vector<2x256xf32>
    %287 = arith.mulf %271, %279 : vector<2x256xf32>
    %288 = arith.addf %286, %287 : vector<2x256xf32>
    %289 = math.tanh %288 : vector<2x256xf32>
    %290 = arith.mulf %285, %289 : vector<2x256xf32>
    %291 = vector.extract_strided_slice %64 {offsets = [8, 0], sizes = [2, 256], strides = [1, 1]} : vector<12x256xf32> to vector<2x256xf32>
    %292 = vector.extract_strided_slice %64 {offsets = [10, 0], sizes = [2, 256], strides = [1, 1]} : vector<12x256xf32> to vector<2x256xf32>
    %293 = tpu.concatenate %291, %292 in 0 : vector<2x256xf32>, vector<2x256xf32> -> vector<4x256xf32>
    %294 = arith.truncf %293 : vector<4x256xf32> to vector<4x256xbf16>
    %c0_96 = arith.constant 0 : index
    %c0_97 = arith.constant 0 : index
    %295 = vector.load %arg29[%c0_96, %c0_97] : memref<256x1024xbf16, #tpu.memory_space<vmem>>, vector<256x1024xbf16>
    %cst_98 = arith.constant dense<0.000000e+00> : vector<4x1024xf32>
    %296 = tpu.matmul %294, %295, %cst_98 {dimension_numbers = #tpu.dot_dimension_numbers<[1], [0], [0], [1], [0, 0, 1, 1], [], []>} : vector<4x256xbf16>, vector<256x1024xbf16>, vector<4x1024xf32> -> vector<4x1024xf32>
    %c0_99 = arith.constant 0 : index
    %c0_100 = arith.constant 0 : index
    %297 = vector.load %arg22[%c0_99, %c0_100] : memref<1x1024xf32, #tpu.memory_space<vmem>>, vector<1x1024xf32>
    %298 = vector.broadcast %297 : vector<1x1024xf32> to vector<4x1024xf32>
    %299 = arith.addf %296, %298 : vector<4x1024xf32>
    %c0_101 = arith.constant 0 : index
    %c0_102 = arith.constant 0 : index
    %300 = vector.load %arg30[%c0_101, %c0_102] : memref<256x1024xbf16, #tpu.memory_space<vmem>>, vector<256x1024xbf16>
    %cst_103 = arith.constant 0.000000e+00 : f32
    %301 = vector.broadcast %cst_103 : f32 to vector<2x256xf32>
    %cst_104 = arith.constant 0.000000e+00 : f32
    %302 = vector.broadcast %cst_104 : f32 to vector<2x256xf32>
    %303 = vector.extract_strided_slice %299 {offsets = [0, 0], sizes = [2, 1024], strides = [1, 1]} : vector<4x1024xf32> to vector<2x1024xf32>
    %304 = arith.truncf %301 : vector<2x256xf32> to vector<2x256xbf16>
    %cst_105 = arith.constant dense<0.000000e+00> : vector<2x1024xf32>
    %305 = tpu.matmul %304, %300, %cst_105 {dimension_numbers = #tpu.dot_dimension_numbers<[1], [0], [0], [1], [0, 0, 1, 1], [], []>} : vector<2x256xbf16>, vector<256x1024xbf16>, vector<2x1024xf32> -> vector<2x1024xf32>
    %306 = arith.addf %303, %305 : vector<2x1024xf32>
    %307 = vector.extract_strided_slice %306 {offsets = [0, 0], sizes = [2, 256], strides = [1, 1]} : vector<2x1024xf32> to vector<2x256xf32>
    %308 = arith.negf %307 : vector<2x256xf32>
    %309 = math.exp %308 : vector<2x256xf32>
    %cst_106 = arith.constant 1.000000e+00 : f32
    %310 = vector.broadcast %cst_106 : f32 to vector<2x256xf32>
    %311 = arith.addf %310, %309 : vector<2x256xf32>
    %312 = arith.divf %310, %311 : vector<2x256xf32>
    %313 = vector.extract_strided_slice %306 {offsets = [0, 256], sizes = [2, 256], strides = [1, 1]} : vector<2x1024xf32> to vector<2x256xf32>
    %314 = arith.negf %313 : vector<2x256xf32>
    %315 = math.exp %314 : vector<2x256xf32>
    %cst_107 = arith.constant 1.000000e+00 : f32
    %316 = vector.broadcast %cst_107 : f32 to vector<2x256xf32>
    %317 = arith.addf %316, %315 : vector<2x256xf32>
    %318 = arith.divf %316, %317 : vector<2x256xf32>
    %319 = vector.extract_strided_slice %306 {offsets = [0, 512], sizes = [2, 256], strides = [1, 1]} : vector<2x1024xf32> to vector<2x256xf32>
    %320 = math.tanh %319 : vector<2x256xf32>
    %321 = vector.extract_strided_slice %306 {offsets = [0, 768], sizes = [2, 256], strides = [1, 1]} : vector<2x1024xf32> to vector<2x256xf32>
    %322 = arith.negf %321 : vector<2x256xf32>
    %323 = math.exp %322 : vector<2x256xf32>
    %cst_108 = arith.constant 1.000000e+00 : f32
    %324 = vector.broadcast %cst_108 : f32 to vector<2x256xf32>
    %325 = arith.addf %324, %323 : vector<2x256xf32>
    %326 = arith.divf %324, %325 : vector<2x256xf32>
    %327 = arith.mulf %318, %302 : vector<2x256xf32>
    %328 = arith.mulf %312, %320 : vector<2x256xf32>
    %329 = arith.addf %327, %328 : vector<2x256xf32>
    %330 = math.tanh %329 : vector<2x256xf32>
    %331 = arith.mulf %326, %330 : vector<2x256xf32>
    %332 = vector.extract_strided_slice %299 {offsets = [2, 0], sizes = [2, 1024], strides = [1, 1]} : vector<4x1024xf32> to vector<2x1024xf32>
    %333 = arith.truncf %331 : vector<2x256xf32> to vector<2x256xbf16>
    %cst_109 = arith.constant dense<0.000000e+00> : vector<2x1024xf32>
    %334 = tpu.matmul %333, %300, %cst_109 {dimension_numbers = #tpu.dot_dimension_numbers<[1], [0], [0], [1], [0, 0, 1, 1], [], []>} : vector<2x256xbf16>, vector<256x1024xbf16>, vector<2x1024xf32> -> vector<2x1024xf32>
    %335 = arith.addf %332, %334 : vector<2x1024xf32>
    %336 = vector.extract_strided_slice %335 {offsets = [0, 0], sizes = [2, 256], strides = [1, 1]} : vector<2x1024xf32> to vector<2x256xf32>
    %337 = arith.negf %336 : vector<2x256xf32>
    %338 = math.exp %337 : vector<2x256xf32>
    %cst_110 = arith.constant 1.000000e+00 : f32
    %339 = vector.broadcast %cst_110 : f32 to vector<2x256xf32>
    %340 = arith.addf %339, %338 : vector<2x256xf32>
    %341 = arith.divf %339, %340 : vector<2x256xf32>
    %342 = vector.extract_strided_slice %335 {offsets = [0, 256], sizes = [2, 256], strides = [1, 1]} : vector<2x1024xf32> to vector<2x256xf32>
    %343 = arith.negf %342 : vector<2x256xf32>
    %344 = math.exp %343 : vector<2x256xf32>
    %cst_111 = arith.constant 1.000000e+00 : f32
    %345 = vector.broadcast %cst_111 : f32 to vector<2x256xf32>
    %346 = arith.addf %345, %344 : vector<2x256xf32>
    %347 = arith.divf %345, %346 : vector<2x256xf32>
    %348 = vector.extract_strided_slice %335 {offsets = [0, 512], sizes = [2, 256], strides = [1, 1]} : vector<2x1024xf32> to vector<2x256xf32>
    %349 = math.tanh %348 : vector<2x256xf32>
    %350 = vector.extract_strided_slice %335 {offsets = [0, 768], sizes = [2, 256], strides = [1, 1]} : vector<2x1024xf32> to vector<2x256xf32>
    %351 = arith.negf %350 : vector<2x256xf32>
    %352 = math.exp %351 : vector<2x256xf32>
    %cst_112 = arith.constant 1.000000e+00 : f32
    %353 = vector.broadcast %cst_112 : f32 to vector<2x256xf32>
    %354 = arith.addf %353, %352 : vector<2x256xf32>
    %355 = arith.divf %353, %354 : vector<2x256xf32>
    %356 = arith.mulf %347, %329 : vector<2x256xf32>
    %357 = arith.mulf %341, %349 : vector<2x256xf32>
    %358 = arith.addf %356, %357 : vector<2x256xf32>
    %359 = math.tanh %358 : vector<2x256xf32>
    %360 = arith.mulf %355, %359 : vector<2x256xf32>
    %361 = vector.extract_strided_slice %65 {offsets = [0, 0], sizes = [2, 128], strides = [1, 1]} : vector<8x128xf32> to vector<2x128xf32>
    %362 = tpu.concatenate %290, %360, %361 in 1 : vector<2x256xf32>, vector<2x256xf32>, vector<2x128xf32> -> vector<2x640xf32>
    %363 = arith.truncf %362 : vector<2x640xf32> to vector<2x640xbf16>
    %c0_113 = arith.constant 0 : index
    %c0_114 = arith.constant 0 : index
    %364 = vector.load %arg10[%c0_113, %c0_114] : memref<640x256xbf16, #tpu.memory_space<vmem>>, vector<640x256xbf16>
    %cst_115 = arith.constant dense<0.000000e+00> : vector<2x256xf32>
    %365 = tpu.matmul %363, %364, %cst_115 {dimension_numbers = #tpu.dot_dimension_numbers<[1], [0], [0], [1], [0, 0, 1, 1], [], []>} : vector<2x640xbf16>, vector<640x256xbf16>, vector<2x256xf32> -> vector<2x256xf32>
    %c0_116 = arith.constant 0 : index
    %c0_117 = arith.constant 0 : index
    %366 = vector.load %arg11[%c0_116, %c0_117] : memref<1x256xf32, #tpu.memory_space<vmem>>, vector<1x256xf32>
    %367 = vector.broadcast %366 : vector<1x256xf32> to vector<2x256xf32>
    %368 = arith.addf %365, %367 : vector<2x256xf32>
    %cst_118 = arith.constant 0.000000e+00 : f32
    %369 = vector.broadcast %cst_118 : f32 to vector<2x256xf32>
    %370 = arith.cmpf ogt, %368, %369 : vector<2x256xf32>
    %cst_119 = arith.constant 0.000000e+00 : f32
    %371 = vector.broadcast %cst_119 : f32 to vector<2x256xf32>
    %372 = arith.minimumf %368, %371 : vector<2x256xf32>
    %373 = math.exp %372 : vector<2x256xf32>
    %cst_120 = arith.constant 1.000000e+00 : f32
    %374 = vector.broadcast %cst_120 : f32 to vector<2x256xf32>
    %375 = arith.subf %373, %374 : vector<2x256xf32>
    %376 = arith.select %370, %368, %375 : vector<2x256xi1>, vector<2x256xf32>
    %377 = arith.truncf %376 : vector<2x256xf32> to vector<2x256xbf16>
    %c0_121 = arith.constant 0 : index
    %c0_122 = arith.constant 0 : index
    %378 = vector.load %arg12[%c0_121, %c0_122] : memref<256x256xbf16, #tpu.memory_space<vmem>>, vector<256x256xbf16>
    %cst_123 = arith.constant dense<0.000000e+00> : vector<2x256xf32>
    %379 = tpu.matmul %377, %378, %cst_123 {dimension_numbers = #tpu.dot_dimension_numbers<[1], [0], [0], [1], [0, 0, 1, 1], [], []>} : vector<2x256xbf16>, vector<256x256xbf16>, vector<2x256xf32> -> vector<2x256xf32>
    %c0_124 = arith.constant 0 : index
    %c0_125 = arith.constant 0 : index
    %380 = vector.load %arg13[%c0_124, %c0_125] : memref<1x256xf32, #tpu.memory_space<vmem>>, vector<1x256xf32>
    %381 = vector.broadcast %380 : vector<1x256xf32> to vector<2x256xf32>
    %382 = arith.addf %379, %381 : vector<2x256xf32>
    %cst_126 = arith.constant 0.000000e+00 : f32
    %383 = vector.broadcast %cst_126 : f32 to vector<2x256xf32>
    %384 = arith.cmpf ogt, %382, %383 : vector<2x256xf32>
    %cst_127 = arith.constant 0.000000e+00 : f32
    %385 = vector.broadcast %cst_127 : f32 to vector<2x256xf32>
    %386 = arith.minimumf %382, %385 : vector<2x256xf32>
    %387 = math.exp %386 : vector<2x256xf32>
    %cst_128 = arith.constant 1.000000e+00 : f32
    %388 = vector.broadcast %cst_128 : f32 to vector<2x256xf32>
    %389 = arith.subf %387, %388 : vector<2x256xf32>
    %390 = arith.select %384, %382, %389 : vector<2x256xi1>, vector<2x256xf32>
    %391 = arith.truncf %390 : vector<2x256xf32> to vector<2x256xbf16>
    %c0_129 = arith.constant 0 : index
    %c0_130 = arith.constant 0 : index
    %392 = vector.load %arg14[%c0_129, %c0_130] : memref<256x256xbf16, #tpu.memory_space<vmem>>, vector<256x256xbf16>
    %cst_131 = arith.constant dense<0.000000e+00> : vector<2x256xf32>
    %393 = tpu.matmul %391, %392, %cst_131 {dimension_numbers = #tpu.dot_dimension_numbers<[1], [0], [0], [1], [0, 0, 1, 1], [], []>} : vector<2x256xbf16>, vector<256x256xbf16>, vector<2x256xf32> -> vector<2x256xf32>
    %c0_132 = arith.constant 0 : index
    %c0_133 = arith.constant 0 : index
    %394 = vector.load %arg15[%c0_132, %c0_133] : memref<1x256xf32, #tpu.memory_space<vmem>>, vector<1x256xf32>
    %395 = vector.broadcast %394 : vector<1x256xf32> to vector<2x256xf32>
    %396 = arith.addf %393, %395 : vector<2x256xf32>
    %cst_134 = arith.constant 0.000000e+00 : f32
    %397 = vector.broadcast %cst_134 : f32 to vector<2x256xf32>
    %398 = arith.cmpf ogt, %396, %397 : vector<2x256xf32>
    %cst_135 = arith.constant 0.000000e+00 : f32
    %399 = vector.broadcast %cst_135 : f32 to vector<2x256xf32>
    %400 = arith.minimumf %396, %399 : vector<2x256xf32>
    %401 = math.exp %400 : vector<2x256xf32>
    %cst_136 = arith.constant 1.000000e+00 : f32
    %402 = vector.broadcast %cst_136 : f32 to vector<2x256xf32>
    %403 = arith.subf %401, %402 : vector<2x256xf32>
    %404 = arith.select %398, %396, %403 : vector<2x256xi1>, vector<2x256xf32>
    %405 = arith.truncf %404 : vector<2x256xf32> to vector<2x256xbf16>
    %c0_137 = arith.constant 0 : index
    %c0_138 = arith.constant 0 : index
    %406 = vector.load %arg16[%c0_137, %c0_138] : memref<256x256xbf16, #tpu.memory_space<vmem>>, vector<256x256xbf16>
    %cst_139 = arith.constant dense<0.000000e+00> : vector<2x256xf32>
    %407 = tpu.matmul %405, %406, %cst_139 {dimension_numbers = #tpu.dot_dimension_numbers<[1], [0], [0], [1], [0, 0, 1, 1], [], []>} : vector<2x256xbf16>, vector<256x256xbf16>, vector<2x256xf32> -> vector<2x256xf32>
    %c0_140 = arith.constant 0 : index
    %c0_141 = arith.constant 0 : index
    %408 = vector.load %arg17[%c0_140, %c0_141] : memref<1x256xf32, #tpu.memory_space<vmem>>, vector<1x256xf32>
    %409 = vector.broadcast %408 : vector<1x256xf32> to vector<2x256xf32>
    %410 = arith.addf %407, %409 : vector<2x256xf32>
    %cst_142 = arith.constant 0.000000e+00 : f32
    %411 = vector.broadcast %cst_142 : f32 to vector<2x256xf32>
    %412 = arith.cmpf ogt, %410, %411 : vector<2x256xf32>
    %cst_143 = arith.constant 0.000000e+00 : f32
    %413 = vector.broadcast %cst_143 : f32 to vector<2x256xf32>
    %414 = arith.minimumf %410, %413 : vector<2x256xf32>
    %415 = math.exp %414 : vector<2x256xf32>
    %cst_144 = arith.constant 1.000000e+00 : f32
    %416 = vector.broadcast %cst_144 : f32 to vector<2x256xf32>
    %417 = arith.subf %415, %416 : vector<2x256xf32>
    %418 = arith.select %412, %410, %417 : vector<2x256xi1>, vector<2x256xf32>
    %419 = arith.truncf %418 : vector<2x256xf32> to vector<2x256xbf16>
    %c0_145 = arith.constant 0 : index
    %c0_146 = arith.constant 0 : index
    %420 = vector.load %arg18[%c0_145, %c0_146] : memref<256x128xbf16, #tpu.memory_space<vmem>>, vector<256x128xbf16>
    %cst_147 = arith.constant dense<0.000000e+00> : vector<2x128xf32>
    %421 = tpu.matmul %419, %420, %cst_147 {dimension_numbers = #tpu.dot_dimension_numbers<[1], [0], [0], [1], [0, 0, 1, 1], [], []>} : vector<2x256xbf16>, vector<256x128xbf16>, vector<2x128xf32> -> vector<2x128xf32>
    %c0_148 = arith.constant 0 : index
    %c0_149 = arith.constant 0 : index
    %422 = vector.load %arg19[%c0_148, %c0_149] : memref<1x128xf32, #tpu.memory_space<vmem>>, vector<1x128xf32>
    %423 = vector.broadcast %422 : vector<1x128xf32> to vector<2x128xf32>
    %424 = arith.addf %421, %423 : vector<2x128xf32>
    %c0_150 = arith.constant 0 : index
    %c0_151 = arith.constant 0 : index
    %425 = vector.load %arg28[%c0_150, %c0_151] : memref<2x128xf32, #tpu.memory_space<vmem>>, vector<2x128xf32>
    tpu.vector_store %arg28[%c0_150, %c0_151], %424 {strides = array<i32>} : memref<2x128xf32, #tpu.memory_space<vmem>>, vector<2x128xf32>,
    return
  }
}

</mosaic_0001>

<llo_original>
// kernel: forward.1
$region0: #{forward.1}
  #allocation0 [shape = 'u32[]', space=smem, size = 0x4, offset = 0x4, fixed_abs, tag = 'smem constant byte address 0x4 - core index']
  #allocation1 [shape = 'u32[72,128]{1,0:T(1,128)}', space=vmem, size = 0x9000, scoped, tag = 'internal scratch']
  #allocation2 [shape = 'bf16[256,1024]{1,0:T(8,128)(2,1)}', space=vmem, size = 0x80000, scoped, tag = 'scratch operand']
  #allocation3 [shape = 'bf16[256,1024]{1,0:T(8,128)(2,1)}', space=vmem, size = 0x80000, scoped, tag = 'scratch operand']
  #allocation4 [shape = 'bf16[256,1024]{1,0:T(8,128)(2,1)}', space=vmem, size = 0x80000, scoped, tag = 'scratch operand']
  #allocation5 [shape = 'bf16[256,1024]{1,0:T(8,128)(2,1)}', space=vmem, size = 0x80000, scoped, tag = 'scratch operand']
  #allocation6 [shape = 's32[4]{0}', space=sflag, size = 0x10, scoped, tag = 'scratch operand']
  #allocation21 [shape = 's32[]', space=sflag, size = 0x4, offset = 0, fixed_abs, tag = 'sflag constant byte address 0x0 - dummy sync flag']
  #allocation22 [shape = 's32[]', space=sflag, size = 0x4, offset = 0, fixed_abs, tag = 'sflag constant byte address 0x0 - dummy sync flag']
  #allocation23 [shape = 'u32[]', space=smem, size = 0x4, offset = 0x44, fixed_abs, tag = 'smem constant byte address 0x44 - assertion arg 0']
  #allocation24 [shape = 'u32[]', space=smem, size = 0x4, offset = 0x48, fixed_abs, tag = 'smem constant byte address 0x48 - assertion arg 1']
  #allocation25 [shape = 's32[]', space=sflag, size = 0x4, offset = 0, fixed_abs, tag = 'sflag constant byte address 0x0 - dummy sync flag']
  #allocation26 [shape = 's32[]', space=sflag, size = 0x4, offset = 0, fixed_abs, tag = 'sflag constant byte address 0x0 - dummy sync flag']
  #allocation27 [shape = 's32[]', space=sflag, size = 0x4, offset = 0, fixed_abs, tag = 'sflag constant byte address 0x0 - dummy sync flag']
  #allocation28 [shape = 's32[]', space=sflag, size = 0x4, offset = 0, fixed_abs, tag = 'sflag constant byte address 0x0 - dummy sync flag']
  #allocation29 [shape = 's32[]', space=sflag, size = 0x4, offset = 0, fixed_abs, tag = 'sflag constant byte address 0x0 - dummy sync flag']
  #allocation30 [shape = 's32[]', space=sflag, size = 0x4, offset = 0, fixed_abs, tag = 'sflag constant byte address 0x0 - dummy sync flag']
  %s0 = inlined_call_operand.vmem [shape: f32[12,128], index: 0, kind: input, shape index: {}]
  %s1 = inlined_call_operand.vmem [shape: f32[8,128], index: 1, kind: input, shape index: {}]
  %s2 = inlined_call_operand.hbm [shape: bf16[128,640], index: 2, kind: input, shape index: {}]
  %s3 = inlined_call_operand.vmem [shape: f32[1,640], index: 3, kind: input, shape index: {}]
  %s4 = inlined_call_operand.hbm [shape: bf16[640,384], index: 4, kind: input, shape index: {}]
  %s5 = inlined_call_operand.vmem [shape: f32[1,384], index: 5, kind: input, shape index: {}]
  %s6 = inlined_call_operand.hbm [shape: bf16[384,256], index: 6, kind: input, shape index: {}]
  %s7 = inlined_call_operand.vmem [shape: f32[1,256], index: 7, kind: input, shape index: {}]
  %s8 = inlined_call_operand.hbm [shape: bf16[256,256], index: 8, kind: input, shape index: {}]
  %s9 = inlined_call_operand.vmem [shape: f32[1,256], index: 9, kind: input, shape index: {}]
  %s10 = inlined_call_operand.hbm [shape: bf16[640,256], index: 10, kind: input, shape index: {}]
  %s11 = inlined_call_operand.vmem [shape: f32[1,256], index: 11, kind: input, shape index: {}]
  %s12 = inlined_call_operand.hbm [shape: bf16[256,256], index: 12, kind: input, shape index: {}]
  %s13 = inlined_call_operand.vmem [shape: f32[1,256], index: 13, kind: input, shape index: {}]
  %s14 = inlined_call_operand.hbm [shape: bf16[256,256], index: 14, kind: input, shape index: {}]
  %s15 = inlined_call_operand.vmem [shape: f32[1,256], index: 15, kind: input, shape index: {}]
  %s16 = inlined_call_operand.hbm [shape: bf16[256,256], index: 16, kind: input, shape index: {}]
  %s17 = inlined_call_operand.vmem [shape: f32[1,256], index: 17, kind: input, shape index: {}]
  %s18 = inlined_call_operand.hbm [shape: bf16[256,128], index: 18, kind: input, shape index: {}]
  %s19 = inlined_call_operand.vmem [shape: f32[1,128], index: 19, kind: input, shape index: {}]
  %s20 = inlined_call_operand.hbm [shape: bf16[256,1024], index: 20, kind: input, shape index: {}]
  %s21 = inlined_call_operand.hbm [shape: bf16[256,1024], index: 21, kind: input, shape index: {}]
  %s22 = inlined_call_operand.vmem [shape: f32[1,1024], index: 22, kind: input, shape index: {}]
  %s23 = inlined_call_operand.hbm [shape: bf16[256,1024], index: 23, kind: input, shape index: {}]
  %s24 = inlined_call_operand.hbm [shape: bf16[256,1024], index: 24, kind: input, shape index: {}]
  %s25 = inlined_call_operand.vmem [shape: f32[1,1024], index: 25, kind: input, shape index: {}]
  %s26 = inlined_call_operand.vmem [shape: f32[1,256], index: 26, kind: input, shape index: {}]
  %s27 = inlined_call_operand.vmem [shape: f32[1,256], index: 27, kind: input, shape index: {}]
  %s28 = inlined_call_operand.vmem [shape: f32[2,128], index: 28, kind: output, shape index: {}]
  %s29 = sld [smem:[#allocation0]]
  $region158: #{forward.1} parent=0
    _
  %s31 = ssub.s32 1, %s29
  %s32 = scalar_select 0, %s31, %s29
  $region1: #{forward.1} parent=0
    #allocation7 [shape = 'u8[163840]{0}', space=vmem, size = 0x28000, scoped, tag = 'input window, operand 2, single buffered']
    #allocation8 [shape = 's32[1]{0}', space=sflag, size = 0x4, scoped, tag = 'scoped memory for forward.1']
    #allocation9 [shape = 'u8[491520]{0}', space=vmem, size = 0x78000, scoped, tag = 'input window, operand 4, single buffered']
    #allocation10 [shape = 's32[1]{0}', space=sflag, size = 0x4, scoped, tag = 'scoped memory for forward.1']
    #allocation11 [shape = 'u8[196608]{0}', space=vmem, size = 0x30000, scoped, tag = 'input window, operand 6, single buffered']
    #allocation12 [shape = 'u8[131072]{0}', space=vmem, size = 0x20000, scoped, tag = 'input window, operand 8, single buffered']
    #allocation13 [shape = 's32[1]{0}', space=sflag, size = 0x4, scoped, tag = 'scoped memory for forward.1']
    #allocation14 [shape = 'u8[327680]{0}', space=vmem, size = 0x50000, scoped, tag = 'input window, operand 10, single buffered']
    #allocation15 [shape = 'u8[131072]{0}', space=vmem, size = 0x20000, scoped, tag = 'input window, operand 12, single buffered']
    #allocation16 [shape = 's32[1]{0}', space=sflag, size = 0x4, scoped, tag = 'scoped memory for forward.1']
    #allocation17 [shape = 'u8[131072]{0}', space=vmem, size = 0x20000, scoped, tag = 'input window, operand 14, single buffered']
    #allocation18 [shape = 'u8[131072]{0}', space=vmem, size = 0x20000, scoped, tag = 'input window, operand 16, single buffered']
    #allocation19 [shape = 's32[1]{0}', space=sflag, size = 0x4, scoped, tag = 'scoped memory for forward.1']
    #allocation20 [shape = 'u8[65536]{0}', space=vmem, size = 0x10000, scoped, tag = 'input window, operand 18, single buffered']
    %33 = vsyncpa [#allocation8], 0
    %34 = vsyncpa [#allocation10], 0
    %35 = vsyncpa [#allocation13], 0
    %36 = vsyncpa [#allocation16], 0
    %37 = vsyncpa [#allocation19], 0
    // Predicated region
    $region2: #{forward.1} parent=1 // pred_check
      _
    $region3: #{forward.1} parent=1 // pred_check_branch
      %39 = sbr.rel (0) target = $region5
    $region4: #{forward.1} parent=1 // pred_region
      _
    $region5: #{forward.1} parent=1 // pred_fallthru
      _
    // Predicated region
    $region6: #{forward.1} parent=1 // pred_check
      _
    $region7: #{forward.1} parent=1 // pred_check_branch
      %41 = sbr.rel (0) target = $region9
    $region8: #{forward.1} parent=1 // pred_region
      _
    $region9: #{forward.1} parent=1 // pred_fallthru
      _
    // Predicated region
    $region10: #{forward.1} parent=1 // pred_check
      _
    $region11: #{forward.1} parent=1 // pred_check_branch
      %43 = sbr.rel (0) target = $region13
    $region12: #{forward.1} parent=1 // pred_region
      %45 = vsyncadd [#allocation8], 0
      %s46 = sshll.u32 %s2, 4
      %s47 = int_to_ptr.hbm [resolvable:$true] %s46
      %s48 = sshll.u32 [#allocation7], 4
      %s49 = int_to_ptr.vmem [resolvable:$true] %s48
      %54 = dma.hbm_to_vmem [thread:$0]  %s47, 5120, %s49, [#allocation8], 320, 320, 20
    $region13: #{forward.1} parent=1 // pred_fallthru
      _
    // Predicated region
    $region14: #{forward.1} parent=1 // pred_check
      _
    $region15: #{forward.1} parent=1 // pred_check_branch
      %56 = sbr.rel (0) target = $region17
    $region16: #{forward.1} parent=1 // pred_region
      _
    $region17: #{forward.1} parent=1 // pred_fallthru
      _
    // Predicated region
    $region18: #{forward.1} parent=1 // pred_check
      _
    $region19: #{forward.1} parent=1 // pred_check_branch
      %58 = sbr.rel (0) target = $region21
    $region20: #{forward.1} parent=1 // pred_region
      %60 = vsyncadd [#allocation10], 0
      %s61 = sshll.u32 %s4, 4
      %s62 = int_to_ptr.hbm [resolvable:$true] %s61
      %s63 = sshll.u32 [#allocation9], 4
      %s64 = int_to_ptr.vmem [resolvable:$true] %s63
      %69 = dma.hbm_to_vmem [thread:$0]  %s62, 15360, %s64, [#allocation10], 192, 192, 12
    $region21: #{forward.1} parent=1 // pred_fallthru
      _
    // Predicated region
    $region22: #{forward.1} parent=1 // pred_check
      _
    $region23: #{forward.1} parent=1 // pred_check_branch
      %71 = sbr.rel (0) target = $region25
    $region24: #{forward.1} parent=1 // pred_region
      _
    $region25: #{forward.1} parent=1 // pred_fallthru
      _
    // Predicated region
    $region26: #{forward.1} parent=1 // pred_check
      _
    $region27: #{forward.1} parent=1 // pred_check_branch
      %73 = sbr.rel (0) target = $region29
    $region28: #{forward.1} parent=1 // pred_region
      %75 = vsyncadd [#allocation10], 0
      %s76 = sshll.u32 %s6, 4
      %s77 = int_to_ptr.hbm [resolvable:$true] %s76
      %s78 = sshll.u32 [#allocation11], 4
      %s79 = int_to_ptr.vmem [resolvable:$true] %s78
      %84 = dma.hbm_to_vmem [thread:$0]  %s77, 6144, %s79, [#allocation10], 128, 128, 8
    $region29: #{forward.1} parent=1 // pred_fallthru
      _
    // Predicated region
    $region30: #{forward.1} parent=1 // pred_check
      _
    $region31: #{forward.1} parent=1 // pred_check_branch
      %86 = sbr.rel (0) target = $region33
    $region32: #{forward.1} parent=1 // pred_region
      _
    $region33: #{forward.1} parent=1 // pred_fallthru
      _
    // Predicated region
    $region34: #{forward.1} parent=1 // pred_check
      _
    $region35: #{forward.1} parent=1 // pred_check_branch
      %88 = sbr.rel (0) target = $region37
    $region36: #{forward.1} parent=1 // pred_region
      %90 = vsyncadd [#allocation13], 0
      %s91 = sshll.u32 %s8, 4
      %s92 = int_to_ptr.hbm [resolvable:$true] %s91
      %s93 = sshll.u32 [#allocation12], 4
      %s94 = int_to_ptr.vmem [resolvable:$true] %s93
      %99 = dma.hbm_to_vmem [thread:$0]  %s92, 4096, %s94, [#allocation13], 128, 128, 8
    $region37: #{forward.1} parent=1 // pred_fallthru
      _
    // Predicated region
    $region38: #{forward.1} parent=1 // pred_check
      _
    $region39: #{forward.1} parent=1 // pred_check_branch
      %101 = sbr.rel (0) target = $region41
    $region40: #{forward.1} parent=1 // pred_region
      _
    $region41: #{forward.1} parent=1 // pred_fallthru
      _
    // Predicated region
    $region42: #{forward.1} parent=1 // pred_check
      _
    $region43: #{forward.1} parent=1 // pred_check_branch
      %103 = sbr.rel (0) target = $region45
    $region44: #{forward.1} parent=1 // pred_region
      %105 = vsyncadd [#allocation13], 0
      %s106 = sshll.u32 %s10, 4
      %s107 = int_to_ptr.hbm [resolvable:$true] %s106
      %s108 = sshll.u32 [#allocation14], 4
      %s109 = int_to_ptr.vmem [resolvable:$true] %s108
      %114 = dma.hbm_to_vmem [thread:$0]  %s107, 10240, %s109, [#allocation13], 128, 128, 8
    $region45: #{forward.1} parent=1 // pred_fallthru
      _
    // Predicated region
    $region46: #{forward.1} parent=1 // pred_check
      _
    $region47: #{forward.1} parent=1 // pred_check_branch
      %116 = sbr.rel (0) target = $region49
    $region48: #{forward.1} parent=1 // pred_region
      _
    $region49: #{forward.1} parent=1 // pred_fallthru
      _
    // Predicated region
    $region50: #{forward.1} parent=1 // pred_check
      _
    $region51: #{forward.1} parent=1 // pred_check_branch
      %118 = sbr.rel (0) target = $region53
    $region52: #{forward.1} parent=1 // pred_region
      %120 = vsyncadd [#allocation16], 0
      %s121 = sshll.u32 %s12, 4
      %s122 = int_to_ptr.hbm [resolvable:$true] %s121
      %s123 = sshll.u32 [#allocation15], 4
      %s124 = int_to_ptr.vmem [resolvable:$true] %s123
      %129 = dma.hbm_to_vmem [thread:$0]  %s122, 4096, %s124, [#allocation16], 128, 128, 8
    $region53: #{forward.1} parent=1 // pred_fallthru
      _
    // Predicated region
    $region54: #{forward.1} parent=1 // pred_check
      _
    $region55: #{forward.1} parent=1 // pred_check_branch
      %131 = sbr.rel (0) target = $region57
    $region56: #{forward.1} parent=1 // pred_region
      _
    $region57: #{forward.1} parent=1 // pred_fallthru
      _
    // Predicated region
    $region58: #{forward.1} parent=1 // pred_check
      _
    $region59: #{forward.1} parent=1 // pred_check_branch
      %133 = sbr.rel (0) target = $region61
    $region60: #{forward.1} parent=1 // pred_region
      %135 = vsyncadd [#allocation16], 0
      %s136 = sshll.u32 %s14, 4
      %s137 = int_to_ptr.hbm [resolvable:$true] %s136
      %s138 = sshll.u32 [#allocation17], 4
      %s139 = int_to_ptr.vmem [resolvable:$true] %s138
      %144 = dma.hbm_to_vmem [thread:$0]  %s137, 4096, %s139, [#allocation16], 128, 128, 8
    $region61: #{forward.1} parent=1 // pred_fallthru
      _
    // Predicated region
    $region62: #{forward.1} parent=1 // pred_check
      _
    $region63: #{forward.1} parent=1 // pred_check_branch
      %146 = sbr.rel (0) target = $region65
    $region64: #{forward.1} parent=1 // pred_region
      _
    $region65: #{forward.1} parent=1 // pred_fallthru
      _
    // Predicated region
    $region66: #{forward.1} parent=1 // pred_check
      _
    $region67: #{forward.1} parent=1 // pred_check_branch
      %148 = sbr.rel (0) target = $region69
    $region68: #{forward.1} parent=1 // pred_region
      %150 = vsyncadd [#allocation19], 0
      %s151 = sshll.u32 %s16, 4
      %s152 = int_to_ptr.hbm [resolvable:$true] %s151
      %s153 = sshll.u32 [#allocation18], 4
      %s154 = int_to_ptr.vmem [resolvable:$true] %s153
      %159 = dma.hbm_to_vmem [thread:$0]  %s152, 4096, %s154, [#allocation19], 128, 128, 8
    $region69: #{forward.1} parent=1 // pred_fallthru
      _
    // Predicated region
    $region70: #{forward.1} parent=1 // pred_check
      _
    $region71: #{forward.1} parent=1 // pred_check_branch
      %161 = sbr.rel (0) target = $region73
    $region72: #{forward.1} parent=1 // pred_region
      _
    $region73: #{forward.1} parent=1 // pred_fallthru
      _
    // Predicated region
    $region74: #{forward.1} parent=1 // pred_check
      _
    $region75: #{forward.1} parent=1 // pred_check_branch
      %163 = sbr.rel (0) target = $region77
    $region76: #{forward.1} parent=1 // pred_region
      %165 = vsyncadd [#allocation19], 0
      %s166 = sshll.u32 %s18, 4
      %s167 = int_to_ptr.hbm [resolvable:$true] %s166
      %s168 = sshll.u32 [#allocation20], 4
      %s169 = int_to_ptr.vmem [resolvable:$true] %s168
      %174 = dma.hbm_to_vmem [thread:$0]  %s167, 2048, %s169, [#allocation19], 64, 64, 4
    $region77: #{forward.1} parent=1 // pred_fallthru
      _
    // Predicated region
    $region78: #{forward.1} parent=1 // pred_check
      _
    $region79: #{forward.1} parent=1 // pred_check_branch
      %176 = sbr.rel (0) target = $region81
    $region80: #{forward.1} parent=1 // pred_region
      _
    $region81: #{forward.1} parent=1 // pred_fallthru
      _
    // Predicated region
    $region82: #{forward.1} parent=1 // pred_check
      _
    $region83: #{forward.1} parent=1 // pred_check_branch
      %178 = sbr.rel (0) target = $region85
    $region84: #{forward.1} parent=1 // pred_region
      _
    $region85: #{forward.1} parent=1 // pred_fallthru
      _
    // Predicated region
    $region86: #{forward.1} parent=1 // pred_check
      _
    $region87: #{forward.1} parent=1 // pred_check_branch
      %180 = sbr.rel (0) target = $region89
    $region88: #{forward.1} parent=1 // pred_region
      _
    $region89: #{forward.1} parent=1 // pred_fallthru
      _
    // Predicated region
    $region90: #{forward.1} parent=1 // pred_check
      _
    $region91: #{forward.1} parent=1 // pred_check_branch
      %182 = sbr.rel (0) target = $region93
    $region92: #{forward.1} parent=1 // pred_region
      _
    $region93: #{forward.1} parent=1 // pred_fallthru
      _
    // Predicated region
    $region94: #{forward.1} parent=1 // pred_check
      _
    $region95: #{forward.1} parent=1 // pred_check_branch
      %184 = sbr.rel (0) target = $region97
    $region96: #{forward.1} parent=1 // pred_region
      _
    $region97: #{forward.1} parent=1 // pred_fallthru
      _
    // Predicated region
    $region98: #{forward.1} parent=1 // pred_check
      _
    $region99: #{forward.1} parent=1 // pred_check_branch
      %186 = sbr.rel (0) target = $region101
    $region100: #{forward.1} parent=1 // pred_region
      %188 = dma.done [#allocation8], 5120
    $region101: #{forward.1} parent=1 // pred_fallthru
      _
    // Predicated region
    $region102: #{forward.1} parent=1 // pred_check
      _
    $region103: #{forward.1} parent=1 // pred_check_branch
      %190 = sbr.rel (0) target = $region105
    $region104: #{forward.1} parent=1 // pred_region
      %192 = dma.done [#allocation10], 15360
    $region105: #{forward.1} parent=1 // pred_fallthru
      _
    // Predicated region
    $region106: #{forward.1} parent=1 // pred_check
      _
    $region107: #{forward.1} parent=1 // pred_check_branch
      %194 = sbr.rel (0) target = $region109
    $region108: #{forward.1} parent=1 // pred_region
      %196 = dma.done [#allocation10], 6144
    $region109: #{forward.1} parent=1 // pred_fallthru
      _
    // Predicated region
    $region110: #{forward.1} parent=1 // pred_check
      _
    $region111: #{forward.1} parent=1 // pred_check_branch
      %198 = sbr.rel (0) target = $region113
    $region112: #{forward.1} parent=1 // pred_region
      %200 = dma.done [#allocation13], 4096
    $region113: #{forward.1} parent=1 // pred_fallthru
      _
    // Predicated region
    $region114: #{forward.1} parent=1 // pred_check
      _
    $region115: #{forward.1} parent=1 // pred_check_branch
      %202 = sbr.rel (0) target = $region117
    $region116: #{forward.1} parent=1 // pred_region
      %204 = dma.done [#allocation13], 10240
    $region117: #{forward.1} parent=1 // pred_fallthru
      _
    // Predicated region
    $region118: #{forward.1} parent=1 // pred_check
      _
    $region119: #{forward.1} parent=1 // pred_check_branch
      %206 = sbr.rel (0) target = $region121
    $region120: #{forward.1} parent=1 // pred_region
      %208 = dma.done [#allocation16], 4096
    $region121: #{forward.1} parent=1 // pred_fallthru
      _
    // Predicated region
    $region122: #{forward.1} parent=1 // pred_check
      _
    $region123: #{forward.1} parent=1 // pred_check_branch
      %210 = sbr.rel (0) target = $region125
    $region124: #{forward.1} parent=1 // pred_region
      %212 = dma.done [#allocation16], 4096
    $region125: #{forward.1} parent=1 // pred_fallthru
      _
    // Predicated region
    $region126: #{forward.1} parent=1 // pred_check
      _
    $region127: #{forward.1} parent=1 // pred_check_branch
      %214 = sbr.rel (0) target = $region129
    $region128: #{forward.1} parent=1 // pred_region
      %216 = dma.done [#allocation19], 4096
    $region129: #{forward.1} parent=1 // pred_fallthru
      _
    // Predicated region
    $region130: #{forward.1} parent=1 // pred_check
      _
    $region131: #{forward.1} parent=1 // pred_check_branch
      %218 = sbr.rel (0) target = $region133
    $region132: #{forward.1} parent=1 // pred_region
      %220 = dma.done [#allocation19], 2048
    $region133: #{forward.1} parent=1 // pred_fallthru
      _
    // Predicated region
    $region134: #{forward.1} parent=1 // pred_check
      _
    $region135: #{forward.1} parent=1 // pred_check_branch
      %223 = sbr.rel target = $region137
    $region136: #{forward.1} parent=1 // pred_region
      %224 = sst [smem:[#allocation23]] [#allocation22]
      %225 = sst [smem:[#allocation24]] [#allocation21]
    $region137: #{forward.1} parent=1 // pred_fallthru
      _
    %227 = shalt.err (0)
    %s229 = sshll.u32 %s20, 4
    %s230 = int_to_ptr.hbm [resolvable:$true] %s229
    %s231 = sshll.u32 [#allocation2], 4
    %s232 = int_to_ptr.vmem [resolvable:$true] %s231
    %234 = dma.hbm_to_vmem [thread:$0]  %s230, 16384, %s232, [#allocation6]
    %s235 = scalar_lea.sflag [#allocation6], 1
    // Predicated region
    $region138: #{forward.1} parent=1 // pred_check
      _
    $region139: #{forward.1} parent=1 // pred_check_branch
      %237 = sbr.rel target = $region141
    $region140: #{forward.1} parent=1 // pred_region
      %238 = sst [smem:[#allocation23]] [#allocation26]
      %239 = sst [smem:[#allocation24]] [#allocation25]
    $region141: #{forward.1} parent=1 // pred_fallthru
      _
    %241 = shalt.err (0)
    %s243 = sshll.u32 %s21, 4
    %s244 = int_to_ptr.hbm [resolvable:$true] %s243
    %s245 = sshll.u32 [#allocation3], 4
    %s246 = int_to_ptr.vmem [resolvable:$true] %s245
    %248 = dma.hbm_to_vmem [thread:$0]  %s244, 16384, %s246, %s235
    %s249 = scalar_lea.sflag [#allocation6], 2
    // Predicated region
    $region142: #{forward.1} parent=1 // pred_check
      _
    $region143: #{forward.1} parent=1 // pred_check_branch
      %251 = sbr.rel target = $region145
    $region144: #{forward.1} parent=1 // pred_region
      %252 = sst [smem:[#allocation23]] [#allocation28]
      %253 = sst [smem:[#allocation24]] [#allocation27]
    $region145: #{forward.1} parent=1 // pred_fallthru
      _
    %255 = shalt.err (0)
    %s257 = sshll.u32 %s23, 4
    %s258 = int_to_ptr.hbm [resolvable:$true] %s257
    %s259 = sshll.u32 [#allocation4], 4
    %s260 = int_to_ptr.vmem [resolvable:$true] %s259
    %262 = dma.hbm_to_vmem [thread:$0]  %s258, 16384, %s260, %s249
    %s263 = scalar_lea.sflag [#allocation6], 3
    // Predicated region
    $region146: #{forward.1} parent=1 // pred_check
      _
    $region147: #{forward.1} parent=1 // pred_check_branch
      %265 = sbr.rel target = $region149
    $region148: #{forward.1} parent=1 // pred_region
      %266 = sst [smem:[#allocation23]] [#allocation30]
      %267 = sst [smem:[#allocation24]] [#allocation29]
    $region149: #{forward.1} parent=1 // pred_fallthru
      _
    %269 = shalt.err (0)
    %s271 = sshll.u32 %s24, 4
    %s272 = int_to_ptr.hbm [resolvable:$true] %s271
    %s273 = sshll.u32 [#allocation5], 4
    %s274 = int_to_ptr.vmem [resolvable:$true] %s273
    %276 = dma.hbm_to_vmem [thread:$0]  %s272, 16384, %s274, %s263
    %v277 = vld [vmem:[%s0] sm:$0xff]
    %v278 = vld [vmem:[%s0 + $0x8] sm:$0xf]
    %v279 = vpack.c.bf16 %v278, %v277
    %v280 = vld [vmem:[#allocation7] sm:$0xff]
    %v281 = vld [vmem:[#allocation7 + $0x8] sm:$0xff]
    %v282 = vld [vmem:[#allocation7 + $0x10] sm:$0xf]
    %v283 = vld [vmem:[#allocation7 + $0x14] sm:$0xff]
    %v284 = vld [vmem:[#allocation7 + $0x1c] sm:$0xff]
    %v285 = vld [vmem:[#allocation7 + $0x24] sm:$0xf]
    %v286 = vld [vmem:[#allocation7 + $0x28] sm:$0xff]
    %v287 = vld [vmem:[#allocation7 + $0x30] sm:$0xff]
    %v288 = vld [vmem:[#allocation7 + $0x38] sm:$0xf]
    %v289 = vld [vmem:[#allocation7 + $0x3c] sm:$0xff]
    %v290 = vld [vmem:[#allocation7 + $0x44] sm:$0xff]
    %v291 = vld [vmem:[#allocation7 + $0x4c] sm:$0xf]
    %v292 = vld [vmem:[#allocation7 + $0x50] sm:$0xff]
    %v293 = vld [vmem:[#allocation7 + $0x58] sm:$0xff]
    %v294 = vld [vmem:[#allocation7 + $0x60] sm:$0xf]
    %v295 = vld [vmem:[#allocation7 + $0x64] sm:$0xff]
    %v296 = vld [vmem:[#allocation7 + $0x6c] sm:$0xff]
    %v297 = vld [vmem:[#allocation7 + $0x74] sm:$0xf]
    %v298 = vld [vmem:[#allocation7 + $0x78] sm:$0xff]
    %v299 = vld [vmem:[#allocation7 + $0x80] sm:$0xff]
    %v300 = vld [vmem:[#allocation7 + $0x88] sm:$0xf]
    %v301 = vld [vmem:[#allocation7 + $0x8c] sm:$0xff]
    %v302 = vld [vmem:[#allocation7 + $0x94] sm:$0xff]
    %v303 = vld [vmem:[#allocation7 + $0x9c] sm:$0xf]
    %v304 = vld [vmem:[#allocation7 + $0xa0] sm:$0xff]
    %v305 = vld [vmem:[#allocation7 + $0xa8] sm:$0xff]
    %v306 = vld [vmem:[#allocation7 + $0xb0] sm:$0xf]
    %v307 = vld [vmem:[#allocation7 + $0xb4] sm:$0xff]
    %v308 = vld [vmem:[#allocation7 + $0xbc] sm:$0xff]
    %v309 = vld [vmem:[#allocation7 + $0xc4] sm:$0xf]
    %v310 = vld [vmem:[#allocation7 + $0xc8] sm:$0xff]
    %v311 = vld [vmem:[#allocation7 + $0xd0] sm:$0xff]
    %v312 = vld [vmem:[#allocation7 + $0xd8] sm:$0xf]
    %v313 = vld [vmem:[#allocation7 + $0xdc] sm:$0xff]
    %v314 = vld [vmem:[#allocation7 + $0xe4] sm:$0xff]
    %v315 = vld [vmem:[#allocation7 + $0xec] sm:$0xf]
    %v316 = vld [vmem:[#allocation7 + $0xf0] sm:$0xff]
    %v317 = vld [vmem:[#allocation7 + $0xf8] sm:$0xff]
    %v318 = vld [vmem:[#allocation7 + $0x100] sm:$0xf]
    %v319 = vld [vmem:[#allocation7 + $0x104] sm:$0xff]
    %v320 = vld [vmem:[#allocation7 + $0x10c] sm:$0xff]
    %v321 = vld [vmem:[#allocation7 + $0x114] sm:$0xf]
    %v322 = vld [vmem:[#allocation7 + $0x118] sm:$0xff]
    %v323 = vld [vmem:[#allocation7 + $0x120] sm:$0xff]
    %v324 = vld [vmem:[#allocation7 + $0x128] sm:$0xf]
    %v325 = vld [vmem:[#allocation7 + $0x12c] sm:$0xff]
    %v326 = vld [vmem:[#allocation7 + $0x134] sm:$0xff]
    %v327 = vld [vmem:[#allocation7 + $0x13c] sm:$0xf]
    %v328 = vld [vmem:[%s3] sm:$0x1f]
    %v330 = vperm.slane %v328, 0
    %v331 = vperm.slane %v328, 1
    %v332 = vperm.slane %v328, 2
    %v333 = vperm.slane %v328, 3
    %v334 = vperm.slane %v328, 4
    %v388 = vunpack.c.l.b16 %v280
    %v389 = vunpack.c.h.b16 %v280
    %v390 = vunpack.c.l.b16 %v281
    %v391 = vunpack.c.h.b16 %v281
    %v392 = vunpack.c.l.b16 %v282
    %v393 = vunpack.c.l.b16 %v283
    %v394 = vunpack.c.h.b16 %v283
    %v395 = vunpack.c.l.b16 %v284
    %v396 = vunpack.c.h.b16 %v284
    %v397 = vunpack.c.l.b16 %v285
    %v398 = vunpack.c.l.b16 %v286
    %v399 = vunpack.c.h.b16 %v286
    %v400 = vunpack.c.l.b16 %v287
    %v401 = vunpack.c.h.b16 %v287
    %v402 = vunpack.c.l.b16 %v288
    %v403 = vunpack.c.l.b16 %v289
    %v404 = vunpack.c.h.b16 %v289
    %v405 = vunpack.c.l.b16 %v290
    %v406 = vunpack.c.h.b16 %v290
    %v407 = vunpack.c.l.b16 %v291
    %v408 = vunpack.c.l.b16 %v292
    %v409 = vunpack.c.h.b16 %v292
    %v410 = vunpack.c.l.b16 %v293
    %v411 = vunpack.c.h.b16 %v293
    %v412 = vunpack.c.l.b16 %v294
    %v413 = vunpack.c.l.b16 %v295
    %v414 = vunpack.c.h.b16 %v295
    %v415 = vunpack.c.l.b16 %v296
    %v416 = vunpack.c.h.b16 %v296
    %v417 = vunpack.c.l.b16 %v297
    %v418 = vunpack.c.l.b16 %v298
    %v419 = vunpack.c.h.b16 %v298
    %v420 = vunpack.c.l.b16 %v299
    %v421 = vunpack.c.h.b16 %v299
    %v422 = vunpack.c.l.b16 %v300
    %v423 = vunpack.c.l.b16 %v301
    %v424 = vunpack.c.h.b16 %v301
    %v425 = vunpack.c.l.b16 %v302
    %v426 = vunpack.c.h.b16 %v302
    %v427 = vunpack.c.l.b16 %v303
    %v428 = vunpack.c.l.b16 %v304
    %v429 = vunpack.c.h.b16 %v304
    %v430 = vunpack.c.l.b16 %v305
    %v431 = vunpack.c.h.b16 %v305
    %v432 = vunpack.c.l.b16 %v306
    %v433 = vunpack.c.l.b16 %v307
    %v434 = vunpack.c.h.b16 %v307
    %v435 = vunpack.c.l.b16 %v308
    %v436 = vunpack.c.h.b16 %v308
    %v437 = vunpack.c.l.b16 %v309
    %v438 = vunpack.c.l.b16 %v310
    %v439 = vunpack.c.h.b16 %v310
    %v440 = vunpack.c.l.b16 %v311
    %v441 = vunpack.c.h.b16 %v311
    %v442 = vunpack.c.l.b16 %v312
    %v443 = vunpack.c.l.b16 %v313
    %v444 = vunpack.c.h.b16 %v313
    %v445 = vunpack.c.l.b16 %v314
    %v446 = vunpack.c.h.b16 %v314
    %v447 = vunpack.c.l.b16 %v315
    %v448 = vunpack.c.l.b16 %v316
    %v449 = vunpack.c.h.b16 %v316
    %v450 = vunpack.c.l.b16 %v317
    %v451 = vunpack.c.h.b16 %v317
    %v452 = vunpack.c.l.b16 %v318
    %v453 = vunpack.c.l.b16 %v319
    %v454 = vunpack.c.h.b16 %v319
    %v455 = vunpack.c.l.b16 %v320
    %v456 = vunpack.c.h.b16 %v320
    %v457 = vunpack.c.l.b16 %v321
    %v458 = vunpack.c.l.b16 %v322
    %v459 = vunpack.c.h.b16 %v322
    %v460 = vunpack.c.l.b16 %v323
    %v461 = vunpack.c.h.b16 %v323
    %v462 = vunpack.c.l.b16 %v324
    %v463 = vunpack.c.l.b16 %v325
    %v464 = vunpack.c.h.b16 %v325
    %v465 = vunpack.c.l.b16 %v326
    %v466 = vunpack.c.h.b16 %v326
    %v467 = vunpack.c.l.b16 %v327
    %v468 = vpack.c.b16 %v393, %v388
    %v469 = vpack.c.b16 %v394, %v389
    %v470 = vpack.c.b16 %v395, %v390
    %v471 = vpack.c.b16 %v396, %v391
    %v472 = vpack.c.b16 %v397, %v392
    %v473 = vpack.c.b16 %v403, %v398
    %v474 = vpack.c.b16 %v404, %v399
    %v475 = vpack.c.b16 %v405, %v400
    %v476 = vpack.c.b16 %v406, %v401
    %v477 = vpack.c.b16 %v407, %v402
    %v478 = vpack.c.b16 %v413, %v408
    %v479 = vpack.c.b16 %v414, %v409
    %v480 = vpack.c.b16 %v415, %v410
    %v481 = vpack.c.b16 %v416, %v411
    %v482 = vpack.c.b16 %v417, %v412
    %v483 = vpack.c.b16 %v423, %v418
    %v484 = vpack.c.b16 %v424, %v419
    %v485 = vpack.c.b16 %v425, %v420
    %v486 = vpack.c.b16 %v426, %v421
    %v487 = vpack.c.b16 %v427, %v422
    %v488 = vpack.c.b16 %v433, %v428
    %v489 = vpack.c.b16 %v434, %v429
    %v490 = vpack.c.b16 %v435, %v430
    %v491 = vpack.c.b16 %v436, %v431
    %v492 = vpack.c.b16 %v437, %v432
    %v493 = vpack.c.b16 %v443, %v438
    %v494 = vpack.c.b16 %v444, %v439
    %v495 = vpack.c.b16 %v445, %v440
    %v496 = vpack.c.b16 %v446, %v441
    %v497 = vpack.c.b16 %v447, %v442
    %v498 = vpack.c.b16 %v453, %v448
    %v499 = vpack.c.b16 %v454, %v449
    %v500 = vpack.c.b16 %v455, %v450
    %v501 = vpack.c.b16 %v456, %v451
    %v502 = vpack.c.b16 %v457, %v452
    %v503 = vpack.c.b16 %v463, %v458
    %v504 = vpack.c.b16 %v464, %v459
    %v505 = vpack.c.b16 %v465, %v460
    %v506 = vpack.c.b16 %v466, %v461
    %v507 = vpack.c.b16 %v467, %v462
    %548 = vmatpush.bf16.msra.mxu0 %v503
    %549 = vmatpush.bf16.msra.mxu0 %v498
    %550 = vmatpush.bf16.msra.mxu0 %v493
    %551 = vmatpush.bf16.msra.mxu0 %v488
    %552 = vmatpush.bf16.msra.mxu0 %v483
    %553 = vmatpush.bf16.msra.mxu0 %v478
    %554 = vmatpush.bf16.msra.mxu0 %v473
    %555 = vmatpush.bf16.msra.mxu0 %v468
    %556 = vmatmul.bf16.gmra.mxu0 %v279
    %v557 = vpop.f32.mrf.mxu0
    %v558 = vadd.f32 %v330, %v557
    %v559 = vpop.f32.mrf.mxu0
    %v560 = vadd.f32 %v330, %v559
    %561 = vdwg.mxu0
    %562 = vmatpush.bf16.msra.mxu0 %v504
    %563 = vmatpush.bf16.msra.mxu0 %v499
    %564 = vmatpush.bf16.msra.mxu0 %v494
    %565 = vmatpush.bf16.msra.mxu0 %v489
    %566 = vmatpush.bf16.msra.mxu0 %v484
    %567 = vmatpush.bf16.msra.mxu0 %v479
    %568 = vmatpush.bf16.msra.mxu0 %v474
    %569 = vmatpush.bf16.msra.mxu0 %v469
    %570 = vmatmul.bf16.gmra.mxu0 %v279
    %v571 = vpop.f32.mrf.mxu0
    %v572 = vadd.f32 %v331, %v571
    %v573 = vpop.f32.mrf.mxu0
    %v574 = vadd.f32 %v331, %v573
    %575 = vdwg.mxu0
    %576 = vmatpush.bf16.msra.mxu0 %v505
    %577 = vmatpush.bf16.msra.mxu0 %v500
    %578 = vmatpush.bf16.msra.mxu0 %v495
    %579 = vmatpush.bf16.msra.mxu0 %v490
    %580 = vmatpush.bf16.msra.mxu0 %v485
    %581 = vmatpush.bf16.msra.mxu0 %v480
    %582 = vmatpush.bf16.msra.mxu0 %v475
    %583 = vmatpush.bf16.msra.mxu0 %v470
    %584 = vmatmul.bf16.gmra.mxu0 %v279
    %v585 = vpop.f32.mrf.mxu0
    %v586 = vadd.f32 %v332, %v585
    %v587 = vpop.f32.mrf.mxu0
    %v588 = vadd.f32 %v332, %v587
    %589 = vdwg.mxu0
    %590 = vmatpush.bf16.msra.mxu0 %v506
    %591 = vmatpush.bf16.msra.mxu0 %v501
    %592 = vmatpush.bf16.msra.mxu0 %v496
    %593 = vmatpush.bf16.msra.mxu0 %v491
    %594 = vmatpush.bf16.msra.mxu0 %v486
    %595 = vmatpush.bf16.msra.mxu0 %v481
    %596 = vmatpush.bf16.msra.mxu0 %v476
    %597 = vmatpush.bf16.msra.mxu0 %v471
    %598 = vmatmul.bf16.gmra.mxu0 %v279
    %v599 = vpop.f32.mrf.mxu0
    %v600 = vadd.f32 %v333, %v599
    %v601 = vpop.f32.mrf.mxu0
    %v602 = vadd.f32 %v333, %v601
    %603 = vdwg.mxu0
    %604 = vmatpush.bf16.msra.mxu0 %v507
    %605 = vmatpush.bf16.msra.mxu0 %v502
    %606 = vmatpush.bf16.msra.mxu0 %v497
    %607 = vmatpush.bf16.msra.mxu0 %v492
    %608 = vmatpush.bf16.msra.mxu0 %v487
    %609 = vmatpush.bf16.msra.mxu0 %v482
    %610 = vmatpush.bf16.msra.mxu0 %v477
    %611 = vmatpush.bf16.msra.mxu0 %v472
    %612 = vmatmul.bf16.gmra.mxu0 %v279
    %v613 = vpop.f32.mrf.mxu0
    %v614 = vadd.f32 %v334, %v613
    %v615 = vpop.f32.mrf.mxu0
    %v616 = vadd.f32 %v334, %v615
    %617 = vdwg.mxu0
    %vm618 = vcmp.gt.f32.partialorder %v558, 0.0
    %vm619 = vcmp.gt.f32.partialorder %v572, 0.0
    %vm620 = vcmp.gt.f32.partialorder %v586, 0.0
    %vm621 = vcmp.gt.f32.partialorder %v600, 0.0
    %vm622 = vcmp.gt.f32.partialorder %v614, 0.0
    %vm623 = vcmp.gt.f32.partialorder %v560, 0.0
    %vm624 = vcmp.gt.f32.partialorder %v574, 0.0
    %vm625 = vcmp.gt.f32.partialorder %v588, 0.0
    %vm626 = vcmp.gt.f32.partialorder %v602, 0.0
    %vm627 = vcmp.gt.f32.partialorder %v616, 0.0
    %v628 = vmin.f32 %v558, 0.0
    %v629 = vmin.f32 %v572, 0.0
    %v630 = vmin.f32 %v586, 0.0
    %v631 = vmin.f32 %v600, 0.0
    %v632 = vmin.f32 %v614, 0.0
    %v633 = vmin.f32 %v560, 0.0
    %v634 = vmin.f32 %v574, 0.0
    %v635 = vmin.f32 %v588, 0.0
    %v636 = vmin.f32 %v602, 0.0
    %v637 = vmin.f32 %v616, 0.0
    %v638 = vmul.f32 %v628, 1.442695
    %v639 = vpow.pop %v638
    %v640 = vmul.f32 %v629, 1.442695
    %v641 = vpow.pop %v640
    %v642 = vmul.f32 %v630, 1.442695
    %v643 = vpow.pop %v642
    %v644 = vmul.f32 %v631, 1.442695
    %v645 = vpow.pop %v644
    %v646 = vmul.f32 %v632, 1.442695
    %v647 = vpow.pop %v646
    %v648 = vmul.f32 %v633, 1.442695
    %v649 = vpow.pop %v648
    %v650 = vmul.f32 %v634, 1.442695
    %v651 = vpow.pop %v650
    %v652 = vmul.f32 %v635, 1.442695
    %v653 = vpow.pop %v652
    %v654 = vmul.f32 %v636, 1.442695
    %v655 = vpow.pop %v654
    %v656 = vmul.f32 %v637, 1.442695
    %v657 = vpow.pop %v656
    %v658 = vsub.f32 %v639, 1.0
    %v659 = vsub.f32 %v641, 1.0
    %v660 = vsub.f32 %v643, 1.0
    %v661 = vsub.f32 %v645, 1.0
    %v662 = vsub.f32 %v647, 1.0
    %v663 = vsub.f32 %v649, 1.0
    %v664 = vsub.f32 %v651, 1.0
    %v665 = vsub.f32 %v653, 1.0
    %v666 = vsub.f32 %v655, 1.0
    %v667 = vsub.f32 %v657, 1.0
    %v668 = vsel %vm618, %v558, %v658
    %v669 = vsel %vm619, %v572, %v659
    %v670 = vsel %vm620, %v586, %v660
    %v671 = vsel %vm621, %v600, %v661
    %v672 = vsel %vm622, %v614, %v662
    %v673 = vsel %vm623, %v560, %v663
    %v674 = vsel %vm624, %v574, %v664
    %v675 = vsel %vm625, %v588, %v665
    %v676 = vsel %vm626, %v602, %v666
    %v677 = vsel %vm627, %v616, %v667
    %v678 = vpack.c.bf16 %v673, %v668
    %v679 = vpack.c.bf16 %v674, %v669
    %v680 = vpack.c.bf16 %v675, %v670
    %v681 = vpack.c.bf16 %v676, %v671
    %v682 = vpack.c.bf16 %v677, %v672
    %v683 = vld [vmem:[#allocation9] sm:$0xff]
    %v684 = vld [vmem:[#allocation9 + $0x8] sm:$0xf]
    %v685 = vld [vmem:[#allocation9 + $0xc] sm:$0xff]
    %v686 = vld [vmem:[#allocation9 + $0x14] sm:$0xf]
    %v687 = vld [vmem:[#allocation9 + $0x18] sm:$0xff]
    %v688 = vld [vmem:[#allocation9 + $0x20] sm:$0xf]
    %v689 = vld [vmem:[#allocation9 + $0x24] sm:$0xff]
    %v690 = vld [vmem:[#allocation9 + $0x2c] sm:$0xf]
    %v691 = vld [vmem:[#allocation9 + $0x30] sm:$0xff]
    %v692 = vld [vmem:[#allocation9 + $0x38] sm:$0xf]
    %v693 = vld [vmem:[#allocation9 + $0x3c] sm:$0xff]
    %v694 = vld [vmem:[#allocation9 + $0x44] sm:$0xf]
    %v695 = vld [vmem:[#allocation9 + $0x48] sm:$0xff]
    %v696 = vld [vmem:[#allocation9 + $0x50] sm:$0xf]
    %v697 = vld [vmem:[#allocation9 + $0x54] sm:$0xff]
    %v698 = vld [vmem:[#allocation9 + $0x5c] sm:$0xf]
    %v699 = vld [vmem:[#allocation9 + $0x60] sm:$0xff]
    %v700 = vld [vmem:[#allocation9 + $0x68] sm:$0xf]
    %v701 = vld [vmem:[#allocation9 + $0x6c] sm:$0xff]
    %v702 = vld [vmem:[#allocation9 + $0x74] sm:$0xf]
    %v703 = vld [vmem:[#allocation9 + $0x78] sm:$0xff]
    %v704 = vld [vmem:[#allocation9 + $0x80] sm:$0xf]
    %v705 = vld [vmem:[#allocation9 + $0x84] sm:$0xff]
    %v706 = vld [vmem:[#allocation9 + $0x8c] sm:$0xf]
    %v707 = vld [vmem:[#allocation9 + $0x90] sm:$0xff]
    %v708 = vld [vmem:[#allocation9 + $0x98] sm:$0xf]
    %v709 = vld [vmem:[#allocation9 + $0x9c] sm:$0xff]
    %v710 = vld [vmem:[#allocation9 + $0xa4] sm:$0xf]
    %v711 = vld [vmem:[#allocation9 + $0xa8] sm:$0xff]
    %v712 = vld [vmem:[#allocation9 + $0xb0] sm:$0xf]
    %v713 = vld [vmem:[#allocation9 + $0xb4] sm:$0xff]
    %v714 = vld [vmem:[#allocation9 + $0xbc] sm:$0xf]
    %v715 = vld [vmem:[#allocation9 + $0xc0] sm:$0xff]
    %v716 = vld [vmem:[#allocation9 + $0xc8] sm:$0xf]
    %v717 = vld [vmem:[#allocation9 + $0xcc] sm:$0xff]
    %v718 = vld [vmem:[#allocation9 + $0xd4] sm:$0xf]
    %v719 = vld [vmem:[#allocation9 + $0xd8] sm:$0xff]
    %v720 = vld [vmem:[#allocation9 + $0xe0] sm:$0xf]
    %v721 = vld [vmem:[#allocation9 + $0xe4] sm:$0xff]
    %v722 = vld [vmem:[#allocation9 + $0xec] sm:$0xf]
    %v723 = vld [vmem:[#allocation9 + $0xf0] sm:$0xff]
    %v724 = vld [vmem:[#allocation9 + $0xf8] sm:$0xf]
    %v725 = vld [vmem:[#allocation9 + $0xfc] sm:$0xff]
    %v726 = vld [vmem:[#allocation9 + $0x104] sm:$0xf]
    %v727 = vld [vmem:[#allocation9 + $0x108] sm:$0xff]
    %v728 = vld [vmem:[#allocation9 + $0x110] sm:$0xf]
    %v729 = vld [vmem:[#allocation9 + $0x114] sm:$0xff]
    %v730 = vld [vmem:[#allocation9 + $0x11c] sm:$0xf]
    %v731 = vld [vmem:[#allocation9 + $0x120] sm:$0xff]
    %v732 = vld [vmem:[#allocation9 + $0x128] sm:$0xf]
    %v733 = vld [vmem:[#allocation9 + $0x12c] sm:$0xff]
    %v734 = vld [vmem:[#allocation9 + $0x134] sm:$0xf]
    %v735 = vld [vmem:[#allocation9 + $0x138] sm:$0xff]
    %v736 = vld [vmem:[#allocation9 + $0x140] sm:$0xf]
    %v737 = vld [vmem:[#allocation9 + $0x144] sm:$0xff]
    %v738 = vld [vmem:[#allocation9 + $0x14c] sm:$0xf]
    %v739 = vld [vmem:[#allocation9 + $0x150] sm:$0xff]
    %v740 = vld [vmem:[#allocation9 + $0x158] sm:$0xf]
    %v741 = vld [vmem:[#allocation9 + $0x15c] sm:$0xff]
    %v742 = vld [vmem:[#allocation9 + $0x164] sm:$0xf]
    %v743 = vld [vmem:[#allocation9 + $0x168] sm:$0xff]
    %v744 = vld [vmem:[#allocation9 + $0x170] sm:$0xf]
    %v745 = vld [vmem:[#allocation9 + $0x174] sm:$0xff]
    %v746 = vld [vmem:[#allocation9 + $0x17c] sm:$0xf]
    %v747 = vld [vmem:[#allocation9 + $0x180] sm:$0xff]
    %v748 = vld [vmem:[#allocation9 + $0x188] sm:$0xf]
    %v749 = vld [vmem:[#allocation9 + $0x18c] sm:$0xff]
    %v750 = vld [vmem:[#allocation9 + $0x194] sm:$0xf]
    %v751 = vld [vmem:[#allocation9 + $0x198] sm:$0xff]
    %v752 = vld [vmem:[#allocation9 + $0x1a0] sm:$0xf]
    %v753 = vld [vmem:[#allocation9 + $0x1a4] sm:$0xff]
    %v754 = vld [vmem:[#allocation9 + $0x1ac] sm:$0xf]
    %v755 = vld [vmem:[#allocation9 + $0x1b0] sm:$0xff]
    %v756 = vld [vmem:[#allocation9 + $0x1b8] sm:$0xf]
    %v757 = vld [vmem:[#allocation9 + $0x1bc] sm:$0xff]
    %v758 = vld [vmem:[#allocation9 + $0x1c4] sm:$0xf]
    %v759 = vld [vmem:[#allocation9 + $0x1c8] sm:$0xff]
    %v760 = vld [vmem:[#allocation9 + $0x1d0] sm:$0xf]
    %v761 = vld [vmem:[#allocation9 + $0x1d4] sm:$0xff]
    %v762 = vld [vmem:[#allocation9 + $0x1dc] sm:$0xf]
    %v763 = vld [vmem:[#allocation9 + $0x1e0] sm:$0xff]
    %v764 = vld [vmem:[#allocation9 + $0x1e8] sm:$0xf]
    %v765 = vld [vmem:[#allocation9 + $0x1ec] sm:$0xff]
    %v766 = vld [vmem:[#allocation9 + $0x1f4] sm:$0xf]
    %v767 = vld [vmem:[#allocation9 + $0x1f8] sm:$0xff]
    %v768 = vld [vmem:[#allocation9 + $0x200] sm:$0xf]
    %v769 = vld [vmem:[#allocation9 + $0x204] sm:$0xff]
    %v770 = vld [vmem:[#allocation9 + $0x20c] sm:$0xf]
    %v771 = vld [vmem:[#allocation9 + $0x210] sm:$0xff]
    %v772 = vld [vmem:[#allocation9 + $0x218] sm:$0xf]
    %v773 = vld [vmem:[#allocation9 + $0x21c] sm:$0xff]
    %v774 = vld [vmem:[#allocation9 + $0x224] sm:$0xf]
    %v775 = vld [vmem:[#allocation9 + $0x228] sm:$0xff]
    %v776 = vld [vmem:[#allocation9 + $0x230] sm:$0xf]
    %v777 = vld [vmem:[#allocation9 + $0x234] sm:$0xff]
    %v778 = vld [vmem:[#allocation9 + $0x23c] sm:$0xf]
    %v779 = vld [vmem:[#allocation9 + $0x240] sm:$0xff]
    %v780 = vld [vmem:[#allocation9 + $0x248] sm:$0xf]
    %v781 = vld [vmem:[#allocation9 + $0x24c] sm:$0xff]
    %v782 = vld [vmem:[#allocation9 + $0x254] sm:$0xf]
    %v783 = vld [vmem:[#allocation9 + $0x258] sm:$0xff]
    %v784 = vld [vmem:[#allocation9 + $0x260] sm:$0xf]
    %v785 = vld [vmem:[#allocation9 + $0x264] sm:$0xff]
    %v786 = vld [vmem:[#allocation9 + $0x26c] sm:$0xf]
    %v787 = vld [vmem:[#allocation9 + $0x270] sm:$0xff]
    %v788 = vld [vmem:[#allocation9 + $0x278] sm:$0xf]
    %v789 = vld [vmem:[#allocation9 + $0x27c] sm:$0xff]
    %v790 = vld [vmem:[#allocation9 + $0x284] sm:$0xf]
    %v791 = vld [vmem:[#allocation9 + $0x288] sm:$0xff]
    %v792 = vld [vmem:[#allocation9 + $0x290] sm:$0xf]
    %v793 = vld [vmem:[#allocation9 + $0x294] sm:$0xff]
    %v794 = vld [vmem:[#allocation9 + $0x29c] sm:$0xf]
    %v795 = vld [vmem:[#allocation9 + $0x2a0] sm:$0xff]
    %v796 = vld [vmem:[#allocation9 + $0x2a8] sm:$0xf]
    %v797 = vld [vmem:[#allocation9 + $0x2ac] sm:$0xff]
    %v798 = vld [vmem:[#allocation9 + $0x2b4] sm:$0xf]
    %v799 = vld [vmem:[#allocation9 + $0x2b8] sm:$0xff]
    %v800 = vld [vmem:[#allocation9 + $0x2c0] sm:$0xf]
    %v801 = vld [vmem:[#allocation9 + $0x2c4] sm:$0xff]
    %v802 = vld [vmem:[#allocation9 + $0x2cc] sm:$0xf]
    %v803 = vld [vmem:[#allocation9 + $0x2d0] sm:$0xff]
    %v804 = vld [vmem:[#allocation9 + $0x2d8] sm:$0xf]
    %v805 = vld [vmem:[#allocation9 + $0x2dc] sm:$0xff]
    %v806 = vld [vmem:[#allocation9 + $0x2e4] sm:$0xf]
    %v807 = vld [vmem:[#allocation9 + $0x2e8] sm:$0xff]
    %v808 = vld [vmem:[#allocation9 + $0x2f0] sm:$0xf]
    %v809 = vld [vmem:[#allocation9 + $0x2f4] sm:$0xff]
    %v810 = vld [vmem:[#allocation9 + $0x2fc] sm:$0xf]
    %v811 = vld [vmem:[#allocation9 + $0x300] sm:$0xff]
    %v812 = vld [vmem:[#allocation9 + $0x308] sm:$0xf]
    %v813 = vld [vmem:[#allocation9 + $0x30c] sm:$0xff]
    %v814 = vld [vmem:[#allocation9 + $0x314] sm:$0xf]
    %v815 = vld [vmem:[#allocation9 + $0x318] sm:$0xff]
    %v816 = vld [vmem:[#allocation9 + $0x320] sm:$0xf]
    %v817 = vld [vmem:[#allocation9 + $0x324] sm:$0xff]
    %v818 = vld [vmem:[#allocation9 + $0x32c] sm:$0xf]
    %v819 = vld [vmem:[#allocation9 + $0x330] sm:$0xff]
    %v820 = vld [vmem:[#allocation9 + $0x338] sm:$0xf]
    %v821 = vld [vmem:[#allocation9 + $0x33c] sm:$0xff]
    %v822 = vld [vmem:[#allocation9 + $0x344] sm:$0xf]
    %v823 = vld [vmem:[#allocation9 + $0x348] sm:$0xff]
    %v824 = vld [vmem:[#allocation9 + $0x350] sm:$0xf]
    %v825 = vld [vmem:[#allocation9 + $0x354] sm:$0xff]
    %v826 = vld [vmem:[#allocation9 + $0x35c] sm:$0xf]
    %v827 = vld [vmem:[#allocation9 + $0x360] sm:$0xff]
    %v828 = vld [vmem:[#allocation9 + $0x368] sm:$0xf]
    %v829 = vld [vmem:[#allocation9 + $0x36c] sm:$0xff]
    %v830 = vld [vmem:[#allocation9 + $0x374] sm:$0xf]
    %v831 = vld [vmem:[#allocation9 + $0x378] sm:$0xff]
    %v832 = vld [vmem:[#allocation9 + $0x380] sm:$0xf]
    %v833 = vld [vmem:[#allocation9 + $0x384] sm:$0xff]
    %v834 = vld [vmem:[#allocation9 + $0x38c] sm:$0xf]
    %v835 = vld [vmem:[#allocation9 + $0x390] sm:$0xff]
    %v836 = vld [vmem:[#allocation9 + $0x398] sm:$0xf]
    %v837 = vld [vmem:[#allocation9 + $0x39c] sm:$0xff]
    %v838 = vld [vmem:[#allocation9 + $0x3a4] sm:$0xf]
    %v839 = vld [vmem:[#allocation9 + $0x3a8] sm:$0xff]
    %v840 = vld [vmem:[#allocation9 + $0x3b0] sm:$0xf]
    %v841 = vld [vmem:[#allocation9 + $0x3b4] sm:$0xff]
    %v842 = vld [vmem:[#allocation9 + $0x3bc] sm:$0xf]
    %v843 = vld [vmem:[%s5] sm:$0x7]
    %v845 = vperm.slane %v843, 0
    %v846 = vperm.slane %v843, 1
    %v847 = vperm.slane %v843, 2
    %v1011 = vunpack.c.l.b16 %v683
    %v1012 = vunpack.c.h.b16 %v683
    %v1013 = vunpack.c.l.b16 %v684
    %v1014 = vunpack.c.l.b16 %v685
    %v1015 = vunpack.c.h.b16 %v685
    %v1016 = vunpack.c.l.b16 %v686
    %v1017 = vunpack.c.l.b16 %v687
    %v1018 = vunpack.c.h.b16 %v687
    %v1019 = vunpack.c.l.b16 %v688
    %v1020 = vunpack.c.l.b16 %v689
    %v1021 = vunpack.c.h.b16 %v689
    %v1022 = vunpack.c.l.b16 %v690
    %v1023 = vunpack.c.l.b16 %v691
    %v1024 = vunpack.c.h.b16 %v691
    %v1025 = vunpack.c.l.b16 %v692
    %v1026 = vunpack.c.l.b16 %v693
    %v1027 = vunpack.c.h.b16 %v693
    %v1028 = vunpack.c.l.b16 %v694
    %v1029 = vunpack.c.l.b16 %v695
    %v1030 = vunpack.c.h.b16 %v695
    %v1031 = vunpack.c.l.b16 %v696
    %v1032 = vunpack.c.l.b16 %v697
    %v1033 = vunpack.c.h.b16 %v697
    %v1034 = vunpack.c.l.b16 %v698
    %v1035 = vunpack.c.l.b16 %v699
    %v1036 = vunpack.c.h.b16 %v699
    %v1037 = vunpack.c.l.b16 %v700
    %v1038 = vunpack.c.l.b16 %v701
    %v1039 = vunpack.c.h.b16 %v701
    %v1040 = vunpack.c.l.b16 %v702
    %v1041 = vunpack.c.l.b16 %v703
    %v1042 = vunpack.c.h.b16 %v703
    %v1043 = vunpack.c.l.b16 %v704
    %v1044 = vunpack.c.l.b16 %v705
    %v1045 = vunpack.c.h.b16 %v705
    %v1046 = vunpack.c.l.b16 %v706
    %v1047 = vunpack.c.l.b16 %v707
    %v1048 = vunpack.c.h.b16 %v707
    %v1049 = vunpack.c.l.b16 %v708
    %v1050 = vunpack.c.l.b16 %v709
    %v1051 = vunpack.c.h.b16 %v709
    %v1052 = vunpack.c.l.b16 %v710
    %v1053 = vunpack.c.l.b16 %v711
    %v1054 = vunpack.c.h.b16 %v711
    %v1055 = vunpack.c.l.b16 %v712
    %v1056 = vunpack.c.l.b16 %v713
    %v1057 = vunpack.c.h.b16 %v713
    %v1058 = vunpack.c.l.b16 %v714
    %v1059 = vunpack.c.l.b16 %v715
    %v1060 = vunpack.c.h.b16 %v715
    %v1061 = vunpack.c.l.b16 %v716
    %v1062 = vunpack.c.l.b16 %v717
    %v1063 = vunpack.c.h.b16 %v717
    %v1064 = vunpack.c.l.b16 %v718
    %v1065 = vunpack.c.l.b16 %v719
    %v1066 = vunpack.c.h.b16 %v719
    %v1067 = vunpack.c.l.b16 %v720
    %v1068 = vunpack.c.l.b16 %v721
    %v1069 = vunpack.c.h.b16 %v721
    %v1070 = vunpack.c.l.b16 %v722
    %v1071 = vunpack.c.l.b16 %v723
    %v1072 = vunpack.c.h.b16 %v723
    %v1073 = vunpack.c.l.b16 %v724
    %v1074 = vunpack.c.l.b16 %v725
    %v1075 = vunpack.c.h.b16 %v725
    %v1076 = vunpack.c.l.b16 %v726
    %v1077 = vunpack.c.l.b16 %v727
    %v1078 = vunpack.c.h.b16 %v727
    %v1079 = vunpack.c.l.b16 %v728
    %v1080 = vunpack.c.l.b16 %v729
    %v1081 = vunpack.c.h.b16 %v729
    %v1082 = vunpack.c.l.b16 %v730
    %v1083 = vunpack.c.l.b16 %v731
    %v1084 = vunpack.c.h.b16 %v731
    %v1085 = vunpack.c.l.b16 %v732
    %v1086 = vunpack.c.l.b16 %v733
    %v1087 = vunpack.c.h.b16 %v733
    %v1088 = vunpack.c.l.b16 %v734
    %v1089 = vunpack.c.l.b16 %v735
    %v1090 = vunpack.c.h.b16 %v735
    %v1091 = vunpack.c.l.b16 %v736
    %v1092 = vunpack.c.l.b16 %v737
    %v1093 = vunpack.c.h.b16 %v737
    %v1094 = vunpack.c.l.b16 %v738
    %v1095 = vunpack.c.l.b16 %v739
    %v1096 = vunpack.c.h.b16 %v739
    %v1097 = vunpack.c.l.b16 %v740
    %v1098 = vunpack.c.l.b16 %v741
    %v1099 = vunpack.c.h.b16 %v741
    %v1100 = vunpack.c.l.b16 %v742
    %v1101 = vunpack.c.l.b16 %v743
    %v1102 = vunpack.c.h.b16 %v743
    %v1103 = vunpack.c.l.b16 %v744
    %v1104 = vunpack.c.l.b16 %v745
    %v1105 = vunpack.c.h.b16 %v745
    %v1106 = vunpack.c.l.b16 %v746
    %v1107 = vunpack.c.l.b16 %v747
    %v1108 = vunpack.c.h.b16 %v747
    %v1109 = vunpack.c.l.b16 %v748
    %v1110 = vunpack.c.l.b16 %v749
    %v1111 = vunpack.c.h.b16 %v749
    %v1112 = vunpack.c.l.b16 %v750
    %v1113 = vunpack.c.l.b16 %v751
    %v1114 = vunpack.c.h.b16 %v751
    %v1115 = vunpack.c.l.b16 %v752
    %v1116 = vunpack.c.l.b16 %v753
    %v1117 = vunpack.c.h.b16 %v753
    %v1118 = vunpack.c.l.b16 %v754
    %v1119 = vunpack.c.l.b16 %v755
    %v1120 = vunpack.c.h.b16 %v755
    %v1121 = vunpack.c.l.b16 %v756
    %v1122 = vunpack.c.l.b16 %v757
    %v1123 = vunpack.c.h.b16 %v757
    %v1124 = vunpack.c.l.b16 %v758
    %v1125 = vunpack.c.l.b16 %v759
    %v1126 = vunpack.c.h.b16 %v759
    %v1127 = vunpack.c.l.b16 %v760
    %v1128 = vunpack.c.l.b16 %v761
    %v1129 = vunpack.c.h.b16 %v761
    %v1130 = vunpack.c.l.b16 %v762
    %v1131 = vunpack.c.l.b16 %v763
    %v1132 = vunpack.c.h.b16 %v763
    %v1133 = vunpack.c.l.b16 %v764
    %v1134 = vunpack.c.l.b16 %v765
    %v1135 = vunpack.c.h.b16 %v765
    %v1136 = vunpack.c.l.b16 %v766
    %v1137 = vunpack.c.l.b16 %v767
    %v1138 = vunpack.c.h.b16 %v767
    %v1139 = vunpack.c.l.b16 %v768
    %v1140 = vunpack.c.l.b16 %v769
    %v1141 = vunpack.c.h.b16 %v769
    %v1142 = vunpack.c.l.b16 %v770
    %v1143 = vunpack.c.l.b16 %v771
    %v1144 = vunpack.c.h.b16 %v771
    %v1145 = vunpack.c.l.b16 %v772
    %v1146 = vunpack.c.l.b16 %v773
    %v1147 = vunpack.c.h.b16 %v773
    %v1148 = vunpack.c.l.b16 %v774
    %v1149 = vunpack.c.l.b16 %v775
    %v1150 = vunpack.c.h.b16 %v775
    %v1151 = vunpack.c.l.b16 %v776
    %v1152 = vunpack.c.l.b16 %v777
    %v1153 = vunpack.c.h.b16 %v777
    %v1154 = vunpack.c.l.b16 %v778
    %v1155 = vunpack.c.l.b16 %v779
    %v1156 = vunpack.c.h.b16 %v779
    %v1157 = vunpack.c.l.b16 %v780
    %v1158 = vunpack.c.l.b16 %v781
    %v1159 = vunpack.c.h.b16 %v781
    %v1160 = vunpack.c.l.b16 %v782
    %v1161 = vunpack.c.l.b16 %v783
    %v1162 = vunpack.c.h.b16 %v783
    %v1163 = vunpack.c.l.b16 %v784
    %v1164 = vunpack.c.l.b16 %v785
    %v1165 = vunpack.c.h.b16 %v785
    %v1166 = vunpack.c.l.b16 %v786
    %v1167 = vunpack.c.l.b16 %v787
    %v1168 = vunpack.c.h.b16 %v787
    %v1169 = vunpack.c.l.b16 %v788
    %v1170 = vunpack.c.l.b16 %v789
    %v1171 = vunpack.c.h.b16 %v789
    %v1172 = vunpack.c.l.b16 %v790
    %v1173 = vunpack.c.l.b16 %v791
    %v1174 = vunpack.c.h.b16 %v791
    %v1175 = vunpack.c.l.b16 %v792
    %v1176 = vunpack.c.l.b16 %v793
    %v1177 = vunpack.c.h.b16 %v793
    %v1178 = vunpack.c.l.b16 %v794
    %v1179 = vunpack.c.l.b16 %v795
    %v1180 = vunpack.c.h.b16 %v795
    %v1181 = vunpack.c.l.b16 %v796
    %v1182 = vunpack.c.l.b16 %v797
    %v1183 = vunpack.c.h.b16 %v797
    %v1184 = vunpack.c.l.b16 %v798
    %v1185 = vunpack.c.l.b16 %v799
    %v1186 = vunpack.c.h.b16 %v799
    %v1187 = vunpack.c.l.b16 %v800
    %v1188 = vunpack.c.l.b16 %v801
    %v1189 = vunpack.c.h.b16 %v801
    %v1190 = vunpack.c.l.b16 %v802
    %v1191 = vunpack.c.l.b16 %v803
    %v1192 = vunpack.c.h.b16 %v803
    %v1193 = vunpack.c.l.b16 %v804
    %v1194 = vunpack.c.l.b16 %v805
    %v1195 = vunpack.c.h.b16 %v805
    %v1196 = vunpack.c.l.b16 %v806
    %v1197 = vunpack.c.l.b16 %v807
    %v1198 = vunpack.c.h.b16 %v807
    %v1199 = vunpack.c.l.b16 %v808
    %v1200 = vunpack.c.l.b16 %v809
    %v1201 = vunpack.c.h.b16 %v809
    %v1202 = vunpack.c.l.b16 %v810
    %v1203 = vunpack.c.l.b16 %v811
    %v1204 = vunpack.c.h.b16 %v811
    %v1205 = vunpack.c.l.b16 %v812
    %v1206 = vunpack.c.l.b16 %v813
    %v1207 = vunpack.c.h.b16 %v813
    %v1208 = vunpack.c.l.b16 %v814
    %v1209 = vunpack.c.l.b16 %v815
    %v1210 = vunpack.c.h.b16 %v815
    %v1211 = vunpack.c.l.b16 %v816
    %v1212 = vunpack.c.l.b16 %v817
    %v1213 = vunpack.c.h.b16 %v817
    %v1214 = vunpack.c.l.b16 %v818
    %v1215 = vunpack.c.l.b16 %v819
    %v1216 = vunpack.c.h.b16 %v819
    %v1217 = vunpack.c.l.b16 %v820
    %v1218 = vunpack.c.l.b16 %v821
    %v1219 = vunpack.c.h.b16 %v821
    %v1220 = vunpack.c.l.b16 %v822
    %v1221 = vunpack.c.l.b16 %v823
    %v1222 = vunpack.c.h.b16 %v823
    %v1223 = vunpack.c.l.b16 %v824
    %v1224 = vunpack.c.l.b16 %v825
    %v1225 = vunpack.c.h.b16 %v825
    %v1226 = vunpack.c.l.b16 %v826
    %v1227 = vunpack.c.l.b16 %v827
    %v1228 = vunpack.c.h.b16 %v827
    %v1229 = vunpack.c.l.b16 %v828
    %v1230 = vunpack.c.l.b16 %v829
    %v1231 = vunpack.c.h.b16 %v829
    %v1232 = vunpack.c.l.b16 %v830
    %v1233 = vunpack.c.l.b16 %v831
    %v1234 = vunpack.c.h.b16 %v831
    %v1235 = vunpack.c.l.b16 %v832
    %v1236 = vunpack.c.l.b16 %v833
    %v1237 = vunpack.c.h.b16 %v833
    %v1238 = vunpack.c.l.b16 %v834
    %v1239 = vunpack.c.l.b16 %v835
    %v1240 = vunpack.c.h.b16 %v835
    %v1241 = vunpack.c.l.b16 %v836
    %v1242 = vunpack.c.l.b16 %v837
    %v1243 = vunpack.c.h.b16 %v837
    %v1244 = vunpack.c.l.b16 %v838
    %v1245 = vunpack.c.l.b16 %v839
    %v1246 = vunpack.c.h.b16 %v839
    %v1247 = vunpack.c.l.b16 %v840
    %v1248 = vunpack.c.l.b16 %v841
    %v1249 = vunpack.c.h.b16 %v841
    %v1250 = vunpack.c.l.b16 %v842
    %v1251 = vpack.c.b16 %v1014, %v1011
    %v1252 = vpack.c.b16 %v1015, %v1012
    %v1253 = vpack.c.b16 %v1016, %v1013
    %v1254 = vpack.c.b16 %v1020, %v1017
    %v1255 = vpack.c.b16 %v1021, %v1018
    %v1256 = vpack.c.b16 %v1022, %v1019
    %v1257 = vpack.c.b16 %v1026, %v1023
    %v1258 = vpack.c.b16 %v1027, %v1024
    %v1259 = vpack.c.b16 %v1028, %v1025
    %v1260 = vpack.c.b16 %v1032, %v1029
    %v1261 = vpack.c.b16 %v1033, %v1030
    %v1262 = vpack.c.b16 %v1034, %v1031
    %v1263 = vpack.c.b16 %v1038, %v1035
    %v1264 = vpack.c.b16 %v1039, %v1036
    %v1265 = vpack.c.b16 %v1040, %v1037
    %v1266 = vpack.c.b16 %v1044, %v1041
    %v1267 = vpack.c.b16 %v1045, %v1042
    %v1268 = vpack.c.b16 %v1046, %v1043
    %v1269 = vpack.c.b16 %v1050, %v1047
    %v1270 = vpack.c.b16 %v1051, %v1048
    %v1271 = vpack.c.b16 %v1052, %v1049
    %v1272 = vpack.c.b16 %v1056, %v1053
    %v1273 = vpack.c.b16 %v1057, %v1054
    %v1274 = vpack.c.b16 %v1058, %v1055
    %v1275 = vpack.c.b16 %v1062, %v1059
    %v1276 = vpack.c.b16 %v1063, %v1060
    %v1277 = vpack.c.b16 %v1064, %v1061
    %v1278 = vpack.c.b16 %v1068, %v1065
    %v1279 = vpack.c.b16 %v1069, %v1066
    %v1280 = vpack.c.b16 %v1070, %v1067
    %v1281 = vpack.c.b16 %v1074, %v1071
    %v1282 = vpack.c.b16 %v1075, %v1072
    %v1283 = vpack.c.b16 %v1076, %v1073
    %v1284 = vpack.c.b16 %v1080, %v1077
    %v1285 = vpack.c.b16 %v1081, %v1078
    %v1286 = vpack.c.b16 %v1082, %v1079
    %v1287 = vpack.c.b16 %v1086, %v1083
    %v1288 = vpack.c.b16 %v1087, %v1084
    %v1289 = vpack.c.b16 %v1088, %v1085
    %v1290 = vpack.c.b16 %v1092, %v1089
    %v1291 = vpack.c.b16 %v1093, %v1090
    %v1292 = vpack.c.b16 %v1094, %v1091
    %v1293 = vpack.c.b16 %v1098, %v1095
    %v1294 = vpack.c.b16 %v1099, %v1096
    %v1295 = vpack.c.b16 %v1100, %v1097
    %v1296 = vpack.c.b16 %v1104, %v1101
    %v1297 = vpack.c.b16 %v1105, %v1102
    %v1298 = vpack.c.b16 %v1106, %v1103
    %v1299 = vpack.c.b16 %v1110, %v1107
    %v1300 = vpack.c.b16 %v1111, %v1108
    %v1301 = vpack.c.b16 %v1112, %v1109
    %v1302 = vpack.c.b16 %v1116, %v1113
    %v1303 = vpack.c.b16 %v1117, %v1114
    %v1304 = vpack.c.b16 %v1118, %v1115
    %v1305 = vpack.c.b16 %v1122, %v1119
    %v1306 = vpack.c.b16 %v1123, %v1120
    %v1307 = vpack.c.b16 %v1124, %v1121
    %v1308 = vpack.c.b16 %v1128, %v1125
    %v1309 = vpack.c.b16 %v1129, %v1126
    %v1310 = vpack.c.b16 %v1130, %v1127
    %v1311 = vpack.c.b16 %v1134, %v1131
    %v1312 = vpack.c.b16 %v1135, %v1132
    %v1313 = vpack.c.b16 %v1136, %v1133
    %v1314 = vpack.c.b16 %v1140, %v1137
    %v1315 = vpack.c.b16 %v1141, %v1138
    %v1316 = vpack.c.b16 %v1142, %v1139
    %v1317 = vpack.c.b16 %v1146, %v1143
    %v1318 = vpack.c.b16 %v1147, %v1144
    %v1319 = vpack.c.b16 %v1148, %v1145
    %v1320 = vpack.c.b16 %v1152, %v1149
    %v1321 = vpack.c.b16 %v1153, %v1150
    %v1322 = vpack.c.b16 %v1154, %v1151
    %v1323 = vpack.c.b16 %v1158, %v1155
    %v1324 = vpack.c.b16 %v1159, %v1156
    %v1325 = vpack.c.b16 %v1160, %v1157
    %v1326 = vpack.c.b16 %v1164, %v1161
    %v1327 = vpack.c.b16 %v1165, %v1162
    %v1328 = vpack.c.b16 %v1166, %v1163
    %v1329 = vpack.c.b16 %v1170, %v1167
    %v1330 = vpack.c.b16 %v1171, %v1168
    %v1331 = vpack.c.b16 %v1172, %v1169
    %v1332 = vpack.c.b16 %v1176, %v1173
    %v1333 = vpack.c.b16 %v1177, %v1174
    %v1334 = vpack.c.b16 %v1178, %v1175
    %v1335 = vpack.c.b16 %v1182, %v1179
    %v1336 = vpack.c.b16 %v1183, %v1180
    %v1337 = vpack.c.b16 %v1184, %v1181
    %v1338 = vpack.c.b16 %v1188, %v1185
    %v1339 = vpack.c.b16 %v1189, %v1186
    %v1340 = vpack.c.b16 %v1190, %v1187
    %v1341 = vpack.c.b16 %v1194, %v1191
    %v1342 = vpack.c.b16 %v1195, %v1192
    %v1343 = vpack.c.b16 %v1196, %v1193
    %v1344 = vpack.c.b16 %v1200, %v1197
    %v1345 = vpack.c.b16 %v1201, %v1198
    %v1346 = vpack.c.b16 %v1202, %v1199
    %v1347 = vpack.c.b16 %v1206, %v1203
    %v1348 = vpack.c.b16 %v1207, %v1204
    %v1349 = vpack.c.b16 %v1208, %v1205
    %v1350 = vpack.c.b16 %v1212, %v1209
    %v1351 = vpack.c.b16 %v1213, %v1210
    %v1352 = vpack.c.b16 %v1214, %v1211
    %v1353 = vpack.c.b16 %v1218, %v1215
    %v1354 = vpack.c.b16 %v1219, %v1216
    %v1355 = vpack.c.b16 %v1220, %v1217
    %v1356 = vpack.c.b16 %v1224, %v1221
    %v1357 = vpack.c.b16 %v1225, %v1222
    %v1358 = vpack.c.b16 %v1226, %v1223
    %v1359 = vpack.c.b16 %v1230, %v1227
    %v1360 = vpack.c.b16 %v1231, %v1228
    %v1361 = vpack.c.b16 %v1232, %v1229
    %v1362 = vpack.c.b16 %v1236, %v1233
    %v1363 = vpack.c.b16 %v1237, %v1234
    %v1364 = vpack.c.b16 %v1238, %v1235
    %v1365 = vpack.c.b16 %v1242, %v1239
    %v1366 = vpack.c.b16 %v1243, %v1240
    %v1367 = vpack.c.b16 %v1244, %v1241
    %v1368 = vpack.c.b16 %v1248, %v1245
    %v1369 = vpack.c.b16 %v1249, %v1246
    %v1370 = vpack.c.b16 %v1250, %v1247
    %1491 = vmatpush.bf16.msra.mxu0 %v1272
    %1492 = vmatpush.bf16.msra.mxu0 %v1269
    %1493 = vmatpush.bf16.msra.mxu0 %v1266
    %1494 = vmatpush.bf16.msra.mxu0 %v1263
    %1495 = vmatpush.bf16.msra.mxu0 %v1260
    %1496 = vmatpush.bf16.msra.mxu0 %v1257
    %1497 = vmatpush.bf16.msra.mxu0 %v1254
    %1498 = vmatpush.bf16.msra.mxu0 %v1251
    %1499 = vmatmul.bf16.gmra.mxu0 %v678
    %v1500 = vpop.f32.mrf.mxu0
    %v1501 = vadd.f32 %v845, %v1500
    %v1502 = vpop.f32.mrf.mxu0
    %v1503 = vadd.f32 %v845, %v1502
    %1504 = vdwg.mxu0
    %1505 = vmatpush.bf16.msra.mxu0 %v1296
    %1506 = vmatpush.bf16.msra.mxu0 %v1293
    %1507 = vmatpush.bf16.msra.mxu0 %v1290
    %1508 = vmatpush.bf16.msra.mxu0 %v1287
    %1509 = vmatpush.bf16.msra.mxu0 %v1284
    %1510 = vmatpush.bf16.msra.mxu0 %v1281
    %1511 = vmatpush.bf16.msra.mxu0 %v1278
    %1512 = vmatpush.bf16.msra.mxu0 %v1275
    %1513 = vmatmul.bf16.gmra.mxu0 %v679
    %v1514 = vpop.f32.mrf.mxu0
    %v1515 = vadd.f32 %v1501, %v1514
    %v1516 = vpop.f32.mrf.mxu0
    %v1517 = vadd.f32 %v1503, %v1516
    %1518 = vdwg.mxu0
    %1519 = vmatpush.bf16.msra.mxu0 %v1320
    %1520 = vmatpush.bf16.msra.mxu0 %v1317
    %1521 = vmatpush.bf16.msra.mxu0 %v1314
    %1522 = vmatpush.bf16.msra.mxu0 %v1311
    %1523 = vmatpush.bf16.msra.mxu0 %v1308
    %1524 = vmatpush.bf16.msra.mxu0 %v1305
    %1525 = vmatpush.bf16.msra.mxu0 %v1302
    %1526 = vmatpush.bf16.msra.mxu0 %v1299
    %1527 = vmatmul.bf16.gmra.mxu0 %v680
    %v1528 = vpop.f32.mrf.mxu0
    %v1529 = vadd.f32 %v1515, %v1528
    %v1530 = vpop.f32.mrf.mxu0
    %v1531 = vadd.f32 %v1517, %v1530
    %1532 = vdwg.mxu0
    %1533 = vmatpush.bf16.msra.mxu0 %v1344
    %1534 = vmatpush.bf16.msra.mxu0 %v1341
    %1535 = vmatpush.bf16.msra.mxu0 %v1338
    %1536 = vmatpush.bf16.msra.mxu0 %v1335
    %1537 = vmatpush.bf16.msra.mxu0 %v1332
    %1538 = vmatpush.bf16.msra.mxu0 %v1329
    %1539 = vmatpush.bf16.msra.mxu0 %v1326
    %1540 = vmatpush.bf16.msra.mxu0 %v1323
    %1541 = vmatmul.bf16.gmra.mxu0 %v681
    %v1542 = vpop.f32.mrf.mxu0
    %v1543 = vadd.f32 %v1529, %v1542
    %v1544 = vpop.f32.mrf.mxu0
    %v1545 = vadd.f32 %v1531, %v1544
    %1546 = vdwg.mxu0
    %1547 = vmatpush.bf16.msra.mxu0 %v1368
    %1548 = vmatpush.bf16.msra.mxu0 %v1365
    %1549 = vmatpush.bf16.msra.mxu0 %v1362
    %1550 = vmatpush.bf16.msra.mxu0 %v1359
    %1551 = vmatpush.bf16.msra.mxu0 %v1356
    %1552 = vmatpush.bf16.msra.mxu0 %v1353
    %1553 = vmatpush.bf16.msra.mxu0 %v1350
    %1554 = vmatpush.bf16.msra.mxu0 %v1347
    %1555 = vmatmul.bf16.gmra.mxu0 %v682
    %v1556 = vpop.f32.mrf.mxu0
    %v1557 = vadd.f32 %v1543, %v1556
    %v1558 = vpop.f32.mrf.mxu0
    %v1559 = vadd.f32 %v1545, %v1558
    %1560 = vdwg.mxu0
    %1561 = vmatpush.bf16.msra.mxu0 %v1273
    %1562 = vmatpush.bf16.msra.mxu0 %v1270
    %1563 = vmatpush.bf16.msra.mxu0 %v1267
    %1564 = vmatpush.bf16.msra.mxu0 %v1264
    %1565 = vmatpush.bf16.msra.mxu0 %v1261
    %1566 = vmatpush.bf16.msra.mxu0 %v1258
    %1567 = vmatpush.bf16.msra.mxu0 %v1255
    %1568 = vmatpush.bf16.msra.mxu0 %v1252
    %1569 = vmatmul.bf16.gmra.mxu0 %v678
    %v1570 = vpop.f32.mrf.mxu0
    %v1571 = vadd.f32 %v846, %v1570
    %v1572 = vpop.f32.mrf.mxu0
    %v1573 = vadd.f32 %v846, %v1572
    %1574 = vdwg.mxu0
    %1575 = vmatpush.bf16.msra.mxu0 %v1297
    %1576 = vmatpush.bf16.msra.mxu0 %v1294
    %1577 = vmatpush.bf16.msra.mxu0 %v1291
    %1578 = vmatpush.bf16.msra.mxu0 %v1288
    %1579 = vmatpush.bf16.msra.mxu0 %v1285
    %1580 = vmatpush.bf16.msra.mxu0 %v1282
    %1581 = vmatpush.bf16.msra.mxu0 %v1279
    %1582 = vmatpush.bf16.msra.mxu0 %v1276
    %1583 = vmatmul.bf16.gmra.mxu0 %v679
    %v1584 = vpop.f32.mrf.mxu0
    %v1585 = vadd.f32 %v1571, %v1584
    %v1586 = vpop.f32.mrf.mxu0
    %v1587 = vadd.f32 %v1573, %v1586
    %1588 = vdwg.mxu0
    %1589 = vmatpush.bf16.msra.mxu0 %v1321
    %1590 = vmatpush.bf16.msra.mxu0 %v1318
    %1591 = vmatpush.bf16.msra.mxu0 %v1315
    %1592 = vmatpush.bf16.msra.mxu0 %v1312
    %1593 = vmatpush.bf16.msra.mxu0 %v1309
    %1594 = vmatpush.bf16.msra.mxu0 %v1306
    %1595 = vmatpush.bf16.msra.mxu0 %v1303
    %1596 = vmatpush.bf16.msra.mxu0 %v1300
    %1597 = vmatmul.bf16.gmra.mxu0 %v680
    %v1598 = vpop.f32.mrf.mxu0
    %v1599 = vadd.f32 %v1585, %v1598
    %v1600 = vpop.f32.mrf.mxu0
    %v1601 = vadd.f32 %v1587, %v1600
    %1602 = vdwg.mxu0
    %1603 = vmatpush.bf16.msra.mxu0 %v1345
    %1604 = vmatpush.bf16.msra.mxu0 %v1342
    %1605 = vmatpush.bf16.msra.mxu0 %v1339
    %1606 = vmatpush.bf16.msra.mxu0 %v1336
    %1607 = vmatpush.bf16.msra.mxu0 %v1333
    %1608 = vmatpush.bf16.msra.mxu0 %v1330
    %1609 = vmatpush.bf16.msra.mxu0 %v1327
    %1610 = vmatpush.bf16.msra.mxu0 %v1324
    %1611 = vmatmul.bf16.gmra.mxu0 %v681
    %v1612 = vpop.f32.mrf.mxu0
    %v1613 = vadd.f32 %v1599, %v1612
    %v1614 = vpop.f32.mrf.mxu0
    %v1615 = vadd.f32 %v1601, %v1614
    %1616 = vdwg.mxu0
    %1617 = vmatpush.bf16.msra.mxu0 %v1369
    %1618 = vmatpush.bf16.msra.mxu0 %v1366
    %1619 = vmatpush.bf16.msra.mxu0 %v1363
    %1620 = vmatpush.bf16.msra.mxu0 %v1360
    %1621 = vmatpush.bf16.msra.mxu0 %v1357
    %1622 = vmatpush.bf16.msra.mxu0 %v1354
    %1623 = vmatpush.bf16.msra.mxu0 %v1351
    %1624 = vmatpush.bf16.msra.mxu0 %v1348
    %1625 = vmatmul.bf16.gmra.mxu0 %v682
    %v1626 = vpop.f32.mrf.mxu0
    %v1627 = vadd.f32 %v1613, %v1626
    %v1628 = vpop.f32.mrf.mxu0
    %v1629 = vadd.f32 %v1615, %v1628
    %1630 = vdwg.mxu0
    %1631 = vmatpush.bf16.msra.mxu0 %v1274
    %1632 = vmatpush.bf16.msra.mxu0 %v1271
    %1633 = vmatpush.bf16.msra.mxu0 %v1268
    %1634 = vmatpush.bf16.msra.mxu0 %v1265
    %1635 = vmatpush.bf16.msra.mxu0 %v1262
    %1636 = vmatpush.bf16.msra.mxu0 %v1259
    %1637 = vmatpush.bf16.msra.mxu0 %v1256
    %1638 = vmatpush.bf16.msra.mxu0 %v1253
    %1639 = vmatmul.bf16.gmra.mxu0 %v678
    %v1640 = vpop.f32.mrf.mxu0
    %v1641 = vadd.f32 %v847, %v1640
    %v1642 = vpop.f32.mrf.mxu0
    %v1643 = vadd.f32 %v847, %v1642
    %1644 = vdwg.mxu0
    %1645 = vmatpush.bf16.msra.mxu0 %v1298
    %1646 = vmatpush.bf16.msra.mxu0 %v1295
    %1647 = vmatpush.bf16.msra.mxu0 %v1292
    %1648 = vmatpush.bf16.msra.mxu0 %v1289
    %1649 = vmatpush.bf16.msra.mxu0 %v1286
    %1650 = vmatpush.bf16.msra.mxu0 %v1283
    %1651 = vmatpush.bf16.msra.mxu0 %v1280
    %1652 = vmatpush.bf16.msra.mxu0 %v1277
    %1653 = vmatmul.bf16.gmra.mxu0 %v679
    %v1654 = vpop.f32.mrf.mxu0
    %v1655 = vadd.f32 %v1641, %v1654
    %v1656 = vpop.f32.mrf.mxu0
    %v1657 = vadd.f32 %v1643, %v1656
    %1658 = vdwg.mxu0
    %1659 = vmatpush.bf16.msra.mxu0 %v1322
    %1660 = vmatpush.bf16.msra.mxu0 %v1319
    %1661 = vmatpush.bf16.msra.mxu0 %v1316
    %1662 = vmatpush.bf16.msra.mxu0 %v1313
    %1663 = vmatpush.bf16.msra.mxu0 %v1310
    %1664 = vmatpush.bf16.msra.mxu0 %v1307
    %1665 = vmatpush.bf16.msra.mxu0 %v1304
    %1666 = vmatpush.bf16.msra.mxu0 %v1301
    %1667 = vmatmul.bf16.gmra.mxu0 %v680
    %v1668 = vpop.f32.mrf.mxu0
    %v1669 = vadd.f32 %v1655, %v1668
    %v1670 = vpop.f32.mrf.mxu0
    %v1671 = vadd.f32 %v1657, %v1670
    %1672 = vdwg.mxu0
    %1673 = vmatpush.bf16.msra.mxu0 %v1346
    %1674 = vmatpush.bf16.msra.mxu0 %v1343
    %1675 = vmatpush.bf16.msra.mxu0 %v1340
    %1676 = vmatpush.bf16.msra.mxu0 %v1337
    %1677 = vmatpush.bf16.msra.mxu0 %v1334
    %1678 = vmatpush.bf16.msra.mxu0 %v1331
    %1679 = vmatpush.bf16.msra.mxu0 %v1328
    %1680 = vmatpush.bf16.msra.mxu0 %v1325
    %1681 = vmatmul.bf16.gmra.mxu0 %v681
    %v1682 = vpop.f32.mrf.mxu0
    %v1683 = vadd.f32 %v1669, %v1682
    %v1684 = vpop.f32.mrf.mxu0
    %v1685 = vadd.f32 %v1671, %v1684
    %1686 = vdwg.mxu0
    %1687 = vmatpush.bf16.msra.mxu0 %v1370
    %1688 = vmatpush.bf16.msra.mxu0 %v1367
    %1689 = vmatpush.bf16.msra.mxu0 %v1364
    %1690 = vmatpush.bf16.msra.mxu0 %v1361
    %1691 = vmatpush.bf16.msra.mxu0 %v1358
    %1692 = vmatpush.bf16.msra.mxu0 %v1355
    %1693 = vmatpush.bf16.msra.mxu0 %v1352
    %1694 = vmatpush.bf16.msra.mxu0 %v1349
    %1695 = vmatmul.bf16.gmra.mxu0 %v682
    %v1696 = vpop.f32.mrf.mxu0
    %v1697 = vadd.f32 %v1683, %v1696
    %v1698 = vpop.f32.mrf.mxu0
    %v1699 = vadd.f32 %v1685, %v1698
    %1700 = vdwg.mxu0
    %vm1701 = vcmp.gt.f32.partialorder %v1557, 0.0
    %vm1702 = vcmp.gt.f32.partialorder %v1627, 0.0
    %vm1703 = vcmp.gt.f32.partialorder %v1697, 0.0
    %vm1704 = vcmp.gt.f32.partialorder %v1559, 0.0
    %vm1705 = vcmp.gt.f32.partialorder %v1629, 0.0
    %vm1706 = vcmp.gt.f32.partialorder %v1699, 0.0
    %v1707 = vmin.f32 %v1557, 0.0
    %v1708 = vmin.f32 %v1627, 0.0
    %v1709 = vmin.f32 %v1697, 0.0
    %v1710 = vmin.f32 %v1559, 0.0
    %v1711 = vmin.f32 %v1629, 0.0
    %v1712 = vmin.f32 %v1699, 0.0
    %v1713 = vmul.f32 %v1707, 1.442695
    %v1714 = vpow.pop %v1713
    %v1715 = vmul.f32 %v1708, 1.442695
    %v1716 = vpow.pop %v1715
    %v1717 = vmul.f32 %v1709, 1.442695
    %v1718 = vpow.pop %v1717
    %v1719 = vmul.f32 %v1710, 1.442695
    %v1720 = vpow.pop %v1719
    %v1721 = vmul.f32 %v1711, 1.442695
    %v1722 = vpow.pop %v1721
    %v1723 = vmul.f32 %v1712, 1.442695
    %v1724 = vpow.pop %v1723
    %v1725 = vsub.f32 %v1714, 1.0
    %v1726 = vsub.f32 %v1716, 1.0
    %v1727 = vsub.f32 %v1718, 1.0
    %v1728 = vsub.f32 %v1720, 1.0
    %v1729 = vsub.f32 %v1722, 1.0
    %v1730 = vsub.f32 %v1724, 1.0
    %v1731 = vsel %vm1701, %v1557, %v1725
    %v1732 = vsel %vm1702, %v1627, %v1726
    %v1733 = vsel %vm1703, %v1697, %v1727
    %v1734 = vsel %vm1704, %v1559, %v1728
    %v1735 = vsel %vm1705, %v1629, %v1729
    %v1736 = vsel %vm1706, %v1699, %v1730
    %v1737 = vpack.c.bf16 %v1734, %v1731
    %v1738 = vpack.c.bf16 %v1735, %v1732
    %v1739 = vpack.c.bf16 %v1736, %v1733
    %v1740 = vld [vmem:[#allocation11] sm:$0xff]
    %v1741 = vld [vmem:[#allocation11 + $0x8] sm:$0xff]
    %v1742 = vld [vmem:[#allocation11 + $0x10] sm:$0xff]
    %v1743 = vld [vmem:[#allocation11 + $0x18] sm:$0xff]
    %v1744 = vld [vmem:[#allocation11 + $0x20] sm:$0xff]
    %v1745 = vld [vmem:[#allocation11 + $0x28] sm:$0xff]
    %v1746 = vld [vmem:[#allocation11 + $0x30] sm:$0xff]
    %v1747 = vld [vmem:[#allocation11 + $0x38] sm:$0xff]
    %v1748 = vld [vmem:[#allocation11 + $0x40] sm:$0xff]
    %v1749 = vld [vmem:[#allocation11 + $0x48] sm:$0xff]
    %v1750 = vld [vmem:[#allocation11 + $0x50] sm:$0xff]
    %v1751 = vld [vmem:[#allocation11 + $0x58] sm:$0xff]
    %v1752 = vld [vmem:[#allocation11 + $0x60] sm:$0xff]
    %v1753 = vld [vmem:[#allocation11 + $0x68] sm:$0xff]
    %v1754 = vld [vmem:[#allocation11 + $0x70] sm:$0xff]
    %v1755 = vld [vmem:[#allocation11 + $0x78] sm:$0xff]
    %v1756 = vld [vmem:[#allocation11 + $0x80] sm:$0xff]
    %v1757 = vld [vmem:[#allocation11 + $0x88] sm:$0xff]
    %v1758 = vld [vmem:[#allocation11 + $0x90] sm:$0xff]
    %v1759 = vld [vmem:[#allocation11 + $0x98] sm:$0xff]
    %v1760 = vld [vmem:[#allocation11 + $0xa0] sm:$0xff]
    %v1761 = vld [vmem:[#allocation11 + $0xa8] sm:$0xff]
    %v1762 = vld [vmem:[#allocation11 + $0xb0] sm:$0xff]
    %v1763 = vld [vmem:[#allocation11 + $0xb8] sm:$0xff]
    %v1764 = vld [vmem:[#allocation11 + $0xc0] sm:$0xff]
    %v1765 = vld [vmem:[#allocation11 + $0xc8] sm:$0xff]
    %v1766 = vld [vmem:[#allocation11 + $0xd0] sm:$0xff]
    %v1767 = vld [vmem:[#allocation11 + $0xd8] sm:$0xff]
    %v1768 = vld [vmem:[#allocation11 + $0xe0] sm:$0xff]
    %v1769 = vld [vmem:[#allocation11 + $0xe8] sm:$0xff]
    %v1770 = vld [vmem:[#allocation11 + $0xf0] sm:$0xff]
    %v1771 = vld [vmem:[#allocation11 + $0xf8] sm:$0xff]
    %v1772 = vld [vmem:[#allocation11 + $0x100] sm:$0xff]
    %v1773 = vld [vmem:[#allocation11 + $0x108] sm:$0xff]
    %v1774 = vld [vmem:[#allocation11 + $0x110] sm:$0xff]
    %v1775 = vld [vmem:[#allocation11 + $0x118] sm:$0xff]
    %v1776 = vld [vmem:[#allocation11 + $0x120] sm:$0xff]
    %v1777 = vld [vmem:[#allocation11 + $0x128] sm:$0xff]
    %v1778 = vld [vmem:[#allocation11 + $0x130] sm:$0xff]
    %v1779 = vld [vmem:[#allocation11 + $0x138] sm:$0xff]
    %v1780 = vld [vmem:[#allocation11 + $0x140] sm:$0xff]
    %v1781 = vld [vmem:[#allocation11 + $0x148] sm:$0xff]
    %v1782 = vld [vmem:[#allocation11 + $0x150] sm:$0xff]
    %v1783 = vld [vmem:[#allocation11 + $0x158] sm:$0xff]
    %v1784 = vld [vmem:[#allocation11 + $0x160] sm:$0xff]
    %v1785 = vld [vmem:[#allocation11 + $0x168] sm:$0xff]
    %v1786 = vld [vmem:[#allocation11 + $0x170] sm:$0xff]
    %v1787 = vld [vmem:[#allocation11 + $0x178] sm:$0xff]
    %v1788 = vld [vmem:[%s7] sm:$0x3]
    %v1790 = vperm.slane %v1788, 0
    %v1791 = vperm.slane %v1788, 1
    %v1842 = vunpack.c.l.b16 %v1740
    %v1843 = vunpack.c.h.b16 %v1740
    %v1844 = vunpack.c.l.b16 %v1741
    %v1845 = vunpack.c.h.b16 %v1741
    %v1846 = vunpack.c.l.b16 %v1742
    %v1847 = vunpack.c.h.b16 %v1742
    %v1848 = vunpack.c.l.b16 %v1743
    %v1849 = vunpack.c.h.b16 %v1743
    %v1850 = vunpack.c.l.b16 %v1744
    %v1851 = vunpack.c.h.b16 %v1744
    %v1852 = vunpack.c.l.b16 %v1745
    %v1853 = vunpack.c.h.b16 %v1745
    %v1854 = vunpack.c.l.b16 %v1746
    %v1855 = vunpack.c.h.b16 %v1746
    %v1856 = vunpack.c.l.b16 %v1747
    %v1857 = vunpack.c.h.b16 %v1747
    %v1858 = vunpack.c.l.b16 %v1748
    %v1859 = vunpack.c.h.b16 %v1748
    %v1860 = vunpack.c.l.b16 %v1749
    %v1861 = vunpack.c.h.b16 %v1749
    %v1862 = vunpack.c.l.b16 %v1750
    %v1863 = vunpack.c.h.b16 %v1750
    %v1864 = vunpack.c.l.b16 %v1751
    %v1865 = vunpack.c.h.b16 %v1751
    %v1866 = vunpack.c.l.b16 %v1752
    %v1867 = vunpack.c.h.b16 %v1752
    %v1868 = vunpack.c.l.b16 %v1753
    %v1869 = vunpack.c.h.b16 %v1753
    %v1870 = vunpack.c.l.b16 %v1754
    %v1871 = vunpack.c.h.b16 %v1754
    %v1872 = vunpack.c.l.b16 %v1755
    %v1873 = vunpack.c.h.b16 %v1755
    %v1874 = vunpack.c.l.b16 %v1756
    %v1875 = vunpack.c.h.b16 %v1756
    %v1876 = vunpack.c.l.b16 %v1757
    %v1877 = vunpack.c.h.b16 %v1757
    %v1878 = vunpack.c.l.b16 %v1758
    %v1879 = vunpack.c.h.b16 %v1758
    %v1880 = vunpack.c.l.b16 %v1759
    %v1881 = vunpack.c.h.b16 %v1759
    %v1882 = vunpack.c.l.b16 %v1760
    %v1883 = vunpack.c.h.b16 %v1760
    %v1884 = vunpack.c.l.b16 %v1761
    %v1885 = vunpack.c.h.b16 %v1761
    %v1886 = vunpack.c.l.b16 %v1762
    %v1887 = vunpack.c.h.b16 %v1762
    %v1888 = vunpack.c.l.b16 %v1763
    %v1889 = vunpack.c.h.b16 %v1763
    %v1890 = vunpack.c.l.b16 %v1764
    %v1891 = vunpack.c.h.b16 %v1764
    %v1892 = vunpack.c.l.b16 %v1765
    %v1893 = vunpack.c.h.b16 %v1765
    %v1894 = vunpack.c.l.b16 %v1766
    %v1895 = vunpack.c.h.b16 %v1766
    %v1896 = vunpack.c.l.b16 %v1767
    %v1897 = vunpack.c.h.b16 %v1767
    %v1898 = vunpack.c.l.b16 %v1768
    %v1899 = vunpack.c.h.b16 %v1768
    %v1900 = vunpack.c.l.b16 %v1769
    %v1901 = vunpack.c.h.b16 %v1769
    %v1902 = vunpack.c.l.b16 %v1770
    %v1903 = vunpack.c.h.b16 %v1770
    %v1904 = vunpack.c.l.b16 %v1771
    %v1905 = vunpack.c.h.b16 %v1771
    %v1906 = vunpack.c.l.b16 %v1772
    %v1907 = vunpack.c.h.b16 %v1772
    %v1908 = vunpack.c.l.b16 %v1773
    %v1909 = vunpack.c.h.b16 %v1773
    %v1910 = vunpack.c.l.b16 %v1774
    %v1911 = vunpack.c.h.b16 %v1774
    %v1912 = vunpack.c.l.b16 %v1775
    %v1913 = vunpack.c.h.b16 %v1775
    %v1914 = vunpack.c.l.b16 %v1776
    %v1915 = vunpack.c.h.b16 %v1776
    %v1916 = vunpack.c.l.b16 %v1777
    %v1917 = vunpack.c.h.b16 %v1777
    %v1918 = vunpack.c.l.b16 %v1778
    %v1919 = vunpack.c.h.b16 %v1778
    %v1920 = vunpack.c.l.b16 %v1779
    %v1921 = vunpack.c.h.b16 %v1779
    %v1922 = vunpack.c.l.b16 %v1780
    %v1923 = vunpack.c.h.b16 %v1780
    %v1924 = vunpack.c.l.b16 %v1781
    %v1925 = vunpack.c.h.b16 %v1781
    %v1926 = vunpack.c.l.b16 %v1782
    %v1927 = vunpack.c.h.b16 %v1782
    %v1928 = vunpack.c.l.b16 %v1783
    %v1929 = vunpack.c.h.b16 %v1783
    %v1930 = vunpack.c.l.b16 %v1784
    %v1931 = vunpack.c.h.b16 %v1784
    %v1932 = vunpack.c.l.b16 %v1785
    %v1933 = vunpack.c.h.b16 %v1785
    %v1934 = vunpack.c.l.b16 %v1786
    %v1935 = vunpack.c.h.b16 %v1786
    %v1936 = vunpack.c.l.b16 %v1787
    %v1937 = vunpack.c.h.b16 %v1787
    %v1938 = vpack.c.b16 %v1844, %v1842
    %v1939 = vpack.c.b16 %v1845, %v1843
    %v1940 = vpack.c.b16 %v1848, %v1846
    %v1941 = vpack.c.b16 %v1849, %v1847
    %v1942 = vpack.c.b16 %v1852, %v1850
    %v1943 = vpack.c.b16 %v1853, %v1851
    %v1944 = vpack.c.b16 %v1856, %v1854
    %v1945 = vpack.c.b16 %v1857, %v1855
    %v1946 = vpack.c.b16 %v1860, %v1858
    %v1947 = vpack.c.b16 %v1861, %v1859
    %v1948 = vpack.c.b16 %v1864, %v1862
    %v1949 = vpack.c.b16 %v1865, %v1863
    %v1950 = vpack.c.b16 %v1868, %v1866
    %v1951 = vpack.c.b16 %v1869, %v1867
    %v1952 = vpack.c.b16 %v1872, %v1870
    %v1953 = vpack.c.b16 %v1873, %v1871
    %v1954 = vpack.c.b16 %v1876, %v1874
    %v1955 = vpack.c.b16 %v1877, %v1875
    %v1956 = vpack.c.b16 %v1880, %v1878
    %v1957 = vpack.c.b16 %v1881, %v1879
    %v1958 = vpack.c.b16 %v1884, %v1882
    %v1959 = vpack.c.b16 %v1885, %v1883
    %v1960 = vpack.c.b16 %v1888, %v1886
    %v1961 = vpack.c.b16 %v1889, %v1887
    %v1962 = vpack.c.b16 %v1892, %v1890
    %v1963 = vpack.c.b16 %v1893, %v1891
    %v1964 = vpack.c.b16 %v1896, %v1894
    %v1965 = vpack.c.b16 %v1897, %v1895
    %v1966 = vpack.c.b16 %v1900, %v1898
    %v1967 = vpack.c.b16 %v1901, %v1899
    %v1968 = vpack.c.b16 %v1904, %v1902
    %v1969 = vpack.c.b16 %v1905, %v1903
    %v1970 = vpack.c.b16 %v1908, %v1906
    %v1971 = vpack.c.b16 %v1909, %v1907
    %v1972 = vpack.c.b16 %v1912, %v1910
    %v1973 = vpack.c.b16 %v1913, %v1911
    %v1974 = vpack.c.b16 %v1916, %v1914
    %v1975 = vpack.c.b16 %v1917, %v1915
    %v1976 = vpack.c.b16 %v1920, %v1918
    %v1977 = vpack.c.b16 %v1921, %v1919
    %v1978 = vpack.c.b16 %v1924, %v1922
    %v1979 = vpack.c.b16 %v1925, %v1923
    %v1980 = vpack.c.b16 %v1928, %v1926
    %v1981 = vpack.c.b16 %v1929, %v1927
    %v1982 = vpack.c.b16 %v1932, %v1930
    %v1983 = vpack.c.b16 %v1933, %v1931
    %v1984 = vpack.c.b16 %v1936, %v1934
    %v1985 = vpack.c.b16 %v1937, %v1935
    %2034 = vmatpush.bf16.msra.mxu0 %v1952
    %2035 = vmatpush.bf16.msra.mxu0 %v1950
    %2036 = vmatpush.bf16.msra.mxu0 %v1948
    %2037 = vmatpush.bf16.msra.mxu0 %v1946
    %2038 = vmatpush.bf16.msra.mxu0 %v1944
    %2039 = vmatpush.bf16.msra.mxu0 %v1942
    %2040 = vmatpush.bf16.msra.mxu0 %v1940
    %2041 = vmatpush.bf16.msra.mxu0 %v1938
    %2042 = vmatmul.bf16.gmra.mxu0 %v1737
    %v2043 = vpop.f32.mrf.mxu0
    %v2044 = vadd.f32 %v1790, %v2043
    %v2045 = vpop.f32.mrf.mxu0
    %v2046 = vadd.f32 %v1790, %v2045
    %2047 = vdwg.mxu0
    %2048 = vmatpush.bf16.msra.mxu0 %v1968
    %2049 = vmatpush.bf16.msra.mxu0 %v1966
    %2050 = vmatpush.bf16.msra.mxu0 %v1964
    %2051 = vmatpush.bf16.msra.mxu0 %v1962
    %2052 = vmatpush.bf16.msra.mxu0 %v1960
    %2053 = vmatpush.bf16.msra.mxu0 %v1958
    %2054 = vmatpush.bf16.msra.mxu0 %v1956
    %2055 = vmatpush.bf16.msra.mxu0 %v1954
    %2056 = vmatmul.bf16.gmra.mxu0 %v1738
    %v2057 = vpop.f32.mrf.mxu0
    %v2058 = vadd.f32 %v2044, %v2057
    %v2059 = vpop.f32.mrf.mxu0
    %v2060 = vadd.f32 %v2046, %v2059
    %2061 = vdwg.mxu0
    %2062 = vmatpush.bf16.msra.mxu0 %v1984
    %2063 = vmatpush.bf16.msra.mxu0 %v1982
    %2064 = vmatpush.bf16.msra.mxu0 %v1980
    %2065 = vmatpush.bf16.msra.mxu0 %v1978
    %2066 = vmatpush.bf16.msra.mxu0 %v1976
    %2067 = vmatpush.bf16.msra.mxu0 %v1974
    %2068 = vmatpush.bf16.msra.mxu0 %v1972
    %2069 = vmatpush.bf16.msra.mxu0 %v1970
    %2070 = vmatmul.bf16.gmra.mxu0 %v1739
    %v2071 = vpop.f32.mrf.mxu0
    %v2072 = vadd.f32 %v2058, %v2071
    %v2073 = vpop.f32.mrf.mxu0
    %v2074 = vadd.f32 %v2060, %v2073
    %2075 = vdwg.mxu0
    %2076 = vmatpush.bf16.msra.mxu0 %v1953
    %2077 = vmatpush.bf16.msra.mxu0 %v1951
    %2078 = vmatpush.bf16.msra.mxu0 %v1949
    %2079 = vmatpush.bf16.msra.mxu0 %v1947
    %2080 = vmatpush.bf16.msra.mxu0 %v1945
    %2081 = vmatpush.bf16.msra.mxu0 %v1943
    %2082 = vmatpush.bf16.msra.mxu0 %v1941
    %2083 = vmatpush.bf16.msra.mxu0 %v1939
    %2084 = vmatmul.bf16.gmra.mxu0 %v1737
    %v2085 = vpop.f32.mrf.mxu0
    %v2086 = vadd.f32 %v1791, %v2085
    %v2087 = vpop.f32.mrf.mxu0
    %v2088 = vadd.f32 %v1791, %v2087
    %2089 = vdwg.mxu0
    %2090 = vmatpush.bf16.msra.mxu0 %v1969
    %2091 = vmatpush.bf16.msra.mxu0 %v1967
    %2092 = vmatpush.bf16.msra.mxu0 %v1965
    %2093 = vmatpush.bf16.msra.mxu0 %v1963
    %2094 = vmatpush.bf16.msra.mxu0 %v1961
    %2095 = vmatpush.bf16.msra.mxu0 %v1959
    %2096 = vmatpush.bf16.msra.mxu0 %v1957
    %2097 = vmatpush.bf16.msra.mxu0 %v1955
    %2098 = vmatmul.bf16.gmra.mxu0 %v1738
    %v2099 = vpop.f32.mrf.mxu0
    %v2100 = vadd.f32 %v2086, %v2099
    %v2101 = vpop.f32.mrf.mxu0
    %v2102 = vadd.f32 %v2088, %v2101
    %2103 = vdwg.mxu0
    %2104 = vmatpush.bf16.msra.mxu0 %v1985
    %2105 = vmatpush.bf16.msra.mxu0 %v1983
    %2106 = vmatpush.bf16.msra.mxu0 %v1981
    %2107 = vmatpush.bf16.msra.mxu0 %v1979
    %2108 = vmatpush.bf16.msra.mxu0 %v1977
    %2109 = vmatpush.bf16.msra.mxu0 %v1975
    %2110 = vmatpush.bf16.msra.mxu0 %v1973
    %2111 = vmatpush.bf16.msra.mxu0 %v1971
    %2112 = vmatmul.bf16.gmra.mxu0 %v1739
    %v2113 = vpop.f32.mrf.mxu0
    %v2114 = vadd.f32 %v2100, %v2113
    %v2115 = vpop.f32.mrf.mxu0
    %v2116 = vadd.f32 %v2102, %v2115
    %2117 = vdwg.mxu0
    %vm2118 = vcmp.gt.f32.partialorder %v2072, 0.0
    %vm2119 = vcmp.gt.f32.partialorder %v2114, 0.0
    %vm2120 = vcmp.gt.f32.partialorder %v2074, 0.0
    %vm2121 = vcmp.gt.f32.partialorder %v2116, 0.0
    %v2122 = vmin.f32 %v2072, 0.0
    %v2123 = vmin.f32 %v2114, 0.0
    %v2124 = vmin.f32 %v2074, 0.0
    %v2125 = vmin.f32 %v2116, 0.0
    %v2126 = vmul.f32 %v2122, 1.442695
    %v2127 = vpow.pop %v2126
    %v2128 = vmul.f32 %v2123, 1.442695
    %v2129 = vpow.pop %v2128
    %v2130 = vmul.f32 %v2124, 1.442695
    %v2131 = vpow.pop %v2130
    %v2132 = vmul.f32 %v2125, 1.442695
    %v2133 = vpow.pop %v2132
    %v2134 = vsub.f32 %v2127, 1.0
    %v2135 = vsub.f32 %v2129, 1.0
    %v2136 = vsub.f32 %v2131, 1.0
    %v2137 = vsub.f32 %v2133, 1.0
    %v2138 = vsel %vm2118, %v2072, %v2134
    %v2139 = vsel %vm2119, %v2114, %v2135
    %v2140 = vsel %vm2120, %v2074, %v2136
    %v2141 = vsel %vm2121, %v2116, %v2137
    %v2142 = vpack.c.bf16 %v2140, %v2138
    %v2143 = vpack.c.bf16 %v2141, %v2139
    %v2144 = vld [vmem:[#allocation12] sm:$0xff]
    %v2145 = vld [vmem:[#allocation12 + $0x8] sm:$0xff]
    %v2146 = vld [vmem:[#allocation12 + $0x10] sm:$0xff]
    %v2147 = vld [vmem:[#allocation12 + $0x18] sm:$0xff]
    %v2148 = vld [vmem:[#allocation12 + $0x20] sm:$0xff]
    %v2149 = vld [vmem:[#allocation12 + $0x28] sm:$0xff]
    %v2150 = vld [vmem:[#allocation12 + $0x30] sm:$0xff]
    %v2151 = vld [vmem:[#allocation12 + $0x38] sm:$0xff]
    %v2152 = vld [vmem:[#allocation12 + $0x40] sm:$0xff]
    %v2153 = vld [vmem:[#allocation12 + $0x48] sm:$0xff]
    %v2154 = vld [vmem:[#allocation12 + $0x50] sm:$0xff]
    %v2155 = vld [vmem:[#allocation12 + $0x58] sm:$0xff]
    %v2156 = vld [vmem:[#allocation12 + $0x60] sm:$0xff]
    %v2157 = vld [vmem:[#allocation12 + $0x68] sm:$0xff]
    %v2158 = vld [vmem:[#allocation12 + $0x70] sm:$0xff]
    %v2159 = vld [vmem:[#allocation12 + $0x78] sm:$0xff]
    %v2160 = vld [vmem:[#allocation12 + $0x80] sm:$0xff]
    %v2161 = vld [vmem:[#allocation12 + $0x88] sm:$0xff]
    %v2162 = vld [vmem:[#allocation12 + $0x90] sm:$0xff]
    %v2163 = vld [vmem:[#allocation12 + $0x98] sm:$0xff]
    %v2164 = vld [vmem:[#allocation12 + $0xa0] sm:$0xff]
    %v2165 = vld [vmem:[#allocation12 + $0xa8] sm:$0xff]
    %v2166 = vld [vmem:[#allocation12 + $0xb0] sm:$0xff]
    %v2167 = vld [vmem:[#allocation12 + $0xb8] sm:$0xff]
    %v2168 = vld [vmem:[#allocation12 + $0xc0] sm:$0xff]
    %v2169 = vld [vmem:[#allocation12 + $0xc8] sm:$0xff]
    %v2170 = vld [vmem:[#allocation12 + $0xd0] sm:$0xff]
    %v2171 = vld [vmem:[#allocation12 + $0xd8] sm:$0xff]
    %v2172 = vld [vmem:[#allocation12 + $0xe0] sm:$0xff]
    %v2173 = vld [vmem:[#allocation12 + $0xe8] sm:$0xff]
    %v2174 = vld [vmem:[#allocation12 + $0xf0] sm:$0xff]
    %v2175 = vld [vmem:[#allocation12 + $0xf8] sm:$0xff]
    %v2176 = vld [vmem:[%s9] sm:$0x3]
    %v2178 = vperm.slane %v2176, 0
    %v2179 = vperm.slane %v2176, 1
    %v2214 = vunpack.c.l.b16 %v2144
    %v2215 = vunpack.c.h.b16 %v2144
    %v2216 = vunpack.c.l.b16 %v2145
    %v2217 = vunpack.c.h.b16 %v2145
    %v2218 = vunpack.c.l.b16 %v2146
    %v2219 = vunpack.c.h.b16 %v2146
    %v2220 = vunpack.c.l.b16 %v2147
    %v2221 = vunpack.c.h.b16 %v2147
    %v2222 = vunpack.c.l.b16 %v2148
    %v2223 = vunpack.c.h.b16 %v2148
    %v2224 = vunpack.c.l.b16 %v2149
    %v2225 = vunpack.c.h.b16 %v2149
    %v2226 = vunpack.c.l.b16 %v2150
    %v2227 = vunpack.c.h.b16 %v2150
    %v2228 = vunpack.c.l.b16 %v2151
    %v2229 = vunpack.c.h.b16 %v2151
    %v2230 = vunpack.c.l.b16 %v2152
    %v2231 = vunpack.c.h.b16 %v2152
    %v2232 = vunpack.c.l.b16 %v2153
    %v2233 = vunpack.c.h.b16 %v2153
    %v2234 = vunpack.c.l.b16 %v2154
    %v2235 = vunpack.c.h.b16 %v2154
    %v2236 = vunpack.c.l.b16 %v2155
    %v2237 = vunpack.c.h.b16 %v2155
    %v2238 = vunpack.c.l.b16 %v2156
    %v2239 = vunpack.c.h.b16 %v2156
    %v2240 = vunpack.c.l.b16 %v2157
    %v2241 = vunpack.c.h.b16 %v2157
    %v2242 = vunpack.c.l.b16 %v2158
    %v2243 = vunpack.c.h.b16 %v2158
    %v2244 = vunpack.c.l.b16 %v2159
    %v2245 = vunpack.c.h.b16 %v2159
    %v2246 = vunpack.c.l.b16 %v2160
    %v2247 = vunpack.c.h.b16 %v2160
    %v2248 = vunpack.c.l.b16 %v2161
    %v2249 = vunpack.c.h.b16 %v2161
    %v2250 = vunpack.c.l.b16 %v2162
    %v2251 = vunpack.c.h.b16 %v2162
    %v2252 = vunpack.c.l.b16 %v2163
    %v2253 = vunpack.c.h.b16 %v2163
    %v2254 = vunpack.c.l.b16 %v2164
    %v2255 = vunpack.c.h.b16 %v2164
    %v2256 = vunpack.c.l.b16 %v2165
    %v2257 = vunpack.c.h.b16 %v2165
    %v2258 = vunpack.c.l.b16 %v2166
    %v2259 = vunpack.c.h.b16 %v2166
    %v2260 = vunpack.c.l.b16 %v2167
    %v2261 = vunpack.c.h.b16 %v2167
    %v2262 = vunpack.c.l.b16 %v2168
    %v2263 = vunpack.c.h.b16 %v2168
    %v2264 = vunpack.c.l.b16 %v2169
    %v2265 = vunpack.c.h.b16 %v2169
    %v2266 = vunpack.c.l.b16 %v2170
    %v2267 = vunpack.c.h.b16 %v2170
    %v2268 = vunpack.c.l.b16 %v2171
    %v2269 = vunpack.c.h.b16 %v2171
    %v2270 = vunpack.c.l.b16 %v2172
    %v2271 = vunpack.c.h.b16 %v2172
    %v2272 = vunpack.c.l.b16 %v2173
    %v2273 = vunpack.c.h.b16 %v2173
    %v2274 = vunpack.c.l.b16 %v2174
    %v2275 = vunpack.c.h.b16 %v2174
    %v2276 = vunpack.c.l.b16 %v2175
    %v2277 = vunpack.c.h.b16 %v2175
    %v2278 = vpack.c.b16 %v2216, %v2214
    %v2279 = vpack.c.b16 %v2217, %v2215
    %v2280 = vpack.c.b16 %v2220, %v2218
    %v2281 = vpack.c.b16 %v2221, %v2219
    %v2282 = vpack.c.b16 %v2224, %v2222
    %v2283 = vpack.c.b16 %v2225, %v2223
    %v2284 = vpack.c.b16 %v2228, %v2226
    %v2285 = vpack.c.b16 %v2229, %v2227
    %v2286 = vpack.c.b16 %v2232, %v2230
    %v2287 = vpack.c.b16 %v2233, %v2231
    %v2288 = vpack.c.b16 %v2236, %v2234
    %v2289 = vpack.c.b16 %v2237, %v2235
    %v2290 = vpack.c.b16 %v2240, %v2238
    %v2291 = vpack.c.b16 %v2241, %v2239
    %v2292 = vpack.c.b16 %v2244, %v2242
    %v2293 = vpack.c.b16 %v2245, %v2243
    %v2294 = vpack.c.b16 %v2248, %v2246
    %v2295 = vpack.c.b16 %v2249, %v2247
    %v2296 = vpack.c.b16 %v2252, %v2250
    %v2297 = vpack.c.b16 %v2253, %v2251
    %v2298 = vpack.c.b16 %v2256, %v2254
    %v2299 = vpack.c.b16 %v2257, %v2255
    %v2300 = vpack.c.b16 %v2260, %v2258
    %v2301 = vpack.c.b16 %v2261, %v2259
    %v2302 = vpack.c.b16 %v2264, %v2262
    %v2303 = vpack.c.b16 %v2265, %v2263
    %v2304 = vpack.c.b16 %v2268, %v2266
    %v2305 = vpack.c.b16 %v2269, %v2267
    %v2306 = vpack.c.b16 %v2272, %v2270
    %v2307 = vpack.c.b16 %v2273, %v2271
    %v2308 = vpack.c.b16 %v2276, %v2274
    %v2309 = vpack.c.b16 %v2277, %v2275
    %2342 = vmatpush.bf16.msra.mxu0 %v2292
    %2343 = vmatpush.bf16.msra.mxu0 %v2290
    %2344 = vmatpush.bf16.msra.mxu0 %v2288
    %2345 = vmatpush.bf16.msra.mxu0 %v2286
    %2346 = vmatpush.bf16.msra.mxu0 %v2284
    %2347 = vmatpush.bf16.msra.mxu0 %v2282
    %2348 = vmatpush.bf16.msra.mxu0 %v2280
    %2349 = vmatpush.bf16.msra.mxu0 %v2278
    %2350 = vmatmul.bf16.gmra.mxu0 %v2142
    %v2351 = vpop.f32.mrf.mxu0
    %v2352 = vadd.f32 %v2178, %v2351
    %v2353 = vpop.f32.mrf.mxu0
    %v2354 = vadd.f32 %v2178, %v2353
    %2355 = vdwg.mxu0
    %2356 = vmatpush.bf16.msra.mxu0 %v2308
    %2357 = vmatpush.bf16.msra.mxu0 %v2306
    %2358 = vmatpush.bf16.msra.mxu0 %v2304
    %2359 = vmatpush.bf16.msra.mxu0 %v2302
    %2360 = vmatpush.bf16.msra.mxu0 %v2300
    %2361 = vmatpush.bf16.msra.mxu0 %v2298
    %2362 = vmatpush.bf16.msra.mxu0 %v2296
    %2363 = vmatpush.bf16.msra.mxu0 %v2294
    %2364 = vmatmul.bf16.gmra.mxu0 %v2143
    %v2365 = vpop.f32.mrf.mxu0
    %v2366 = vadd.f32 %v2352, %v2365
    %v2367 = vpop.f32.mrf.mxu0
    %v2368 = vadd.f32 %v2354, %v2367
    %2369 = vdwg.mxu0
    %2370 = vmatpush.bf16.msra.mxu0 %v2293
    %2371 = vmatpush.bf16.msra.mxu0 %v2291
    %2372 = vmatpush.bf16.msra.mxu0 %v2289
    %2373 = vmatpush.bf16.msra.mxu0 %v2287
    %2374 = vmatpush.bf16.msra.mxu0 %v2285
    %2375 = vmatpush.bf16.msra.mxu0 %v2283
    %2376 = vmatpush.bf16.msra.mxu0 %v2281
    %2377 = vmatpush.bf16.msra.mxu0 %v2279
    %2378 = vmatmul.bf16.gmra.mxu0 %v2142
    %v2379 = vpop.f32.mrf.mxu0
    %v2380 = vadd.f32 %v2179, %v2379
    %v2381 = vpop.f32.mrf.mxu0
    %v2382 = vadd.f32 %v2179, %v2381
    %2383 = vdwg.mxu0
    %2384 = vmatpush.bf16.msra.mxu0 %v2309
    %2385 = vmatpush.bf16.msra.mxu0 %v2307
    %2386 = vmatpush.bf16.msra.mxu0 %v2305
    %2387 = vmatpush.bf16.msra.mxu0 %v2303
    %2388 = vmatpush.bf16.msra.mxu0 %v2301
    %2389 = vmatpush.bf16.msra.mxu0 %v2299
    %2390 = vmatpush.bf16.msra.mxu0 %v2297
    %2391 = vmatpush.bf16.msra.mxu0 %v2295
    %2392 = vmatmul.bf16.gmra.mxu0 %v2143
    %v2393 = vpop.f32.mrf.mxu0
    %v2394 = vadd.f32 %v2380, %v2393
    %v2395 = vpop.f32.mrf.mxu0
    %v2396 = vadd.f32 %v2382, %v2395
    %2397 = vdwg.mxu0
    %vm2398 = vcmp.gt.f32.partialorder %v2366, 0.0
    %vm2399 = vcmp.gt.f32.partialorder %v2394, 0.0
    %vm2400 = vcmp.gt.f32.partialorder %v2368, 0.0
    %vm2401 = vcmp.gt.f32.partialorder %v2396, 0.0
    %v2402 = vmin.f32 %v2366, 0.0
    %v2403 = vmin.f32 %v2394, 0.0
    %v2404 = vmin.f32 %v2368, 0.0
    %v2405 = vmin.f32 %v2396, 0.0
    %v2406 = vmul.f32 %v2402, 1.442695
    %v2407 = vpow.pop %v2406
    %v2408 = vmul.f32 %v2403, 1.442695
    %v2409 = vpow.pop %v2408
    %v2410 = vmul.f32 %v2404, 1.442695
    %v2411 = vpow.pop %v2410
    %v2412 = vmul.f32 %v2405, 1.442695
    %v2413 = vpow.pop %v2412
    %v2414 = vsub.f32 %v2407, 1.0
    %v2415 = vsub.f32 %v2409, 1.0
    %v2416 = vsub.f32 %v2411, 1.0
    %v2417 = vsub.f32 %v2413, 1.0
    %v2418 = vsel %vm2398, %v2366, %v2414
    %v2419 = vsel %vm2399, %v2394, %v2415
    %v2420 = vsel %vm2400, %v2368, %v2416
    %v2421 = vsel %vm2401, %v2396, %v2417
    %v2422 = vld [vmem:[%s1] sm:$0xff]
    %s2423 = smul.u32 4, 32
    %s2424 = smul.u32 %s2423, 8
    %s2425 = sshll.u32 %s2424, 4
    %2426 = dma.done [#allocation6], %s2425
    %s2427 = sshll.u32 %s2424, 4
    %2428 = dma.done %s235, %s2427
    %s2429 = sshll.u32 %s2424, 4
    %2430 = dma.done %s249, %s2429
    %s2431 = sshll.u32 %s2424, 4
    %2432 = dma.done %s263, %s2431
    %v2433 = vld [vmem:[%s27] sm:$0x3]
    %v2435 = vperm.slane %v2433, 0
    %v2436 = vperm.slane %v2433, 1
    %v2439 = vld [vmem:[%s26] sm:$0x3]
    %v2441 = vperm.slane %v2439, 0
    %v2442 = vperm.slane %v2439, 1
    %v2445 = vrot.slane %v2418, 2
    %v2446 = vrot.slane %v2419, 2
    %vm2449 = vcmask 1041408
    %v2450 = vsel %vm2449, %v2418, %v2445
    %v2451 = vsel %vm2449, %v2419, %v2446
    %v2452 = vrot.slane %v2418, 4
    %v2453 = vrot.slane %v2419, 4
    %v2456 = vsel %vm2449, %v2445, %v2452
    %v2457 = vsel %vm2449, %v2446, %v2453
    %v2460 = vrot.slane %v2456, 4
    %v2461 = vrot.slane %v2457, 4
    %vm2464 = vcmask 1043456
    %v2465 = vsel %vm2464, %v2450, %v2460
    %v2466 = vsel %vm2464, %v2451, %v2461
    %v2467 = vpack.c.bf16 %v2465, %v2465
    %v2468 = vpack.c.bf16 %v2466, %v2466
    %v2469 = vld [vmem:[#allocation2] sm:$0xff]
    %v2470 = vld [vmem:[#allocation2 + $0x8] sm:$0xff]
    %v2471 = vld [vmem:[#allocation2 + $0x10] sm:$0xff]
    %v2472 = vld [vmem:[#allocation2 + $0x18] sm:$0xff]
    %v2473 = vld [vmem:[#allocation2 + $0x20] sm:$0xff]
    %v2474 = vld [vmem:[#allocation2 + $0x28] sm:$0xff]
    %v2475 = vld [vmem:[#allocation2 + $0x30] sm:$0xff]
    %v2476 = vld [vmem:[#allocation2 + $0x38] sm:$0xff]
    %v2477 = vld [vmem:[#allocation2 + $0x40] sm:$0xff]
    %v2478 = vld [vmem:[#allocation2 + $0x48] sm:$0xff]
    %v2479 = vld [vmem:[#allocation2 + $0x50] sm:$0xff]
    %v2480 = vld [vmem:[#allocation2 + $0x58] sm:$0xff]
    %v2481 = vld [vmem:[#allocation2 + $0x60] sm:$0xff]
    %v2482 = vld [vmem:[#allocation2 + $0x68] sm:$0xff]
    %v2483 = vld [vmem:[#allocation2 + $0x70] sm:$0xff]
    %v2484 = vld [vmem:[#allocation2 + $0x78] sm:$0xff]
    %v2485 = vld [vmem:[#allocation2 + $0x80] sm:$0xff]
    %v2486 = vld [vmem:[#allocation2 + $0x88] sm:$0xff]
    %v2487 = vld [vmem:[#allocation2 + $0x90] sm:$0xff]
    %v2488 = vld [vmem:[#allocation2 + $0x98] sm:$0xff]
    %v2489 = vld [vmem:[#allocation2 + $0xa0] sm:$0xff]
    %v2490 = vld [vmem:[#allocation2 + $0xa8] sm:$0xff]
    %v2491 = vld [vmem:[#allocation2 + $0xb0] sm:$0xff]
    %v2492 = vld [vmem:[#allocation2 + $0xb8] sm:$0xff]
    %v2493 = vld [vmem:[#allocation2 + $0xc0] sm:$0xff]
    %v2494 = vld [vmem:[#allocation2 + $0xc8] sm:$0xff]
    %v2495 = vld [vmem:[#allocation2 + $0xd0] sm:$0xff]
    %v2496 = vld [vmem:[#allocation2 + $0xd8] sm:$0xff]
    %v2497 = vld [vmem:[#allocation2 + $0xe0] sm:$0xff]
    %v2498 = vld [vmem:[#allocation2 + $0xe8] sm:$0xff]
    %v2499 = vld [vmem:[#allocation2 + $0xf0] sm:$0xff]
    %v2500 = vld [vmem:[#allocation2 + $0xf8] sm:$0xff]
    %v2501 = vld [vmem:[#allocation2 + $0x100] sm:$0xff]
    %v2502 = vld [vmem:[#allocation2 + $0x108] sm:$0xff]
    %v2503 = vld [vmem:[#allocation2 + $0x110] sm:$0xff]
    %v2504 = vld [vmem:[#allocation2 + $0x118] sm:$0xff]
    %v2505 = vld [vmem:[#allocation2 + $0x120] sm:$0xff]
    %v2506 = vld [vmem:[#allocation2 + $0x128] sm:$0xff]
    %v2507 = vld [vmem:[#allocation2 + $0x130] sm:$0xff]
    %v2508 = vld [vmem:[#allocation2 + $0x138] sm:$0xff]
    %v2509 = vld [vmem:[#allocation2 + $0x140] sm:$0xff]
    %v2510 = vld [vmem:[#allocation2 + $0x148] sm:$0xff]
    %v2511 = vld [vmem:[#allocation2 + $0x150] sm:$0xff]
    %v2512 = vld [vmem:[#allocation2 + $0x158] sm:$0xff]
    %v2513 = vld [vmem:[#allocation2 + $0x160] sm:$0xff]
    %v2514 = vld [vmem:[#allocation2 + $0x168] sm:$0xff]
    %v2515 = vld [vmem:[#allocation2 + $0x170] sm:$0xff]
    %v2516 = vld [vmem:[#allocation2 + $0x178] sm:$0xff]
    %v2517 = vld [vmem:[#allocation2 + $0x180] sm:$0xff]
    %v2518 = vld [vmem:[#allocation2 + $0x188] sm:$0xff]
    %v2519 = vld [vmem:[#allocation2 + $0x190] sm:$0xff]
    %v2520 = vld [vmem:[#allocation2 + $0x198] sm:$0xff]
    %v2521 = vld [vmem:[#allocation2 + $0x1a0] sm:$0xff]
    %v2522 = vld [vmem:[#allocation2 + $0x1a8] sm:$0xff]
    %v2523 = vld [vmem:[#allocation2 + $0x1b0] sm:$0xff]
    %v2524 = vld [vmem:[#allocation2 + $0x1b8] sm:$0xff]
    %v2525 = vld [vmem:[#allocation2 + $0x1c0] sm:$0xff]
    %v2526 = vld [vmem:[#allocation2 + $0x1c8] sm:$0xff]
    %v2527 = vld [vmem:[#allocation2 + $0x1d0] sm:$0xff]
    %v2528 = vld [vmem:[#allocation2 + $0x1d8] sm:$0xff]
    %v2529 = vld [vmem:[#allocation2 + $0x1e0] sm:$0xff]
    %v2530 = vld [vmem:[#allocation2 + $0x1e8] sm:$0xff]
    %v2531 = vld [vmem:[#allocation2 + $0x1f0] sm:$0xff]
    %v2532 = vld [vmem:[#allocation2 + $0x1f8] sm:$0xff]
    %v2533 = vld [vmem:[#allocation2 + $0x200] sm:$0xff]
    %v2534 = vld [vmem:[#allocation2 + $0x208] sm:$0xff]
    %v2535 = vld [vmem:[#allocation2 + $0x210] sm:$0xff]
    %v2536 = vld [vmem:[#allocation2 + $0x218] sm:$0xff]
    %v2537 = vld [vmem:[#allocation2 + $0x220] sm:$0xff]
    %v2538 = vld [vmem:[#allocation2 + $0x228] sm:$0xff]
    %v2539 = vld [vmem:[#allocation2 + $0x230] sm:$0xff]
    %v2540 = vld [vmem:[#allocation2 + $0x238] sm:$0xff]
    %v2541 = vld [vmem:[#allocation2 + $0x240] sm:$0xff]
    %v2542 = vld [vmem:[#allocation2 + $0x248] sm:$0xff]
    %v2543 = vld [vmem:[#allocation2 + $0x250] sm:$0xff]
    %v2544 = vld [vmem:[#allocation2 + $0x258] sm:$0xff]
    %v2545 = vld [vmem:[#allocation2 + $0x260] sm:$0xff]
    %v2546 = vld [vmem:[#allocation2 + $0x268] sm:$0xff]
    %v2547 = vld [vmem:[#allocation2 + $0x270] sm:$0xff]
    %v2548 = vld [vmem:[#allocation2 + $0x278] sm:$0xff]
    %v2549 = vld [vmem:[#allocation2 + $0x280] sm:$0xff]
    %v2550 = vld [vmem:[#allocation2 + $0x288] sm:$0xff]
    %v2551 = vld [vmem:[#allocation2 + $0x290] sm:$0xff]
    %v2552 = vld [vmem:[#allocation2 + $0x298] sm:$0xff]
    %v2553 = vld [vmem:[#allocation2 + $0x2a0] sm:$0xff]
    %v2554 = vld [vmem:[#allocation2 + $0x2a8] sm:$0xff]
    %v2555 = vld [vmem:[#allocation2 + $0x2b0] sm:$0xff]
    %v2556 = vld [vmem:[#allocation2 + $0x2b8] sm:$0xff]
    %v2557 = vld [vmem:[#allocation2 + $0x2c0] sm:$0xff]
    %v2558 = vld [vmem:[#allocation2 + $0x2c8] sm:$0xff]
    %v2559 = vld [vmem:[#allocation2 + $0x2d0] sm:$0xff]
    %v2560 = vld [vmem:[#allocation2 + $0x2d8] sm:$0xff]
    %v2561 = vld [vmem:[#allocation2 + $0x2e0] sm:$0xff]
    %v2562 = vld [vmem:[#allocation2 + $0x2e8] sm:$0xff]
    %v2563 = vld [vmem:[#allocation2 + $0x2f0] sm:$0xff]
    %v2564 = vld [vmem:[#allocation2 + $0x2f8] sm:$0xff]
    %v2565 = vld [vmem:[#allocation2 + $0x300] sm:$0xff]
    %v2566 = vld [vmem:[#allocation2 + $0x308] sm:$0xff]
    %v2567 = vld [vmem:[#allocation2 + $0x310] sm:$0xff]
    %v2568 = vld [vmem:[#allocation2 + $0x318] sm:$0xff]
    %v2569 = vld [vmem:[#allocation2 + $0x320] sm:$0xff]
    %v2570 = vld [vmem:[#allocation2 + $0x328] sm:$0xff]
    %v2571 = vld [vmem:[#allocation2 + $0x330] sm:$0xff]
    %v2572 = vld [vmem:[#allocation2 + $0x338] sm:$0xff]
    %v2573 = vld [vmem:[#allocation2 + $0x340] sm:$0xff]
    %v2574 = vld [vmem:[#allocation2 + $0x348] sm:$0xff]
    %v2575 = vld [vmem:[#allocation2 + $0x350] sm:$0xff]
    %v2576 = vld [vmem:[#allocation2 + $0x358] sm:$0xff]
    %v2577 = vld [vmem:[#allocation2 + $0x360] sm:$0xff]
    %v2578 = vld [vmem:[#allocation2 + $0x368] sm:$0xff]
    %v2579 = vld [vmem:[#allocation2 + $0x370] sm:$0xff]
    %v2580 = vld [vmem:[#allocation2 + $0x378] sm:$0xff]
    %v2581 = vld [vmem:[#allocation2 + $0x380] sm:$0xff]
    %v2582 = vld [vmem:[#allocation2 + $0x388] sm:$0xff]
    %v2583 = vld [vmem:[#allocation2 + $0x390] sm:$0xff]
    %v2584 = vld [vmem:[#allocation2 + $0x398] sm:$0xff]
    %v2585 = vld [vmem:[#allocation2 + $0x3a0] sm:$0xff]
    %v2586 = vld [vmem:[#allocation2 + $0x3a8] sm:$0xff]
    %v2587 = vld [vmem:[#allocation2 + $0x3b0] sm:$0xff]
    %v2588 = vld [vmem:[#allocation2 + $0x3b8] sm:$0xff]
    %v2589 = vld [vmem:[#allocation2 + $0x3c0] sm:$0xff]
    %v2590 = vld [vmem:[#allocation2 + $0x3c8] sm:$0xff]
    %v2591 = vld [vmem:[#allocation2 + $0x3d0] sm:$0xff]
    %v2592 = vld [vmem:[#allocation2 + $0x3d8] sm:$0xff]
    %v2593 = vld [vmem:[#allocation2 + $0x3e0] sm:$0xff]
    %v2594 = vld [vmem:[#allocation2 + $0x3e8] sm:$0xff]
    %v2595 = vld [vmem:[#allocation2 + $0x3f0] sm:$0xff]
    %v2596 = vld [vmem:[#allocation2 + $0x3f8] sm:$0xff]
    %v2597 = vld [vmem:[%s22] sm:$0xff]
    %v2599 = vperm.slane %v2597, 0
    %v2600 = vperm.slane %v2597, 1
    %v2601 = vperm.slane %v2597, 2
    %v2602 = vperm.slane %v2597, 3
    %v2603 = vperm.slane %v2597, 4
    %v2604 = vperm.slane %v2597, 5
    %v2605 = vperm.slane %v2597, 6
    %v2606 = vperm.slane %v2597, 7
    %v2743 = vunpack.c.l.b16 %v2469
    %v2744 = vunpack.c.h.b16 %v2469
    %v2745 = vunpack.c.l.b16 %v2470
    %v2746 = vunpack.c.h.b16 %v2470
    %v2747 = vunpack.c.l.b16 %v2471
    %v2748 = vunpack.c.h.b16 %v2471
    %v2749 = vunpack.c.l.b16 %v2472
    %v2750 = vunpack.c.h.b16 %v2472
    %v2751 = vunpack.c.l.b16 %v2473
    %v2752 = vunpack.c.h.b16 %v2473
    %v2753 = vunpack.c.l.b16 %v2474
    %v2754 = vunpack.c.h.b16 %v2474
    %v2755 = vunpack.c.l.b16 %v2475
    %v2756 = vunpack.c.h.b16 %v2475
    %v2757 = vunpack.c.l.b16 %v2476
    %v2758 = vunpack.c.h.b16 %v2476
    %v2759 = vunpack.c.l.b16 %v2477
    %v2760 = vunpack.c.h.b16 %v2477
    %v2761 = vunpack.c.l.b16 %v2478
    %v2762 = vunpack.c.h.b16 %v2478
    %v2763 = vunpack.c.l.b16 %v2479
    %v2764 = vunpack.c.h.b16 %v2479
    %v2765 = vunpack.c.l.b16 %v2480
    %v2766 = vunpack.c.h.b16 %v2480
    %v2767 = vunpack.c.l.b16 %v2481
    %v2768 = vunpack.c.h.b16 %v2481
    %v2769 = vunpack.c.l.b16 %v2482
    %v2770 = vunpack.c.h.b16 %v2482
    %v2771 = vunpack.c.l.b16 %v2483
    %v2772 = vunpack.c.h.b16 %v2483
    %v2773 = vunpack.c.l.b16 %v2484
    %v2774 = vunpack.c.h.b16 %v2484
    %v2775 = vunpack.c.l.b16 %v2485
    %v2776 = vunpack.c.h.b16 %v2485
    %v2777 = vunpack.c.l.b16 %v2486
    %v2778 = vunpack.c.h.b16 %v2486
    %v2779 = vunpack.c.l.b16 %v2487
    %v2780 = vunpack.c.h.b16 %v2487
    %v2781 = vunpack.c.l.b16 %v2488
    %v2782 = vunpack.c.h.b16 %v2488
    %v2783 = vunpack.c.l.b16 %v2489
    %v2784 = vunpack.c.h.b16 %v2489
    %v2785 = vunpack.c.l.b16 %v2490
    %v2786 = vunpack.c.h.b16 %v2490
    %v2787 = vunpack.c.l.b16 %v2491
    %v2788 = vunpack.c.h.b16 %v2491
    %v2789 = vunpack.c.l.b16 %v2492
    %v2790 = vunpack.c.h.b16 %v2492
    %v2791 = vunpack.c.l.b16 %v2493
    %v2792 = vunpack.c.h.b16 %v2493
    %v2793 = vunpack.c.l.b16 %v2494
    %v2794 = vunpack.c.h.b16 %v2494
    %v2795 = vunpack.c.l.b16 %v2495
    %v2796 = vunpack.c.h.b16 %v2495
    %v2797 = vunpack.c.l.b16 %v2496
    %v2798 = vunpack.c.h.b16 %v2496
    %v2799 = vunpack.c.l.b16 %v2497
    %v2800 = vunpack.c.h.b16 %v2497
    %v2801 = vunpack.c.l.b16 %v2498
    %v2802 = vunpack.c.h.b16 %v2498
    %v2803 = vunpack.c.l.b16 %v2499
    %v2804 = vunpack.c.h.b16 %v2499
    %v2805 = vunpack.c.l.b16 %v2500
    %v2806 = vunpack.c.h.b16 %v2500
    %v2807 = vunpack.c.l.b16 %v2501
    %v2808 = vunpack.c.h.b16 %v2501
    %v2809 = vunpack.c.l.b16 %v2502
    %v2810 = vunpack.c.h.b16 %v2502
    %v2811 = vunpack.c.l.b16 %v2503
    %v2812 = vunpack.c.h.b16 %v2503
    %v2813 = vunpack.c.l.b16 %v2504
    %v2814 = vunpack.c.h.b16 %v2504
    %v2815 = vunpack.c.l.b16 %v2505
    %v2816 = vunpack.c.h.b16 %v2505
    %v2817 = vunpack.c.l.b16 %v2506
    %v2818 = vunpack.c.h.b16 %v2506
    %v2819 = vunpack.c.l.b16 %v2507
    %v2820 = vunpack.c.h.b16 %v2507
    %v2821 = vunpack.c.l.b16 %v2508
    %v2822 = vunpack.c.h.b16 %v2508
    %v2823 = vunpack.c.l.b16 %v2509
    %v2824 = vunpack.c.h.b16 %v2509
    %v2825 = vunpack.c.l.b16 %v2510
    %v2826 = vunpack.c.h.b16 %v2510
    %v2827 = vunpack.c.l.b16 %v2511
    %v2828 = vunpack.c.h.b16 %v2511
    %v2829 = vunpack.c.l.b16 %v2512
    %v2830 = vunpack.c.h.b16 %v2512
    %v2831 = vunpack.c.l.b16 %v2513
    %v2832 = vunpack.c.h.b16 %v2513
    %v2833 = vunpack.c.l.b16 %v2514
    %v2834 = vunpack.c.h.b16 %v2514
    %v2835 = vunpack.c.l.b16 %v2515
    %v2836 = vunpack.c.h.b16 %v2515
    %v2837 = vunpack.c.l.b16 %v2516
    %v2838 = vunpack.c.h.b16 %v2516
    %v2839 = vunpack.c.l.b16 %v2517
    %v2840 = vunpack.c.h.b16 %v2517
    %v2841 = vunpack.c.l.b16 %v2518
    %v2842 = vunpack.c.h.b16 %v2518
    %v2843 = vunpack.c.l.b16 %v2519
    %v2844 = vunpack.c.h.b16 %v2519
    %v2845 = vunpack.c.l.b16 %v2520
    %v2846 = vunpack.c.h.b16 %v2520
    %v2847 = vunpack.c.l.b16 %v2521
    %v2848 = vunpack.c.h.b16 %v2521
    %v2849 = vunpack.c.l.b16 %v2522
    %v2850 = vunpack.c.h.b16 %v2522
    %v2851 = vunpack.c.l.b16 %v2523
    %v2852 = vunpack.c.h.b16 %v2523
    %v2853 = vunpack.c.l.b16 %v2524
    %v2854 = vunpack.c.h.b16 %v2524
    %v2855 = vunpack.c.l.b16 %v2525
    %v2856 = vunpack.c.h.b16 %v2525
    %v2857 = vunpack.c.l.b16 %v2526
    %v2858 = vunpack.c.h.b16 %v2526
    %v2859 = vunpack.c.l.b16 %v2527
    %v2860 = vunpack.c.h.b16 %v2527
    %v2861 = vunpack.c.l.b16 %v2528
    %v2862 = vunpack.c.h.b16 %v2528
    %v2863 = vunpack.c.l.b16 %v2529
    %v2864 = vunpack.c.h.b16 %v2529
    %v2865 = vunpack.c.l.b16 %v2530
    %v2866 = vunpack.c.h.b16 %v2530
    %v2867 = vunpack.c.l.b16 %v2531
    %v2868 = vunpack.c.h.b16 %v2531
    %v2869 = vunpack.c.l.b16 %v2532
    %v2870 = vunpack.c.h.b16 %v2532
    %v2871 = vunpack.c.l.b16 %v2533
    %v2872 = vunpack.c.h.b16 %v2533
    %v2873 = vunpack.c.l.b16 %v2534
    %v2874 = vunpack.c.h.b16 %v2534
    %v2875 = vunpack.c.l.b16 %v2535
    %v2876 = vunpack.c.h.b16 %v2535
    %v2877 = vunpack.c.l.b16 %v2536
    %v2878 = vunpack.c.h.b16 %v2536
    %v2879 = vunpack.c.l.b16 %v2537
    %v2880 = vunpack.c.h.b16 %v2537
    %v2881 = vunpack.c.l.b16 %v2538
    %v2882 = vunpack.c.h.b16 %v2538
    %v2883 = vunpack.c.l.b16 %v2539
    %v2884 = vunpack.c.h.b16 %v2539
    %v2885 = vunpack.c.l.b16 %v2540
    %v2886 = vunpack.c.h.b16 %v2540
    %v2887 = vunpack.c.l.b16 %v2541
    %v2888 = vunpack.c.h.b16 %v2541
    %v2889 = vunpack.c.l.b16 %v2542
    %v2890 = vunpack.c.h.b16 %v2542
    %v2891 = vunpack.c.l.b16 %v2543
    %v2892 = vunpack.c.h.b16 %v2543
    %v2893 = vunpack.c.l.b16 %v2544
    %v2894 = vunpack.c.h.b16 %v2544
    %v2895 = vunpack.c.l.b16 %v2545
    %v2896 = vunpack.c.h.b16 %v2545
    %v2897 = vunpack.c.l.b16 %v2546
    %v2898 = vunpack.c.h.b16 %v2546
    %v2899 = vunpack.c.l.b16 %v2547
    %v2900 = vunpack.c.h.b16 %v2547
    %v2901 = vunpack.c.l.b16 %v2548
    %v2902 = vunpack.c.h.b16 %v2548
    %v2903 = vunpack.c.l.b16 %v2549
    %v2904 = vunpack.c.h.b16 %v2549
    %v2905 = vunpack.c.l.b16 %v2550
    %v2906 = vunpack.c.h.b16 %v2550
    %v2907 = vunpack.c.l.b16 %v2551
    %v2908 = vunpack.c.h.b16 %v2551
    %v2909 = vunpack.c.l.b16 %v2552
    %v2910 = vunpack.c.h.b16 %v2552
    %v2911 = vunpack.c.l.b16 %v2553
    %v2912 = vunpack.c.h.b16 %v2553
    %v2913 = vunpack.c.l.b16 %v2554
    %v2914 = vunpack.c.h.b16 %v2554
    %v2915 = vunpack.c.l.b16 %v2555
    %v2916 = vunpack.c.h.b16 %v2555
    %v2917 = vunpack.c.l.b16 %v2556
    %v2918 = vunpack.c.h.b16 %v2556
    %v2919 = vunpack.c.l.b16 %v2557
    %v2920 = vunpack.c.h.b16 %v2557
    %v2921 = vunpack.c.l.b16 %v2558
    %v2922 = vunpack.c.h.b16 %v2558
    %v2923 = vunpack.c.l.b16 %v2559
    %v2924 = vunpack.c.h.b16 %v2559
    %v2925 = vunpack.c.l.b16 %v2560
    %v2926 = vunpack.c.h.b16 %v2560
    %v2927 = vunpack.c.l.b16 %v2561
    %v2928 = vunpack.c.h.b16 %v2561
    %v2929 = vunpack.c.l.b16 %v2562
    %v2930 = vunpack.c.h.b16 %v2562
    %v2931 = vunpack.c.l.b16 %v2563
    %v2932 = vunpack.c.h.b16 %v2563
    %v2933 = vunpack.c.l.b16 %v2564
    %v2934 = vunpack.c.h.b16 %v2564
    %v2935 = vunpack.c.l.b16 %v2565
    %v2936 = vunpack.c.h.b16 %v2565
    %v2937 = vunpack.c.l.b16 %v2566
    %v2938 = vunpack.c.h.b16 %v2566
    %v2939 = vunpack.c.l.b16 %v2567
    %v2940 = vunpack.c.h.b16 %v2567
    %v2941 = vunpack.c.l.b16 %v2568
    %v2942 = vunpack.c.h.b16 %v2568
    %v2943 = vunpack.c.l.b16 %v2569
    %v2944 = vunpack.c.h.b16 %v2569
    %v2945 = vunpack.c.l.b16 %v2570
    %v2946 = vunpack.c.h.b16 %v2570
    %v2947 = vunpack.c.l.b16 %v2571
    %v2948 = vunpack.c.h.b16 %v2571
    %v2949 = vunpack.c.l.b16 %v2572
    %v2950 = vunpack.c.h.b16 %v2572
    %v2951 = vunpack.c.l.b16 %v2573
    %v2952 = vunpack.c.h.b16 %v2573
    %v2953 = vunpack.c.l.b16 %v2574
    %v2954 = vunpack.c.h.b16 %v2574
    %v2955 = vunpack.c.l.b16 %v2575
    %v2956 = vunpack.c.h.b16 %v2575
    %v2957 = vunpack.c.l.b16 %v2576
    %v2958 = vunpack.c.h.b16 %v2576
    %v2959 = vunpack.c.l.b16 %v2577
    %v2960 = vunpack.c.h.b16 %v2577
    %v2961 = vunpack.c.l.b16 %v2578
    %v2962 = vunpack.c.h.b16 %v2578
    %v2963 = vunpack.c.l.b16 %v2579
    %v2964 = vunpack.c.h.b16 %v2579
    %v2965 = vunpack.c.l.b16 %v2580
    %v2966 = vunpack.c.h.b16 %v2580
    %v2967 = vunpack.c.l.b16 %v2581
    %v2968 = vunpack.c.h.b16 %v2581
    %v2969 = vunpack.c.l.b16 %v2582
    %v2970 = vunpack.c.h.b16 %v2582
    %v2971 = vunpack.c.l.b16 %v2583
    %v2972 = vunpack.c.h.b16 %v2583
    %v2973 = vunpack.c.l.b16 %v2584
    %v2974 = vunpack.c.h.b16 %v2584
    %v2975 = vunpack.c.l.b16 %v2585
    %v2976 = vunpack.c.h.b16 %v2585
    %v2977 = vunpack.c.l.b16 %v2586
    %v2978 = vunpack.c.h.b16 %v2586
    %v2979 = vunpack.c.l.b16 %v2587
    %v2980 = vunpack.c.h.b16 %v2587
    %v2981 = vunpack.c.l.b16 %v2588
    %v2982 = vunpack.c.h.b16 %v2588
    %v2983 = vunpack.c.l.b16 %v2589
    %v2984 = vunpack.c.h.b16 %v2589
    %v2985 = vunpack.c.l.b16 %v2590
    %v2986 = vunpack.c.h.b16 %v2590
    %v2987 = vunpack.c.l.b16 %v2591
    %v2988 = vunpack.c.h.b16 %v2591
    %v2989 = vunpack.c.l.b16 %v2592
    %v2990 = vunpack.c.h.b16 %v2592
    %v2991 = vunpack.c.l.b16 %v2593
    %v2992 = vunpack.c.h.b16 %v2593
    %v2993 = vunpack.c.l.b16 %v2594
    %v2994 = vunpack.c.h.b16 %v2594
    %v2995 = vunpack.c.l.b16 %v2595
    %v2996 = vunpack.c.h.b16 %v2595
    %v2997 = vunpack.c.l.b16 %v2596
    %v2998 = vunpack.c.h.b16 %v2596
    %v2999 = vpack.c.b16 %v2751, %v2743
    %v3000 = vpack.c.b16 %v2752, %v2744
    %v3001 = vpack.c.b16 %v2753, %v2745
    %v3002 = vpack.c.b16 %v2754, %v2746
    %v3003 = vpack.c.b16 %v2755, %v2747
    %v3004 = vpack.c.b16 %v2756, %v2748
    %v3005 = vpack.c.b16 %v2757, %v2749
    %v3006 = vpack.c.b16 %v2758, %v2750
    %v3007 = vpack.c.b16 %v2767, %v2759
    %v3008 = vpack.c.b16 %v2768, %v2760
    %v3009 = vpack.c.b16 %v2769, %v2761
    %v3010 = vpack.c.b16 %v2770, %v2762
    %v3011 = vpack.c.b16 %v2771, %v2763
    %v3012 = vpack.c.b16 %v2772, %v2764
    %v3013 = vpack.c.b16 %v2773, %v2765
    %v3014 = vpack.c.b16 %v2774, %v2766
    %v3015 = vpack.c.b16 %v2783, %v2775
    %v3016 = vpack.c.b16 %v2784, %v2776
    %v3017 = vpack.c.b16 %v2785, %v2777
    %v3018 = vpack.c.b16 %v2786, %v2778
    %v3019 = vpack.c.b16 %v2787, %v2779
    %v3020 = vpack.c.b16 %v2788, %v2780
    %v3021 = vpack.c.b16 %v2789, %v2781
    %v3022 = vpack.c.b16 %v2790, %v2782
    %v3023 = vpack.c.b16 %v2799, %v2791
    %v3024 = vpack.c.b16 %v2800, %v2792
    %v3025 = vpack.c.b16 %v2801, %v2793
    %v3026 = vpack.c.b16 %v2802, %v2794
    %v3027 = vpack.c.b16 %v2803, %v2795
    %v3028 = vpack.c.b16 %v2804, %v2796
    %v3029 = vpack.c.b16 %v2805, %v2797
    %v3030 = vpack.c.b16 %v2806, %v2798
    %v3031 = vpack.c.b16 %v2815, %v2807
    %v3032 = vpack.c.b16 %v2816, %v2808
    %v3033 = vpack.c.b16 %v2817, %v2809
    %v3034 = vpack.c.b16 %v2818, %v2810
    %v3035 = vpack.c.b16 %v2819, %v2811
    %v3036 = vpack.c.b16 %v2820, %v2812
    %v3037 = vpack.c.b16 %v2821, %v2813
    %v3038 = vpack.c.b16 %v2822, %v2814
    %v3039 = vpack.c.b16 %v2831, %v2823
    %v3040 = vpack.c.b16 %v2832, %v2824
    %v3041 = vpack.c.b16 %v2833, %v2825
    %v3042 = vpack.c.b16 %v2834, %v2826
    %v3043 = vpack.c.b16 %v2835, %v2827
    %v3044 = vpack.c.b16 %v2836, %v2828
    %v3045 = vpack.c.b16 %v2837, %v2829
    %v3046 = vpack.c.b16 %v2838, %v2830
    %v3047 = vpack.c.b16 %v2847, %v2839
    %v3048 = vpack.c.b16 %v2848, %v2840
    %v3049 = vpack.c.b16 %v2849, %v2841
    %v3050 = vpack.c.b16 %v2850, %v2842
    %v3051 = vpack.c.b16 %v2851, %v2843
    %v3052 = vpack.c.b16 %v2852, %v2844
    %v3053 = vpack.c.b16 %v2853, %v2845
    %v3054 = vpack.c.b16 %v2854, %v2846
    %v3055 = vpack.c.b16 %v2863, %v2855
    %v3056 = vpack.c.b16 %v2864, %v2856
    %v3057 = vpack.c.b16 %v2865, %v2857
    %v3058 = vpack.c.b16 %v2866, %v2858
    %v3059 = vpack.c.b16 %v2867, %v2859
    %v3060 = vpack.c.b16 %v2868, %v2860
    %v3061 = vpack.c.b16 %v2869, %v2861
    %v3062 = vpack.c.b16 %v2870, %v2862
    %v3063 = vpack.c.b16 %v2879, %v2871
    %v3064 = vpack.c.b16 %v2880, %v2872
    %v3065 = vpack.c.b16 %v2881, %v2873
    %v3066 = vpack.c.b16 %v2882, %v2874
    %v3067 = vpack.c.b16 %v2883, %v2875
    %v3068 = vpack.c.b16 %v2884, %v2876
    %v3069 = vpack.c.b16 %v2885, %v2877
    %v3070 = vpack.c.b16 %v2886, %v2878
    %v3071 = vpack.c.b16 %v2895, %v2887
    %v3072 = vpack.c.b16 %v2896, %v2888
    %v3073 = vpack.c.b16 %v2897, %v2889
    %v3074 = vpack.c.b16 %v2898, %v2890
    %v3075 = vpack.c.b16 %v2899, %v2891
    %v3076 = vpack.c.b16 %v2900, %v2892
    %v3077 = vpack.c.b16 %v2901, %v2893
    %v3078 = vpack.c.b16 %v2902, %v2894
    %v3079 = vpack.c.b16 %v2911, %v2903
    %v3080 = vpack.c.b16 %v2912, %v2904
    %v3081 = vpack.c.b16 %v2913, %v2905
    %v3082 = vpack.c.b16 %v2914, %v2906
    %v3083 = vpack.c.b16 %v2915, %v2907
    %v3084 = vpack.c.b16 %v2916, %v2908
    %v3085 = vpack.c.b16 %v2917, %v2909
    %v3086 = vpack.c.b16 %v2918, %v2910
    %v3087 = vpack.c.b16 %v2927, %v2919
    %v3088 = vpack.c.b16 %v2928, %v2920
    %v3089 = vpack.c.b16 %v2929, %v2921
    %v3090 = vpack.c.b16 %v2930, %v2922
    %v3091 = vpack.c.b16 %v2931, %v2923
    %v3092 = vpack.c.b16 %v2932, %v2924
    %v3093 = vpack.c.b16 %v2933, %v2925
    %v3094 = vpack.c.b16 %v2934, %v2926
    %v3095 = vpack.c.b16 %v2943, %v2935
    %v3096 = vpack.c.b16 %v2944, %v2936
    %v3097 = vpack.c.b16 %v2945, %v2937
    %v3098 = vpack.c.b16 %v2946, %v2938
    %v3099 = vpack.c.b16 %v2947, %v2939
    %v3100 = vpack.c.b16 %v2948, %v2940
    %v3101 = vpack.c.b16 %v2949, %v2941
    %v3102 = vpack.c.b16 %v2950, %v2942
    %v3103 = vpack.c.b16 %v2959, %v2951
    %v3104 = vpack.c.b16 %v2960, %v2952
    %v3105 = vpack.c.b16 %v2961, %v2953
    %v3106 = vpack.c.b16 %v2962, %v2954
    %v3107 = vpack.c.b16 %v2963, %v2955
    %v3108 = vpack.c.b16 %v2964, %v2956
    %v3109 = vpack.c.b16 %v2965, %v2957
    %v3110 = vpack.c.b16 %v2966, %v2958
    %v3111 = vpack.c.b16 %v2975, %v2967
    %v3112 = vpack.c.b16 %v2976, %v2968
    %v3113 = vpack.c.b16 %v2977, %v2969
    %v3114 = vpack.c.b16 %v2978, %v2970
    %v3115 = vpack.c.b16 %v2979, %v2971
    %v3116 = vpack.c.b16 %v2980, %v2972
    %v3117 = vpack.c.b16 %v2981, %v2973
    %v3118 = vpack.c.b16 %v2982, %v2974
    %v3119 = vpack.c.b16 %v2991, %v2983
    %v3120 = vpack.c.b16 %v2992, %v2984
    %v3121 = vpack.c.b16 %v2993, %v2985
    %v3122 = vpack.c.b16 %v2994, %v2986
    %v3123 = vpack.c.b16 %v2995, %v2987
    %v3124 = vpack.c.b16 %v2996, %v2988
    %v3125 = vpack.c.b16 %v2997, %v2989
    %v3126 = vpack.c.b16 %v2998, %v2990
    %3255 = vmatpush.bf16.msra.mxu0 %v3055
    %3256 = vmatpush.bf16.msra.mxu0 %v3047
    %3257 = vmatpush.bf16.msra.mxu0 %v3039
    %3258 = vmatpush.bf16.msra.mxu0 %v3031
    %3259 = vmatpush.bf16.msra.mxu0 %v3023
    %3260 = vmatpush.bf16.msra.mxu0 %v3015
    %3261 = vmatpush.bf16.msra.mxu0 %v3007
    %3262 = vmatpush.bf16.msra.mxu0 %v2999
    %3263 = vmatmul.bf16.gmra.mxu0 %v2467
    %v3264 = vpop.f32.mrf.mxu0
    %v3265 = vadd.f32 %v2599, %v3264
    %v3266 = vpop.f32.mrf.mxu0
    %3267 = vdwg.mxu0
    %3268 = vmatpush.bf16.msra.mxu0 %v3119
    %3269 = vmatpush.bf16.msra.mxu0 %v3111
    %3270 = vmatpush.bf16.msra.mxu0 %v3103
    %3271 = vmatpush.bf16.msra.mxu0 %v3095
    %3272 = vmatpush.bf16.msra.mxu0 %v3087
    %3273 = vmatpush.bf16.msra.mxu0 %v3079
    %3274 = vmatpush.bf16.msra.mxu0 %v3071
    %3275 = vmatpush.bf16.msra.mxu0 %v3063
    %3276 = vmatmul.bf16.gmra.mxu0 %v2468
    %v3277 = vpop.f32.mrf.mxu0
    %v3278 = vadd.f32 %v3265, %v3277
    %v3279 = vpop.f32.mrf.mxu0
    %3280 = vdwg.mxu0
    %3281 = vmatpush.bf16.msra.mxu0 %v3056
    %3282 = vmatpush.bf16.msra.mxu0 %v3048
    %3283 = vmatpush.bf16.msra.mxu0 %v3040
    %3284 = vmatpush.bf16.msra.mxu0 %v3032
    %3285 = vmatpush.bf16.msra.mxu0 %v3024
    %3286 = vmatpush.bf16.msra.mxu0 %v3016
    %3287 = vmatpush.bf16.msra.mxu0 %v3008
    %3288 = vmatpush.bf16.msra.mxu0 %v3000
    %3289 = vmatmul.bf16.gmra.mxu0 %v2467
    %v3290 = vpop.f32.mrf.mxu0
    %v3291 = vadd.f32 %v2600, %v3290
    %v3292 = vpop.f32.mrf.mxu0
    %3293 = vdwg.mxu0
    %3294 = vmatpush.bf16.msra.mxu0 %v3120
    %3295 = vmatpush.bf16.msra.mxu0 %v3112
    %3296 = vmatpush.bf16.msra.mxu0 %v3104
    %3297 = vmatpush.bf16.msra.mxu0 %v3096
    %3298 = vmatpush.bf16.msra.mxu0 %v3088
    %3299 = vmatpush.bf16.msra.mxu0 %v3080
    %3300 = vmatpush.bf16.msra.mxu0 %v3072
    %3301 = vmatpush.bf16.msra.mxu0 %v3064
    %3302 = vmatmul.bf16.gmra.mxu0 %v2468
    %v3303 = vpop.f32.mrf.mxu0
    %v3304 = vadd.f32 %v3291, %v3303
    %v3305 = vpop.f32.mrf.mxu0
    %3306 = vdwg.mxu0
    %3307 = vmatpush.bf16.msra.mxu0 %v3057
    %3308 = vmatpush.bf16.msra.mxu0 %v3049
    %3309 = vmatpush.bf16.msra.mxu0 %v3041
    %3310 = vmatpush.bf16.msra.mxu0 %v3033
    %3311 = vmatpush.bf16.msra.mxu0 %v3025
    %3312 = vmatpush.bf16.msra.mxu0 %v3017
    %3313 = vmatpush.bf16.msra.mxu0 %v3009
    %3314 = vmatpush.bf16.msra.mxu0 %v3001
    %3315 = vmatmul.bf16.gmra.mxu0 %v2467
    %v3316 = vpop.f32.mrf.mxu0
    %v3317 = vadd.f32 %v2601, %v3316
    %v3318 = vpop.f32.mrf.mxu0
    %3319 = vdwg.mxu0
    %3320 = vmatpush.bf16.msra.mxu0 %v3121
    %3321 = vmatpush.bf16.msra.mxu0 %v3113
    %3322 = vmatpush.bf16.msra.mxu0 %v3105
    %3323 = vmatpush.bf16.msra.mxu0 %v3097
    %3324 = vmatpush.bf16.msra.mxu0 %v3089
    %3325 = vmatpush.bf16.msra.mxu0 %v3081
    %3326 = vmatpush.bf16.msra.mxu0 %v3073
    %3327 = vmatpush.bf16.msra.mxu0 %v3065
    %3328 = vmatmul.bf16.gmra.mxu0 %v2468
    %v3329 = vpop.f32.mrf.mxu0
    %v3330 = vadd.f32 %v3317, %v3329
    %v3331 = vpop.f32.mrf.mxu0
    %3332 = vdwg.mxu0
    %3333 = vmatpush.bf16.msra.mxu0 %v3058
    %3334 = vmatpush.bf16.msra.mxu0 %v3050
    %3335 = vmatpush.bf16.msra.mxu0 %v3042
    %3336 = vmatpush.bf16.msra.mxu0 %v3034
    %3337 = vmatpush.bf16.msra.mxu0 %v3026
    %3338 = vmatpush.bf16.msra.mxu0 %v3018
    %3339 = vmatpush.bf16.msra.mxu0 %v3010
    %3340 = vmatpush.bf16.msra.mxu0 %v3002
    %3341 = vmatmul.bf16.gmra.mxu0 %v2467
    %v3342 = vpop.f32.mrf.mxu0
    %v3343 = vadd.f32 %v2602, %v3342
    %v3344 = vpop.f32.mrf.mxu0
    %3345 = vdwg.mxu0
    %3346 = vmatpush.bf16.msra.mxu0 %v3122
    %3347 = vmatpush.bf16.msra.mxu0 %v3114
    %3348 = vmatpush.bf16.msra.mxu0 %v3106
    %3349 = vmatpush.bf16.msra.mxu0 %v3098
    %3350 = vmatpush.bf16.msra.mxu0 %v3090
    %3351 = vmatpush.bf16.msra.mxu0 %v3082
    %3352 = vmatpush.bf16.msra.mxu0 %v3074
    %3353 = vmatpush.bf16.msra.mxu0 %v3066
    %3354 = vmatmul.bf16.gmra.mxu0 %v2468
    %v3355 = vpop.f32.mrf.mxu0
    %v3356 = vadd.f32 %v3343, %v3355
    %v3357 = vpop.f32.mrf.mxu0
    %3358 = vdwg.mxu0
    %3359 = vmatpush.bf16.msra.mxu0 %v3059
    %3360 = vmatpush.bf16.msra.mxu0 %v3051
    %3361 = vmatpush.bf16.msra.mxu0 %v3043
    %3362 = vmatpush.bf16.msra.mxu0 %v3035
    %3363 = vmatpush.bf16.msra.mxu0 %v3027
    %3364 = vmatpush.bf16.msra.mxu0 %v3019
    %3365 = vmatpush.bf16.msra.mxu0 %v3011
    %3366 = vmatpush.bf16.msra.mxu0 %v3003
    %3367 = vmatmul.bf16.gmra.mxu0 %v2467
    %v3368 = vpop.f32.mrf.mxu0
    %v3369 = vadd.f32 %v2603, %v3368
    %v3370 = vpop.f32.mrf.mxu0
    %3371 = vdwg.mxu0
    %3372 = vmatpush.bf16.msra.mxu0 %v3123
    %3373 = vmatpush.bf16.msra.mxu0 %v3115
    %3374 = vmatpush.bf16.msra.mxu0 %v3107
    %3375 = vmatpush.bf16.msra.mxu0 %v3099
    %3376 = vmatpush.bf16.msra.mxu0 %v3091
    %3377 = vmatpush.bf16.msra.mxu0 %v3083
    %3378 = vmatpush.bf16.msra.mxu0 %v3075
    %3379 = vmatpush.bf16.msra.mxu0 %v3067
    %3380 = vmatmul.bf16.gmra.mxu0 %v2468
    %v3381 = vpop.f32.mrf.mxu0
    %v3382 = vadd.f32 %v3369, %v3381
    %v3383 = vpop.f32.mrf.mxu0
    %3384 = vdwg.mxu0
    %3385 = vmatpush.bf16.msra.mxu0 %v3060
    %3386 = vmatpush.bf16.msra.mxu0 %v3052
    %3387 = vmatpush.bf16.msra.mxu0 %v3044
    %3388 = vmatpush.bf16.msra.mxu0 %v3036
    %3389 = vmatpush.bf16.msra.mxu0 %v3028
    %3390 = vmatpush.bf16.msra.mxu0 %v3020
    %3391 = vmatpush.bf16.msra.mxu0 %v3012
    %3392 = vmatpush.bf16.msra.mxu0 %v3004
    %3393 = vmatmul.bf16.gmra.mxu0 %v2467
    %v3394 = vpop.f32.mrf.mxu0
    %v3395 = vadd.f32 %v2604, %v3394
    %v3396 = vpop.f32.mrf.mxu0
    %3397 = vdwg.mxu0
    %3398 = vmatpush.bf16.msra.mxu0 %v3124
    %3399 = vmatpush.bf16.msra.mxu0 %v3116
    %3400 = vmatpush.bf16.msra.mxu0 %v3108
    %3401 = vmatpush.bf16.msra.mxu0 %v3100
    %3402 = vmatpush.bf16.msra.mxu0 %v3092
    %3403 = vmatpush.bf16.msra.mxu0 %v3084
    %3404 = vmatpush.bf16.msra.mxu0 %v3076
    %3405 = vmatpush.bf16.msra.mxu0 %v3068
    %3406 = vmatmul.bf16.gmra.mxu0 %v2468
    %v3407 = vpop.f32.mrf.mxu0
    %v3408 = vadd.f32 %v3395, %v3407
    %v3409 = vpop.f32.mrf.mxu0
    %3410 = vdwg.mxu0
    %3411 = vmatpush.bf16.msra.mxu0 %v3061
    %3412 = vmatpush.bf16.msra.mxu0 %v3053
    %3413 = vmatpush.bf16.msra.mxu0 %v3045
    %3414 = vmatpush.bf16.msra.mxu0 %v3037
    %3415 = vmatpush.bf16.msra.mxu0 %v3029
    %3416 = vmatpush.bf16.msra.mxu0 %v3021
    %3417 = vmatpush.bf16.msra.mxu0 %v3013
    %3418 = vmatpush.bf16.msra.mxu0 %v3005
    %3419 = vmatmul.bf16.gmra.mxu0 %v2467
    %v3420 = vpop.f32.mrf.mxu0
    %v3421 = vadd.f32 %v2605, %v3420
    %v3422 = vpop.f32.mrf.mxu0
    %3423 = vdwg.mxu0
    %3424 = vmatpush.bf16.msra.mxu0 %v3125
    %3425 = vmatpush.bf16.msra.mxu0 %v3117
    %3426 = vmatpush.bf16.msra.mxu0 %v3109
    %3427 = vmatpush.bf16.msra.mxu0 %v3101
    %3428 = vmatpush.bf16.msra.mxu0 %v3093
    %3429 = vmatpush.bf16.msra.mxu0 %v3085
    %3430 = vmatpush.bf16.msra.mxu0 %v3077
    %3431 = vmatpush.bf16.msra.mxu0 %v3069
    %3432 = vmatmul.bf16.gmra.mxu0 %v2468
    %v3433 = vpop.f32.mrf.mxu0
    %v3434 = vadd.f32 %v3421, %v3433
    %v3435 = vpop.f32.mrf.mxu0
    %3436 = vdwg.mxu0
    %3437 = vmatpush.bf16.msra.mxu0 %v3062
    %3438 = vmatpush.bf16.msra.mxu0 %v3054
    %3439 = vmatpush.bf16.msra.mxu0 %v3046
    %3440 = vmatpush.bf16.msra.mxu0 %v3038
    %3441 = vmatpush.bf16.msra.mxu0 %v3030
    %3442 = vmatpush.bf16.msra.mxu0 %v3022
    %3443 = vmatpush.bf16.msra.mxu0 %v3014
    %3444 = vmatpush.bf16.msra.mxu0 %v3006
    %3445 = vmatmul.bf16.gmra.mxu0 %v2467
    %v3446 = vpop.f32.mrf.mxu0
    %v3447 = vadd.f32 %v2606, %v3446
    %v3448 = vpop.f32.mrf.mxu0
    %3449 = vdwg.mxu0
    %3450 = vmatpush.bf16.msra.mxu0 %v3126
    %3451 = vmatpush.bf16.msra.mxu0 %v3118
    %3452 = vmatpush.bf16.msra.mxu0 %v3110
    %3453 = vmatpush.bf16.msra.mxu0 %v3102
    %3454 = vmatpush.bf16.msra.mxu0 %v3094
    %3455 = vmatpush.bf16.msra.mxu0 %v3086
    %3456 = vmatpush.bf16.msra.mxu0 %v3078
    %3457 = vmatpush.bf16.msra.mxu0 %v3070
    %3458 = vmatmul.bf16.gmra.mxu0 %v2468
    %v3459 = vpop.f32.mrf.mxu0
    %v3460 = vadd.f32 %v3447, %v3459
    %v3461 = vpop.f32.mrf.mxu0
    %3462 = vdwg.mxu0
    %v3463 = vld [vmem:[#allocation3] sm:$0xff]
    %v3464 = vld [vmem:[#allocation3 + $0x8] sm:$0xff]
    %v3465 = vld [vmem:[#allocation3 + $0x10] sm:$0xff]
    %v3466 = vld [vmem:[#allocation3 + $0x18] sm:$0xff]
    %v3467 = vld [vmem:[#allocation3 + $0x20] sm:$0xff]
    %v3468 = vld [vmem:[#allocation3 + $0x28] sm:$0xff]
    %v3469 = vld [vmem:[#allocation3 + $0x30] sm:$0xff]
    %v3470 = vld [vmem:[#allocation3 + $0x38] sm:$0xff]
    %v3471 = vld [vmem:[#allocation3 + $0x40] sm:$0xff]
    %v3472 = vld [vmem:[#allocation3 + $0x48] sm:$0xff]
    %v3473 = vld [vmem:[#allocation3 + $0x50] sm:$0xff]
    %v3474 = vld [vmem:[#allocation3 + $0x58] sm:$0xff]
    %v3475 = vld [vmem:[#allocation3 + $0x60] sm:$0xff]
    %v3476 = vld [vmem:[#allocation3 + $0x68] sm:$0xff]
    %v3477 = vld [vmem:[#allocation3 + $0x70] sm:$0xff]
    %v3478 = vld [vmem:[#allocation3 + $0x78] sm:$0xff]
    %v3479 = vld [vmem:[#allocation3 + $0x80] sm:$0xff]
    %v3480 = vld [vmem:[#allocation3 + $0x88] sm:$0xff]
    %v3481 = vld [vmem:[#allocation3 + $0x90] sm:$0xff]
    %v3482 = vld [vmem:[#allocation3 + $0x98] sm:$0xff]
    %v3483 = vld [vmem:[#allocation3 + $0xa0] sm:$0xff]
    %v3484 = vld [vmem:[#allocation3 + $0xa8] sm:$0xff]
    %v3485 = vld [vmem:[#allocation3 + $0xb0] sm:$0xff]
    %v3486 = vld [vmem:[#allocation3 + $0xb8] sm:$0xff]
    %v3487 = vld [vmem:[#allocation3 + $0xc0] sm:$0xff]
    %v3488 = vld [vmem:[#allocation3 + $0xc8] sm:$0xff]
    %v3489 = vld [vmem:[#allocation3 + $0xd0] sm:$0xff]
    %v3490 = vld [vmem:[#allocation3 + $0xd8] sm:$0xff]
    %v3491 = vld [vmem:[#allocation3 + $0xe0] sm:$0xff]
    %v3492 = vld [vmem:[#allocation3 + $0xe8] sm:$0xff]
    %v3493 = vld [vmem:[#allocation3 + $0xf0] sm:$0xff]
    %v3494 = vld [vmem:[#allocation3 + $0xf8] sm:$0xff]
    %v3495 = vld [vmem:[#allocation3 + $0x100] sm:$0xff]
    %v3496 = vld [vmem:[#allocation3 + $0x108] sm:$0xff]
    %v3497 = vld [vmem:[#allocation3 + $0x110] sm:$0xff]
    %v3498 = vld [vmem:[#allocation3 + $0x118] sm:$0xff]
    %v3499 = vld [vmem:[#allocation3 + $0x120] sm:$0xff]
    %v3500 = vld [vmem:[#allocation3 + $0x128] sm:$0xff]
    %v3501 = vld [vmem:[#allocation3 + $0x130] sm:$0xff]
    %v3502 = vld [vmem:[#allocation3 + $0x138] sm:$0xff]
    %v3503 = vld [vmem:[#allocation3 + $0x140] sm:$0xff]
    %v3504 = vld [vmem:[#allocation3 + $0x148] sm:$0xff]
    %v3505 = vld [vmem:[#allocation3 + $0x150] sm:$0xff]
    %v3506 = vld [vmem:[#allocation3 + $0x158] sm:$0xff]
    %v3507 = vld [vmem:[#allocation3 + $0x160] sm:$0xff]
    %v3508 = vld [vmem:[#allocation3 + $0x168] sm:$0xff]
    %v3509 = vld [vmem:[#allocation3 + $0x170] sm:$0xff]
    %v3510 = vld [vmem:[#allocation3 + $0x178] sm:$0xff]
    %v3511 = vld [vmem:[#allocation3 + $0x180] sm:$0xff]
    %v3512 = vld [vmem:[#allocation3 + $0x188] sm:$0xff]
    %v3513 = vld [vmem:[#allocation3 + $0x190] sm:$0xff]
    %v3514 = vld [vmem:[#allocation3 + $0x198] sm:$0xff]
    %v3515 = vld [vmem:[#allocation3 + $0x1a0] sm:$0xff]
    %v3516 = vld [vmem:[#allocation3 + $0x1a8] sm:$0xff]
    %v3517 = vld [vmem:[#allocation3 + $0x1b0] sm:$0xff]
    %v3518 = vld [vmem:[#allocation3 + $0x1b8] sm:$0xff]
    %v3519 = vld [vmem:[#allocation3 + $0x1c0] sm:$0xff]
    %v3520 = vld [vmem:[#allocation3 + $0x1c8] sm:$0xff]
    %v3521 = vld [vmem:[#allocation3 + $0x1d0] sm:$0xff]
    %v3522 = vld [vmem:[#allocation3 + $0x1d8] sm:$0xff]
    %v3523 = vld [vmem:[#allocation3 + $0x1e0] sm:$0xff]
    %v3524 = vld [vmem:[#allocation3 + $0x1e8] sm:$0xff]
    %v3525 = vld [vmem:[#allocation3 + $0x1f0] sm:$0xff]
    %v3526 = vld [vmem:[#allocation3 + $0x1f8] sm:$0xff]
    %v3527 = vld [vmem:[#allocation3 + $0x200] sm:$0xff]
    %v3528 = vld [vmem:[#allocation3 + $0x208] sm:$0xff]
    %v3529 = vld [vmem:[#allocation3 + $0x210] sm:$0xff]
    %v3530 = vld [vmem:[#allocation3 + $0x218] sm:$0xff]
    %v3531 = vld [vmem:[#allocation3 + $0x220] sm:$0xff]
    %v3532 = vld [vmem:[#allocation3 + $0x228] sm:$0xff]
    %v3533 = vld [vmem:[#allocation3 + $0x230] sm:$0xff]
    %v3534 = vld [vmem:[#allocation3 + $0x238] sm:$0xff]
    %v3535 = vld [vmem:[#allocation3 + $0x240] sm:$0xff]
    %v3536 = vld [vmem:[#allocation3 + $0x248] sm:$0xff]
    %v3537 = vld [vmem:[#allocation3 + $0x250] sm:$0xff]
    %v3538 = vld [vmem:[#allocation3 + $0x258] sm:$0xff]
    %v3539 = vld [vmem:[#allocation3 + $0x260] sm:$0xff]
    %v3540 = vld [vmem:[#allocation3 + $0x268] sm:$0xff]
    %v3541 = vld [vmem:[#allocation3 + $0x270] sm:$0xff]
    %v3542 = vld [vmem:[#allocation3 + $0x278] sm:$0xff]
    %v3543 = vld [vmem:[#allocation3 + $0x280] sm:$0xff]
    %v3544 = vld [vmem:[#allocation3 + $0x288] sm:$0xff]
    %v3545 = vld [vmem:[#allocation3 + $0x290] sm:$0xff]
    %v3546 = vld [vmem:[#allocation3 + $0x298] sm:$0xff]
    %v3547 = vld [vmem:[#allocation3 + $0x2a0] sm:$0xff]
    %v3548 = vld [vmem:[#allocation3 + $0x2a8] sm:$0xff]
    %v3549 = vld [vmem:[#allocation3 + $0x2b0] sm:$0xff]
    %v3550 = vld [vmem:[#allocation3 + $0x2b8] sm:$0xff]
    %v3551 = vld [vmem:[#allocation3 + $0x2c0] sm:$0xff]
    %v3552 = vld [vmem:[#allocation3 + $0x2c8] sm:$0xff]
    %v3553 = vld [vmem:[#allocation3 + $0x2d0] sm:$0xff]
    %v3554 = vld [vmem:[#allocation3 + $0x2d8] sm:$0xff]
    %v3555 = vld [vmem:[#allocation3 + $0x2e0] sm:$0xff]
    %v3556 = vld [vmem:[#allocation3 + $0x2e8] sm:$0xff]
    %v3557 = vld [vmem:[#allocation3 + $0x2f0] sm:$0xff]
    %v3558 = vld [vmem:[#allocation3 + $0x2f8] sm:$0xff]
    %v3559 = vld [vmem:[#allocation3 + $0x300] sm:$0xff]
    %v3560 = vld [vmem:[#allocation3 + $0x308] sm:$0xff]
    %v3561 = vld [vmem:[#allocation3 + $0x310] sm:$0xff]
    %v3562 = vld [vmem:[#allocation3 + $0x318] sm:$0xff]
    %v3563 = vld [vmem:[#allocation3 + $0x320] sm:$0xff]
    %v3564 = vld [vmem:[#allocation3 + $0x328] sm:$0xff]
    %v3565 = vld [vmem:[#allocation3 + $0x330] sm:$0xff]
    %v3566 = vld [vmem:[#allocation3 + $0x338] sm:$0xff]
    %v3567 = vld [vmem:[#allocation3 + $0x340] sm:$0xff]
    %v3568 = vld [vmem:[#allocation3 + $0x348] sm:$0xff]
    %v3569 = vld [vmem:[#allocation3 + $0x350] sm:$0xff]
    %v3570 = vld [vmem:[#allocation3 + $0x358] sm:$0xff]
    %v3571 = vld [vmem:[#allocation3 + $0x360] sm:$0xff]
    %v3572 = vld [vmem:[#allocation3 + $0x368] sm:$0xff]
    %v3573 = vld [vmem:[#allocation3 + $0x370] sm:$0xff]
    %v3574 = vld [vmem:[#allocation3 + $0x378] sm:$0xff]
    %v3575 = vld [vmem:[#allocation3 + $0x380] sm:$0xff]
    %v3576 = vld [vmem:[#allocation3 + $0x388] sm:$0xff]
    %v3577 = vld [vmem:[#allocation3 + $0x390] sm:$0xff]
    %v3578 = vld [vmem:[#allocation3 + $0x398] sm:$0xff]
    %v3579 = vld [vmem:[#allocation3 + $0x3a0] sm:$0xff]
    %v3580 = vld [vmem:[#allocation3 + $0x3a8] sm:$0xff]
    %v3581 = vld [vmem:[#allocation3 + $0x3b0] sm:$0xff]
    %v3582 = vld [vmem:[#allocation3 + $0x3b8] sm:$0xff]
    %v3583 = vld [vmem:[#allocation3 + $0x3c0] sm:$0xff]
    %v3584 = vld [vmem:[#allocation3 + $0x3c8] sm:$0xff]
    %v3585 = vld [vmem:[#allocation3 + $0x3d0] sm:$0xff]
    %v3586 = vld [vmem:[#allocation3 + $0x3d8] sm:$0xff]
    %v3587 = vld [vmem:[#allocation3 + $0x3e0] sm:$0xff]
    %v3588 = vld [vmem:[#allocation3 + $0x3e8] sm:$0xff]
    %v3589 = vld [vmem:[#allocation3 + $0x3f0] sm:$0xff]
    %v3590 = vld [vmem:[#allocation3 + $0x3f8] sm:$0xff]
    %v3719 = vunpack.c.l.b16 %v3463
    %v3720 = vunpack.c.h.b16 %v3463
    %v3721 = vunpack.c.l.b16 %v3464
    %v3722 = vunpack.c.h.b16 %v3464
    %v3723 = vunpack.c.l.b16 %v3465
    %v3724 = vunpack.c.h.b16 %v3465
    %v3725 = vunpack.c.l.b16 %v3466
    %v3726 = vunpack.c.h.b16 %v3466
    %v3727 = vunpack.c.l.b16 %v3467
    %v3728 = vunpack.c.h.b16 %v3467
    %v3729 = vunpack.c.l.b16 %v3468
    %v3730 = vunpack.c.h.b16 %v3468
    %v3731 = vunpack.c.l.b16 %v3469
    %v3732 = vunpack.c.h.b16 %v3469
    %v3733 = vunpack.c.l.b16 %v3470
    %v3734 = vunpack.c.h.b16 %v3470
    %v3735 = vunpack.c.l.b16 %v3471
    %v3736 = vunpack.c.h.b16 %v3471
    %v3737 = vunpack.c.l.b16 %v3472
    %v3738 = vunpack.c.h.b16 %v3472
    %v3739 = vunpack.c.l.b16 %v3473
    %v3740 = vunpack.c.h.b16 %v3473
    %v3741 = vunpack.c.l.b16 %v3474
    %v3742 = vunpack.c.h.b16 %v3474
    %v3743 = vunpack.c.l.b16 %v3475
    %v3744 = vunpack.c.h.b16 %v3475
    %v3745 = vunpack.c.l.b16 %v3476
    %v3746 = vunpack.c.h.b16 %v3476
    %v3747 = vunpack.c.l.b16 %v3477
    %v3748 = vunpack.c.h.b16 %v3477
    %v3749 = vunpack.c.l.b16 %v3478
    %v3750 = vunpack.c.h.b16 %v3478
    %v3751 = vunpack.c.l.b16 %v3479
    %v3752 = vunpack.c.h.b16 %v3479
    %v3753 = vunpack.c.l.b16 %v3480
    %v3754 = vunpack.c.h.b16 %v3480
    %v3755 = vunpack.c.l.b16 %v3481
    %v3756 = vunpack.c.h.b16 %v3481
    %v3757 = vunpack.c.l.b16 %v3482
    %v3758 = vunpack.c.h.b16 %v3482
    %v3759 = vunpack.c.l.b16 %v3483
    %v3760 = vunpack.c.h.b16 %v3483
    %v3761 = vunpack.c.l.b16 %v3484
    %v3762 = vunpack.c.h.b16 %v3484
    %v3763 = vunpack.c.l.b16 %v3485
    %v3764 = vunpack.c.h.b16 %v3485
    %v3765 = vunpack.c.l.b16 %v3486
    %v3766 = vunpack.c.h.b16 %v3486
    %v3767 = vunpack.c.l.b16 %v3487
    %v3768 = vunpack.c.h.b16 %v3487
    %v3769 = vunpack.c.l.b16 %v3488
    %v3770 = vunpack.c.h.b16 %v3488
    %v3771 = vunpack.c.l.b16 %v3489
    %v3772 = vunpack.c.h.b16 %v3489
    %v3773 = vunpack.c.l.b16 %v3490
    %v3774 = vunpack.c.h.b16 %v3490
    %v3775 = vunpack.c.l.b16 %v3491
    %v3776 = vunpack.c.h.b16 %v3491
    %v3777 = vunpack.c.l.b16 %v3492
    %v3778 = vunpack.c.h.b16 %v3492
    %v3779 = vunpack.c.l.b16 %v3493
    %v3780 = vunpack.c.h.b16 %v3493
    %v3781 = vunpack.c.l.b16 %v3494
    %v3782 = vunpack.c.h.b16 %v3494
    %v3783 = vunpack.c.l.b16 %v3495
    %v3784 = vunpack.c.h.b16 %v3495
    %v3785 = vunpack.c.l.b16 %v3496
    %v3786 = vunpack.c.h.b16 %v3496
    %v3787 = vunpack.c.l.b16 %v3497
    %v3788 = vunpack.c.h.b16 %v3497
    %v3789 = vunpack.c.l.b16 %v3498
    %v3790 = vunpack.c.h.b16 %v3498
    %v3791 = vunpack.c.l.b16 %v3499
    %v3792 = vunpack.c.h.b16 %v3499
    %v3793 = vunpack.c.l.b16 %v3500
    %v3794 = vunpack.c.h.b16 %v3500
    %v3795 = vunpack.c.l.b16 %v3501
    %v3796 = vunpack.c.h.b16 %v3501
    %v3797 = vunpack.c.l.b16 %v3502
    %v3798 = vunpack.c.h.b16 %v3502
    %v3799 = vunpack.c.l.b16 %v3503
    %v3800 = vunpack.c.h.b16 %v3503
    %v3801 = vunpack.c.l.b16 %v3504
    %v3802 = vunpack.c.h.b16 %v3504
    %v3803 = vunpack.c.l.b16 %v3505
    %v3804 = vunpack.c.h.b16 %v3505
    %v3805 = vunpack.c.l.b16 %v3506
    %v3806 = vunpack.c.h.b16 %v3506
    %v3807 = vunpack.c.l.b16 %v3507
    %v3808 = vunpack.c.h.b16 %v3507
    %v3809 = vunpack.c.l.b16 %v3508
    %v3810 = vunpack.c.h.b16 %v3508
    %v3811 = vunpack.c.l.b16 %v3509
    %v3812 = vunpack.c.h.b16 %v3509
    %v3813 = vunpack.c.l.b16 %v3510
    %v3814 = vunpack.c.h.b16 %v3510
    %v3815 = vunpack.c.l.b16 %v3511
    %v3816 = vunpack.c.h.b16 %v3511
    %v3817 = vunpack.c.l.b16 %v3512
    %v3818 = vunpack.c.h.b16 %v3512
    %v3819 = vunpack.c.l.b16 %v3513
    %v3820 = vunpack.c.h.b16 %v3513
    %v3821 = vunpack.c.l.b16 %v3514
    %v3822 = vunpack.c.h.b16 %v3514
    %v3823 = vunpack.c.l.b16 %v3515
    %v3824 = vunpack.c.h.b16 %v3515
    %v3825 = vunpack.c.l.b16 %v3516
    %v3826 = vunpack.c.h.b16 %v3516
    %v3827 = vunpack.c.l.b16 %v3517
    %v3828 = vunpack.c.h.b16 %v3517
    %v3829 = vunpack.c.l.b16 %v3518
    %v3830 = vunpack.c.h.b16 %v3518
    %v3831 = vunpack.c.l.b16 %v3519
    %v3832 = vunpack.c.h.b16 %v3519
    %v3833 = vunpack.c.l.b16 %v3520
    %v3834 = vunpack.c.h.b16 %v3520
    %v3835 = vunpack.c.l.b16 %v3521
    %v3836 = vunpack.c.h.b16 %v3521
    %v3837 = vunpack.c.l.b16 %v3522
    %v3838 = vunpack.c.h.b16 %v3522
    %v3839 = vunpack.c.l.b16 %v3523
    %v3840 = vunpack.c.h.b16 %v3523
    %v3841 = vunpack.c.l.b16 %v3524
    %v3842 = vunpack.c.h.b16 %v3524
    %v3843 = vunpack.c.l.b16 %v3525
    %v3844 = vunpack.c.h.b16 %v3525
    %v3845 = vunpack.c.l.b16 %v3526
    %v3846 = vunpack.c.h.b16 %v3526
    %v3847 = vunpack.c.l.b16 %v3527
    %v3848 = vunpack.c.h.b16 %v3527
    %v3849 = vunpack.c.l.b16 %v3528
    %v3850 = vunpack.c.h.b16 %v3528
    %v3851 = vunpack.c.l.b16 %v3529
    %v3852 = vunpack.c.h.b16 %v3529
    %v3853 = vunpack.c.l.b16 %v3530
    %v3854 = vunpack.c.h.b16 %v3530
    %v3855 = vunpack.c.l.b16 %v3531
    %v3856 = vunpack.c.h.b16 %v3531
    %v3857 = vunpack.c.l.b16 %v3532
    %v3858 = vunpack.c.h.b16 %v3532
    %v3859 = vunpack.c.l.b16 %v3533
    %v3860 = vunpack.c.h.b16 %v3533
    %v3861 = vunpack.c.l.b16 %v3534
    %v3862 = vunpack.c.h.b16 %v3534
    %v3863 = vunpack.c.l.b16 %v3535
    %v3864 = vunpack.c.h.b16 %v3535
    %v3865 = vunpack.c.l.b16 %v3536
    %v3866 = vunpack.c.h.b16 %v3536
    %v3867 = vunpack.c.l.b16 %v3537
    %v3868 = vunpack.c.h.b16 %v3537
    %v3869 = vunpack.c.l.b16 %v3538
    %v3870 = vunpack.c.h.b16 %v3538
    %v3871 = vunpack.c.l.b16 %v3539
    %v3872 = vunpack.c.h.b16 %v3539
    %v3873 = vunpack.c.l.b16 %v3540
    %v3874 = vunpack.c.h.b16 %v3540
    %v3875 = vunpack.c.l.b16 %v3541
    %v3876 = vunpack.c.h.b16 %v3541
    %v3877 = vunpack.c.l.b16 %v3542
    %v3878 = vunpack.c.h.b16 %v3542
    %v3879 = vunpack.c.l.b16 %v3543
    %v3880 = vunpack.c.h.b16 %v3543
    %v3881 = vunpack.c.l.b16 %v3544
    %v3882 = vunpack.c.h.b16 %v3544
    %v3883 = vunpack.c.l.b16 %v3545
    %v3884 = vunpack.c.h.b16 %v3545
    %v3885 = vunpack.c.l.b16 %v3546
    %v3886 = vunpack.c.h.b16 %v3546
    %v3887 = vunpack.c.l.b16 %v3547
    %v3888 = vunpack.c.h.b16 %v3547
    %v3889 = vunpack.c.l.b16 %v3548
    %v3890 = vunpack.c.h.b16 %v3548
    %v3891 = vunpack.c.l.b16 %v3549
    %v3892 = vunpack.c.h.b16 %v3549
    %v3893 = vunpack.c.l.b16 %v3550
    %v3894 = vunpack.c.h.b16 %v3550
    %v3895 = vunpack.c.l.b16 %v3551
    %v3896 = vunpack.c.h.b16 %v3551
    %v3897 = vunpack.c.l.b16 %v3552
    %v3898 = vunpack.c.h.b16 %v3552
    %v3899 = vunpack.c.l.b16 %v3553
    %v3900 = vunpack.c.h.b16 %v3553
    %v3901 = vunpack.c.l.b16 %v3554
    %v3902 = vunpack.c.h.b16 %v3554
    %v3903 = vunpack.c.l.b16 %v3555
    %v3904 = vunpack.c.h.b16 %v3555
    %v3905 = vunpack.c.l.b16 %v3556
    %v3906 = vunpack.c.h.b16 %v3556
    %v3907 = vunpack.c.l.b16 %v3557
    %v3908 = vunpack.c.h.b16 %v3557
    %v3909 = vunpack.c.l.b16 %v3558
    %v3910 = vunpack.c.h.b16 %v3558
    %v3911 = vunpack.c.l.b16 %v3559
    %v3912 = vunpack.c.h.b16 %v3559
    %v3913 = vunpack.c.l.b16 %v3560
    %v3914 = vunpack.c.h.b16 %v3560
    %v3915 = vunpack.c.l.b16 %v3561
    %v3916 = vunpack.c.h.b16 %v3561
    %v3917 = vunpack.c.l.b16 %v3562
    %v3918 = vunpack.c.h.b16 %v3562
    %v3919 = vunpack.c.l.b16 %v3563
    %v3920 = vunpack.c.h.b16 %v3563
    %v3921 = vunpack.c.l.b16 %v3564
    %v3922 = vunpack.c.h.b16 %v3564
    %v3923 = vunpack.c.l.b16 %v3565
    %v3924 = vunpack.c.h.b16 %v3565
    %v3925 = vunpack.c.l.b16 %v3566
    %v3926 = vunpack.c.h.b16 %v3566
    %v3927 = vunpack.c.l.b16 %v3567
    %v3928 = vunpack.c.h.b16 %v3567
    %v3929 = vunpack.c.l.b16 %v3568
    %v3930 = vunpack.c.h.b16 %v3568
    %v3931 = vunpack.c.l.b16 %v3569
    %v3932 = vunpack.c.h.b16 %v3569
    %v3933 = vunpack.c.l.b16 %v3570
    %v3934 = vunpack.c.h.b16 %v3570
    %v3935 = vunpack.c.l.b16 %v3571
    %v3936 = vunpack.c.h.b16 %v3571
    %v3937 = vunpack.c.l.b16 %v3572
    %v3938 = vunpack.c.h.b16 %v3572
    %v3939 = vunpack.c.l.b16 %v3573
    %v3940 = vunpack.c.h.b16 %v3573
    %v3941 = vunpack.c.l.b16 %v3574
    %v3942 = vunpack.c.h.b16 %v3574
    %v3943 = vunpack.c.l.b16 %v3575
    %v3944 = vunpack.c.h.b16 %v3575
    %v3945 = vunpack.c.l.b16 %v3576
    %v3946 = vunpack.c.h.b16 %v3576
    %v3947 = vunpack.c.l.b16 %v3577
    %v3948 = vunpack.c.h.b16 %v3577
    %v3949 = vunpack.c.l.b16 %v3578
    %v3950 = vunpack.c.h.b16 %v3578
    %v3951 = vunpack.c.l.b16 %v3579
    %v3952 = vunpack.c.h.b16 %v3579
    %v3953 = vunpack.c.l.b16 %v3580
    %v3954 = vunpack.c.h.b16 %v3580
    %v3955 = vunpack.c.l.b16 %v3581
    %v3956 = vunpack.c.h.b16 %v3581
    %v3957 = vunpack.c.l.b16 %v3582
    %v3958 = vunpack.c.h.b16 %v3582
    %v3959 = vunpack.c.l.b16 %v3583
    %v3960 = vunpack.c.h.b16 %v3583
    %v3961 = vunpack.c.l.b16 %v3584
    %v3962 = vunpack.c.h.b16 %v3584
    %v3963 = vunpack.c.l.b16 %v3585
    %v3964 = vunpack.c.h.b16 %v3585
    %v3965 = vunpack.c.l.b16 %v3586
    %v3966 = vunpack.c.h.b16 %v3586
    %v3967 = vunpack.c.l.b16 %v3587
    %v3968 = vunpack.c.h.b16 %v3587
    %v3969 = vunpack.c.l.b16 %v3588
    %v3970 = vunpack.c.h.b16 %v3588
    %v3971 = vunpack.c.l.b16 %v3589
    %v3972 = vunpack.c.h.b16 %v3589
    %v3973 = vunpack.c.l.b16 %v3590
    %v3974 = vunpack.c.h.b16 %v3590
    %v3975 = vpack.c.b16 %v3727, %v3719
    %v3976 = vpack.c.b16 %v3728, %v3720
    %v3977 = vpack.c.b16 %v3729, %v3721
    %v3978 = vpack.c.b16 %v3730, %v3722
    %v3979 = vpack.c.b16 %v3731, %v3723
    %v3980 = vpack.c.b16 %v3732, %v3724
    %v3981 = vpack.c.b16 %v3733, %v3725
    %v3982 = vpack.c.b16 %v3734, %v3726
    %v3983 = vpack.c.b16 %v3743, %v3735
    %v3984 = vpack.c.b16 %v3744, %v3736
    %v3985 = vpack.c.b16 %v3745, %v3737
    %v3986 = vpack.c.b16 %v3746, %v3738
    %v3987 = vpack.c.b16 %v3747, %v3739
    %v3988 = vpack.c.b16 %v3748, %v3740
    %v3989 = vpack.c.b16 %v3749, %v3741
    %v3990 = vpack.c.b16 %v3750, %v3742
    %v3991 = vpack.c.b16 %v3759, %v3751
    %v3992 = vpack.c.b16 %v3760, %v3752
    %v3993 = vpack.c.b16 %v3761, %v3753
    %v3994 = vpack.c.b16 %v3762, %v3754
    %v3995 = vpack.c.b16 %v3763, %v3755
    %v3996 = vpack.c.b16 %v3764, %v3756
    %v3997 = vpack.c.b16 %v3765, %v3757
    %v3998 = vpack.c.b16 %v3766, %v3758
    %v3999 = vpack.c.b16 %v3775, %v3767
    %v4000 = vpack.c.b16 %v3776, %v3768
    %v4001 = vpack.c.b16 %v3777, %v3769
    %v4002 = vpack.c.b16 %v3778, %v3770
    %v4003 = vpack.c.b16 %v3779, %v3771
    %v4004 = vpack.c.b16 %v3780, %v3772
    %v4005 = vpack.c.b16 %v3781, %v3773
    %v4006 = vpack.c.b16 %v3782, %v3774
    %v4007 = vpack.c.b16 %v3791, %v3783
    %v4008 = vpack.c.b16 %v3792, %v3784
    %v4009 = vpack.c.b16 %v3793, %v3785
    %v4010 = vpack.c.b16 %v3794, %v3786
    %v4011 = vpack.c.b16 %v3795, %v3787
    %v4012 = vpack.c.b16 %v3796, %v3788
    %v4013 = vpack.c.b16 %v3797, %v3789
    %v4014 = vpack.c.b16 %v3798, %v3790
    %v4015 = vpack.c.b16 %v3807, %v3799
    %v4016 = vpack.c.b16 %v3808, %v3800
    %v4017 = vpack.c.b16 %v3809, %v3801
    %v4018 = vpack.c.b16 %v3810, %v3802
    %v4019 = vpack.c.b16 %v3811, %v3803
    %v4020 = vpack.c.b16 %v3812, %v3804
    %v4021 = vpack.c.b16 %v3813, %v3805
    %v4022 = vpack.c.b16 %v3814, %v3806
    %v4023 = vpack.c.b16 %v3823, %v3815
    %v4024 = vpack.c.b16 %v3824, %v3816
    %v4025 = vpack.c.b16 %v3825, %v3817
    %v4026 = vpack.c.b16 %v3826, %v3818
    %v4027 = vpack.c.b16 %v3827, %v3819
    %v4028 = vpack.c.b16 %v3828, %v3820
    %v4029 = vpack.c.b16 %v3829, %v3821
    %v4030 = vpack.c.b16 %v3830, %v3822
    %v4031 = vpack.c.b16 %v3839, %v3831
    %v4032 = vpack.c.b16 %v3840, %v3832
    %v4033 = vpack.c.b16 %v3841, %v3833
    %v4034 = vpack.c.b16 %v3842, %v3834
    %v4035 = vpack.c.b16 %v3843, %v3835
    %v4036 = vpack.c.b16 %v3844, %v3836
    %v4037 = vpack.c.b16 %v3845, %v3837
    %v4038 = vpack.c.b16 %v3846, %v3838
    %v4039 = vpack.c.b16 %v3855, %v3847
    %v4040 = vpack.c.b16 %v3856, %v3848
    %v4041 = vpack.c.b16 %v3857, %v3849
    %v4042 = vpack.c.b16 %v3858, %v3850
    %v4043 = vpack.c.b16 %v3859, %v3851
    %v4044 = vpack.c.b16 %v3860, %v3852
    %v4045 = vpack.c.b16 %v3861, %v3853
    %v4046 = vpack.c.b16 %v3862, %v3854
    %v4047 = vpack.c.b16 %v3871, %v3863
    %v4048 = vpack.c.b16 %v3872, %v3864
    %v4049 = vpack.c.b16 %v3873, %v3865
    %v4050 = vpack.c.b16 %v3874, %v3866
    %v4051 = vpack.c.b16 %v3875, %v3867
    %v4052 = vpack.c.b16 %v3876, %v3868
    %v4053 = vpack.c.b16 %v3877, %v3869
    %v4054 = vpack.c.b16 %v3878, %v3870
    %v4055 = vpack.c.b16 %v3887, %v3879
    %v4056 = vpack.c.b16 %v3888, %v3880
    %v4057 = vpack.c.b16 %v3889, %v3881
    %v4058 = vpack.c.b16 %v3890, %v3882
    %v4059 = vpack.c.b16 %v3891, %v3883
    %v4060 = vpack.c.b16 %v3892, %v3884
    %v4061 = vpack.c.b16 %v3893, %v3885
    %v4062 = vpack.c.b16 %v3894, %v3886
    %v4063 = vpack.c.b16 %v3903, %v3895
    %v4064 = vpack.c.b16 %v3904, %v3896
    %v4065 = vpack.c.b16 %v3905, %v3897
    %v4066 = vpack.c.b16 %v3906, %v3898
    %v4067 = vpack.c.b16 %v3907, %v3899
    %v4068 = vpack.c.b16 %v3908, %v3900
    %v4069 = vpack.c.b16 %v3909, %v3901
    %v4070 = vpack.c.b16 %v3910, %v3902
    %v4071 = vpack.c.b16 %v3919, %v3911
    %v4072 = vpack.c.b16 %v3920, %v3912
    %v4073 = vpack.c.b16 %v3921, %v3913
    %v4074 = vpack.c.b16 %v3922, %v3914
    %v4075 = vpack.c.b16 %v3923, %v3915
    %v4076 = vpack.c.b16 %v3924, %v3916
    %v4077 = vpack.c.b16 %v3925, %v3917
    %v4078 = vpack.c.b16 %v3926, %v3918
    %v4079 = vpack.c.b16 %v3935, %v3927
    %v4080 = vpack.c.b16 %v3936, %v3928
    %v4081 = vpack.c.b16 %v3937, %v3929
    %v4082 = vpack.c.b16 %v3938, %v3930
    %v4083 = vpack.c.b16 %v3939, %v3931
    %v4084 = vpack.c.b16 %v3940, %v3932
    %v4085 = vpack.c.b16 %v3941, %v3933
    %v4086 = vpack.c.b16 %v3942, %v3934
    %v4087 = vpack.c.b16 %v3951, %v3943
    %v4088 = vpack.c.b16 %v3952, %v3944
    %v4089 = vpack.c.b16 %v3953, %v3945
    %v4090 = vpack.c.b16 %v3954, %v3946
    %v4091 = vpack.c.b16 %v3955, %v3947
    %v4092 = vpack.c.b16 %v3956, %v3948
    %v4093 = vpack.c.b16 %v3957, %v3949
    %v4094 = vpack.c.b16 %v3958, %v3950
    %v4095 = vpack.c.b16 %v3967, %v3959
    %v4096 = vpack.c.b16 %v3968, %v3960
    %v4097 = vpack.c.b16 %v3969, %v3961
    %v4098 = vpack.c.b16 %v3970, %v3962
    %v4099 = vpack.c.b16 %v3971, %v3963
    %v4100 = vpack.c.b16 %v3972, %v3964
    %v4101 = vpack.c.b16 %v3973, %v3965
    %v4102 = vpack.c.b16 %v3974, %v3966
    %4231 = vmatpush.bf16.msra.mxu0 %v4031
    %4232 = vmatpush.bf16.msra.mxu0 %v4023
    %4233 = vmatpush.bf16.msra.mxu0 %v4015
    %4234 = vmatpush.bf16.msra.mxu0 %v4007
    %4235 = vmatpush.bf16.msra.mxu0 %v3999
    %4236 = vmatpush.bf16.msra.mxu0 %v3991
    %4237 = vmatpush.bf16.msra.mxu0 %v3983
    %4238 = vmatpush.bf16.msra.mxu0 %v3975
    %4239 = vmatmul.bf16.gmra.mxu0 0
    %v4240 = vpop.f32.mrf.mxu0
    %v4241 = vadd.f32 0.0, %v4240
    %v4242 = vpop.f32.mrf.mxu0
    %4243 = vdwg.mxu0
    %4244 = vmatpush.bf16.msra.mxu0 %v4095
    %4245 = vmatpush.bf16.msra.mxu0 %v4087
    %4246 = vmatpush.bf16.msra.mxu0 %v4079
    %4247 = vmatpush.bf16.msra.mxu0 %v4071
    %4248 = vmatpush.bf16.msra.mxu0 %v4063
    %4249 = vmatpush.bf16.msra.mxu0 %v4055
    %4250 = vmatpush.bf16.msra.mxu0 %v4047
    %4251 = vmatpush.bf16.msra.mxu0 %v4039
    %4252 = vmatmul.bf16.gmra.mxu0 0
    %v4253 = vpop.f32.mrf.mxu0
    %v4254 = vadd.f32 %v4241, %v4253
    %v4255 = vpop.f32.mrf.mxu0
    %4256 = vdwg.mxu0
    %4257 = vmatpush.bf16.msra.mxu0 %v4032
    %4258 = vmatpush.bf16.msra.mxu0 %v4024
    %4259 = vmatpush.bf16.msra.mxu0 %v4016
    %4260 = vmatpush.bf16.msra.mxu0 %v4008
    %4261 = vmatpush.bf16.msra.mxu0 %v4000
    %4262 = vmatpush.bf16.msra.mxu0 %v3992
    %4263 = vmatpush.bf16.msra.mxu0 %v3984
    %4264 = vmatpush.bf16.msra.mxu0 %v3976
    %4265 = vmatmul.bf16.gmra.mxu0 0
    %v4266 = vpop.f32.mrf.mxu0
    %v4267 = vadd.f32 0.0, %v4266
    %v4268 = vpop.f32.mrf.mxu0
    %4269 = vdwg.mxu0
    %4270 = vmatpush.bf16.msra.mxu0 %v4096
    %4271 = vmatpush.bf16.msra.mxu0 %v4088
    %4272 = vmatpush.bf16.msra.mxu0 %v4080
    %4273 = vmatpush.bf16.msra.mxu0 %v4072
    %4274 = vmatpush.bf16.msra.mxu0 %v4064
    %4275 = vmatpush.bf16.msra.mxu0 %v4056
    %4276 = vmatpush.bf16.msra.mxu0 %v4048
    %4277 = vmatpush.bf16.msra.mxu0 %v4040
    %4278 = vmatmul.bf16.gmra.mxu0 0
    %v4279 = vpop.f32.mrf.mxu0
    %v4280 = vadd.f32 %v4267, %v4279
    %v4281 = vpop.f32.mrf.mxu0
    %4282 = vdwg.mxu0
    %4283 = vmatpush.bf16.msra.mxu0 %v4033
    %4284 = vmatpush.bf16.msra.mxu0 %v4025
    %4285 = vmatpush.bf16.msra.mxu0 %v4017
    %4286 = vmatpush.bf16.msra.mxu0 %v4009
    %4287 = vmatpush.bf16.msra.mxu0 %v4001
    %4288 = vmatpush.bf16.msra.mxu0 %v3993
    %4289 = vmatpush.bf16.msra.mxu0 %v3985
    %4290 = vmatpush.bf16.msra.mxu0 %v3977
    %4291 = vmatmul.bf16.gmra.mxu0 0
    %v4292 = vpop.f32.mrf.mxu0
    %v4293 = vadd.f32 0.0, %v4292
    %v4294 = vpop.f32.mrf.mxu0
    %4295 = vdwg.mxu0
    %4296 = vmatpush.bf16.msra.mxu0 %v4097
    %4297 = vmatpush.bf16.msra.mxu0 %v4089
    %4298 = vmatpush.bf16.msra.mxu0 %v4081
    %4299 = vmatpush.bf16.msra.mxu0 %v4073
    %4300 = vmatpush.bf16.msra.mxu0 %v4065
    %4301 = vmatpush.bf16.msra.mxu0 %v4057
    %4302 = vmatpush.bf16.msra.mxu0 %v4049
    %4303 = vmatpush.bf16.msra.mxu0 %v4041
    %4304 = vmatmul.bf16.gmra.mxu0 0
    %v4305 = vpop.f32.mrf.mxu0
    %v4306 = vadd.f32 %v4293, %v4305
    %v4307 = vpop.f32.mrf.mxu0
    %4308 = vdwg.mxu0
    %4309 = vmatpush.bf16.msra.mxu0 %v4034
    %4310 = vmatpush.bf16.msra.mxu0 %v4026
    %4311 = vmatpush.bf16.msra.mxu0 %v4018
    %4312 = vmatpush.bf16.msra.mxu0 %v4010
    %4313 = vmatpush.bf16.msra.mxu0 %v4002
    %4314 = vmatpush.bf16.msra.mxu0 %v3994
    %4315 = vmatpush.bf16.msra.mxu0 %v3986
    %4316 = vmatpush.bf16.msra.mxu0 %v3978
    %4317 = vmatmul.bf16.gmra.mxu0 0
    %v4318 = vpop.f32.mrf.mxu0
    %v4319 = vadd.f32 0.0, %v4318
    %v4320 = vpop.f32.mrf.mxu0
    %4321 = vdwg.mxu0
    %4322 = vmatpush.bf16.msra.mxu0 %v4098
    %4323 = vmatpush.bf16.msra.mxu0 %v4090
    %4324 = vmatpush.bf16.msra.mxu0 %v4082
    %4325 = vmatpush.bf16.msra.mxu0 %v4074
    %4326 = vmatpush.bf16.msra.mxu0 %v4066
    %4327 = vmatpush.bf16.msra.mxu0 %v4058
    %4328 = vmatpush.bf16.msra.mxu0 %v4050
    %4329 = vmatpush.bf16.msra.mxu0 %v4042
    %4330 = vmatmul.bf16.gmra.mxu0 0
    %v4331 = vpop.f32.mrf.mxu0
    %v4332 = vadd.f32 %v4319, %v4331
    %v4333 = vpop.f32.mrf.mxu0
    %4334 = vdwg.mxu0
    %4335 = vmatpush.bf16.msra.mxu0 %v4035
    %4336 = vmatpush.bf16.msra.mxu0 %v4027
    %4337 = vmatpush.bf16.msra.mxu0 %v4019
    %4338 = vmatpush.bf16.msra.mxu0 %v4011
    %4339 = vmatpush.bf16.msra.mxu0 %v4003
    %4340 = vmatpush.bf16.msra.mxu0 %v3995
    %4341 = vmatpush.bf16.msra.mxu0 %v3987
    %4342 = vmatpush.bf16.msra.mxu0 %v3979
    %4343 = vmatmul.bf16.gmra.mxu0 0
    %v4344 = vpop.f32.mrf.mxu0
    %v4345 = vadd.f32 0.0, %v4344
    %v4346 = vpop.f32.mrf.mxu0
    %4347 = vdwg.mxu0
    %4348 = vmatpush.bf16.msra.mxu0 %v4099
    %4349 = vmatpush.bf16.msra.mxu0 %v4091
    %4350 = vmatpush.bf16.msra.mxu0 %v4083
    %4351 = vmatpush.bf16.msra.mxu0 %v4075
    %4352 = vmatpush.bf16.msra.mxu0 %v4067
    %4353 = vmatpush.bf16.msra.mxu0 %v4059
    %4354 = vmatpush.bf16.msra.mxu0 %v4051
    %4355 = vmatpush.bf16.msra.mxu0 %v4043
    %4356 = vmatmul.bf16.gmra.mxu0 0
    %v4357 = vpop.f32.mrf.mxu0
    %v4358 = vadd.f32 %v4345, %v4357
    %v4359 = vpop.f32.mrf.mxu0
    %4360 = vdwg.mxu0
    %4361 = vmatpush.bf16.msra.mxu0 %v4036
    %4362 = vmatpush.bf16.msra.mxu0 %v4028
    %4363 = vmatpush.bf16.msra.mxu0 %v4020
    %4364 = vmatpush.bf16.msra.mxu0 %v4012
    %4365 = vmatpush.bf16.msra.mxu0 %v4004
    %4366 = vmatpush.bf16.msra.mxu0 %v3996
    %4367 = vmatpush.bf16.msra.mxu0 %v3988
    %4368 = vmatpush.bf16.msra.mxu0 %v3980
    %4369 = vmatmul.bf16.gmra.mxu0 0
    %v4370 = vpop.f32.mrf.mxu0
    %v4371 = vadd.f32 0.0, %v4370
    %v4372 = vpop.f32.mrf.mxu0
    %4373 = vdwg.mxu0
    %4374 = vmatpush.bf16.msra.mxu0 %v4100
    %4375 = vmatpush.bf16.msra.mxu0 %v4092
    %4376 = vmatpush.bf16.msra.mxu0 %v4084
    %4377 = vmatpush.bf16.msra.mxu0 %v4076
    %4378 = vmatpush.bf16.msra.mxu0 %v4068
    %4379 = vmatpush.bf16.msra.mxu0 %v4060
    %4380 = vmatpush.bf16.msra.mxu0 %v4052
    %4381 = vmatpush.bf16.msra.mxu0 %v4044
    %4382 = vmatmul.bf16.gmra.mxu0 0
    %v4383 = vpop.f32.mrf.mxu0
    %v4384 = vadd.f32 %v4371, %v4383
    %v4385 = vpop.f32.mrf.mxu0
    %4386 = vdwg.mxu0
    %4387 = vmatpush.bf16.msra.mxu0 %v4037
    %4388 = vmatpush.bf16.msra.mxu0 %v4029
    %4389 = vmatpush.bf16.msra.mxu0 %v4021
    %4390 = vmatpush.bf16.msra.mxu0 %v4013
    %4391 = vmatpush.bf16.msra.mxu0 %v4005
    %4392 = vmatpush.bf16.msra.mxu0 %v3997
    %4393 = vmatpush.bf16.msra.mxu0 %v3989
    %4394 = vmatpush.bf16.msra.mxu0 %v3981
    %4395 = vmatmul.bf16.gmra.mxu0 0
    %v4396 = vpop.f32.mrf.mxu0
    %v4397 = vadd.f32 0.0, %v4396
    %v4398 = vpop.f32.mrf.mxu0
    %4399 = vdwg.mxu0
    %4400 = vmatpush.bf16.msra.mxu0 %v4101
    %4401 = vmatpush.bf16.msra.mxu0 %v4093
    %4402 = vmatpush.bf16.msra.mxu0 %v4085
    %4403 = vmatpush.bf16.msra.mxu0 %v4077
    %4404 = vmatpush.bf16.msra.mxu0 %v4069
    %4405 = vmatpush.bf16.msra.mxu0 %v4061
    %4406 = vmatpush.bf16.msra.mxu0 %v4053
    %4407 = vmatpush.bf16.msra.mxu0 %v4045
    %4408 = vmatmul.bf16.gmra.mxu0 0
    %v4409 = vpop.f32.mrf.mxu0
    %v4410 = vadd.f32 %v4397, %v4409
    %v4411 = vpop.f32.mrf.mxu0
    %4412 = vdwg.mxu0
    %4413 = vmatpush.bf16.msra.mxu0 %v4038
    %4414 = vmatpush.bf16.msra.mxu0 %v4030
    %4415 = vmatpush.bf16.msra.mxu0 %v4022
    %4416 = vmatpush.bf16.msra.mxu0 %v4014
    %4417 = vmatpush.bf16.msra.mxu0 %v4006
    %4418 = vmatpush.bf16.msra.mxu0 %v3998
    %4419 = vmatpush.bf16.msra.mxu0 %v3990
    %4420 = vmatpush.bf16.msra.mxu0 %v3982
    %4421 = vmatmul.bf16.gmra.mxu0 0
    %v4422 = vpop.f32.mrf.mxu0
    %v4423 = vadd.f32 0.0, %v4422
    %v4424 = vpop.f32.mrf.mxu0
    %4425 = vdwg.mxu0
    %4426 = vmatpush.bf16.msra.mxu0 %v4102
    %4427 = vmatpush.bf16.msra.mxu0 %v4094
    %4428 = vmatpush.bf16.msra.mxu0 %v4086
    %4429 = vmatpush.bf16.msra.mxu0 %v4078
    %4430 = vmatpush.bf16.msra.mxu0 %v4070
    %4431 = vmatpush.bf16.msra.mxu0 %v4062
    %4432 = vmatpush.bf16.msra.mxu0 %v4054
    %4433 = vmatpush.bf16.msra.mxu0 %v4046
    %4434 = vmatmul.bf16.gmra.mxu0 0
    %v4435 = vpop.f32.mrf.mxu0
    %v4436 = vadd.f32 %v4423, %v4435
    %v4437 = vpop.f32.mrf.mxu0
    %4438 = vdwg.mxu0
    %v4439 = vadd.f32 %v3278, %v4254
    %v4440 = vadd.f32 %v3304, %v4280
    %v4441 = vadd.f32 %v3330, %v4306
    %v4442 = vadd.f32 %v3356, %v4332
    %v4443 = vadd.f32 %v3382, %v4358
    %v4444 = vadd.f32 %v3408, %v4384
    %v4445 = vadd.f32 %v3434, %v4410
    %v4446 = vadd.f32 %v3460, %v4436
    %v4447 = vxor.u32 %v4439, 2147483648
    %v4448 = vxor.u32 %v4440, 2147483648
    %v4449 = vmul.f32 %v4447, 1.442695
    %v4450 = vpow.pop %v4449
    %v4451 = vmul.f32 %v4448, 1.442695
    %v4452 = vpow.pop %v4451
    %v4453 = vadd.f32 %v4450, 1.0
    %v4454 = vadd.f32 %v4452, 1.0
    %v4455 = vrcp.pop %v4453
    %v4456 = vmul.f32 %v4453, %v4455
    %v4457 = vsub.f32 1.0, %v4456
    %v4458 = vmul.f32 %v4455, %v4457
    %v4459 = vadd.f32 %v4455, %v4458
    %vm4460 = vweird.f32 %v4453
    %vm4461 = vweird.f32 %v4455
    %vm4462 = vmor %vm4460, %vm4461
    %v4463 = vsel %vm4462, %v4455, %v4459
    %v4464 = vand.u32 2147483647, %v4453
    %vm4465 = vcmp.eq.f32.partialorder %v4464, 8.507059e+37
    %v4466 = vand.u32 %v4453, 2147483648
    %v4467 = vor.u32 1.1754944e-38, %v4466
    %v4468 = vsel %vm4465, %v4467, %v4463
    %v4469 = vmul.f32 1.0, %v4468
    %v4470 = vrcp.pop %v4454
    %v4471 = vmul.f32 %v4454, %v4470
    %v4472 = vsub.f32 1.0, %v4471
    %v4473 = vmul.f32 %v4470, %v4472
    %v4474 = vadd.f32 %v4470, %v4473
    %vm4475 = vweird.f32 %v4454
    %vm4476 = vweird.f32 %v4470
    %vm4477 = vmor %vm4475, %vm4476
    %v4478 = vsel %vm4477, %v4470, %v4474
    %v4479 = vand.u32 2147483647, %v4454
    %vm4480 = vcmp.eq.f32.partialorder %v4479, 8.507059e+37
    %v4481 = vand.u32 %v4454, 2147483648
    %v4482 = vor.u32 1.1754944e-38, %v4481
    %v4483 = vsel %vm4480, %v4482, %v4478
    %v4484 = vmul.f32 1.0, %v4483
    %v4485 = vxor.u32 %v4441, 2147483648
    %v4486 = vxor.u32 %v4442, 2147483648
    %v4487 = vmul.f32 %v4485, 1.442695
    %v4488 = vpow.pop %v4487
    %v4489 = vmul.f32 %v4486, 1.442695
    %v4490 = vpow.pop %v4489
    %v4491 = vadd.f32 %v4488, 1.0
    %v4492 = vadd.f32 %v4490, 1.0
    %v4493 = vrcp.pop %v4491
    %v4494 = vmul.f32 %v4491, %v4493
    %v4495 = vsub.f32 1.0, %v4494
    %v4496 = vmul.f32 %v4493, %v4495
    %v4497 = vadd.f32 %v4493, %v4496
    %vm4498 = vweird.f32 %v4491
    %vm4499 = vweird.f32 %v4493
    %vm4500 = vmor %vm4498, %vm4499
    %v4501 = vsel %vm4500, %v4493, %v4497
    %v4502 = vand.u32 2147483647, %v4491
    %vm4503 = vcmp.eq.f32.partialorder %v4502, 8.507059e+37
    %v4504 = vand.u32 %v4491, 2147483648
    %v4505 = vor.u32 1.1754944e-38, %v4504
    %v4506 = vsel %vm4503, %v4505, %v4501
    %v4507 = vmul.f32 1.0, %v4506
    %v4508 = vrcp.pop %v4492
    %v4509 = vmul.f32 %v4492, %v4508
    %v4510 = vsub.f32 1.0, %v4509
    %v4511 = vmul.f32 %v4508, %v4510
    %v4512 = vadd.f32 %v4508, %v4511
    %vm4513 = vweird.f32 %v4492
    %vm4514 = vweird.f32 %v4508
    %vm4515 = vmor %vm4513, %vm4514
    %v4516 = vsel %vm4515, %v4508, %v4512
    %v4517 = vand.u32 2147483647, %v4492
    %vm4518 = vcmp.eq.f32.partialorder %v4517, 8.507059e+37
    %v4519 = vand.u32 %v4492, 2147483648
    %v4520 = vor.u32 1.1754944e-38, %v4519
    %v4521 = vsel %vm4518, %v4520, %v4516
    %v4522 = vmul.f32 1.0, %v4521
    %v4523 = vtanh.pop %v4443
    %v4524 = vtanh.pop %v4444
    %v4525 = vxor.u32 %v4445, 2147483648
    %v4526 = vxor.u32 %v4446, 2147483648
    %v4527 = vmul.f32 %v4525, 1.442695
    %v4528 = vpow.pop %v4527
    %v4529 = vmul.f32 %v4526, 1.442695
    %v4530 = vpow.pop %v4529
    %v4531 = vadd.f32 %v4528, 1.0
    %v4532 = vadd.f32 %v4530, 1.0
    %v4533 = vrcp.pop %v4531
    %v4534 = vmul.f32 %v4531, %v4533
    %v4535 = vsub.f32 1.0, %v4534
    %v4536 = vmul.f32 %v4533, %v4535
    %v4537 = vadd.f32 %v4533, %v4536
    %vm4538 = vweird.f32 %v4531
    %vm4539 = vweird.f32 %v4533
    %vm4540 = vmor %vm4538, %vm4539
    %v4541 = vsel %vm4540, %v4533, %v4537
    %v4542 = vand.u32 2147483647, %v4531
    %vm4543 = vcmp.eq.f32.partialorder %v4542, 8.507059e+37
    %v4544 = vand.u32 %v4531, 2147483648
    %v4545 = vor.u32 1.1754944e-38, %v4544
    %v4546 = vsel %vm4543, %v4545, %v4541
    %v4547 = vmul.f32 1.0, %v4546
    %v4548 = vrcp.pop %v4532
    %v4549 = vmul.f32 %v4532, %v4548
    %v4550 = vsub.f32 1.0, %v4549
    %v4551 = vmul.f32 %v4548, %v4550
    %v4552 = vadd.f32 %v4548, %v4551
    %vm4553 = vweird.f32 %v4532
    %vm4554 = vweird.f32 %v4548
    %vm4555 = vmor %vm4553, %vm4554
    %v4556 = vsel %vm4555, %v4548, %v4552
    %v4557 = vand.u32 2147483647, %v4532
    %vm4558 = vcmp.eq.f32.partialorder %v4557, 8.507059e+37
    %v4559 = vand.u32 %v4532, 2147483648
    %v4560 = vor.u32 1.1754944e-38, %v4559
    %v4561 = vsel %vm4558, %v4560, %v4556
    %v4562 = vmul.f32 1.0, %v4561
    %v4563 = vmul.f32 %v4507, 0.0
    %v4564 = vmul.f32 %v4522, 0.0
    %v4565 = vmul.f32 %v4469, %v4523
    %v4566 = vmul.f32 %v4484, %v4524
    %v4567 = vadd.f32 %v4563, %v4565
    %v4568 = vadd.f32 %v4564, %v4566
    %v4569 = vtanh.pop %v4567
    %v4570 = vtanh.pop %v4568
    %v4571 = vmul.f32 %v4547, %v4569
    %v4572 = vmul.f32 %v4562, %v4570
    %v4573 = vpack.c.bf16 %v4571, %v4571
    %v4574 = vpack.c.bf16 %v4572, %v4572
    %4575 = vmatpush.bf16.msra.mxu0 %v4031
    %4576 = vmatpush.bf16.msra.mxu0 %v4023
    %4577 = vmatpush.bf16.msra.mxu0 %v4015
    %4578 = vmatpush.bf16.msra.mxu0 %v4007
    %4579 = vmatpush.bf16.msra.mxu0 %v3999
    %4580 = vmatpush.bf16.msra.mxu0 %v3991
    %4581 = vmatpush.bf16.msra.mxu0 %v3983
    %4582 = vmatpush.bf16.msra.mxu0 %v3975
    %4583 = vmatmul.bf16.gmra.mxu0 %v4573
    %v4584 = vpop.f32.mrf.mxu0
    %v4585 = vadd.f32 0.0, %v4584
    %v4586 = vpop.f32.mrf.mxu0
    %4587 = vdwg.mxu0
    %4588 = vmatpush.bf16.msra.mxu0 %v4095
    %4589 = vmatpush.bf16.msra.mxu0 %v4087
    %4590 = vmatpush.bf16.msra.mxu0 %v4079
    %4591 = vmatpush.bf16.msra.mxu0 %v4071
    %4592 = vmatpush.bf16.msra.mxu0 %v4063
    %4593 = vmatpush.bf16.msra.mxu0 %v4055
    %4594 = vmatpush.bf16.msra.mxu0 %v4047
    %4595 = vmatpush.bf16.msra.mxu0 %v4039
    %4596 = vmatmul.bf16.gmra.mxu0 %v4574
    %v4597 = vpop.f32.mrf.mxu0
    %v4598 = vadd.f32 %v4585, %v4597
    %v4599 = vpop.f32.mrf.mxu0
    %4600 = vdwg.mxu0
    %4601 = vmatpush.bf16.msra.mxu0 %v4032
    %4602 = vmatpush.bf16.msra.mxu0 %v4024
    %4603 = vmatpush.bf16.msra.mxu0 %v4016
    %4604 = vmatpush.bf16.msra.mxu0 %v4008
    %4605 = vmatpush.bf16.msra.mxu0 %v4000
    %4606 = vmatpush.bf16.msra.mxu0 %v3992
    %4607 = vmatpush.bf16.msra.mxu0 %v3984
    %4608 = vmatpush.bf16.msra.mxu0 %v3976
    %4609 = vmatmul.bf16.gmra.mxu0 %v4573
    %v4610 = vpop.f32.mrf.mxu0
    %v4611 = vadd.f32 0.0, %v4610
    %v4612 = vpop.f32.mrf.mxu0
    %4613 = vdwg.mxu0
    %4614 = vmatpush.bf16.msra.mxu0 %v4096
    %4615 = vmatpush.bf16.msra.mxu0 %v4088
    %4616 = vmatpush.bf16.msra.mxu0 %v4080
    %4617 = vmatpush.bf16.msra.mxu0 %v4072
    %4618 = vmatpush.bf16.msra.mxu0 %v4064
    %4619 = vmatpush.bf16.msra.mxu0 %v4056
    %4620 = vmatpush.bf16.msra.mxu0 %v4048
    %4621 = vmatpush.bf16.msra.mxu0 %v4040
    %4622 = vmatmul.bf16.gmra.mxu0 %v4574
    %v4623 = vpop.f32.mrf.mxu0
    %v4624 = vadd.f32 %v4611, %v4623
    %v4625 = vpop.f32.mrf.mxu0
    %4626 = vdwg.mxu0
    %4627 = vmatpush.bf16.msra.mxu0 %v4033
    %4628 = vmatpush.bf16.msra.mxu0 %v4025
    %4629 = vmatpush.bf16.msra.mxu0 %v4017
    %4630 = vmatpush.bf16.msra.mxu0 %v4009
    %4631 = vmatpush.bf16.msra.mxu0 %v4001
    %4632 = vmatpush.bf16.msra.mxu0 %v3993
    %4633 = vmatpush.bf16.msra.mxu0 %v3985
    %4634 = vmatpush.bf16.msra.mxu0 %v3977
    %4635 = vmatmul.bf16.gmra.mxu0 %v4573
    %v4636 = vpop.f32.mrf.mxu0
    %v4637 = vadd.f32 0.0, %v4636
    %v4638 = vpop.f32.mrf.mxu0
    %4639 = vdwg.mxu0
    %4640 = vmatpush.bf16.msra.mxu0 %v4097
    %4641 = vmatpush.bf16.msra.mxu0 %v4089
    %4642 = vmatpush.bf16.msra.mxu0 %v4081
    %4643 = vmatpush.bf16.msra.mxu0 %v4073
    %4644 = vmatpush.bf16.msra.mxu0 %v4065
    %4645 = vmatpush.bf16.msra.mxu0 %v4057
    %4646 = vmatpush.bf16.msra.mxu0 %v4049
    %4647 = vmatpush.bf16.msra.mxu0 %v4041
    %4648 = vmatmul.bf16.gmra.mxu0 %v4574
    %v4649 = vpop.f32.mrf.mxu0
    %v4650 = vadd.f32 %v4637, %v4649
    %v4651 = vpop.f32.mrf.mxu0
    %4652 = vdwg.mxu0
    %4653 = vmatpush.bf16.msra.mxu0 %v4034
    %4654 = vmatpush.bf16.msra.mxu0 %v4026
    %4655 = vmatpush.bf16.msra.mxu0 %v4018
    %4656 = vmatpush.bf16.msra.mxu0 %v4010
    %4657 = vmatpush.bf16.msra.mxu0 %v4002
    %4658 = vmatpush.bf16.msra.mxu0 %v3994
    %4659 = vmatpush.bf16.msra.mxu0 %v3986
    %4660 = vmatpush.bf16.msra.mxu0 %v3978
    %4661 = vmatmul.bf16.gmra.mxu0 %v4573
    %v4662 = vpop.f32.mrf.mxu0
    %v4663 = vadd.f32 0.0, %v4662
    %v4664 = vpop.f32.mrf.mxu0
    %4665 = vdwg.mxu0
    %4666 = vmatpush.bf16.msra.mxu0 %v4098
    %4667 = vmatpush.bf16.msra.mxu0 %v4090
    %4668 = vmatpush.bf16.msra.mxu0 %v4082
    %4669 = vmatpush.bf16.msra.mxu0 %v4074
    %4670 = vmatpush.bf16.msra.mxu0 %v4066
    %4671 = vmatpush.bf16.msra.mxu0 %v4058
    %4672 = vmatpush.bf16.msra.mxu0 %v4050
    %4673 = vmatpush.bf16.msra.mxu0 %v4042
    %4674 = vmatmul.bf16.gmra.mxu0 %v4574
    %v4675 = vpop.f32.mrf.mxu0
    %v4676 = vadd.f32 %v4663, %v4675
    %v4677 = vpop.f32.mrf.mxu0
    %4678 = vdwg.mxu0
    %4679 = vmatpush.bf16.msra.mxu0 %v4035
    %4680 = vmatpush.bf16.msra.mxu0 %v4027
    %4681 = vmatpush.bf16.msra.mxu0 %v4019
    %4682 = vmatpush.bf16.msra.mxu0 %v4011
    %4683 = vmatpush.bf16.msra.mxu0 %v4003
    %4684 = vmatpush.bf16.msra.mxu0 %v3995
    %4685 = vmatpush.bf16.msra.mxu0 %v3987
    %4686 = vmatpush.bf16.msra.mxu0 %v3979
    %4687 = vmatmul.bf16.gmra.mxu0 %v4573
    %v4688 = vpop.f32.mrf.mxu0
    %v4689 = vadd.f32 0.0, %v4688
    %v4690 = vpop.f32.mrf.mxu0
    %4691 = vdwg.mxu0
    %4692 = vmatpush.bf16.msra.mxu0 %v4099
    %4693 = vmatpush.bf16.msra.mxu0 %v4091
    %4694 = vmatpush.bf16.msra.mxu0 %v4083
    %4695 = vmatpush.bf16.msra.mxu0 %v4075
    %4696 = vmatpush.bf16.msra.mxu0 %v4067
    %4697 = vmatpush.bf16.msra.mxu0 %v4059
    %4698 = vmatpush.bf16.msra.mxu0 %v4051
    %4699 = vmatpush.bf16.msra.mxu0 %v4043
    %4700 = vmatmul.bf16.gmra.mxu0 %v4574
    %v4701 = vpop.f32.mrf.mxu0
    %v4702 = vadd.f32 %v4689, %v4701
    %v4703 = vpop.f32.mrf.mxu0
    %4704 = vdwg.mxu0
    %4705 = vmatpush.bf16.msra.mxu0 %v4036
    %4706 = vmatpush.bf16.msra.mxu0 %v4028
    %4707 = vmatpush.bf16.msra.mxu0 %v4020
    %4708 = vmatpush.bf16.msra.mxu0 %v4012
    %4709 = vmatpush.bf16.msra.mxu0 %v4004
    %4710 = vmatpush.bf16.msra.mxu0 %v3996
    %4711 = vmatpush.bf16.msra.mxu0 %v3988
    %4712 = vmatpush.bf16.msra.mxu0 %v3980
    %4713 = vmatmul.bf16.gmra.mxu0 %v4573
    %v4714 = vpop.f32.mrf.mxu0
    %v4715 = vadd.f32 0.0, %v4714
    %v4716 = vpop.f32.mrf.mxu0
    %4717 = vdwg.mxu0
    %4718 = vmatpush.bf16.msra.mxu0 %v4100
    %4719 = vmatpush.bf16.msra.mxu0 %v4092
    %4720 = vmatpush.bf16.msra.mxu0 %v4084
    %4721 = vmatpush.bf16.msra.mxu0 %v4076
    %4722 = vmatpush.bf16.msra.mxu0 %v4068
    %4723 = vmatpush.bf16.msra.mxu0 %v4060
    %4724 = vmatpush.bf16.msra.mxu0 %v4052
    %4725 = vmatpush.bf16.msra.mxu0 %v4044
    %4726 = vmatmul.bf16.gmra.mxu0 %v4574
    %v4727 = vpop.f32.mrf.mxu0
    %v4728 = vadd.f32 %v4715, %v4727
    %v4729 = vpop.f32.mrf.mxu0
    %4730 = vdwg.mxu0
    %4731 = vmatpush.bf16.msra.mxu0 %v4037
    %4732 = vmatpush.bf16.msra.mxu0 %v4029
    %4733 = vmatpush.bf16.msra.mxu0 %v4021
    %4734 = vmatpush.bf16.msra.mxu0 %v4013
    %4735 = vmatpush.bf16.msra.mxu0 %v4005
    %4736 = vmatpush.bf16.msra.mxu0 %v3997
    %4737 = vmatpush.bf16.msra.mxu0 %v3989
    %4738 = vmatpush.bf16.msra.mxu0 %v3981
    %4739 = vmatmul.bf16.gmra.mxu0 %v4573
    %v4740 = vpop.f32.mrf.mxu0
    %v4741 = vadd.f32 0.0, %v4740
    %v4742 = vpop.f32.mrf.mxu0
    %4743 = vdwg.mxu0
    %4744 = vmatpush.bf16.msra.mxu0 %v4101
    %4745 = vmatpush.bf16.msra.mxu0 %v4093
    %4746 = vmatpush.bf16.msra.mxu0 %v4085
    %4747 = vmatpush.bf16.msra.mxu0 %v4077
    %4748 = vmatpush.bf16.msra.mxu0 %v4069
    %4749 = vmatpush.bf16.msra.mxu0 %v4061
    %4750 = vmatpush.bf16.msra.mxu0 %v4053
    %4751 = vmatpush.bf16.msra.mxu0 %v4045
    %4752 = vmatmul.bf16.gmra.mxu0 %v4574
    %v4753 = vpop.f32.mrf.mxu0
    %v4754 = vadd.f32 %v4741, %v4753
    %v4755 = vpop.f32.mrf.mxu0
    %4756 = vdwg.mxu0
    %4757 = vmatpush.bf16.msra.mxu0 %v4038
    %4758 = vmatpush.bf16.msra.mxu0 %v4030
    %4759 = vmatpush.bf16.msra.mxu0 %v4022
    %4760 = vmatpush.bf16.msra.mxu0 %v4014
    %4761 = vmatpush.bf16.msra.mxu0 %v4006
    %4762 = vmatpush.bf16.msra.mxu0 %v3998
    %4763 = vmatpush.bf16.msra.mxu0 %v3990
    %4764 = vmatpush.bf16.msra.mxu0 %v3982
    %4765 = vmatmul.bf16.gmra.mxu0 %v4573
    %v4766 = vpop.f32.mrf.mxu0
    %v4767 = vadd.f32 0.0, %v4766
    %v4768 = vpop.f32.mrf.mxu0
    %4769 = vdwg.mxu0
    %4770 = vmatpush.bf16.msra.mxu0 %v4102
    %4771 = vmatpush.bf16.msra.mxu0 %v4094
    %4772 = vmatpush.bf16.msra.mxu0 %v4086
    %4773 = vmatpush.bf16.msra.mxu0 %v4078
    %4774 = vmatpush.bf16.msra.mxu0 %v4070
    %4775 = vmatpush.bf16.msra.mxu0 %v4062
    %4776 = vmatpush.bf16.msra.mxu0 %v4054
    %4777 = vmatpush.bf16.msra.mxu0 %v4046
    %4778 = vmatmul.bf16.gmra.mxu0 %v4574
    %v4779 = vpop.f32.mrf.mxu0
    %v4780 = vadd.f32 %v4767, %v4779
    %v4781 = vpop.f32.mrf.mxu0
    %4782 = vdwg.mxu0
    %v4791 = vrot.slane %v4598, 4
    %v4792 = vrot.slane %v4624, 4
    %v4793 = vrot.slane %v4650, 4
    %v4794 = vrot.slane %v4676, 4
    %v4795 = vrot.slane %v4702, 4
    %v4796 = vrot.slane %v4728, 4
    %v4797 = vrot.slane %v4754, 4
    %v4798 = vrot.slane %v4780, 4
    %v4807 = vadd.f32 %v3278, %v4791
    %v4808 = vadd.f32 %v3304, %v4792
    %v4809 = vadd.f32 %v3330, %v4793
    %v4810 = vadd.f32 %v3356, %v4794
    %v4811 = vadd.f32 %v3382, %v4795
    %v4812 = vadd.f32 %v3408, %v4796
    %v4813 = vadd.f32 %v3434, %v4797
    %v4814 = vadd.f32 %v3460, %v4798
    %v4815 = vxor.u32 %v4807, 2147483648
    %v4816 = vxor.u32 %v4808, 2147483648
    %v4817 = vmul.f32 %v4815, 1.442695
    %v4818 = vpow.pop %v4817
    %v4819 = vmul.f32 %v4816, 1.442695
    %v4820 = vpow.pop %v4819
    %v4821 = vadd.f32 %v4818, 1.0
    %v4822 = vadd.f32 %v4820, 1.0
    %v4823 = vrcp.pop %v4821
    %v4824 = vmul.f32 %v4821, %v4823
    %v4825 = vsub.f32 1.0, %v4824
    %v4826 = vmul.f32 %v4823, %v4825
    %v4827 = vadd.f32 %v4823, %v4826
    %vm4828 = vweird.f32 %v4821
    %vm4829 = vweird.f32 %v4823
    %vm4830 = vmor %vm4828, %vm4829
    %v4831 = vsel %vm4830, %v4823, %v4827
    %v4832 = vand.u32 2147483647, %v4821
    %vm4833 = vcmp.eq.f32.partialorder %v4832, 8.507059e+37
    %v4834 = vand.u32 %v4821, 2147483648
    %v4835 = vor.u32 1.1754944e-38, %v4834
    %v4836 = vsel %vm4833, %v4835, %v4831
    %v4837 = vmul.f32 1.0, %v4836
    %v4838 = vrcp.pop %v4822
    %v4839 = vmul.f32 %v4822, %v4838
    %v4840 = vsub.f32 1.0, %v4839
    %v4841 = vmul.f32 %v4838, %v4840
    %v4842 = vadd.f32 %v4838, %v4841
    %vm4843 = vweird.f32 %v4822
    %vm4844 = vweird.f32 %v4838
    %vm4845 = vmor %vm4843, %vm4844
    %v4846 = vsel %vm4845, %v4838, %v4842
    %v4847 = vand.u32 2147483647, %v4822
    %vm4848 = vcmp.eq.f32.partialorder %v4847, 8.507059e+37
    %v4849 = vand.u32 %v4822, 2147483648
    %v4850 = vor.u32 1.1754944e-38, %v4849
    %v4851 = vsel %vm4848, %v4850, %v4846
    %v4852 = vmul.f32 1.0, %v4851
    %v4853 = vxor.u32 %v4809, 2147483648
    %v4854 = vxor.u32 %v4810, 2147483648
    %v4855 = vmul.f32 %v4853, 1.442695
    %v4856 = vpow.pop %v4855
    %v4857 = vmul.f32 %v4854, 1.442695
    %v4858 = vpow.pop %v4857
    %v4859 = vadd.f32 %v4856, 1.0
    %v4860 = vadd.f32 %v4858, 1.0
    %v4861 = vrcp.pop %v4859
    %v4862 = vmul.f32 %v4859, %v4861
    %v4863 = vsub.f32 1.0, %v4862
    %v4864 = vmul.f32 %v4861, %v4863
    %v4865 = vadd.f32 %v4861, %v4864
    %vm4866 = vweird.f32 %v4859
    %vm4867 = vweird.f32 %v4861
    %vm4868 = vmor %vm4866, %vm4867
    %v4869 = vsel %vm4868, %v4861, %v4865
    %v4870 = vand.u32 2147483647, %v4859
    %vm4871 = vcmp.eq.f32.partialorder %v4870, 8.507059e+37
    %v4872 = vand.u32 %v4859, 2147483648
    %v4873 = vor.u32 1.1754944e-38, %v4872
    %v4874 = vsel %vm4871, %v4873, %v4869
    %v4875 = vmul.f32 1.0, %v4874
    %v4876 = vrcp.pop %v4860
    %v4877 = vmul.f32 %v4860, %v4876
    %v4878 = vsub.f32 1.0, %v4877
    %v4879 = vmul.f32 %v4876, %v4878
    %v4880 = vadd.f32 %v4876, %v4879
    %vm4881 = vweird.f32 %v4860
    %vm4882 = vweird.f32 %v4876
    %vm4883 = vmor %vm4881, %vm4882
    %v4884 = vsel %vm4883, %v4876, %v4880
    %v4885 = vand.u32 2147483647, %v4860
    %vm4886 = vcmp.eq.f32.partialorder %v4885, 8.507059e+37
    %v4887 = vand.u32 %v4860, 2147483648
    %v4888 = vor.u32 1.1754944e-38, %v4887
    %v4889 = vsel %vm4886, %v4888, %v4884
    %v4890 = vmul.f32 1.0, %v4889
    %v4891 = vtanh.pop %v4811
    %v4892 = vtanh.pop %v4812
    %v4893 = vxor.u32 %v4813, 2147483648
    %v4894 = vxor.u32 %v4814, 2147483648
    %v4895 = vmul.f32 %v4893, 1.442695
    %v4896 = vpow.pop %v4895
    %v4897 = vmul.f32 %v4894, 1.442695
    %v4898 = vpow.pop %v4897
    %v4899 = vadd.f32 %v4896, 1.0
    %v4900 = vadd.f32 %v4898, 1.0
    %v4901 = vrcp.pop %v4899
    %v4902 = vmul.f32 %v4899, %v4901
    %v4903 = vsub.f32 1.0, %v4902
    %v4904 = vmul.f32 %v4901, %v4903
    %v4905 = vadd.f32 %v4901, %v4904
    %vm4906 = vweird.f32 %v4899
    %vm4907 = vweird.f32 %v4901
    %vm4908 = vmor %vm4906, %vm4907
    %v4909 = vsel %vm4908, %v4901, %v4905
    %v4910 = vand.u32 2147483647, %v4899
    %vm4911 = vcmp.eq.f32.partialorder %v4910, 8.507059e+37
    %v4912 = vand.u32 %v4899, 2147483648
    %v4913 = vor.u32 1.1754944e-38, %v4912
    %v4914 = vsel %vm4911, %v4913, %v4909
    %v4915 = vmul.f32 1.0, %v4914
    %v4916 = vrcp.pop %v4900
    %v4917 = vmul.f32 %v4900, %v4916
    %v4918 = vsub.f32 1.0, %v4917
    %v4919 = vmul.f32 %v4916, %v4918
    %v4920 = vadd.f32 %v4916, %v4919
    %vm4921 = vweird.f32 %v4900
    %vm4922 = vweird.f32 %v4916
    %vm4923 = vmor %vm4921, %vm4922
    %v4924 = vsel %vm4923, %v4916, %v4920
    %v4925 = vand.u32 2147483647, %v4900
    %vm4926 = vcmp.eq.f32.partialorder %v4925, 8.507059e+37
    %v4927 = vand.u32 %v4900, 2147483648
    %v4928 = vor.u32 1.1754944e-38, %v4927
    %v4929 = vsel %vm4926, %v4928, %v4924
    %v4930 = vmul.f32 1.0, %v4929
    %v4933 = vrot.slane %v4567, 4
    %v4934 = vrot.slane %v4568, 4
    %v4937 = vmul.f32 %v4875, %v4933
    %v4938 = vmul.f32 %v4890, %v4934
    %v4939 = vmul.f32 %v4837, %v4891
    %v4940 = vmul.f32 %v4852, %v4892
    %v4941 = vadd.f32 %v4937, %v4939
    %v4942 = vadd.f32 %v4938, %v4940
    %v4943 = vtanh.pop %v4941
    %v4944 = vtanh.pop %v4942
    %v4945 = vmul.f32 %v4915, %v4943
    %v4946 = vmul.f32 %v4930, %v4944
    %v4949 = vrot.slane %v4945, 4
    %v4950 = vrot.slane %v4946, 4
    %v4954 = vrot.slane %v2422, 2
    %v4956 = vrot.slane %v4945, 6
    %v4957 = vrot.slane %v4946, 6
    %v4958 = vrot.slane %v2422, 4
    %v4959 = vrot.slane %v2422, 6
    %v4960 = vrot.slane %v2435, 6
    %v4961 = vrot.slane %v2436, 6
    %v4962 = vrot.slane %v4956, 6
    %v4963 = vrot.slane %v4957, 6
    %v4964 = vrot.slane %v4958, 6
    %v4970 = vrot.slane %v2435, 4
    %v4971 = vrot.slane %v2436, 4
    %v4972 = vrot.slane %v2441, 4
    %v4973 = vrot.slane %v2442, 4
    %v4974 = vrot.slane %v4959, 4
    %v4980 = vsel %vm2449, %v2435, %v4960
    %v4981 = vsel %vm2449, %v2436, %v4961
    %v4982 = vsel %vm2449, %v4949, %v4962
    %v4983 = vsel %vm2449, %v4950, %v4963
    %v4984 = vsel %vm2449, %v4954, %v4964
    %v4985 = vsel %vm2464, %v4980, %v4970
    %v4986 = vsel %vm2464, %v4981, %v4971
    %v4987 = vsel %vm2464, %v4982, %v4972
    %v4988 = vsel %vm2464, %v4983, %v4973
    %v4989 = vsel %vm2464, %v4984, %v4974
    %v4990 = vpack.c.bf16 %v4985, %v4985
    %v4991 = vpack.c.bf16 %v4986, %v4986
    %v4992 = vpack.c.bf16 %v4987, %v4987
    %v4993 = vpack.c.bf16 %v4988, %v4988
    %v4994 = vpack.c.bf16 %v4989, %v4989
    %v4995 = vld [vmem:[#allocation14] sm:$0xff]
    %v4996 = vld [vmem:[#allocation14 + $0x8] sm:$0xff]
    %v4997 = vld [vmem:[#allocation14 + $0x10] sm:$0xff]
    %v4998 = vld [vmem:[#allocation14 + $0x18] sm:$0xff]
    %v4999 = vld [vmem:[#allocation14 + $0x20] sm:$0xff]
    %v5000 = vld [vmem:[#allocation14 + $0x28] sm:$0xff]
    %v5001 = vld [vmem:[#allocation14 + $0x30] sm:$0xff]
    %v5002 = vld [vmem:[#allocation14 + $0x38] sm:$0xff]
    %v5003 = vld [vmem:[#allocation14 + $0x40] sm:$0xff]
    %v5004 = vld [vmem:[#allocation14 + $0x48] sm:$0xff]
    %v5005 = vld [vmem:[#allocation14 + $0x50] sm:$0xff]
    %v5006 = vld [vmem:[#allocation14 + $0x58] sm:$0xff]
    %v5007 = vld [vmem:[#allocation14 + $0x60] sm:$0xff]
    %v5008 = vld [vmem:[#allocation14 + $0x68] sm:$0xff]
    %v5009 = vld [vmem:[#allocation14 + $0x70] sm:$0xff]
    %v5010 = vld [vmem:[#allocation14 + $0x78] sm:$0xff]
    %v5011 = vld [vmem:[#allocation14 + $0x80] sm:$0xff]
    %v5012 = vld [vmem:[#allocation14 + $0x88] sm:$0xff]
    %v5013 = vld [vmem:[#allocation14 + $0x90] sm:$0xff]
    %v5014 = vld [vmem:[#allocation14 + $0x98] sm:$0xff]
    %v5015 = vld [vmem:[#allocation14 + $0xa0] sm:$0xff]
    %v5016 = vld [vmem:[#allocation14 + $0xa8] sm:$0xff]
    %v5017 = vld [vmem:[#allocation14 + $0xb0] sm:$0xff]
    %v5018 = vld [vmem:[#allocation14 + $0xb8] sm:$0xff]
    %v5019 = vld [vmem:[#allocation14 + $0xc0] sm:$0xff]
    %v5020 = vld [vmem:[#allocation14 + $0xc8] sm:$0xff]
    %v5021 = vld [vmem:[#allocation14 + $0xd0] sm:$0xff]
    %v5022 = vld [vmem:[#allocation14 + $0xd8] sm:$0xff]
    %v5023 = vld [vmem:[#allocation14 + $0xe0] sm:$0xff]
    %v5024 = vld [vmem:[#allocation14 + $0xe8] sm:$0xff]
    %v5025 = vld [vmem:[#allocation14 + $0xf0] sm:$0xff]
    %v5026 = vld [vmem:[#allocation14 + $0xf8] sm:$0xff]
    %v5027 = vld [vmem:[#allocation14 + $0x100] sm:$0xff]
    %v5028 = vld [vmem:[#allocation14 + $0x108] sm:$0xff]
    %v5029 = vld [vmem:[#allocation14 + $0x110] sm:$0xff]
    %v5030 = vld [vmem:[#allocation14 + $0x118] sm:$0xff]
    %v5031 = vld [vmem:[#allocation14 + $0x120] sm:$0xff]
    %v5032 = vld [vmem:[#allocation14 + $0x128] sm:$0xff]
    %v5033 = vld [vmem:[#allocation14 + $0x130] sm:$0xff]
    %v5034 = vld [vmem:[#allocation14 + $0x138] sm:$0xff]
    %v5035 = vld [vmem:[#allocation14 + $0x140] sm:$0xff]
    %v5036 = vld [vmem:[#allocation14 + $0x148] sm:$0xff]
    %v5037 = vld [vmem:[#allocation14 + $0x150] sm:$0xff]
    %v5038 = vld [vmem:[#allocation14 + $0x158] sm:$0xff]
    %v5039 = vld [vmem:[#allocation14 + $0x160] sm:$0xff]
    %v5040 = vld [vmem:[#allocation14 + $0x168] sm:$0xff]
    %v5041 = vld [vmem:[#allocation14 + $0x170] sm:$0xff]
    %v5042 = vld [vmem:[#allocation14 + $0x178] sm:$0xff]
    %v5043 = vld [vmem:[#allocation14 + $0x180] sm:$0xff]
    %v5044 = vld [vmem:[#allocation14 + $0x188] sm:$0xff]
    %v5045 = vld [vmem:[#allocation14 + $0x190] sm:$0xff]
    %v5046 = vld [vmem:[#allocation14 + $0x198] sm:$0xff]
    %v5047 = vld [vmem:[#allocation14 + $0x1a0] sm:$0xff]
    %v5048 = vld [vmem:[#allocation14 + $0x1a8] sm:$0xff]
    %v5049 = vld [vmem:[#allocation14 + $0x1b0] sm:$0xff]
    %v5050 = vld [vmem:[#allocation14 + $0x1b8] sm:$0xff]
    %v5051 = vld [vmem:[#allocation14 + $0x1c0] sm:$0xff]
    %v5052 = vld [vmem:[#allocation14 + $0x1c8] sm:$0xff]
    %v5053 = vld [vmem:[#allocation14 + $0x1d0] sm:$0xff]
    %v5054 = vld [vmem:[#allocation14 + $0x1d8] sm:$0xff]
    %v5055 = vld [vmem:[#allocation14 + $0x1e0] sm:$0xff]
    %v5056 = vld [vmem:[#allocation14 + $0x1e8] sm:$0xff]
    %v5057 = vld [vmem:[#allocation14 + $0x1f0] sm:$0xff]
    %v5058 = vld [vmem:[#allocation14 + $0x1f8] sm:$0xff]
    %v5059 = vld [vmem:[#allocation14 + $0x200] sm:$0xff]
    %v5060 = vld [vmem:[#allocation14 + $0x208] sm:$0xff]
    %v5061 = vld [vmem:[#allocation14 + $0x210] sm:$0xff]
    %v5062 = vld [vmem:[#allocation14 + $0x218] sm:$0xff]
    %v5063 = vld [vmem:[#allocation14 + $0x220] sm:$0xff]
    %v5064 = vld [vmem:[#allocation14 + $0x228] sm:$0xff]
    %v5065 = vld [vmem:[#allocation14 + $0x230] sm:$0xff]
    %v5066 = vld [vmem:[#allocation14 + $0x238] sm:$0xff]
    %v5067 = vld [vmem:[#allocation14 + $0x240] sm:$0xff]
    %v5068 = vld [vmem:[#allocation14 + $0x248] sm:$0xff]
    %v5069 = vld [vmem:[#allocation14 + $0x250] sm:$0xff]
    %v5070 = vld [vmem:[#allocation14 + $0x258] sm:$0xff]
    %v5071 = vld [vmem:[#allocation14 + $0x260] sm:$0xff]
    %v5072 = vld [vmem:[#allocation14 + $0x268] sm:$0xff]
    %v5073 = vld [vmem:[#allocation14 + $0x270] sm:$0xff]
    %v5074 = vld [vmem:[#allocation14 + $0x278] sm:$0xff]
    %v5075 = vld [vmem:[%s11] sm:$0x3]
    %v5077 = vperm.slane %v5075, 0
    %v5078 = vperm.slane %v5075, 1
    %v5161 = vunpack.c.l.b16 %v4995
    %v5162 = vunpack.c.h.b16 %v4995
    %v5163 = vunpack.c.l.b16 %v4996
    %v5164 = vunpack.c.h.b16 %v4996
    %v5165 = vunpack.c.l.b16 %v4997
    %v5166 = vunpack.c.h.b16 %v4997
    %v5167 = vunpack.c.l.b16 %v4998
    %v5168 = vunpack.c.h.b16 %v4998
    %v5169 = vunpack.c.l.b16 %v4999
    %v5170 = vunpack.c.h.b16 %v4999
    %v5171 = vunpack.c.l.b16 %v5000
    %v5172 = vunpack.c.h.b16 %v5000
    %v5173 = vunpack.c.l.b16 %v5001
    %v5174 = vunpack.c.h.b16 %v5001
    %v5175 = vunpack.c.l.b16 %v5002
    %v5176 = vunpack.c.h.b16 %v5002
    %v5177 = vunpack.c.l.b16 %v5003
    %v5178 = vunpack.c.h.b16 %v5003
    %v5179 = vunpack.c.l.b16 %v5004
    %v5180 = vunpack.c.h.b16 %v5004
    %v5181 = vunpack.c.l.b16 %v5005
    %v5182 = vunpack.c.h.b16 %v5005
    %v5183 = vunpack.c.l.b16 %v5006
    %v5184 = vunpack.c.h.b16 %v5006
    %v5185 = vunpack.c.l.b16 %v5007
    %v5186 = vunpack.c.h.b16 %v5007
    %v5187 = vunpack.c.l.b16 %v5008
    %v5188 = vunpack.c.h.b16 %v5008
    %v5189 = vunpack.c.l.b16 %v5009
    %v5190 = vunpack.c.h.b16 %v5009
    %v5191 = vunpack.c.l.b16 %v5010
    %v5192 = vunpack.c.h.b16 %v5010
    %v5193 = vunpack.c.l.b16 %v5011
    %v5194 = vunpack.c.h.b16 %v5011
    %v5195 = vunpack.c.l.b16 %v5012
    %v5196 = vunpack.c.h.b16 %v5012
    %v5197 = vunpack.c.l.b16 %v5013
    %v5198 = vunpack.c.h.b16 %v5013
    %v5199 = vunpack.c.l.b16 %v5014
    %v5200 = vunpack.c.h.b16 %v5014
    %v5201 = vunpack.c.l.b16 %v5015
    %v5202 = vunpack.c.h.b16 %v5015
    %v5203 = vunpack.c.l.b16 %v5016
    %v5204 = vunpack.c.h.b16 %v5016
    %v5205 = vunpack.c.l.b16 %v5017
    %v5206 = vunpack.c.h.b16 %v5017
    %v5207 = vunpack.c.l.b16 %v5018
    %v5208 = vunpack.c.h.b16 %v5018
    %v5209 = vunpack.c.l.b16 %v5019
    %v5210 = vunpack.c.h.b16 %v5019
    %v5211 = vunpack.c.l.b16 %v5020
    %v5212 = vunpack.c.h.b16 %v5020
    %v5213 = vunpack.c.l.b16 %v5021
    %v5214 = vunpack.c.h.b16 %v5021
    %v5215 = vunpack.c.l.b16 %v5022
    %v5216 = vunpack.c.h.b16 %v5022
    %v5217 = vunpack.c.l.b16 %v5023
    %v5218 = vunpack.c.h.b16 %v5023
    %v5219 = vunpack.c.l.b16 %v5024
    %v5220 = vunpack.c.h.b16 %v5024
    %v5221 = vunpack.c.l.b16 %v5025
    %v5222 = vunpack.c.h.b16 %v5025
    %v5223 = vunpack.c.l.b16 %v5026
    %v5224 = vunpack.c.h.b16 %v5026
    %v5225 = vunpack.c.l.b16 %v5027
    %v5226 = vunpack.c.h.b16 %v5027
    %v5227 = vunpack.c.l.b16 %v5028
    %v5228 = vunpack.c.h.b16 %v5028
    %v5229 = vunpack.c.l.b16 %v5029
    %v5230 = vunpack.c.h.b16 %v5029
    %v5231 = vunpack.c.l.b16 %v5030
    %v5232 = vunpack.c.h.b16 %v5030
    %v5233 = vunpack.c.l.b16 %v5031
    %v5234 = vunpack.c.h.b16 %v5031
    %v5235 = vunpack.c.l.b16 %v5032
    %v5236 = vunpack.c.h.b16 %v5032
    %v5237 = vunpack.c.l.b16 %v5033
    %v5238 = vunpack.c.h.b16 %v5033
    %v5239 = vunpack.c.l.b16 %v5034
    %v5240 = vunpack.c.h.b16 %v5034
    %v5241 = vunpack.c.l.b16 %v5035
    %v5242 = vunpack.c.h.b16 %v5035
    %v5243 = vunpack.c.l.b16 %v5036
    %v5244 = vunpack.c.h.b16 %v5036
    %v5245 = vunpack.c.l.b16 %v5037
    %v5246 = vunpack.c.h.b16 %v5037
    %v5247 = vunpack.c.l.b16 %v5038
    %v5248 = vunpack.c.h.b16 %v5038
    %v5249 = vunpack.c.l.b16 %v5039
    %v5250 = vunpack.c.h.b16 %v5039
    %v5251 = vunpack.c.l.b16 %v5040
    %v5252 = vunpack.c.h.b16 %v5040
    %v5253 = vunpack.c.l.b16 %v5041
    %v5254 = vunpack.c.h.b16 %v5041
    %v5255 = vunpack.c.l.b16 %v5042
    %v5256 = vunpack.c.h.b16 %v5042
    %v5257 = vunpack.c.l.b16 %v5043
    %v5258 = vunpack.c.h.b16 %v5043
    %v5259 = vunpack.c.l.b16 %v5044
    %v5260 = vunpack.c.h.b16 %v5044
    %v5261 = vunpack.c.l.b16 %v5045
    %v5262 = vunpack.c.h.b16 %v5045
    %v5263 = vunpack.c.l.b16 %v5046
    %v5264 = vunpack.c.h.b16 %v5046
    %v5265 = vunpack.c.l.b16 %v5047
    %v5266 = vunpack.c.h.b16 %v5047
    %v5267 = vunpack.c.l.b16 %v5048
    %v5268 = vunpack.c.h.b16 %v5048
    %v5269 = vunpack.c.l.b16 %v5049
    %v5270 = vunpack.c.h.b16 %v5049
    %v5271 = vunpack.c.l.b16 %v5050
    %v5272 = vunpack.c.h.b16 %v5050
    %v5273 = vunpack.c.l.b16 %v5051
    %v5274 = vunpack.c.h.b16 %v5051
    %v5275 = vunpack.c.l.b16 %v5052
    %v5276 = vunpack.c.h.b16 %v5052
    %v5277 = vunpack.c.l.b16 %v5053
    %v5278 = vunpack.c.h.b16 %v5053
    %v5279 = vunpack.c.l.b16 %v5054
    %v5280 = vunpack.c.h.b16 %v5054
    %v5281 = vunpack.c.l.b16 %v5055
    %v5282 = vunpack.c.h.b16 %v5055
    %v5283 = vunpack.c.l.b16 %v5056
    %v5284 = vunpack.c.h.b16 %v5056
    %v5285 = vunpack.c.l.b16 %v5057
    %v5286 = vunpack.c.h.b16 %v5057
    %v5287 = vunpack.c.l.b16 %v5058
    %v5288 = vunpack.c.h.b16 %v5058
    %v5289 = vunpack.c.l.b16 %v5059
    %v5290 = vunpack.c.h.b16 %v5059
    %v5291 = vunpack.c.l.b16 %v5060
    %v5292 = vunpack.c.h.b16 %v5060
    %v5293 = vunpack.c.l.b16 %v5061
    %v5294 = vunpack.c.h.b16 %v5061
    %v5295 = vunpack.c.l.b16 %v5062
    %v5296 = vunpack.c.h.b16 %v5062
    %v5297 = vunpack.c.l.b16 %v5063
    %v5298 = vunpack.c.h.b16 %v5063
    %v5299 = vunpack.c.l.b16 %v5064
    %v5300 = vunpack.c.h.b16 %v5064
    %v5301 = vunpack.c.l.b16 %v5065
    %v5302 = vunpack.c.h.b16 %v5065
    %v5303 = vunpack.c.l.b16 %v5066
    %v5304 = vunpack.c.h.b16 %v5066
    %v5305 = vunpack.c.l.b16 %v5067
    %v5306 = vunpack.c.h.b16 %v5067
    %v5307 = vunpack.c.l.b16 %v5068
    %v5308 = vunpack.c.h.b16 %v5068
    %v5309 = vunpack.c.l.b16 %v5069
    %v5310 = vunpack.c.h.b16 %v5069
    %v5311 = vunpack.c.l.b16 %v5070
    %v5312 = vunpack.c.h.b16 %v5070
    %v5313 = vunpack.c.l.b16 %v5071
    %v5314 = vunpack.c.h.b16 %v5071
    %v5315 = vunpack.c.l.b16 %v5072
    %v5316 = vunpack.c.h.b16 %v5072
    %v5317 = vunpack.c.l.b16 %v5073
    %v5318 = vunpack.c.h.b16 %v5073
    %v5319 = vunpack.c.l.b16 %v5074
    %v5320 = vunpack.c.h.b16 %v5074
    %v5321 = vpack.c.b16 %v5163, %v5161
    %v5322 = vpack.c.b16 %v5164, %v5162
    %v5323 = vpack.c.b16 %v5167, %v5165
    %v5324 = vpack.c.b16 %v5168, %v5166
    %v5325 = vpack.c.b16 %v5171, %v5169
    %v5326 = vpack.c.b16 %v5172, %v5170
    %v5327 = vpack.c.b16 %v5175, %v5173
    %v5328 = vpack.c.b16 %v5176, %v5174
    %v5329 = vpack.c.b16 %v5179, %v5177
    %v5330 = vpack.c.b16 %v5180, %v5178
    %v5331 = vpack.c.b16 %v5183, %v5181
    %v5332 = vpack.c.b16 %v5184, %v5182
    %v5333 = vpack.c.b16 %v5187, %v5185
    %v5334 = vpack.c.b16 %v5188, %v5186
    %v5335 = vpack.c.b16 %v5191, %v5189
    %v5336 = vpack.c.b16 %v5192, %v5190
    %v5337 = vpack.c.b16 %v5195, %v5193
    %v5338 = vpack.c.b16 %v5196, %v5194
    %v5339 = vpack.c.b16 %v5199, %v5197
    %v5340 = vpack.c.b16 %v5200, %v5198
    %v5341 = vpack.c.b16 %v5203, %v5201
    %v5342 = vpack.c.b16 %v5204, %v5202
    %v5343 = vpack.c.b16 %v5207, %v5205
    %v5344 = vpack.c.b16 %v5208, %v5206
    %v5345 = vpack.c.b16 %v5211, %v5209
    %v5346 = vpack.c.b16 %v5212, %v5210
    %v5347 = vpack.c.b16 %v5215, %v5213
    %v5348 = vpack.c.b16 %v5216, %v5214
    %v5349 = vpack.c.b16 %v5219, %v5217
    %v5350 = vpack.c.b16 %v5220, %v5218
    %v5351 = vpack.c.b16 %v5223, %v5221
    %v5352 = vpack.c.b16 %v5224, %v5222
    %v5353 = vpack.c.b16 %v5227, %v5225
    %v5354 = vpack.c.b16 %v5228, %v5226
    %v5355 = vpack.c.b16 %v5231, %v5229
    %v5356 = vpack.c.b16 %v5232, %v5230
    %v5357 = vpack.c.b16 %v5235, %v5233
    %v5358 = vpack.c.b16 %v5236, %v5234
    %v5359 = vpack.c.b16 %v5239, %v5237
    %v5360 = vpack.c.b16 %v5240, %v5238
    %v5361 = vpack.c.b16 %v5243, %v5241
    %v5362 = vpack.c.b16 %v5244, %v5242
    %v5363 = vpack.c.b16 %v5247, %v5245
    %v5364 = vpack.c.b16 %v5248, %v5246
    %v5365 = vpack.c.b16 %v5251, %v5249
    %v5366 = vpack.c.b16 %v5252, %v5250
    %v5367 = vpack.c.b16 %v5255, %v5253
    %v5368 = vpack.c.b16 %v5256, %v5254
    %v5369 = vpack.c.b16 %v5259, %v5257
    %v5370 = vpack.c.b16 %v5260, %v5258
    %v5371 = vpack.c.b16 %v5263, %v5261
    %v5372 = vpack.c.b16 %v5264, %v5262
    %v5373 = vpack.c.b16 %v5267, %v5265
    %v5374 = vpack.c.b16 %v5268, %v5266
    %v5375 = vpack.c.b16 %v5271, %v5269
    %v5376 = vpack.c.b16 %v5272, %v5270
    %v5377 = vpack.c.b16 %v5275, %v5273
    %v5378 = vpack.c.b16 %v5276, %v5274
    %v5379 = vpack.c.b16 %v5279, %v5277
    %v5380 = vpack.c.b16 %v5280, %v5278
    %v5381 = vpack.c.b16 %v5283, %v5281
    %v5382 = vpack.c.b16 %v5284, %v5282
    %v5383 = vpack.c.b16 %v5287, %v5285
    %v5384 = vpack.c.b16 %v5288, %v5286
    %v5385 = vpack.c.b16 %v5291, %v5289
    %v5386 = vpack.c.b16 %v5292, %v5290
    %v5387 = vpack.c.b16 %v5295, %v5293
    %v5388 = vpack.c.b16 %v5296, %v5294
    %v5389 = vpack.c.b16 %v5299, %v5297
    %v5390 = vpack.c.b16 %v5300, %v5298
    %v5391 = vpack.c.b16 %v5303, %v5301
    %v5392 = vpack.c.b16 %v5304, %v5302
    %v5393 = vpack.c.b16 %v5307, %v5305
    %v5394 = vpack.c.b16 %v5308, %v5306
    %v5395 = vpack.c.b16 %v5311, %v5309
    %v5396 = vpack.c.b16 %v5312, %v5310
    %v5397 = vpack.c.b16 %v5315, %v5313
    %v5398 = vpack.c.b16 %v5316, %v5314
    %v5399 = vpack.c.b16 %v5319, %v5317
    %v5400 = vpack.c.b16 %v5320, %v5318
    %5481 = vmatpush.bf16.msra.mxu0 %v5335
    %5482 = vmatpush.bf16.msra.mxu0 %v5333
    %5483 = vmatpush.bf16.msra.mxu0 %v5331
    %5484 = vmatpush.bf16.msra.mxu0 %v5329
    %5485 = vmatpush.bf16.msra.mxu0 %v5327
    %5486 = vmatpush.bf16.msra.mxu0 %v5325
    %5487 = vmatpush.bf16.msra.mxu0 %v5323
    %5488 = vmatpush.bf16.msra.mxu0 %v5321
    %5489 = vmatmul.bf16.gmra.mxu0 %v4990
    %v5490 = vpop.f32.mrf.mxu0
    %v5491 = vadd.f32 %v5077, %v5490
    %v5492 = vpop.f32.mrf.mxu0
    %5493 = vdwg.mxu0
    %5494 = vmatpush.bf16.msra.mxu0 %v5351
    %5495 = vmatpush.bf16.msra.mxu0 %v5349
    %5496 = vmatpush.bf16.msra.mxu0 %v5347
    %5497 = vmatpush.bf16.msra.mxu0 %v5345
    %5498 = vmatpush.bf16.msra.mxu0 %v5343
    %5499 = vmatpush.bf16.msra.mxu0 %v5341
    %5500 = vmatpush.bf16.msra.mxu0 %v5339
    %5501 = vmatpush.bf16.msra.mxu0 %v5337
    %5502 = vmatmul.bf16.gmra.mxu0 %v4991
    %v5503 = vpop.f32.mrf.mxu0
    %v5504 = vadd.f32 %v5491, %v5503
    %v5505 = vpop.f32.mrf.mxu0
    %5506 = vdwg.mxu0
    %5507 = vmatpush.bf16.msra.mxu0 %v5367
    %5508 = vmatpush.bf16.msra.mxu0 %v5365
    %5509 = vmatpush.bf16.msra.mxu0 %v5363
    %5510 = vmatpush.bf16.msra.mxu0 %v5361
    %5511 = vmatpush.bf16.msra.mxu0 %v5359
    %5512 = vmatpush.bf16.msra.mxu0 %v5357
    %5513 = vmatpush.bf16.msra.mxu0 %v5355
    %5514 = vmatpush.bf16.msra.mxu0 %v5353
    %5515 = vmatmul.bf16.gmra.mxu0 %v4992
    %v5516 = vpop.f32.mrf.mxu0
    %v5517 = vadd.f32 %v5504, %v5516
    %v5518 = vpop.f32.mrf.mxu0
    %5519 = vdwg.mxu0
    %5520 = vmatpush.bf16.msra.mxu0 %v5383
    %5521 = vmatpush.bf16.msra.mxu0 %v5381
    %5522 = vmatpush.bf16.msra.mxu0 %v5379
    %5523 = vmatpush.bf16.msra.mxu0 %v5377
    %5524 = vmatpush.bf16.msra.mxu0 %v5375
    %5525 = vmatpush.bf16.msra.mxu0 %v5373
    %5526 = vmatpush.bf16.msra.mxu0 %v5371
    %5527 = vmatpush.bf16.msra.mxu0 %v5369
    %5528 = vmatmul.bf16.gmra.mxu0 %v4993
    %v5529 = vpop.f32.mrf.mxu0
    %v5530 = vadd.f32 %v5517, %v5529
    %v5531 = vpop.f32.mrf.mxu0
    %5532 = vdwg.mxu0
    %5533 = vmatpush.bf16.msra.mxu0 %v5399
    %5534 = vmatpush.bf16.msra.mxu0 %v5397
    %5535 = vmatpush.bf16.msra.mxu0 %v5395
    %5536 = vmatpush.bf16.msra.mxu0 %v5393
    %5537 = vmatpush.bf16.msra.mxu0 %v5391
    %5538 = vmatpush.bf16.msra.mxu0 %v5389
    %5539 = vmatpush.bf16.msra.mxu0 %v5387
    %5540 = vmatpush.bf16.msra.mxu0 %v5385
    %5541 = vmatmul.bf16.gmra.mxu0 %v4994
    %v5542 = vpop.f32.mrf.mxu0
    %v5543 = vadd.f32 %v5530, %v5542
    %v5544 = vpop.f32.mrf.mxu0
    %5545 = vdwg.mxu0
    %5546 = vmatpush.bf16.msra.mxu0 %v5336
    %5547 = vmatpush.bf16.msra.mxu0 %v5334
    %5548 = vmatpush.bf16.msra.mxu0 %v5332
    %5549 = vmatpush.bf16.msra.mxu0 %v5330
    %5550 = vmatpush.bf16.msra.mxu0 %v5328
    %5551 = vmatpush.bf16.msra.mxu0 %v5326
    %5552 = vmatpush.bf16.msra.mxu0 %v5324
    %5553 = vmatpush.bf16.msra.mxu0 %v5322
    %5554 = vmatmul.bf16.gmra.mxu0 %v4990
    %v5555 = vpop.f32.mrf.mxu0
    %v5556 = vadd.f32 %v5078, %v5555
    %v5557 = vpop.f32.mrf.mxu0
    %5558 = vdwg.mxu0
    %5559 = vmatpush.bf16.msra.mxu0 %v5352
    %5560 = vmatpush.bf16.msra.mxu0 %v5350
    %5561 = vmatpush.bf16.msra.mxu0 %v5348
    %5562 = vmatpush.bf16.msra.mxu0 %v5346
    %5563 = vmatpush.bf16.msra.mxu0 %v5344
    %5564 = vmatpush.bf16.msra.mxu0 %v5342
    %5565 = vmatpush.bf16.msra.mxu0 %v5340
    %5566 = vmatpush.bf16.msra.mxu0 %v5338
    %5567 = vmatmul.bf16.gmra.mxu0 %v4991
    %v5568 = vpop.f32.mrf.mxu0
    %v5569 = vadd.f32 %v5556, %v5568
    %v5570 = vpop.f32.mrf.mxu0
    %5571 = vdwg.mxu0
    %5572 = vmatpush.bf16.msra.mxu0 %v5368
    %5573 = vmatpush.bf16.msra.mxu0 %v5366
    %5574 = vmatpush.bf16.msra.mxu0 %v5364
    %5575 = vmatpush.bf16.msra.mxu0 %v5362
    %5576 = vmatpush.bf16.msra.mxu0 %v5360
    %5577 = vmatpush.bf16.msra.mxu0 %v5358
    %5578 = vmatpush.bf16.msra.mxu0 %v5356
    %5579 = vmatpush.bf16.msra.mxu0 %v5354
    %5580 = vmatmul.bf16.gmra.mxu0 %v4992
    %v5581 = vpop.f32.mrf.mxu0
    %v5582 = vadd.f32 %v5569, %v5581
    %v5583 = vpop.f32.mrf.mxu0
    %5584 = vdwg.mxu0
    %5585 = vmatpush.bf16.msra.mxu0 %v5384
    %5586 = vmatpush.bf16.msra.mxu0 %v5382
    %5587 = vmatpush.bf16.msra.mxu0 %v5380
    %5588 = vmatpush.bf16.msra.mxu0 %v5378
    %5589 = vmatpush.bf16.msra.mxu0 %v5376
    %5590 = vmatpush.bf16.msra.mxu0 %v5374
    %5591 = vmatpush.bf16.msra.mxu0 %v5372
    %5592 = vmatpush.bf16.msra.mxu0 %v5370
    %5593 = vmatmul.bf16.gmra.mxu0 %v4993
    %v5594 = vpop.f32.mrf.mxu0
    %v5595 = vadd.f32 %v5582, %v5594
    %v5596 = vpop.f32.mrf.mxu0
    %5597 = vdwg.mxu0
    %5598 = vmatpush.bf16.msra.mxu0 %v5400
    %5599 = vmatpush.bf16.msra.mxu0 %v5398
    %5600 = vmatpush.bf16.msra.mxu0 %v5396
    %5601 = vmatpush.bf16.msra.mxu0 %v5394
    %5602 = vmatpush.bf16.msra.mxu0 %v5392
    %5603 = vmatpush.bf16.msra.mxu0 %v5390
    %5604 = vmatpush.bf16.msra.mxu0 %v5388
    %5605 = vmatpush.bf16.msra.mxu0 %v5386
    %5606 = vmatmul.bf16.gmra.mxu0 %v4994
    %v5607 = vpop.f32.mrf.mxu0
    %v5608 = vadd.f32 %v5595, %v5607
    %v5609 = vpop.f32.mrf.mxu0
    %5610 = vdwg.mxu0
    %vm5611 = vcmp.gt.f32.partialorder %v5543, 0.0
    %vm5612 = vcmp.gt.f32.partialorder %v5608, 0.0
    %v5613 = vmin.f32 %v5543, 0.0
    %v5614 = vmin.f32 %v5608, 0.0
    %v5615 = vmul.f32 %v5613, 1.442695
    %v5616 = vpow.pop %v5615
    %v5617 = vmul.f32 %v5614, 1.442695
    %v5618 = vpow.pop %v5617
    %v5619 = vsub.f32 %v5616, 1.0
    %v5620 = vsub.f32 %v5618, 1.0
    %v5621 = vsel %vm5611, %v5543, %v5619
    %v5622 = vsel %vm5612, %v5608, %v5620
    %v5623 = vpack.c.bf16 %v5621, %v5621
    %v5624 = vpack.c.bf16 %v5622, %v5622
    %v5625 = vld [vmem:[#allocation15] sm:$0xff]
    %v5626 = vld [vmem:[#allocation15 + $0x8] sm:$0xff]
    %v5627 = vld [vmem:[#allocation15 + $0x10] sm:$0xff]
    %v5628 = vld [vmem:[#allocation15 + $0x18] sm:$0xff]
    %v5629 = vld [vmem:[#allocation15 + $0x20] sm:$0xff]
    %v5630 = vld [vmem:[#allocation15 + $0x28] sm:$0xff]
    %v5631 = vld [vmem:[#allocation15 + $0x30] sm:$0xff]
    %v5632 = vld [vmem:[#allocation15 + $0x38] sm:$0xff]
    %v5633 = vld [vmem:[#allocation15 + $0x40] sm:$0xff]
    %v5634 = vld [vmem:[#allocation15 + $0x48] sm:$0xff]
    %v5635 = vld [vmem:[#allocation15 + $0x50] sm:$0xff]
    %v5636 = vld [vmem:[#allocation15 + $0x58] sm:$0xff]
    %v5637 = vld [vmem:[#allocation15 + $0x60] sm:$0xff]
    %v5638 = vld [vmem:[#allocation15 + $0x68] sm:$0xff]
    %v5639 = vld [vmem:[#allocation15 + $0x70] sm:$0xff]
    %v5640 = vld [vmem:[#allocation15 + $0x78] sm:$0xff]
    %v5641 = vld [vmem:[#allocation15 + $0x80] sm:$0xff]
    %v5642 = vld [vmem:[#allocation15 + $0x88] sm:$0xff]
    %v5643 = vld [vmem:[#allocation15 + $0x90] sm:$0xff]
    %v5644 = vld [vmem:[#allocation15 + $0x98] sm:$0xff]
    %v5645 = vld [vmem:[#allocation15 + $0xa0] sm:$0xff]
    %v5646 = vld [vmem:[#allocation15 + $0xa8] sm:$0xff]
    %v5647 = vld [vmem:[#allocation15 + $0xb0] sm:$0xff]
    %v5648 = vld [vmem:[#allocation15 + $0xb8] sm:$0xff]
    %v5649 = vld [vmem:[#allocation15 + $0xc0] sm:$0xff]
    %v5650 = vld [vmem:[#allocation15 + $0xc8] sm:$0xff]
    %v5651 = vld [vmem:[#allocation15 + $0xd0] sm:$0xff]
    %v5652 = vld [vmem:[#allocation15 + $0xd8] sm:$0xff]
    %v5653 = vld [vmem:[#allocation15 + $0xe0] sm:$0xff]
    %v5654 = vld [vmem:[#allocation15 + $0xe8] sm:$0xff]
    %v5655 = vld [vmem:[#allocation15 + $0xf0] sm:$0xff]
    %v5656 = vld [vmem:[#allocation15 + $0xf8] sm:$0xff]
    %v5657 = vld [vmem:[%s13] sm:$0x3]
    %v5659 = vperm.slane %v5657, 0
    %v5660 = vperm.slane %v5657, 1
    %v5695 = vunpack.c.l.b16 %v5625
    %v5696 = vunpack.c.h.b16 %v5625
    %v5697 = vunpack.c.l.b16 %v5626
    %v5698 = vunpack.c.h.b16 %v5626
    %v5699 = vunpack.c.l.b16 %v5627
    %v5700 = vunpack.c.h.b16 %v5627
    %v5701 = vunpack.c.l.b16 %v5628
    %v5702 = vunpack.c.h.b16 %v5628
    %v5703 = vunpack.c.l.b16 %v5629
    %v5704 = vunpack.c.h.b16 %v5629
    %v5705 = vunpack.c.l.b16 %v5630
    %v5706 = vunpack.c.h.b16 %v5630
    %v5707 = vunpack.c.l.b16 %v5631
    %v5708 = vunpack.c.h.b16 %v5631
    %v5709 = vunpack.c.l.b16 %v5632
    %v5710 = vunpack.c.h.b16 %v5632
    %v5711 = vunpack.c.l.b16 %v5633
    %v5712 = vunpack.c.h.b16 %v5633
    %v5713 = vunpack.c.l.b16 %v5634
    %v5714 = vunpack.c.h.b16 %v5634
    %v5715 = vunpack.c.l.b16 %v5635
    %v5716 = vunpack.c.h.b16 %v5635
    %v5717 = vunpack.c.l.b16 %v5636
    %v5718 = vunpack.c.h.b16 %v5636
    %v5719 = vunpack.c.l.b16 %v5637
    %v5720 = vunpack.c.h.b16 %v5637
    %v5721 = vunpack.c.l.b16 %v5638
    %v5722 = vunpack.c.h.b16 %v5638
    %v5723 = vunpack.c.l.b16 %v5639
    %v5724 = vunpack.c.h.b16 %v5639
    %v5725 = vunpack.c.l.b16 %v5640
    %v5726 = vunpack.c.h.b16 %v5640
    %v5727 = vunpack.c.l.b16 %v5641
    %v5728 = vunpack.c.h.b16 %v5641
    %v5729 = vunpack.c.l.b16 %v5642
    %v5730 = vunpack.c.h.b16 %v5642
    %v5731 = vunpack.c.l.b16 %v5643
    %v5732 = vunpack.c.h.b16 %v5643
    %v5733 = vunpack.c.l.b16 %v5644
    %v5734 = vunpack.c.h.b16 %v5644
    %v5735 = vunpack.c.l.b16 %v5645
    %v5736 = vunpack.c.h.b16 %v5645
    %v5737 = vunpack.c.l.b16 %v5646
    %v5738 = vunpack.c.h.b16 %v5646
    %v5739 = vunpack.c.l.b16 %v5647
    %v5740 = vunpack.c.h.b16 %v5647
    %v5741 = vunpack.c.l.b16 %v5648
    %v5742 = vunpack.c.h.b16 %v5648
    %v5743 = vunpack.c.l.b16 %v5649
    %v5744 = vunpack.c.h.b16 %v5649
    %v5745 = vunpack.c.l.b16 %v5650
    %v5746 = vunpack.c.h.b16 %v5650
    %v5747 = vunpack.c.l.b16 %v5651
    %v5748 = vunpack.c.h.b16 %v5651
    %v5749 = vunpack.c.l.b16 %v5652
    %v5750 = vunpack.c.h.b16 %v5652
    %v5751 = vunpack.c.l.b16 %v5653
    %v5752 = vunpack.c.h.b16 %v5653
    %v5753 = vunpack.c.l.b16 %v5654
    %v5754 = vunpack.c.h.b16 %v5654
    %v5755 = vunpack.c.l.b16 %v5655
    %v5756 = vunpack.c.h.b16 %v5655
    %v5757 = vunpack.c.l.b16 %v5656
    %v5758 = vunpack.c.h.b16 %v5656
    %v5759 = vpack.c.b16 %v5697, %v5695
    %v5760 = vpack.c.b16 %v5698, %v5696
    %v5761 = vpack.c.b16 %v5701, %v5699
    %v5762 = vpack.c.b16 %v5702, %v5700
    %v5763 = vpack.c.b16 %v5705, %v5703
    %v5764 = vpack.c.b16 %v5706, %v5704
    %v5765 = vpack.c.b16 %v5709, %v5707
    %v5766 = vpack.c.b16 %v5710, %v5708
    %v5767 = vpack.c.b16 %v5713, %v5711
    %v5768 = vpack.c.b16 %v5714, %v5712
    %v5769 = vpack.c.b16 %v5717, %v5715
    %v5770 = vpack.c.b16 %v5718, %v5716
    %v5771 = vpack.c.b16 %v5721, %v5719
    %v5772 = vpack.c.b16 %v5722, %v5720
    %v5773 = vpack.c.b16 %v5725, %v5723
    %v5774 = vpack.c.b16 %v5726, %v5724
    %v5775 = vpack.c.b16 %v5729, %v5727
    %v5776 = vpack.c.b16 %v5730, %v5728
    %v5777 = vpack.c.b16 %v5733, %v5731
    %v5778 = vpack.c.b16 %v5734, %v5732
    %v5779 = vpack.c.b16 %v5737, %v5735
    %v5780 = vpack.c.b16 %v5738, %v5736
    %v5781 = vpack.c.b16 %v5741, %v5739
    %v5782 = vpack.c.b16 %v5742, %v5740
    %v5783 = vpack.c.b16 %v5745, %v5743
    %v5784 = vpack.c.b16 %v5746, %v5744
    %v5785 = vpack.c.b16 %v5749, %v5747
    %v5786 = vpack.c.b16 %v5750, %v5748
    %v5787 = vpack.c.b16 %v5753, %v5751
    %v5788 = vpack.c.b16 %v5754, %v5752
    %v5789 = vpack.c.b16 %v5757, %v5755
    %v5790 = vpack.c.b16 %v5758, %v5756
    %5823 = vmatpush.bf16.msra.mxu0 %v5773
    %5824 = vmatpush.bf16.msra.mxu0 %v5771
    %5825 = vmatpush.bf16.msra.mxu0 %v5769
    %5826 = vmatpush.bf16.msra.mxu0 %v5767
    %5827 = vmatpush.bf16.msra.mxu0 %v5765
    %5828 = vmatpush.bf16.msra.mxu0 %v5763
    %5829 = vmatpush.bf16.msra.mxu0 %v5761
    %5830 = vmatpush.bf16.msra.mxu0 %v5759
    %5831 = vmatmul.bf16.gmra.mxu0 %v5623
    %v5832 = vpop.f32.mrf.mxu0
    %v5833 = vadd.f32 %v5659, %v5832
    %v5834 = vpop.f32.mrf.mxu0
    %5835 = vdwg.mxu0
    %5836 = vmatpush.bf16.msra.mxu0 %v5789
    %5837 = vmatpush.bf16.msra.mxu0 %v5787
    %5838 = vmatpush.bf16.msra.mxu0 %v5785
    %5839 = vmatpush.bf16.msra.mxu0 %v5783
    %5840 = vmatpush.bf16.msra.mxu0 %v5781
    %5841 = vmatpush.bf16.msra.mxu0 %v5779
    %5842 = vmatpush.bf16.msra.mxu0 %v5777
    %5843 = vmatpush.bf16.msra.mxu0 %v5775
    %5844 = vmatmul.bf16.gmra.mxu0 %v5624
    %v5845 = vpop.f32.mrf.mxu0
    %v5846 = vadd.f32 %v5833, %v5845
    %v5847 = vpop.f32.mrf.mxu0
    %5848 = vdwg.mxu0
    %5849 = vmatpush.bf16.msra.mxu0 %v5774
    %5850 = vmatpush.bf16.msra.mxu0 %v5772
    %5851 = vmatpush.bf16.msra.mxu0 %v5770
    %5852 = vmatpush.bf16.msra.mxu0 %v5768
    %5853 = vmatpush.bf16.msra.mxu0 %v5766
    %5854 = vmatpush.bf16.msra.mxu0 %v5764
    %5855 = vmatpush.bf16.msra.mxu0 %v5762
    %5856 = vmatpush.bf16.msra.mxu0 %v5760
    %5857 = vmatmul.bf16.gmra.mxu0 %v5623
    %v5858 = vpop.f32.mrf.mxu0
    %v5859 = vadd.f32 %v5660, %v5858
    %v5860 = vpop.f32.mrf.mxu0
    %5861 = vdwg.mxu0
    %5862 = vmatpush.bf16.msra.mxu0 %v5790
    %5863 = vmatpush.bf16.msra.mxu0 %v5788
    %5864 = vmatpush.bf16.msra.mxu0 %v5786
    %5865 = vmatpush.bf16.msra.mxu0 %v5784
    %5866 = vmatpush.bf16.msra.mxu0 %v5782
    %5867 = vmatpush.bf16.msra.mxu0 %v5780
    %5868 = vmatpush.bf16.msra.mxu0 %v5778
    %5869 = vmatpush.bf16.msra.mxu0 %v5776
    %5870 = vmatmul.bf16.gmra.mxu0 %v5624
    %v5871 = vpop.f32.mrf.mxu0
    %v5872 = vadd.f32 %v5859, %v5871
    %v5873 = vpop.f32.mrf.mxu0
    %5874 = vdwg.mxu0
    %vm5875 = vcmp.gt.f32.partialorder %v5846, 0.0
    %vm5876 = vcmp.gt.f32.partialorder %v5872, 0.0
    %v5877 = vmin.f32 %v5846, 0.0
    %v5878 = vmin.f32 %v5872, 0.0
    %v5879 = vmul.f32 %v5877, 1.442695
    %v5880 = vpow.pop %v5879
    %v5881 = vmul.f32 %v5878, 1.442695
    %v5882 = vpow.pop %v5881
    %v5883 = vsub.f32 %v5880, 1.0
    %v5884 = vsub.f32 %v5882, 1.0
    %v5885 = vsel %vm5875, %v5846, %v5883
    %v5886 = vsel %vm5876, %v5872, %v5884
    %v5887 = vpack.c.bf16 %v5885, %v5885
    %v5888 = vpack.c.bf16 %v5886, %v5886
    %v5889 = vld [vmem:[#allocation4] sm:$0xff]
    %v5890 = vld [vmem:[#allocation4 + $0x8] sm:$0xff]
    %v5891 = vld [vmem:[#allocation4 + $0x10] sm:$0xff]
    %v5892 = vld [vmem:[#allocation4 + $0x18] sm:$0xff]
    %v5893 = vld [vmem:[#allocation4 + $0x20] sm:$0xff]
    %v5894 = vld [vmem:[#allocation4 + $0x28] sm:$0xff]
    %v5895 = vld [vmem:[#allocation4 + $0x30] sm:$0xff]
    %v5896 = vld [vmem:[#allocation4 + $0x38] sm:$0xff]
    %v5897 = vld [vmem:[#allocation4 + $0x40] sm:$0xff]
    %v5898 = vld [vmem:[#allocation4 + $0x48] sm:$0xff]
    %v5899 = vld [vmem:[#allocation4 + $0x50] sm:$0xff]
    %v5900 = vld [vmem:[#allocation4 + $0x58] sm:$0xff]
    %v5901 = vld [vmem:[#allocation4 + $0x60] sm:$0xff]
    %v5902 = vld [vmem:[#allocation4 + $0x68] sm:$0xff]
    %v5903 = vld [vmem:[#allocation4 + $0x70] sm:$0xff]
    %v5904 = vld [vmem:[#allocation4 + $0x78] sm:$0xff]
    %v5905 = vld [vmem:[#allocation4 + $0x80] sm:$0xff]
    %v5906 = vld [vmem:[#allocation4 + $0x88] sm:$0xff]
    %v5907 = vld [vmem:[#allocation4 + $0x90] sm:$0xff]
    %v5908 = vld [vmem:[#allocation4 + $0x98] sm:$0xff]
    %v5909 = vld [vmem:[#allocation4 + $0xa0] sm:$0xff]
    %v5910 = vld [vmem:[#allocation4 + $0xa8] sm:$0xff]
    %v5911 = vld [vmem:[#allocation4 + $0xb0] sm:$0xff]
    %v5912 = vld [vmem:[#allocation4 + $0xb8] sm:$0xff]
    %v5913 = vld [vmem:[#allocation4 + $0xc0] sm:$0xff]
    %v5914 = vld [vmem:[#allocation4 + $0xc8] sm:$0xff]
    %v5915 = vld [vmem:[#allocation4 + $0xd0] sm:$0xff]
    %v5916 = vld [vmem:[#allocation4 + $0xd8] sm:$0xff]
    %v5917 = vld [vmem:[#allocation4 + $0xe0] sm:$0xff]
    %v5918 = vld [vmem:[#allocation4 + $0xe8] sm:$0xff]
    %v5919 = vld [vmem:[#allocation4 + $0xf0] sm:$0xff]
    %v5920 = vld [vmem:[#allocation4 + $0xf8] sm:$0xff]
    %v5921 = vld [vmem:[#allocation4 + $0x100] sm:$0xff]
    %v5922 = vld [vmem:[#allocation4 + $0x108] sm:$0xff]
    %v5923 = vld [vmem:[#allocation4 + $0x110] sm:$0xff]
    %v5924 = vld [vmem:[#allocation4 + $0x118] sm:$0xff]
    %v5925 = vld [vmem:[#allocation4 + $0x120] sm:$0xff]
    %v5926 = vld [vmem:[#allocation4 + $0x128] sm:$0xff]
    %v5927 = vld [vmem:[#allocation4 + $0x130] sm:$0xff]
    %v5928 = vld [vmem:[#allocation4 + $0x138] sm:$0xff]
    %v5929 = vld [vmem:[#allocation4 + $0x140] sm:$0xff]
    %v5930 = vld [vmem:[#allocation4 + $0x148] sm:$0xff]
    %v5931 = vld [vmem:[#allocation4 + $0x150] sm:$0xff]
    %v5932 = vld [vmem:[#allocation4 + $0x158] sm:$0xff]
    %v5933 = vld [vmem:[#allocation4 + $0x160] sm:$0xff]
    %v5934 = vld [vmem:[#allocation4 + $0x168] sm:$0xff]
    %v5935 = vld [vmem:[#allocation4 + $0x170] sm:$0xff]
    %v5936 = vld [vmem:[#allocation4 + $0x178] sm:$0xff]
    %v5937 = vld [vmem:[#allocation4 + $0x180] sm:$0xff]
    %v5938 = vld [vmem:[#allocation4 + $0x188] sm:$0xff]
    %v5939 = vld [vmem:[#allocation4 + $0x190] sm:$0xff]
    %v5940 = vld [vmem:[#allocation4 + $0x198] sm:$0xff]
    %v5941 = vld [vmem:[#allocation4 + $0x1a0] sm:$0xff]
    %v5942 = vld [vmem:[#allocation4 + $0x1a8] sm:$0xff]
    %v5943 = vld [vmem:[#allocation4 + $0x1b0] sm:$0xff]
    %v5944 = vld [vmem:[#allocation4 + $0x1b8] sm:$0xff]
    %v5945 = vld [vmem:[#allocation4 + $0x1c0] sm:$0xff]
    %v5946 = vld [vmem:[#allocation4 + $0x1c8] sm:$0xff]
    %v5947 = vld [vmem:[#allocation4 + $0x1d0] sm:$0xff]
    %v5948 = vld [vmem:[#allocation4 + $0x1d8] sm:$0xff]
    %v5949 = vld [vmem:[#allocation4 + $0x1e0] sm:$0xff]
    %v5950 = vld [vmem:[#allocation4 + $0x1e8] sm:$0xff]
    %v5951 = vld [vmem:[#allocation4 + $0x1f0] sm:$0xff]
    %v5952 = vld [vmem:[#allocation4 + $0x1f8] sm:$0xff]
    %v5953 = vld [vmem:[#allocation4 + $0x200] sm:$0xff]
    %v5954 = vld [vmem:[#allocation4 + $0x208] sm:$0xff]
    %v5955 = vld [vmem:[#allocation4 + $0x210] sm:$0xff]
    %v5956 = vld [vmem:[#allocation4 + $0x218] sm:$0xff]
    %v5957 = vld [vmem:[#allocation4 + $0x220] sm:$0xff]
    %v5958 = vld [vmem:[#allocation4 + $0x228] sm:$0xff]
    %v5959 = vld [vmem:[#allocation4 + $0x230] sm:$0xff]
    %v5960 = vld [vmem:[#allocation4 + $0x238] sm:$0xff]
    %v5961 = vld [vmem:[#allocation4 + $0x240] sm:$0xff]
    %v5962 = vld [vmem:[#allocation4 + $0x248] sm:$0xff]
    %v5963 = vld [vmem:[#allocation4 + $0x250] sm:$0xff]
    %v5964 = vld [vmem:[#allocation4 + $0x258] sm:$0xff]
    %v5965 = vld [vmem:[#allocation4 + $0x260] sm:$0xff]
    %v5966 = vld [vmem:[#allocation4 + $0x268] sm:$0xff]
    %v5967 = vld [vmem:[#allocation4 + $0x270] sm:$0xff]
    %v5968 = vld [vmem:[#allocation4 + $0x278] sm:$0xff]
    %v5969 = vld [vmem:[#allocation4 + $0x280] sm:$0xff]
    %v5970 = vld [vmem:[#allocation4 + $0x288] sm:$0xff]
    %v5971 = vld [vmem:[#allocation4 + $0x290] sm:$0xff]
    %v5972 = vld [vmem:[#allocation4 + $0x298] sm:$0xff]
    %v5973 = vld [vmem:[#allocation4 + $0x2a0] sm:$0xff]
    %v5974 = vld [vmem:[#allocation4 + $0x2a8] sm:$0xff]
    %v5975 = vld [vmem:[#allocation4 + $0x2b0] sm:$0xff]
    %v5976 = vld [vmem:[#allocation4 + $0x2b8] sm:$0xff]
    %v5977 = vld [vmem:[#allocation4 + $0x2c0] sm:$0xff]
    %v5978 = vld [vmem:[#allocation4 + $0x2c8] sm:$0xff]
    %v5979 = vld [vmem:[#allocation4 + $0x2d0] sm:$0xff]
    %v5980 = vld [vmem:[#allocation4 + $0x2d8] sm:$0xff]
    %v5981 = vld [vmem:[#allocation4 + $0x2e0] sm:$0xff]
    %v5982 = vld [vmem:[#allocation4 + $0x2e8] sm:$0xff]
    %v5983 = vld [vmem:[#allocation4 + $0x2f0] sm:$0xff]
    %v5984 = vld [vmem:[#allocation4 + $0x2f8] sm:$0xff]
    %v5985 = vld [vmem:[#allocation4 + $0x300] sm:$0xff]
    %v5986 = vld [vmem:[#allocation4 + $0x308] sm:$0xff]
    %v5987 = vld [vmem:[#allocation4 + $0x310] sm:$0xff]
    %v5988 = vld [vmem:[#allocation4 + $0x318] sm:$0xff]
    %v5989 = vld [vmem:[#allocation4 + $0x320] sm:$0xff]
    %v5990 = vld [vmem:[#allocation4 + $0x328] sm:$0xff]
    %v5991 = vld [vmem:[#allocation4 + $0x330] sm:$0xff]
    %v5992 = vld [vmem:[#allocation4 + $0x338] sm:$0xff]
    %v5993 = vld [vmem:[#allocation4 + $0x340] sm:$0xff]
    %v5994 = vld [vmem:[#allocation4 + $0x348] sm:$0xff]
    %v5995 = vld [vmem:[#allocation4 + $0x350] sm:$0xff]
    %v5996 = vld [vmem:[#allocation4 + $0x358] sm:$0xff]
    %v5997 = vld [vmem:[#allocation4 + $0x360] sm:$0xff]
    %v5998 = vld [vmem:[#allocation4 + $0x368] sm:$0xff]
    %v5999 = vld [vmem:[#allocation4 + $0x370] sm:$0xff]
    %v6000 = vld [vmem:[#allocation4 + $0x378] sm:$0xff]
    %v6001 = vld [vmem:[#allocation4 + $0x380] sm:$0xff]
    %v6002 = vld [vmem:[#allocation4 + $0x388] sm:$0xff]
    %v6003 = vld [vmem:[#allocation4 + $0x390] sm:$0xff]
    %v6004 = vld [vmem:[#allocation4 + $0x398] sm:$0xff]
    %v6005 = vld [vmem:[#allocation4 + $0x3a0] sm:$0xff]
    %v6006 = vld [vmem:[#allocation4 + $0x3a8] sm:$0xff]
    %v6007 = vld [vmem:[#allocation4 + $0x3b0] sm:$0xff]
    %v6008 = vld [vmem:[#allocation4 + $0x3b8] sm:$0xff]
    %v6009 = vld [vmem:[#allocation4 + $0x3c0] sm:$0xff]
    %v6010 = vld [vmem:[#allocation4 + $0x3c8] sm:$0xff]
    %v6011 = vld [vmem:[#allocation4 + $0x3d0] sm:$0xff]
    %v6012 = vld [vmem:[#allocation4 + $0x3d8] sm:$0xff]
    %v6013 = vld [vmem:[#allocation4 + $0x3e0] sm:$0xff]
    %v6014 = vld [vmem:[#allocation4 + $0x3e8] sm:$0xff]
    %v6015 = vld [vmem:[#allocation4 + $0x3f0] sm:$0xff]
    %v6016 = vld [vmem:[#allocation4 + $0x3f8] sm:$0xff]
    %v6017 = vld [vmem:[%s25] sm:$0xff]
    %v6019 = vperm.slane %v6017, 0
    %v6020 = vperm.slane %v6017, 1
    %v6021 = vperm.slane %v6017, 2
    %v6022 = vperm.slane %v6017, 3
    %v6023 = vperm.slane %v6017, 4
    %v6024 = vperm.slane %v6017, 5
    %v6025 = vperm.slane %v6017, 6
    %v6026 = vperm.slane %v6017, 7
    %v6163 = vunpack.c.l.b16 %v5889
    %v6164 = vunpack.c.h.b16 %v5889
    %v6165 = vunpack.c.l.b16 %v5890
    %v6166 = vunpack.c.h.b16 %v5890
    %v6167 = vunpack.c.l.b16 %v5891
    %v6168 = vunpack.c.h.b16 %v5891
    %v6169 = vunpack.c.l.b16 %v5892
    %v6170 = vunpack.c.h.b16 %v5892
    %v6171 = vunpack.c.l.b16 %v5893
    %v6172 = vunpack.c.h.b16 %v5893
    %v6173 = vunpack.c.l.b16 %v5894
    %v6174 = vunpack.c.h.b16 %v5894
    %v6175 = vunpack.c.l.b16 %v5895
    %v6176 = vunpack.c.h.b16 %v5895
    %v6177 = vunpack.c.l.b16 %v5896
    %v6178 = vunpack.c.h.b16 %v5896
    %v6179 = vunpack.c.l.b16 %v5897
    %v6180 = vunpack.c.h.b16 %v5897
    %v6181 = vunpack.c.l.b16 %v5898
    %v6182 = vunpack.c.h.b16 %v5898
    %v6183 = vunpack.c.l.b16 %v5899
    %v6184 = vunpack.c.h.b16 %v5899
    %v6185 = vunpack.c.l.b16 %v5900
    %v6186 = vunpack.c.h.b16 %v5900
    %v6187 = vunpack.c.l.b16 %v5901
    %v6188 = vunpack.c.h.b16 %v5901
    %v6189 = vunpack.c.l.b16 %v5902
    %v6190 = vunpack.c.h.b16 %v5902
    %v6191 = vunpack.c.l.b16 %v5903
    %v6192 = vunpack.c.h.b16 %v5903
    %v6193 = vunpack.c.l.b16 %v5904
    %v6194 = vunpack.c.h.b16 %v5904
    %v6195 = vunpack.c.l.b16 %v5905
    %v6196 = vunpack.c.h.b16 %v5905
    %v6197 = vunpack.c.l.b16 %v5906
    %v6198 = vunpack.c.h.b16 %v5906
    %v6199 = vunpack.c.l.b16 %v5907
    %v6200 = vunpack.c.h.b16 %v5907
    %v6201 = vunpack.c.l.b16 %v5908
    %v6202 = vunpack.c.h.b16 %v5908
    %v6203 = vunpack.c.l.b16 %v5909
    %v6204 = vunpack.c.h.b16 %v5909
    %v6205 = vunpack.c.l.b16 %v5910
    %v6206 = vunpack.c.h.b16 %v5910
    %v6207 = vunpack.c.l.b16 %v5911
    %v6208 = vunpack.c.h.b16 %v5911
    %v6209 = vunpack.c.l.b16 %v5912
    %v6210 = vunpack.c.h.b16 %v5912
    %v6211 = vunpack.c.l.b16 %v5913
    %v6212 = vunpack.c.h.b16 %v5913
    %v6213 = vunpack.c.l.b16 %v5914
    %v6214 = vunpack.c.h.b16 %v5914
    %v6215 = vunpack.c.l.b16 %v5915
    %v6216 = vunpack.c.h.b16 %v5915
    %v6217 = vunpack.c.l.b16 %v5916
    %v6218 = vunpack.c.h.b16 %v5916
    %v6219 = vunpack.c.l.b16 %v5917
    %v6220 = vunpack.c.h.b16 %v5917
    %v6221 = vunpack.c.l.b16 %v5918
    %v6222 = vunpack.c.h.b16 %v5918
    %v6223 = vunpack.c.l.b16 %v5919
    %v6224 = vunpack.c.h.b16 %v5919
    %v6225 = vunpack.c.l.b16 %v5920
    %v6226 = vunpack.c.h.b16 %v5920
    %v6227 = vunpack.c.l.b16 %v5921
    %v6228 = vunpack.c.h.b16 %v5921
    %v6229 = vunpack.c.l.b16 %v5922
    %v6230 = vunpack.c.h.b16 %v5922
    %v6231 = vunpack.c.l.b16 %v5923
    %v6232 = vunpack.c.h.b16 %v5923
    %v6233 = vunpack.c.l.b16 %v5924
    %v6234 = vunpack.c.h.b16 %v5924
    %v6235 = vunpack.c.l.b16 %v5925
    %v6236 = vunpack.c.h.b16 %v5925
    %v6237 = vunpack.c.l.b16 %v5926
    %v6238 = vunpack.c.h.b16 %v5926
    %v6239 = vunpack.c.l.b16 %v5927
    %v6240 = vunpack.c.h.b16 %v5927
    %v6241 = vunpack.c.l.b16 %v5928
    %v6242 = vunpack.c.h.b16 %v5928
    %v6243 = vunpack.c.l.b16 %v5929
    %v6244 = vunpack.c.h.b16 %v5929
    %v6245 = vunpack.c.l.b16 %v5930
    %v6246 = vunpack.c.h.b16 %v5930
    %v6247 = vunpack.c.l.b16 %v5931
    %v6248 = vunpack.c.h.b16 %v5931
    %v6249 = vunpack.c.l.b16 %v5932
    %v6250 = vunpack.c.h.b16 %v5932
    %v6251 = vunpack.c.l.b16 %v5933
    %v6252 = vunpack.c.h.b16 %v5933
    %v6253 = vunpack.c.l.b16 %v5934
    %v6254 = vunpack.c.h.b16 %v5934
    %v6255 = vunpack.c.l.b16 %v5935
    %v6256 = vunpack.c.h.b16 %v5935
    %v6257 = vunpack.c.l.b16 %v5936
    %v6258 = vunpack.c.h.b16 %v5936
    %v6259 = vunpack.c.l.b16 %v5937
    %v6260 = vunpack.c.h.b16 %v5937
    %v6261 = vunpack.c.l.b16 %v5938
    %v6262 = vunpack.c.h.b16 %v5938
    %v6263 = vunpack.c.l.b16 %v5939
    %v6264 = vunpack.c.h.b16 %v5939
    %v6265 = vunpack.c.l.b16 %v5940
    %v6266 = vunpack.c.h.b16 %v5940
    %v6267 = vunpack.c.l.b16 %v5941
    %v6268 = vunpack.c.h.b16 %v5941
    %v6269 = vunpack.c.l.b16 %v5942
    %v6270 = vunpack.c.h.b16 %v5942
    %v6271 = vunpack.c.l.b16 %v5943
    %v6272 = vunpack.c.h.b16 %v5943
    %v6273 = vunpack.c.l.b16 %v5944
    %v6274 = vunpack.c.h.b16 %v5944
    %v6275 = vunpack.c.l.b16 %v5945
    %v6276 = vunpack.c.h.b16 %v5945
    %v6277 = vunpack.c.l.b16 %v5946
    %v6278 = vunpack.c.h.b16 %v5946
    %v6279 = vunpack.c.l.b16 %v5947
    %v6280 = vunpack.c.h.b16 %v5947
    %v6281 = vunpack.c.l.b16 %v5948
    %v6282 = vunpack.c.h.b16 %v5948
    %v6283 = vunpack.c.l.b16 %v5949
    %v6284 = vunpack.c.h.b16 %v5949
    %v6285 = vunpack.c.l.b16 %v5950
    %v6286 = vunpack.c.h.b16 %v5950
    %v6287 = vunpack.c.l.b16 %v5951
    %v6288 = vunpack.c.h.b16 %v5951
    %v6289 = vunpack.c.l.b16 %v5952
    %v6290 = vunpack.c.h.b16 %v5952
    %v6291 = vunpack.c.l.b16 %v5953
    %v6292 = vunpack.c.h.b16 %v5953
    %v6293 = vunpack.c.l.b16 %v5954
    %v6294 = vunpack.c.h.b16 %v5954
    %v6295 = vunpack.c.l.b16 %v5955
    %v6296 = vunpack.c.h.b16 %v5955
    %v6297 = vunpack.c.l.b16 %v5956
    %v6298 = vunpack.c.h.b16 %v5956
    %v6299 = vunpack.c.l.b16 %v5957
    %v6300 = vunpack.c.h.b16 %v5957
    %v6301 = vunpack.c.l.b16 %v5958
    %v6302 = vunpack.c.h.b16 %v5958
    %v6303 = vunpack.c.l.b16 %v5959
    %v6304 = vunpack.c.h.b16 %v5959
    %v6305 = vunpack.c.l.b16 %v5960
    %v6306 = vunpack.c.h.b16 %v5960
    %v6307 = vunpack.c.l.b16 %v5961
    %v6308 = vunpack.c.h.b16 %v5961
    %v6309 = vunpack.c.l.b16 %v5962
    %v6310 = vunpack.c.h.b16 %v5962
    %v6311 = vunpack.c.l.b16 %v5963
    %v6312 = vunpack.c.h.b16 %v5963
    %v6313 = vunpack.c.l.b16 %v5964
    %v6314 = vunpack.c.h.b16 %v5964
    %v6315 = vunpack.c.l.b16 %v5965
    %v6316 = vunpack.c.h.b16 %v5965
    %v6317 = vunpack.c.l.b16 %v5966
    %v6318 = vunpack.c.h.b16 %v5966
    %v6319 = vunpack.c.l.b16 %v5967
    %v6320 = vunpack.c.h.b16 %v5967
    %v6321 = vunpack.c.l.b16 %v5968
    %v6322 = vunpack.c.h.b16 %v5968
    %v6323 = vunpack.c.l.b16 %v5969
    %v6324 = vunpack.c.h.b16 %v5969
    %v6325 = vunpack.c.l.b16 %v5970
    %v6326 = vunpack.c.h.b16 %v5970
    %v6327 = vunpack.c.l.b16 %v5971
    %v6328 = vunpack.c.h.b16 %v5971
    %v6329 = vunpack.c.l.b16 %v5972
    %v6330 = vunpack.c.h.b16 %v5972
    %v6331 = vunpack.c.l.b16 %v5973
    %v6332 = vunpack.c.h.b16 %v5973
    %v6333 = vunpack.c.l.b16 %v5974
    %v6334 = vunpack.c.h.b16 %v5974
    %v6335 = vunpack.c.l.b16 %v5975
    %v6336 = vunpack.c.h.b16 %v5975
    %v6337 = vunpack.c.l.b16 %v5976
    %v6338 = vunpack.c.h.b16 %v5976
    %v6339 = vunpack.c.l.b16 %v5977
    %v6340 = vunpack.c.h.b16 %v5977
    %v6341 = vunpack.c.l.b16 %v5978
    %v6342 = vunpack.c.h.b16 %v5978
    %v6343 = vunpack.c.l.b16 %v5979
    %v6344 = vunpack.c.h.b16 %v5979
    %v6345 = vunpack.c.l.b16 %v5980
    %v6346 = vunpack.c.h.b16 %v5980
    %v6347 = vunpack.c.l.b16 %v5981
    %v6348 = vunpack.c.h.b16 %v5981
    %v6349 = vunpack.c.l.b16 %v5982
    %v6350 = vunpack.c.h.b16 %v5982
    %v6351 = vunpack.c.l.b16 %v5983
    %v6352 = vunpack.c.h.b16 %v5983
    %v6353 = vunpack.c.l.b16 %v5984
    %v6354 = vunpack.c.h.b16 %v5984
    %v6355 = vunpack.c.l.b16 %v5985
    %v6356 = vunpack.c.h.b16 %v5985
    %v6357 = vunpack.c.l.b16 %v5986
    %v6358 = vunpack.c.h.b16 %v5986
    %v6359 = vunpack.c.l.b16 %v5987
    %v6360 = vunpack.c.h.b16 %v5987
    %v6361 = vunpack.c.l.b16 %v5988
    %v6362 = vunpack.c.h.b16 %v5988
    %v6363 = vunpack.c.l.b16 %v5989
    %v6364 = vunpack.c.h.b16 %v5989
    %v6365 = vunpack.c.l.b16 %v5990
    %v6366 = vunpack.c.h.b16 %v5990
    %v6367 = vunpack.c.l.b16 %v5991
    %v6368 = vunpack.c.h.b16 %v5991
    %v6369 = vunpack.c.l.b16 %v5992
    %v6370 = vunpack.c.h.b16 %v5992
    %v6371 = vunpack.c.l.b16 %v5993
    %v6372 = vunpack.c.h.b16 %v5993
    %v6373 = vunpack.c.l.b16 %v5994
    %v6374 = vunpack.c.h.b16 %v5994
    %v6375 = vunpack.c.l.b16 %v5995
    %v6376 = vunpack.c.h.b16 %v5995
    %v6377 = vunpack.c.l.b16 %v5996
    %v6378 = vunpack.c.h.b16 %v5996
    %v6379 = vunpack.c.l.b16 %v5997
    %v6380 = vunpack.c.h.b16 %v5997
    %v6381 = vunpack.c.l.b16 %v5998
    %v6382 = vunpack.c.h.b16 %v5998
    %v6383 = vunpack.c.l.b16 %v5999
    %v6384 = vunpack.c.h.b16 %v5999
    %v6385 = vunpack.c.l.b16 %v6000
    %v6386 = vunpack.c.h.b16 %v6000
    %v6387 = vunpack.c.l.b16 %v6001
    %v6388 = vunpack.c.h.b16 %v6001
    %v6389 = vunpack.c.l.b16 %v6002
    %v6390 = vunpack.c.h.b16 %v6002
    %v6391 = vunpack.c.l.b16 %v6003
    %v6392 = vunpack.c.h.b16 %v6003
    %v6393 = vunpack.c.l.b16 %v6004
    %v6394 = vunpack.c.h.b16 %v6004
    %v6395 = vunpack.c.l.b16 %v6005
    %v6396 = vunpack.c.h.b16 %v6005
    %v6397 = vunpack.c.l.b16 %v6006
    %v6398 = vunpack.c.h.b16 %v6006
    %v6399 = vunpack.c.l.b16 %v6007
    %v6400 = vunpack.c.h.b16 %v6007
    %v6401 = vunpack.c.l.b16 %v6008
    %v6402 = vunpack.c.h.b16 %v6008
    %v6403 = vunpack.c.l.b16 %v6009
    %v6404 = vunpack.c.h.b16 %v6009
    %v6405 = vunpack.c.l.b16 %v6010
    %v6406 = vunpack.c.h.b16 %v6010
    %v6407 = vunpack.c.l.b16 %v6011
    %v6408 = vunpack.c.h.b16 %v6011
    %v6409 = vunpack.c.l.b16 %v6012
    %v6410 = vunpack.c.h.b16 %v6012
    %v6411 = vunpack.c.l.b16 %v6013
    %v6412 = vunpack.c.h.b16 %v6013
    %v6413 = vunpack.c.l.b16 %v6014
    %v6414 = vunpack.c.h.b16 %v6014
    %v6415 = vunpack.c.l.b16 %v6015
    %v6416 = vunpack.c.h.b16 %v6015
    %v6417 = vunpack.c.l.b16 %v6016
    %v6418 = vunpack.c.h.b16 %v6016
    %v6419 = vpack.c.b16 %v6171, %v6163
    %v6420 = vpack.c.b16 %v6172, %v6164
    %v6421 = vpack.c.b16 %v6173, %v6165
    %v6422 = vpack.c.b16 %v6174, %v6166
    %v6423 = vpack.c.b16 %v6175, %v6167
    %v6424 = vpack.c.b16 %v6176, %v6168
    %v6425 = vpack.c.b16 %v6177, %v6169
    %v6426 = vpack.c.b16 %v6178, %v6170
    %v6427 = vpack.c.b16 %v6187, %v6179
    %v6428 = vpack.c.b16 %v6188, %v6180
    %v6429 = vpack.c.b16 %v6189, %v6181
    %v6430 = vpack.c.b16 %v6190, %v6182
    %v6431 = vpack.c.b16 %v6191, %v6183
    %v6432 = vpack.c.b16 %v6192, %v6184
    %v6433 = vpack.c.b16 %v6193, %v6185
    %v6434 = vpack.c.b16 %v6194, %v6186
    %v6435 = vpack.c.b16 %v6203, %v6195
    %v6436 = vpack.c.b16 %v6204, %v6196
    %v6437 = vpack.c.b16 %v6205, %v6197
    %v6438 = vpack.c.b16 %v6206, %v6198
    %v6439 = vpack.c.b16 %v6207, %v6199
    %v6440 = vpack.c.b16 %v6208, %v6200
    %v6441 = vpack.c.b16 %v6209, %v6201
    %v6442 = vpack.c.b16 %v6210, %v6202
    %v6443 = vpack.c.b16 %v6219, %v6211
    %v6444 = vpack.c.b16 %v6220, %v6212
    %v6445 = vpack.c.b16 %v6221, %v6213
    %v6446 = vpack.c.b16 %v6222, %v6214
    %v6447 = vpack.c.b16 %v6223, %v6215
    %v6448 = vpack.c.b16 %v6224, %v6216
    %v6449 = vpack.c.b16 %v6225, %v6217
    %v6450 = vpack.c.b16 %v6226, %v6218
    %v6451 = vpack.c.b16 %v6235, %v6227
    %v6452 = vpack.c.b16 %v6236, %v6228
    %v6453 = vpack.c.b16 %v6237, %v6229
    %v6454 = vpack.c.b16 %v6238, %v6230
    %v6455 = vpack.c.b16 %v6239, %v6231
    %v6456 = vpack.c.b16 %v6240, %v6232
    %v6457 = vpack.c.b16 %v6241, %v6233
    %v6458 = vpack.c.b16 %v6242, %v6234
    %v6459 = vpack.c.b16 %v6251, %v6243
    %v6460 = vpack.c.b16 %v6252, %v6244
    %v6461 = vpack.c.b16 %v6253, %v6245
    %v6462 = vpack.c.b16 %v6254, %v6246
    %v6463 = vpack.c.b16 %v6255, %v6247
    %v6464 = vpack.c.b16 %v6256, %v6248
    %v6465 = vpack.c.b16 %v6257, %v6249
    %v6466 = vpack.c.b16 %v6258, %v6250
    %v6467 = vpack.c.b16 %v6267, %v6259
    %v6468 = vpack.c.b16 %v6268, %v6260
    %v6469 = vpack.c.b16 %v6269, %v6261
    %v6470 = vpack.c.b16 %v6270, %v6262
    %v6471 = vpack.c.b16 %v6271, %v6263
    %v6472 = vpack.c.b16 %v6272, %v6264
    %v6473 = vpack.c.b16 %v6273, %v6265
    %v6474 = vpack.c.b16 %v6274, %v6266
    %v6475 = vpack.c.b16 %v6283, %v6275
    %v6476 = vpack.c.b16 %v6284, %v6276
    %v6477 = vpack.c.b16 %v6285, %v6277
    %v6478 = vpack.c.b16 %v6286, %v6278
    %v6479 = vpack.c.b16 %v6287, %v6279
    %v6480 = vpack.c.b16 %v6288, %v6280
    %v6481 = vpack.c.b16 %v6289, %v6281
    %v6482 = vpack.c.b16 %v6290, %v6282
    %v6483 = vpack.c.b16 %v6299, %v6291
    %v6484 = vpack.c.b16 %v6300, %v6292
    %v6485 = vpack.c.b16 %v6301, %v6293
    %v6486 = vpack.c.b16 %v6302, %v6294
    %v6487 = vpack.c.b16 %v6303, %v6295
    %v6488 = vpack.c.b16 %v6304, %v6296
    %v6489 = vpack.c.b16 %v6305, %v6297
    %v6490 = vpack.c.b16 %v6306, %v6298
    %v6491 = vpack.c.b16 %v6315, %v6307
    %v6492 = vpack.c.b16 %v6316, %v6308
    %v6493 = vpack.c.b16 %v6317, %v6309
    %v6494 = vpack.c.b16 %v6318, %v6310
    %v6495 = vpack.c.b16 %v6319, %v6311
    %v6496 = vpack.c.b16 %v6320, %v6312
    %v6497 = vpack.c.b16 %v6321, %v6313
    %v6498 = vpack.c.b16 %v6322, %v6314
    %v6499 = vpack.c.b16 %v6331, %v6323
    %v6500 = vpack.c.b16 %v6332, %v6324
    %v6501 = vpack.c.b16 %v6333, %v6325
    %v6502 = vpack.c.b16 %v6334, %v6326
    %v6503 = vpack.c.b16 %v6335, %v6327
    %v6504 = vpack.c.b16 %v6336, %v6328
    %v6505 = vpack.c.b16 %v6337, %v6329
    %v6506 = vpack.c.b16 %v6338, %v6330
    %v6507 = vpack.c.b16 %v6347, %v6339
    %v6508 = vpack.c.b16 %v6348, %v6340
    %v6509 = vpack.c.b16 %v6349, %v6341
    %v6510 = vpack.c.b16 %v6350, %v6342
    %v6511 = vpack.c.b16 %v6351, %v6343
    %v6512 = vpack.c.b16 %v6352, %v6344
    %v6513 = vpack.c.b16 %v6353, %v6345
    %v6514 = vpack.c.b16 %v6354, %v6346
    %v6515 = vpack.c.b16 %v6363, %v6355
    %v6516 = vpack.c.b16 %v6364, %v6356
    %v6517 = vpack.c.b16 %v6365, %v6357
    %v6518 = vpack.c.b16 %v6366, %v6358
    %v6519 = vpack.c.b16 %v6367, %v6359
    %v6520 = vpack.c.b16 %v6368, %v6360
    %v6521 = vpack.c.b16 %v6369, %v6361
    %v6522 = vpack.c.b16 %v6370, %v6362
    %v6523 = vpack.c.b16 %v6379, %v6371
    %v6524 = vpack.c.b16 %v6380, %v6372
    %v6525 = vpack.c.b16 %v6381, %v6373
    %v6526 = vpack.c.b16 %v6382, %v6374
    %v6527 = vpack.c.b16 %v6383, %v6375
    %v6528 = vpack.c.b16 %v6384, %v6376
    %v6529 = vpack.c.b16 %v6385, %v6377
    %v6530 = vpack.c.b16 %v6386, %v6378
    %v6531 = vpack.c.b16 %v6395, %v6387
    %v6532 = vpack.c.b16 %v6396, %v6388
    %v6533 = vpack.c.b16 %v6397, %v6389
    %v6534 = vpack.c.b16 %v6398, %v6390
    %v6535 = vpack.c.b16 %v6399, %v6391
    %v6536 = vpack.c.b16 %v6400, %v6392
    %v6537 = vpack.c.b16 %v6401, %v6393
    %v6538 = vpack.c.b16 %v6402, %v6394
    %v6539 = vpack.c.b16 %v6411, %v6403
    %v6540 = vpack.c.b16 %v6412, %v6404
    %v6541 = vpack.c.b16 %v6413, %v6405
    %v6542 = vpack.c.b16 %v6414, %v6406
    %v6543 = vpack.c.b16 %v6415, %v6407
    %v6544 = vpack.c.b16 %v6416, %v6408
    %v6545 = vpack.c.b16 %v6417, %v6409
    %v6546 = vpack.c.b16 %v6418, %v6410
    %6675 = vmatpush.bf16.msra.mxu0 %v6475
    %6676 = vmatpush.bf16.msra.mxu0 %v6467
    %6677 = vmatpush.bf16.msra.mxu0 %v6459
    %6678 = vmatpush.bf16.msra.mxu0 %v6451
    %6679 = vmatpush.bf16.msra.mxu0 %v6443
    %6680 = vmatpush.bf16.msra.mxu0 %v6435
    %6681 = vmatpush.bf16.msra.mxu0 %v6427
    %6682 = vmatpush.bf16.msra.mxu0 %v6419
    %6683 = vmatmul.bf16.gmra.mxu0 %v5887
    %v6684 = vpop.f32.mrf.mxu0
    %v6685 = vadd.f32 %v6019, %v6684
    %v6686 = vpop.f32.mrf.mxu0
    %6687 = vdwg.mxu0
    %6688 = vmatpush.bf16.msra.mxu0 %v6539
    %6689 = vmatpush.bf16.msra.mxu0 %v6531
    %6690 = vmatpush.bf16.msra.mxu0 %v6523
    %6691 = vmatpush.bf16.msra.mxu0 %v6515
    %6692 = vmatpush.bf16.msra.mxu0 %v6507
    %6693 = vmatpush.bf16.msra.mxu0 %v6499
    %6694 = vmatpush.bf16.msra.mxu0 %v6491
    %6695 = vmatpush.bf16.msra.mxu0 %v6483
    %6696 = vmatmul.bf16.gmra.mxu0 %v5888
    %v6697 = vpop.f32.mrf.mxu0
    %v6698 = vadd.f32 %v6685, %v6697
    %v6699 = vpop.f32.mrf.mxu0
    %6700 = vdwg.mxu0
    %6701 = vmatpush.bf16.msra.mxu0 %v6476
    %6702 = vmatpush.bf16.msra.mxu0 %v6468
    %6703 = vmatpush.bf16.msra.mxu0 %v6460
    %6704 = vmatpush.bf16.msra.mxu0 %v6452
    %6705 = vmatpush.bf16.msra.mxu0 %v6444
    %6706 = vmatpush.bf16.msra.mxu0 %v6436
    %6707 = vmatpush.bf16.msra.mxu0 %v6428
    %6708 = vmatpush.bf16.msra.mxu0 %v6420
    %6709 = vmatmul.bf16.gmra.mxu0 %v5887
    %v6710 = vpop.f32.mrf.mxu0
    %v6711 = vadd.f32 %v6020, %v6710
    %v6712 = vpop.f32.mrf.mxu0
    %6713 = vdwg.mxu0
    %6714 = vmatpush.bf16.msra.mxu0 %v6540
    %6715 = vmatpush.bf16.msra.mxu0 %v6532
    %6716 = vmatpush.bf16.msra.mxu0 %v6524
    %6717 = vmatpush.bf16.msra.mxu0 %v6516
    %6718 = vmatpush.bf16.msra.mxu0 %v6508
    %6719 = vmatpush.bf16.msra.mxu0 %v6500
    %6720 = vmatpush.bf16.msra.mxu0 %v6492
    %6721 = vmatpush.bf16.msra.mxu0 %v6484
    %6722 = vmatmul.bf16.gmra.mxu0 %v5888
    %v6723 = vpop.f32.mrf.mxu0
    %v6724 = vadd.f32 %v6711, %v6723
    %v6725 = vpop.f32.mrf.mxu0
    %6726 = vdwg.mxu0
    %6727 = vmatpush.bf16.msra.mxu0 %v6477
    %6728 = vmatpush.bf16.msra.mxu0 %v6469
    %6729 = vmatpush.bf16.msra.mxu0 %v6461
    %6730 = vmatpush.bf16.msra.mxu0 %v6453
    %6731 = vmatpush.bf16.msra.mxu0 %v6445
    %6732 = vmatpush.bf16.msra.mxu0 %v6437
    %6733 = vmatpush.bf16.msra.mxu0 %v6429
    %6734 = vmatpush.bf16.msra.mxu0 %v6421
    %6735 = vmatmul.bf16.gmra.mxu0 %v5887
    %v6736 = vpop.f32.mrf.mxu0
    %v6737 = vadd.f32 %v6021, %v6736
    %v6738 = vpop.f32.mrf.mxu0
    %6739 = vdwg.mxu0
    %6740 = vmatpush.bf16.msra.mxu0 %v6541
    %6741 = vmatpush.bf16.msra.mxu0 %v6533
    %6742 = vmatpush.bf16.msra.mxu0 %v6525
    %6743 = vmatpush.bf16.msra.mxu0 %v6517
    %6744 = vmatpush.bf16.msra.mxu0 %v6509
    %6745 = vmatpush.bf16.msra.mxu0 %v6501
    %6746 = vmatpush.bf16.msra.mxu0 %v6493
    %6747 = vmatpush.bf16.msra.mxu0 %v6485
    %6748 = vmatmul.bf16.gmra.mxu0 %v5888
    %v6749 = vpop.f32.mrf.mxu0
    %v6750 = vadd.f32 %v6737, %v6749
    %v6751 = vpop.f32.mrf.mxu0
    %6752 = vdwg.mxu0
    %6753 = vmatpush.bf16.msra.mxu0 %v6478
    %6754 = vmatpush.bf16.msra.mxu0 %v6470
    %6755 = vmatpush.bf16.msra.mxu0 %v6462
    %6756 = vmatpush.bf16.msra.mxu0 %v6454
    %6757 = vmatpush.bf16.msra.mxu0 %v6446
    %6758 = vmatpush.bf16.msra.mxu0 %v6438
    %6759 = vmatpush.bf16.msra.mxu0 %v6430
    %6760 = vmatpush.bf16.msra.mxu0 %v6422
    %6761 = vmatmul.bf16.gmra.mxu0 %v5887
    %v6762 = vpop.f32.mrf.mxu0
    %v6763 = vadd.f32 %v6022, %v6762
    %v6764 = vpop.f32.mrf.mxu0
    %6765 = vdwg.mxu0
    %6766 = vmatpush.bf16.msra.mxu0 %v6542
    %6767 = vmatpush.bf16.msra.mxu0 %v6534
    %6768 = vmatpush.bf16.msra.mxu0 %v6526
    %6769 = vmatpush.bf16.msra.mxu0 %v6518
    %6770 = vmatpush.bf16.msra.mxu0 %v6510
    %6771 = vmatpush.bf16.msra.mxu0 %v6502
    %6772 = vmatpush.bf16.msra.mxu0 %v6494
    %6773 = vmatpush.bf16.msra.mxu0 %v6486
    %6774 = vmatmul.bf16.gmra.mxu0 %v5888
    %v6775 = vpop.f32.mrf.mxu0
    %v6776 = vadd.f32 %v6763, %v6775
    %v6777 = vpop.f32.mrf.mxu0
    %6778 = vdwg.mxu0
    %6779 = vmatpush.bf16.msra.mxu0 %v6479
    %6780 = vmatpush.bf16.msra.mxu0 %v6471
    %6781 = vmatpush.bf16.msra.mxu0 %v6463
    %6782 = vmatpush.bf16.msra.mxu0 %v6455
    %6783 = vmatpush.bf16.msra.mxu0 %v6447
    %6784 = vmatpush.bf16.msra.mxu0 %v6439
    %6785 = vmatpush.bf16.msra.mxu0 %v6431
    %6786 = vmatpush.bf16.msra.mxu0 %v6423
    %6787 = vmatmul.bf16.gmra.mxu0 %v5887
    %v6788 = vpop.f32.mrf.mxu0
    %v6789 = vadd.f32 %v6023, %v6788
    %v6790 = vpop.f32.mrf.mxu0
    %6791 = vdwg.mxu0
    %6792 = vmatpush.bf16.msra.mxu0 %v6543
    %6793 = vmatpush.bf16.msra.mxu0 %v6535
    %6794 = vmatpush.bf16.msra.mxu0 %v6527
    %6795 = vmatpush.bf16.msra.mxu0 %v6519
    %6796 = vmatpush.bf16.msra.mxu0 %v6511
    %6797 = vmatpush.bf16.msra.mxu0 %v6503
    %6798 = vmatpush.bf16.msra.mxu0 %v6495
    %6799 = vmatpush.bf16.msra.mxu0 %v6487
    %6800 = vmatmul.bf16.gmra.mxu0 %v5888
    %v6801 = vpop.f32.mrf.mxu0
    %v6802 = vadd.f32 %v6789, %v6801
    %v6803 = vpop.f32.mrf.mxu0
    %6804 = vdwg.mxu0
    %6805 = vmatpush.bf16.msra.mxu0 %v6480
    %6806 = vmatpush.bf16.msra.mxu0 %v6472
    %6807 = vmatpush.bf16.msra.mxu0 %v6464
    %6808 = vmatpush.bf16.msra.mxu0 %v6456
    %6809 = vmatpush.bf16.msra.mxu0 %v6448
    %6810 = vmatpush.bf16.msra.mxu0 %v6440
    %6811 = vmatpush.bf16.msra.mxu0 %v6432
    %6812 = vmatpush.bf16.msra.mxu0 %v6424
    %6813 = vmatmul.bf16.gmra.mxu0 %v5887
    %v6814 = vpop.f32.mrf.mxu0
    %v6815 = vadd.f32 %v6024, %v6814
    %v6816 = vpop.f32.mrf.mxu0
    %6817 = vdwg.mxu0
    %6818 = vmatpush.bf16.msra.mxu0 %v6544
    %6819 = vmatpush.bf16.msra.mxu0 %v6536
    %6820 = vmatpush.bf16.msra.mxu0 %v6528
    %6821 = vmatpush.bf16.msra.mxu0 %v6520
    %6822 = vmatpush.bf16.msra.mxu0 %v6512
    %6823 = vmatpush.bf16.msra.mxu0 %v6504
    %6824 = vmatpush.bf16.msra.mxu0 %v6496
    %6825 = vmatpush.bf16.msra.mxu0 %v6488
    %6826 = vmatmul.bf16.gmra.mxu0 %v5888
    %v6827 = vpop.f32.mrf.mxu0
    %v6828 = vadd.f32 %v6815, %v6827
    %v6829 = vpop.f32.mrf.mxu0
    %6830 = vdwg.mxu0
    %6831 = vmatpush.bf16.msra.mxu0 %v6481
    %6832 = vmatpush.bf16.msra.mxu0 %v6473
    %6833 = vmatpush.bf16.msra.mxu0 %v6465
    %6834 = vmatpush.bf16.msra.mxu0 %v6457
    %6835 = vmatpush.bf16.msra.mxu0 %v6449
    %6836 = vmatpush.bf16.msra.mxu0 %v6441
    %6837 = vmatpush.bf16.msra.mxu0 %v6433
    %6838 = vmatpush.bf16.msra.mxu0 %v6425
    %6839 = vmatmul.bf16.gmra.mxu0 %v5887
    %v6840 = vpop.f32.mrf.mxu0
    %v6841 = vadd.f32 %v6025, %v6840
    %v6842 = vpop.f32.mrf.mxu0
    %6843 = vdwg.mxu0
    %6844 = vmatpush.bf16.msra.mxu0 %v6545
    %6845 = vmatpush.bf16.msra.mxu0 %v6537
    %6846 = vmatpush.bf16.msra.mxu0 %v6529
    %6847 = vmatpush.bf16.msra.mxu0 %v6521
    %6848 = vmatpush.bf16.msra.mxu0 %v6513
    %6849 = vmatpush.bf16.msra.mxu0 %v6505
    %6850 = vmatpush.bf16.msra.mxu0 %v6497
    %6851 = vmatpush.bf16.msra.mxu0 %v6489
    %6852 = vmatmul.bf16.gmra.mxu0 %v5888
    %v6853 = vpop.f32.mrf.mxu0
    %v6854 = vadd.f32 %v6841, %v6853
    %v6855 = vpop.f32.mrf.mxu0
    %6856 = vdwg.mxu0
    %6857 = vmatpush.bf16.msra.mxu0 %v6482
    %6858 = vmatpush.bf16.msra.mxu0 %v6474
    %6859 = vmatpush.bf16.msra.mxu0 %v6466
    %6860 = vmatpush.bf16.msra.mxu0 %v6458
    %6861 = vmatpush.bf16.msra.mxu0 %v6450
    %6862 = vmatpush.bf16.msra.mxu0 %v6442
    %6863 = vmatpush.bf16.msra.mxu0 %v6434
    %6864 = vmatpush.bf16.msra.mxu0 %v6426
    %6865 = vmatmul.bf16.gmra.mxu0 %v5887
    %v6866 = vpop.f32.mrf.mxu0
    %v6867 = vadd.f32 %v6026, %v6866
    %v6868 = vpop.f32.mrf.mxu0
    %6869 = vdwg.mxu0
    %6870 = vmatpush.bf16.msra.mxu0 %v6546
    %6871 = vmatpush.bf16.msra.mxu0 %v6538
    %6872 = vmatpush.bf16.msra.mxu0 %v6530
    %6873 = vmatpush.bf16.msra.mxu0 %v6522
    %6874 = vmatpush.bf16.msra.mxu0 %v6514
    %6875 = vmatpush.bf16.msra.mxu0 %v6506
    %6876 = vmatpush.bf16.msra.mxu0 %v6498
    %6877 = vmatpush.bf16.msra.mxu0 %v6490
    %6878 = vmatmul.bf16.gmra.mxu0 %v5888
    %v6879 = vpop.f32.mrf.mxu0
    %v6880 = vadd.f32 %v6867, %v6879
    %v6881 = vpop.f32.mrf.mxu0
    %6882 = vdwg.mxu0
    %v6883 = vld [vmem:[#allocation5] sm:$0xff]
    %v6884 = vld [vmem:[#allocation5 + $0x8] sm:$0xff]
    %v6885 = vld [vmem:[#allocation5 + $0x10] sm:$0xff]
    %v6886 = vld [vmem:[#allocation5 + $0x18] sm:$0xff]
    %v6887 = vld [vmem:[#allocation5 + $0x20] sm:$0xff]
    %v6888 = vld [vmem:[#allocation5 + $0x28] sm:$0xff]
    %v6889 = vld [vmem:[#allocation5 + $0x30] sm:$0xff]
    %v6890 = vld [vmem:[#allocation5 + $0x38] sm:$0xff]
    %v6891 = vld [vmem:[#allocation5 + $0x40] sm:$0xff]
    %v6892 = vld [vmem:[#allocation5 + $0x48] sm:$0xff]
    %v6893 = vld [vmem:[#allocation5 + $0x50] sm:$0xff]
    %v6894 = vld [vmem:[#allocation5 + $0x58] sm:$0xff]
    %v6895 = vld [vmem:[#allocation5 + $0x60] sm:$0xff]
    %v6896 = vld [vmem:[#allocation5 + $0x68] sm:$0xff]
    %v6897 = vld [vmem:[#allocation5 + $0x70] sm:$0xff]
    %v6898 = vld [vmem:[#allocation5 + $0x78] sm:$0xff]
    %v6899 = vld [vmem:[#allocation5 + $0x80] sm:$0xff]
    %v6900 = vld [vmem:[#allocation5 + $0x88] sm:$0xff]
    %v6901 = vld [vmem:[#allocation5 + $0x90] sm:$0xff]
    %v6902 = vld [vmem:[#allocation5 + $0x98] sm:$0xff]
    %v6903 = vld [vmem:[#allocation5 + $0xa0] sm:$0xff]
    %v6904 = vld [vmem:[#allocation5 + $0xa8] sm:$0xff]
    %v6905 = vld [vmem:[#allocation5 + $0xb0] sm:$0xff]
    %v6906 = vld [vmem:[#allocation5 + $0xb8] sm:$0xff]
    %v6907 = vld [vmem:[#allocation5 + $0xc0] sm:$0xff]
    %v6908 = vld [vmem:[#allocation5 + $0xc8] sm:$0xff]
    %v6909 = vld [vmem:[#allocation5 + $0xd0] sm:$0xff]
    %v6910 = vld [vmem:[#allocation5 + $0xd8] sm:$0xff]
    %v6911 = vld [vmem:[#allocation5 + $0xe0] sm:$0xff]
    %v6912 = vld [vmem:[#allocation5 + $0xe8] sm:$0xff]
    %v6913 = vld [vmem:[#allocation5 + $0xf0] sm:$0xff]
    %v6914 = vld [vmem:[#allocation5 + $0xf8] sm:$0xff]
    %v6915 = vld [vmem:[#allocation5 + $0x100] sm:$0xff]
    %v6916 = vld [vmem:[#allocation5 + $0x108] sm:$0xff]
    %v6917 = vld [vmem:[#allocation5 + $0x110] sm:$0xff]
    %v6918 = vld [vmem:[#allocation5 + $0x118] sm:$0xff]
    %v6919 = vld [vmem:[#allocation5 + $0x120] sm:$0xff]
    %v6920 = vld [vmem:[#allocation5 + $0x128] sm:$0xff]
    %v6921 = vld [vmem:[#allocation5 + $0x130] sm:$0xff]
    %v6922 = vld [vmem:[#allocation5 + $0x138] sm:$0xff]
    %v6923 = vld [vmem:[#allocation5 + $0x140] sm:$0xff]
    %v6924 = vld [vmem:[#allocation5 + $0x148] sm:$0xff]
    %v6925 = vld [vmem:[#allocation5 + $0x150] sm:$0xff]
    %v6926 = vld [vmem:[#allocation5 + $0x158] sm:$0xff]
    %v6927 = vld [vmem:[#allocation5 + $0x160] sm:$0xff]
    %v6928 = vld [vmem:[#allocation5 + $0x168] sm:$0xff]
    %v6929 = vld [vmem:[#allocation5 + $0x170] sm:$0xff]
    %v6930 = vld [vmem:[#allocation5 + $0x178] sm:$0xff]
    %v6931 = vld [vmem:[#allocation5 + $0x180] sm:$0xff]
    %v6932 = vld [vmem:[#allocation5 + $0x188] sm:$0xff]
    %v6933 = vld [vmem:[#allocation5 + $0x190] sm:$0xff]
    %v6934 = vld [vmem:[#allocation5 + $0x198] sm:$0xff]
    %v6935 = vld [vmem:[#allocation5 + $0x1a0] sm:$0xff]
    %v6936 = vld [vmem:[#allocation5 + $0x1a8] sm:$0xff]
    %v6937 = vld [vmem:[#allocation5 + $0x1b0] sm:$0xff]
    %v6938 = vld [vmem:[#allocation5 + $0x1b8] sm:$0xff]
    %v6939 = vld [vmem:[#allocation5 + $0x1c0] sm:$0xff]
    %v6940 = vld [vmem:[#allocation5 + $0x1c8] sm:$0xff]
    %v6941 = vld [vmem:[#allocation5 + $0x1d0] sm:$0xff]
    %v6942 = vld [vmem:[#allocation5 + $0x1d8] sm:$0xff]
    %v6943 = vld [vmem:[#allocation5 + $0x1e0] sm:$0xff]
    %v6944 = vld [vmem:[#allocation5 + $0x1e8] sm:$0xff]
    %v6945 = vld [vmem:[#allocation5 + $0x1f0] sm:$0xff]
    %v6946 = vld [vmem:[#allocation5 + $0x1f8] sm:$0xff]
    %v6947 = vld [vmem:[#allocation5 + $0x200] sm:$0xff]
    %v6948 = vld [vmem:[#allocation5 + $0x208] sm:$0xff]
    %v6949 = vld [vmem:[#allocation5 + $0x210] sm:$0xff]
    %v6950 = vld [vmem:[#allocation5 + $0x218] sm:$0xff]
    %v6951 = vld [vmem:[#allocation5 + $0x220] sm:$0xff]
    %v6952 = vld [vmem:[#allocation5 + $0x228] sm:$0xff]
    %v6953 = vld [vmem:[#allocation5 + $0x230] sm:$0xff]
    %v6954 = vld [vmem:[#allocation5 + $0x238] sm:$0xff]
    %v6955 = vld [vmem:[#allocation5 + $0x240] sm:$0xff]
    %v6956 = vld [vmem:[#allocation5 + $0x248] sm:$0xff]
    %v6957 = vld [vmem:[#allocation5 + $0x250] sm:$0xff]
    %v6958 = vld [vmem:[#allocation5 + $0x258] sm:$0xff]
    %v6959 = vld [vmem:[#allocation5 + $0x260] sm:$0xff]
    %v6960 = vld [vmem:[#allocation5 + $0x268] sm:$0xff]
    %v6961 = vld [vmem:[#allocation5 + $0x270] sm:$0xff]
    %v6962 = vld [vmem:[#allocation5 + $0x278] sm:$0xff]
    %v6963 = vld [vmem:[#allocation5 + $0x280] sm:$0xff]
    %v6964 = vld [vmem:[#allocation5 + $0x288] sm:$0xff]
    %v6965 = vld [vmem:[#allocation5 + $0x290] sm:$0xff]
    %v6966 = vld [vmem:[#allocation5 + $0x298] sm:$0xff]
    %v6967 = vld [vmem:[#allocation5 + $0x2a0] sm:$0xff]
    %v6968 = vld [vmem:[#allocation5 + $0x2a8] sm:$0xff]
    %v6969 = vld [vmem:[#allocation5 + $0x2b0] sm:$0xff]
    %v6970 = vld [vmem:[#allocation5 + $0x2b8] sm:$0xff]
    %v6971 = vld [vmem:[#allocation5 + $0x2c0] sm:$0xff]
    %v6972 = vld [vmem:[#allocation5 + $0x2c8] sm:$0xff]
    %v6973 = vld [vmem:[#allocation5 + $0x2d0] sm:$0xff]
    %v6974 = vld [vmem:[#allocation5 + $0x2d8] sm:$0xff]
    %v6975 = vld [vmem:[#allocation5 + $0x2e0] sm:$0xff]
    %v6976 = vld [vmem:[#allocation5 + $0x2e8] sm:$0xff]
    %v6977 = vld [vmem:[#allocation5 + $0x2f0] sm:$0xff]
    %v6978 = vld [vmem:[#allocation5 + $0x2f8] sm:$0xff]
    %v6979 = vld [vmem:[#allocation5 + $0x300] sm:$0xff]
    %v6980 = vld [vmem:[#allocation5 + $0x308] sm:$0xff]
    %v6981 = vld [vmem:[#allocation5 + $0x310] sm:$0xff]
    %v6982 = vld [vmem:[#allocation5 + $0x318] sm:$0xff]
    %v6983 = vld [vmem:[#allocation5 + $0x320] sm:$0xff]
    %v6984 = vld [vmem:[#allocation5 + $0x328] sm:$0xff]
    %v6985 = vld [vmem:[#allocation5 + $0x330] sm:$0xff]
    %v6986 = vld [vmem:[#allocation5 + $0x338] sm:$0xff]
    %v6987 = vld [vmem:[#allocation5 + $0x340] sm:$0xff]
    %v6988 = vld [vmem:[#allocation5 + $0x348] sm:$0xff]
    %v6989 = vld [vmem:[#allocation5 + $0x350] sm:$0xff]
    %v6990 = vld [vmem:[#allocation5 + $0x358] sm:$0xff]
    %v6991 = vld [vmem:[#allocation5 + $0x360] sm:$0xff]
    %v6992 = vld [vmem:[#allocation5 + $0x368] sm:$0xff]
    %v6993 = vld [vmem:[#allocation5 + $0x370] sm:$0xff]
    %v6994 = vld [vmem:[#allocation5 + $0x378] sm:$0xff]
    %v6995 = vld [vmem:[#allocation5 + $0x380] sm:$0xff]
    %v6996 = vld [vmem:[#allocation5 + $0x388] sm:$0xff]
    %v6997 = vld [vmem:[#allocation5 + $0x390] sm:$0xff]
    %v6998 = vld [vmem:[#allocation5 + $0x398] sm:$0xff]
    %v6999 = vld [vmem:[#allocation5 + $0x3a0] sm:$0xff]
    %v7000 = vld [vmem:[#allocation5 + $0x3a8] sm:$0xff]
    %v7001 = vld [vmem:[#allocation5 + $0x3b0] sm:$0xff]
    %v7002 = vld [vmem:[#allocation5 + $0x3b8] sm:$0xff]
    %v7003 = vld [vmem:[#allocation5 + $0x3c0] sm:$0xff]
    %v7004 = vld [vmem:[#allocation5 + $0x3c8] sm:$0xff]
    %v7005 = vld [vmem:[#allocation5 + $0x3d0] sm:$0xff]
    %v7006 = vld [vmem:[#allocation5 + $0x3d8] sm:$0xff]
    %v7007 = vld [vmem:[#allocation5 + $0x3e0] sm:$0xff]
    %v7008 = vld [vmem:[#allocation5 + $0x3e8] sm:$0xff]
    %v7009 = vld [vmem:[#allocation5 + $0x3f0] sm:$0xff]
    %v7010 = vld [vmem:[#allocation5 + $0x3f8] sm:$0xff]
    %v7139 = vunpack.c.l.b16 %v6883
    %v7140 = vunpack.c.h.b16 %v6883
    %v7141 = vunpack.c.l.b16 %v6884
    %v7142 = vunpack.c.h.b16 %v6884
    %v7143 = vunpack.c.l.b16 %v6885
    %v7144 = vunpack.c.h.b16 %v6885
    %v7145 = vunpack.c.l.b16 %v6886
    %v7146 = vunpack.c.h.b16 %v6886
    %v7147 = vunpack.c.l.b16 %v6887
    %v7148 = vunpack.c.h.b16 %v6887
    %v7149 = vunpack.c.l.b16 %v6888
    %v7150 = vunpack.c.h.b16 %v6888
    %v7151 = vunpack.c.l.b16 %v6889
    %v7152 = vunpack.c.h.b16 %v6889
    %v7153 = vunpack.c.l.b16 %v6890
    %v7154 = vunpack.c.h.b16 %v6890
    %v7155 = vunpack.c.l.b16 %v6891
    %v7156 = vunpack.c.h.b16 %v6891
    %v7157 = vunpack.c.l.b16 %v6892
    %v7158 = vunpack.c.h.b16 %v6892
    %v7159 = vunpack.c.l.b16 %v6893
    %v7160 = vunpack.c.h.b16 %v6893
    %v7161 = vunpack.c.l.b16 %v6894
    %v7162 = vunpack.c.h.b16 %v6894
    %v7163 = vunpack.c.l.b16 %v6895
    %v7164 = vunpack.c.h.b16 %v6895
    %v7165 = vunpack.c.l.b16 %v6896
    %v7166 = vunpack.c.h.b16 %v6896
    %v7167 = vunpack.c.l.b16 %v6897
    %v7168 = vunpack.c.h.b16 %v6897
    %v7169 = vunpack.c.l.b16 %v6898
    %v7170 = vunpack.c.h.b16 %v6898
    %v7171 = vunpack.c.l.b16 %v6899
    %v7172 = vunpack.c.h.b16 %v6899
    %v7173 = vunpack.c.l.b16 %v6900
    %v7174 = vunpack.c.h.b16 %v6900
    %v7175 = vunpack.c.l.b16 %v6901
    %v7176 = vunpack.c.h.b16 %v6901
    %v7177 = vunpack.c.l.b16 %v6902
    %v7178 = vunpack.c.h.b16 %v6902
    %v7179 = vunpack.c.l.b16 %v6903
    %v7180 = vunpack.c.h.b16 %v6903
    %v7181 = vunpack.c.l.b16 %v6904
    %v7182 = vunpack.c.h.b16 %v6904
    %v7183 = vunpack.c.l.b16 %v6905
    %v7184 = vunpack.c.h.b16 %v6905
    %v7185 = vunpack.c.l.b16 %v6906
    %v7186 = vunpack.c.h.b16 %v6906
    %v7187 = vunpack.c.l.b16 %v6907
    %v7188 = vunpack.c.h.b16 %v6907
    %v7189 = vunpack.c.l.b16 %v6908
    %v7190 = vunpack.c.h.b16 %v6908
    %v7191 = vunpack.c.l.b16 %v6909
    %v7192 = vunpack.c.h.b16 %v6909
    %v7193 = vunpack.c.l.b16 %v6910
    %v7194 = vunpack.c.h.b16 %v6910
    %v7195 = vunpack.c.l.b16 %v6911
    %v7196 = vunpack.c.h.b16 %v6911
    %v7197 = vunpack.c.l.b16 %v6912
    %v7198 = vunpack.c.h.b16 %v6912
    %v7199 = vunpack.c.l.b16 %v6913
    %v7200 = vunpack.c.h.b16 %v6913
    %v7201 = vunpack.c.l.b16 %v6914
    %v7202 = vunpack.c.h.b16 %v6914
    %v7203 = vunpack.c.l.b16 %v6915
    %v7204 = vunpack.c.h.b16 %v6915
    %v7205 = vunpack.c.l.b16 %v6916
    %v7206 = vunpack.c.h.b16 %v6916
    %v7207 = vunpack.c.l.b16 %v6917
    %v7208 = vunpack.c.h.b16 %v6917
    %v7209 = vunpack.c.l.b16 %v6918
    %v7210 = vunpack.c.h.b16 %v6918
    %v7211 = vunpack.c.l.b16 %v6919
    %v7212 = vunpack.c.h.b16 %v6919
    %v7213 = vunpack.c.l.b16 %v6920
    %v7214 = vunpack.c.h.b16 %v6920
    %v7215 = vunpack.c.l.b16 %v6921
    %v7216 = vunpack.c.h.b16 %v6921
    %v7217 = vunpack.c.l.b16 %v6922
    %v7218 = vunpack.c.h.b16 %v6922
    %v7219 = vunpack.c.l.b16 %v6923
    %v7220 = vunpack.c.h.b16 %v6923
    %v7221 = vunpack.c.l.b16 %v6924
    %v7222 = vunpack.c.h.b16 %v6924
    %v7223 = vunpack.c.l.b16 %v6925
    %v7224 = vunpack.c.h.b16 %v6925
    %v7225 = vunpack.c.l.b16 %v6926
    %v7226 = vunpack.c.h.b16 %v6926
    %v7227 = vunpack.c.l.b16 %v6927
    %v7228 = vunpack.c.h.b16 %v6927
    %v7229 = vunpack.c.l.b16 %v6928
    %v7230 = vunpack.c.h.b16 %v6928
    %v7231 = vunpack.c.l.b16 %v6929
    %v7232 = vunpack.c.h.b16 %v6929
    %v7233 = vunpack.c.l.b16 %v6930
    %v7234 = vunpack.c.h.b16 %v6930
    %v7235 = vunpack.c.l.b16 %v6931
    %v7236 = vunpack.c.h.b16 %v6931
    %v7237 = vunpack.c.l.b16 %v6932
    %v7238 = vunpack.c.h.b16 %v6932
    %v7239 = vunpack.c.l.b16 %v6933
    %v7240 = vunpack.c.h.b16 %v6933
    %v7241 = vunpack.c.l.b16 %v6934
    %v7242 = vunpack.c.h.b16 %v6934
    %v7243 = vunpack.c.l.b16 %v6935
    %v7244 = vunpack.c.h.b16 %v6935
    %v7245 = vunpack.c.l.b16 %v6936
    %v7246 = vunpack.c.h.b16 %v6936
    %v7247 = vunpack.c.l.b16 %v6937
    %v7248 = vunpack.c.h.b16 %v6937
    %v7249 = vunpack.c.l.b16 %v6938
    %v7250 = vunpack.c.h.b16 %v6938
    %v7251 = vunpack.c.l.b16 %v6939
    %v7252 = vunpack.c.h.b16 %v6939
    %v7253 = vunpack.c.l.b16 %v6940
    %v7254 = vunpack.c.h.b16 %v6940
    %v7255 = vunpack.c.l.b16 %v6941
    %v7256 = vunpack.c.h.b16 %v6941
    %v7257 = vunpack.c.l.b16 %v6942
    %v7258 = vunpack.c.h.b16 %v6942
    %v7259 = vunpack.c.l.b16 %v6943
    %v7260 = vunpack.c.h.b16 %v6943
    %v7261 = vunpack.c.l.b16 %v6944
    %v7262 = vunpack.c.h.b16 %v6944
    %v7263 = vunpack.c.l.b16 %v6945
    %v7264 = vunpack.c.h.b16 %v6945
    %v7265 = vunpack.c.l.b16 %v6946
    %v7266 = vunpack.c.h.b16 %v6946
    %v7267 = vunpack.c.l.b16 %v6947
    %v7268 = vunpack.c.h.b16 %v6947
    %v7269 = vunpack.c.l.b16 %v6948
    %v7270 = vunpack.c.h.b16 %v6948
    %v7271 = vunpack.c.l.b16 %v6949
    %v7272 = vunpack.c.h.b16 %v6949
    %v7273 = vunpack.c.l.b16 %v6950
    %v7274 = vunpack.c.h.b16 %v6950
    %v7275 = vunpack.c.l.b16 %v6951
    %v7276 = vunpack.c.h.b16 %v6951
    %v7277 = vunpack.c.l.b16 %v6952
    %v7278 = vunpack.c.h.b16 %v6952
    %v7279 = vunpack.c.l.b16 %v6953
    %v7280 = vunpack.c.h.b16 %v6953
    %v7281 = vunpack.c.l.b16 %v6954
    %v7282 = vunpack.c.h.b16 %v6954
    %v7283 = vunpack.c.l.b16 %v6955
    %v7284 = vunpack.c.h.b16 %v6955
    %v7285 = vunpack.c.l.b16 %v6956
    %v7286 = vunpack.c.h.b16 %v6956
    %v7287 = vunpack.c.l.b16 %v6957
    %v7288 = vunpack.c.h.b16 %v6957
    %v7289 = vunpack.c.l.b16 %v6958
    %v7290 = vunpack.c.h.b16 %v6958
    %v7291 = vunpack.c.l.b16 %v6959
    %v7292 = vunpack.c.h.b16 %v6959
    %v7293 = vunpack.c.l.b16 %v6960
    %v7294 = vunpack.c.h.b16 %v6960
    %v7295 = vunpack.c.l.b16 %v6961
    %v7296 = vunpack.c.h.b16 %v6961
    %v7297 = vunpack.c.l.b16 %v6962
    %v7298 = vunpack.c.h.b16 %v6962
    %v7299 = vunpack.c.l.b16 %v6963
    %v7300 = vunpack.c.h.b16 %v6963
    %v7301 = vunpack.c.l.b16 %v6964
    %v7302 = vunpack.c.h.b16 %v6964
    %v7303 = vunpack.c.l.b16 %v6965
    %v7304 = vunpack.c.h.b16 %v6965
    %v7305 = vunpack.c.l.b16 %v6966
    %v7306 = vunpack.c.h.b16 %v6966
    %v7307 = vunpack.c.l.b16 %v6967
    %v7308 = vunpack.c.h.b16 %v6967
    %v7309 = vunpack.c.l.b16 %v6968
    %v7310 = vunpack.c.h.b16 %v6968
    %v7311 = vunpack.c.l.b16 %v6969
    %v7312 = vunpack.c.h.b16 %v6969
    %v7313 = vunpack.c.l.b16 %v6970
    %v7314 = vunpack.c.h.b16 %v6970
    %v7315 = vunpack.c.l.b16 %v6971
    %v7316 = vunpack.c.h.b16 %v6971
    %v7317 = vunpack.c.l.b16 %v6972
    %v7318 = vunpack.c.h.b16 %v6972
    %v7319 = vunpack.c.l.b16 %v6973
    %v7320 = vunpack.c.h.b16 %v6973
    %v7321 = vunpack.c.l.b16 %v6974
    %v7322 = vunpack.c.h.b16 %v6974
    %v7323 = vunpack.c.l.b16 %v6975
    %v7324 = vunpack.c.h.b16 %v6975
    %v7325 = vunpack.c.l.b16 %v6976
    %v7326 = vunpack.c.h.b16 %v6976
    %v7327 = vunpack.c.l.b16 %v6977
    %v7328 = vunpack.c.h.b16 %v6977
    %v7329 = vunpack.c.l.b16 %v6978
    %v7330 = vunpack.c.h.b16 %v6978
    %v7331 = vunpack.c.l.b16 %v6979
    %v7332 = vunpack.c.h.b16 %v6979
    %v7333 = vunpack.c.l.b16 %v6980
    %v7334 = vunpack.c.h.b16 %v6980
    %v7335 = vunpack.c.l.b16 %v6981
    %v7336 = vunpack.c.h.b16 %v6981
    %v7337 = vunpack.c.l.b16 %v6982
    %v7338 = vunpack.c.h.b16 %v6982
    %v7339 = vunpack.c.l.b16 %v6983
    %v7340 = vunpack.c.h.b16 %v6983
    %v7341 = vunpack.c.l.b16 %v6984
    %v7342 = vunpack.c.h.b16 %v6984
    %v7343 = vunpack.c.l.b16 %v6985
    %v7344 = vunpack.c.h.b16 %v6985
    %v7345 = vunpack.c.l.b16 %v6986
    %v7346 = vunpack.c.h.b16 %v6986
    %v7347 = vunpack.c.l.b16 %v6987
    %v7348 = vunpack.c.h.b16 %v6987
    %v7349 = vunpack.c.l.b16 %v6988
    %v7350 = vunpack.c.h.b16 %v6988
    %v7351 = vunpack.c.l.b16 %v6989
    %v7352 = vunpack.c.h.b16 %v6989
    %v7353 = vunpack.c.l.b16 %v6990
    %v7354 = vunpack.c.h.b16 %v6990
    %v7355 = vunpack.c.l.b16 %v6991
    %v7356 = vunpack.c.h.b16 %v6991
    %v7357 = vunpack.c.l.b16 %v6992
    %v7358 = vunpack.c.h.b16 %v6992
    %v7359 = vunpack.c.l.b16 %v6993
    %v7360 = vunpack.c.h.b16 %v6993
    %v7361 = vunpack.c.l.b16 %v6994
    %v7362 = vunpack.c.h.b16 %v6994
    %v7363 = vunpack.c.l.b16 %v6995
    %v7364 = vunpack.c.h.b16 %v6995
    %v7365 = vunpack.c.l.b16 %v6996
    %v7366 = vunpack.c.h.b16 %v6996
    %v7367 = vunpack.c.l.b16 %v6997
    %v7368 = vunpack.c.h.b16 %v6997
    %v7369 = vunpack.c.l.b16 %v6998
    %v7370 = vunpack.c.h.b16 %v6998
    %v7371 = vunpack.c.l.b16 %v6999
    %v7372 = vunpack.c.h.b16 %v6999
    %v7373 = vunpack.c.l.b16 %v7000
    %v7374 = vunpack.c.h.b16 %v7000
    %v7375 = vunpack.c.l.b16 %v7001
    %v7376 = vunpack.c.h.b16 %v7001
    %v7377 = vunpack.c.l.b16 %v7002
    %v7378 = vunpack.c.h.b16 %v7002
    %v7379 = vunpack.c.l.b16 %v7003
    %v7380 = vunpack.c.h.b16 %v7003
    %v7381 = vunpack.c.l.b16 %v7004
    %v7382 = vunpack.c.h.b16 %v7004
    %v7383 = vunpack.c.l.b16 %v7005
    %v7384 = vunpack.c.h.b16 %v7005
    %v7385 = vunpack.c.l.b16 %v7006
    %v7386 = vunpack.c.h.b16 %v7006
    %v7387 = vunpack.c.l.b16 %v7007
    %v7388 = vunpack.c.h.b16 %v7007
    %v7389 = vunpack.c.l.b16 %v7008
    %v7390 = vunpack.c.h.b16 %v7008
    %v7391 = vunpack.c.l.b16 %v7009
    %v7392 = vunpack.c.h.b16 %v7009
    %v7393 = vunpack.c.l.b16 %v7010
    %v7394 = vunpack.c.h.b16 %v7010
    %v7395 = vpack.c.b16 %v7147, %v7139
    %v7396 = vpack.c.b16 %v7148, %v7140
    %v7397 = vpack.c.b16 %v7149, %v7141
    %v7398 = vpack.c.b16 %v7150, %v7142
    %v7399 = vpack.c.b16 %v7151, %v7143
    %v7400 = vpack.c.b16 %v7152, %v7144
    %v7401 = vpack.c.b16 %v7153, %v7145
    %v7402 = vpack.c.b16 %v7154, %v7146
    %v7403 = vpack.c.b16 %v7163, %v7155
    %v7404 = vpack.c.b16 %v7164, %v7156
    %v7405 = vpack.c.b16 %v7165, %v7157
    %v7406 = vpack.c.b16 %v7166, %v7158
    %v7407 = vpack.c.b16 %v7167, %v7159
    %v7408 = vpack.c.b16 %v7168, %v7160
    %v7409 = vpack.c.b16 %v7169, %v7161
    %v7410 = vpack.c.b16 %v7170, %v7162
    %v7411 = vpack.c.b16 %v7179, %v7171
    %v7412 = vpack.c.b16 %v7180, %v7172
    %v7413 = vpack.c.b16 %v7181, %v7173
    %v7414 = vpack.c.b16 %v7182, %v7174
    %v7415 = vpack.c.b16 %v7183, %v7175
    %v7416 = vpack.c.b16 %v7184, %v7176
    %v7417 = vpack.c.b16 %v7185, %v7177
    %v7418 = vpack.c.b16 %v7186, %v7178
    %v7419 = vpack.c.b16 %v7195, %v7187
    %v7420 = vpack.c.b16 %v7196, %v7188
    %v7421 = vpack.c.b16 %v7197, %v7189
    %v7422 = vpack.c.b16 %v7198, %v7190
    %v7423 = vpack.c.b16 %v7199, %v7191
    %v7424 = vpack.c.b16 %v7200, %v7192
    %v7425 = vpack.c.b16 %v7201, %v7193
    %v7426 = vpack.c.b16 %v7202, %v7194
    %v7427 = vpack.c.b16 %v7211, %v7203
    %v7428 = vpack.c.b16 %v7212, %v7204
    %v7429 = vpack.c.b16 %v7213, %v7205
    %v7430 = vpack.c.b16 %v7214, %v7206
    %v7431 = vpack.c.b16 %v7215, %v7207
    %v7432 = vpack.c.b16 %v7216, %v7208
    %v7433 = vpack.c.b16 %v7217, %v7209
    %v7434 = vpack.c.b16 %v7218, %v7210
    %v7435 = vpack.c.b16 %v7227, %v7219
    %v7436 = vpack.c.b16 %v7228, %v7220
    %v7437 = vpack.c.b16 %v7229, %v7221
    %v7438 = vpack.c.b16 %v7230, %v7222
    %v7439 = vpack.c.b16 %v7231, %v7223
    %v7440 = vpack.c.b16 %v7232, %v7224
    %v7441 = vpack.c.b16 %v7233, %v7225
    %v7442 = vpack.c.b16 %v7234, %v7226
    %v7443 = vpack.c.b16 %v7243, %v7235
    %v7444 = vpack.c.b16 %v7244, %v7236
    %v7445 = vpack.c.b16 %v7245, %v7237
    %v7446 = vpack.c.b16 %v7246, %v7238
    %v7447 = vpack.c.b16 %v7247, %v7239
    %v7448 = vpack.c.b16 %v7248, %v7240
    %v7449 = vpack.c.b16 %v7249, %v7241
    %v7450 = vpack.c.b16 %v7250, %v7242
    %v7451 = vpack.c.b16 %v7259, %v7251
    %v7452 = vpack.c.b16 %v7260, %v7252
    %v7453 = vpack.c.b16 %v7261, %v7253
    %v7454 = vpack.c.b16 %v7262, %v7254
    %v7455 = vpack.c.b16 %v7263, %v7255
    %v7456 = vpack.c.b16 %v7264, %v7256
    %v7457 = vpack.c.b16 %v7265, %v7257
    %v7458 = vpack.c.b16 %v7266, %v7258
    %v7459 = vpack.c.b16 %v7275, %v7267
    %v7460 = vpack.c.b16 %v7276, %v7268
    %v7461 = vpack.c.b16 %v7277, %v7269
    %v7462 = vpack.c.b16 %v7278, %v7270
    %v7463 = vpack.c.b16 %v7279, %v7271
    %v7464 = vpack.c.b16 %v7280, %v7272
    %v7465 = vpack.c.b16 %v7281, %v7273
    %v7466 = vpack.c.b16 %v7282, %v7274
    %v7467 = vpack.c.b16 %v7291, %v7283
    %v7468 = vpack.c.b16 %v7292, %v7284
    %v7469 = vpack.c.b16 %v7293, %v7285
    %v7470 = vpack.c.b16 %v7294, %v7286
    %v7471 = vpack.c.b16 %v7295, %v7287
    %v7472 = vpack.c.b16 %v7296, %v7288
    %v7473 = vpack.c.b16 %v7297, %v7289
    %v7474 = vpack.c.b16 %v7298, %v7290
    %v7475 = vpack.c.b16 %v7307, %v7299
    %v7476 = vpack.c.b16 %v7308, %v7300
    %v7477 = vpack.c.b16 %v7309, %v7301
    %v7478 = vpack.c.b16 %v7310, %v7302
    %v7479 = vpack.c.b16 %v7311, %v7303
    %v7480 = vpack.c.b16 %v7312, %v7304
    %v7481 = vpack.c.b16 %v7313, %v7305
    %v7482 = vpack.c.b16 %v7314, %v7306
    %v7483 = vpack.c.b16 %v7323, %v7315
    %v7484 = vpack.c.b16 %v7324, %v7316
    %v7485 = vpack.c.b16 %v7325, %v7317
    %v7486 = vpack.c.b16 %v7326, %v7318
    %v7487 = vpack.c.b16 %v7327, %v7319
    %v7488 = vpack.c.b16 %v7328, %v7320
    %v7489 = vpack.c.b16 %v7329, %v7321
    %v7490 = vpack.c.b16 %v7330, %v7322
    %v7491 = vpack.c.b16 %v7339, %v7331
    %v7492 = vpack.c.b16 %v7340, %v7332
    %v7493 = vpack.c.b16 %v7341, %v7333
    %v7494 = vpack.c.b16 %v7342, %v7334
    %v7495 = vpack.c.b16 %v7343, %v7335
    %v7496 = vpack.c.b16 %v7344, %v7336
    %v7497 = vpack.c.b16 %v7345, %v7337
    %v7498 = vpack.c.b16 %v7346, %v7338
    %v7499 = vpack.c.b16 %v7355, %v7347
    %v7500 = vpack.c.b16 %v7356, %v7348
    %v7501 = vpack.c.b16 %v7357, %v7349
    %v7502 = vpack.c.b16 %v7358, %v7350
    %v7503 = vpack.c.b16 %v7359, %v7351
    %v7504 = vpack.c.b16 %v7360, %v7352
    %v7505 = vpack.c.b16 %v7361, %v7353
    %v7506 = vpack.c.b16 %v7362, %v7354
    %v7507 = vpack.c.b16 %v7371, %v7363
    %v7508 = vpack.c.b16 %v7372, %v7364
    %v7509 = vpack.c.b16 %v7373, %v7365
    %v7510 = vpack.c.b16 %v7374, %v7366
    %v7511 = vpack.c.b16 %v7375, %v7367
    %v7512 = vpack.c.b16 %v7376, %v7368
    %v7513 = vpack.c.b16 %v7377, %v7369
    %v7514 = vpack.c.b16 %v7378, %v7370
    %v7515 = vpack.c.b16 %v7387, %v7379
    %v7516 = vpack.c.b16 %v7388, %v7380
    %v7517 = vpack.c.b16 %v7389, %v7381
    %v7518 = vpack.c.b16 %v7390, %v7382
    %v7519 = vpack.c.b16 %v7391, %v7383
    %v7520 = vpack.c.b16 %v7392, %v7384
    %v7521 = vpack.c.b16 %v7393, %v7385
    %v7522 = vpack.c.b16 %v7394, %v7386
    %7651 = vmatpush.bf16.msra.mxu0 %v7451
    %7652 = vmatpush.bf16.msra.mxu0 %v7443
    %7653 = vmatpush.bf16.msra.mxu0 %v7435
    %7654 = vmatpush.bf16.msra.mxu0 %v7427
    %7655 = vmatpush.bf16.msra.mxu0 %v7419
    %7656 = vmatpush.bf16.msra.mxu0 %v7411
    %7657 = vmatpush.bf16.msra.mxu0 %v7403
    %7658 = vmatpush.bf16.msra.mxu0 %v7395
    %7659 = vmatmul.bf16.gmra.mxu0 0
    %v7660 = vpop.f32.mrf.mxu0
    %v7661 = vadd.f32 0.0, %v7660
    %v7662 = vpop.f32.mrf.mxu0
    %7663 = vdwg.mxu0
    %7664 = vmatpush.bf16.msra.mxu0 %v7515
    %7665 = vmatpush.bf16.msra.mxu0 %v7507
    %7666 = vmatpush.bf16.msra.mxu0 %v7499
    %7667 = vmatpush.bf16.msra.mxu0 %v7491
    %7668 = vmatpush.bf16.msra.mxu0 %v7483
    %7669 = vmatpush.bf16.msra.mxu0 %v7475
    %7670 = vmatpush.bf16.msra.mxu0 %v7467
    %7671 = vmatpush.bf16.msra.mxu0 %v7459
    %7672 = vmatmul.bf16.gmra.mxu0 0
    %v7673 = vpop.f32.mrf.mxu0
    %v7674 = vadd.f32 %v7661, %v7673
    %v7675 = vpop.f32.mrf.mxu0
    %7676 = vdwg.mxu0
    %7677 = vmatpush.bf16.msra.mxu0 %v7452
    %7678 = vmatpush.bf16.msra.mxu0 %v7444
    %7679 = vmatpush.bf16.msra.mxu0 %v7436
    %7680 = vmatpush.bf16.msra.mxu0 %v7428
    %7681 = vmatpush.bf16.msra.mxu0 %v7420
    %7682 = vmatpush.bf16.msra.mxu0 %v7412
    %7683 = vmatpush.bf16.msra.mxu0 %v7404
    %7684 = vmatpush.bf16.msra.mxu0 %v7396
    %7685 = vmatmul.bf16.gmra.mxu0 0
    %v7686 = vpop.f32.mrf.mxu0
    %v7687 = vadd.f32 0.0, %v7686
    %v7688 = vpop.f32.mrf.mxu0
    %7689 = vdwg.mxu0
    %7690 = vmatpush.bf16.msra.mxu0 %v7516
    %7691 = vmatpush.bf16.msra.mxu0 %v7508
    %7692 = vmatpush.bf16.msra.mxu0 %v7500
    %7693 = vmatpush.bf16.msra.mxu0 %v7492
    %7694 = vmatpush.bf16.msra.mxu0 %v7484
    %7695 = vmatpush.bf16.msra.mxu0 %v7476
    %7696 = vmatpush.bf16.msra.mxu0 %v7468
    %7697 = vmatpush.bf16.msra.mxu0 %v7460
    %7698 = vmatmul.bf16.gmra.mxu0 0
    %v7699 = vpop.f32.mrf.mxu0
    %v7700 = vadd.f32 %v7687, %v7699
    %v7701 = vpop.f32.mrf.mxu0
    %7702 = vdwg.mxu0
    %7703 = vmatpush.bf16.msra.mxu0 %v7453
    %7704 = vmatpush.bf16.msra.mxu0 %v7445
    %7705 = vmatpush.bf16.msra.mxu0 %v7437
    %7706 = vmatpush.bf16.msra.mxu0 %v7429
    %7707 = vmatpush.bf16.msra.mxu0 %v7421
    %7708 = vmatpush.bf16.msra.mxu0 %v7413
    %7709 = vmatpush.bf16.msra.mxu0 %v7405
    %7710 = vmatpush.bf16.msra.mxu0 %v7397
    %7711 = vmatmul.bf16.gmra.mxu0 0
    %v7712 = vpop.f32.mrf.mxu0
    %v7713 = vadd.f32 0.0, %v7712
    %v7714 = vpop.f32.mrf.mxu0
    %7715 = vdwg.mxu0
    %7716 = vmatpush.bf16.msra.mxu0 %v7517
    %7717 = vmatpush.bf16.msra.mxu0 %v7509
    %7718 = vmatpush.bf16.msra.mxu0 %v7501
    %7719 = vmatpush.bf16.msra.mxu0 %v7493
    %7720 = vmatpush.bf16.msra.mxu0 %v7485
    %7721 = vmatpush.bf16.msra.mxu0 %v7477
    %7722 = vmatpush.bf16.msra.mxu0 %v7469
    %7723 = vmatpush.bf16.msra.mxu0 %v7461
    %7724 = vmatmul.bf16.gmra.mxu0 0
    %v7725 = vpop.f32.mrf.mxu0
    %v7726 = vadd.f32 %v7713, %v7725
    %v7727 = vpop.f32.mrf.mxu0
    %7728 = vdwg.mxu0
    %7729 = vmatpush.bf16.msra.mxu0 %v7454
    %7730 = vmatpush.bf16.msra.mxu0 %v7446
    %7731 = vmatpush.bf16.msra.mxu0 %v7438
    %7732 = vmatpush.bf16.msra.mxu0 %v7430
    %7733 = vmatpush.bf16.msra.mxu0 %v7422
    %7734 = vmatpush.bf16.msra.mxu0 %v7414
    %7735 = vmatpush.bf16.msra.mxu0 %v7406
    %7736 = vmatpush.bf16.msra.mxu0 %v7398
    %7737 = vmatmul.bf16.gmra.mxu0 0
    %v7738 = vpop.f32.mrf.mxu0
    %v7739 = vadd.f32 0.0, %v7738
    %v7740 = vpop.f32.mrf.mxu0
    %7741 = vdwg.mxu0
    %7742 = vmatpush.bf16.msra.mxu0 %v7518
    %7743 = vmatpush.bf16.msra.mxu0 %v7510
    %7744 = vmatpush.bf16.msra.mxu0 %v7502
    %7745 = vmatpush.bf16.msra.mxu0 %v7494
    %7746 = vmatpush.bf16.msra.mxu0 %v7486
    %7747 = vmatpush.bf16.msra.mxu0 %v7478
    %7748 = vmatpush.bf16.msra.mxu0 %v7470
    %7749 = vmatpush.bf16.msra.mxu0 %v7462
    %7750 = vmatmul.bf16.gmra.mxu0 0
    %v7751 = vpop.f32.mrf.mxu0
    %v7752 = vadd.f32 %v7739, %v7751
    %v7753 = vpop.f32.mrf.mxu0
    %7754 = vdwg.mxu0
    %7755 = vmatpush.bf16.msra.mxu0 %v7455
    %7756 = vmatpush.bf16.msra.mxu0 %v7447
    %7757 = vmatpush.bf16.msra.mxu0 %v7439
    %7758 = vmatpush.bf16.msra.mxu0 %v7431
    %7759 = vmatpush.bf16.msra.mxu0 %v7423
    %7760 = vmatpush.bf16.msra.mxu0 %v7415
    %7761 = vmatpush.bf16.msra.mxu0 %v7407
    %7762 = vmatpush.bf16.msra.mxu0 %v7399
    %7763 = vmatmul.bf16.gmra.mxu0 0
    %v7764 = vpop.f32.mrf.mxu0
    %v7765 = vadd.f32 0.0, %v7764
    %v7766 = vpop.f32.mrf.mxu0
    %7767 = vdwg.mxu0
    %7768 = vmatpush.bf16.msra.mxu0 %v7519
    %7769 = vmatpush.bf16.msra.mxu0 %v7511
    %7770 = vmatpush.bf16.msra.mxu0 %v7503
    %7771 = vmatpush.bf16.msra.mxu0 %v7495
    %7772 = vmatpush.bf16.msra.mxu0 %v7487
    %7773 = vmatpush.bf16.msra.mxu0 %v7479
    %7774 = vmatpush.bf16.msra.mxu0 %v7471
    %7775 = vmatpush.bf16.msra.mxu0 %v7463
    %7776 = vmatmul.bf16.gmra.mxu0 0
    %v7777 = vpop.f32.mrf.mxu0
    %v7778 = vadd.f32 %v7765, %v7777
    %v7779 = vpop.f32.mrf.mxu0
    %7780 = vdwg.mxu0
    %7781 = vmatpush.bf16.msra.mxu0 %v7456
    %7782 = vmatpush.bf16.msra.mxu0 %v7448
    %7783 = vmatpush.bf16.msra.mxu0 %v7440
    %7784 = vmatpush.bf16.msra.mxu0 %v7432
    %7785 = vmatpush.bf16.msra.mxu0 %v7424
    %7786 = vmatpush.bf16.msra.mxu0 %v7416
    %7787 = vmatpush.bf16.msra.mxu0 %v7408
    %7788 = vmatpush.bf16.msra.mxu0 %v7400
    %7789 = vmatmul.bf16.gmra.mxu0 0
    %v7790 = vpop.f32.mrf.mxu0
    %v7791 = vadd.f32 0.0, %v7790
    %v7792 = vpop.f32.mrf.mxu0
    %7793 = vdwg.mxu0
    %7794 = vmatpush.bf16.msra.mxu0 %v7520
    %7795 = vmatpush.bf16.msra.mxu0 %v7512
    %7796 = vmatpush.bf16.msra.mxu0 %v7504
    %7797 = vmatpush.bf16.msra.mxu0 %v7496
    %7798 = vmatpush.bf16.msra.mxu0 %v7488
    %7799 = vmatpush.bf16.msra.mxu0 %v7480
    %7800 = vmatpush.bf16.msra.mxu0 %v7472
    %7801 = vmatpush.bf16.msra.mxu0 %v7464
    %7802 = vmatmul.bf16.gmra.mxu0 0
    %v7803 = vpop.f32.mrf.mxu0
    %v7804 = vadd.f32 %v7791, %v7803
    %v7805 = vpop.f32.mrf.mxu0
    %7806 = vdwg.mxu0
    %7807 = vmatpush.bf16.msra.mxu0 %v7457
    %7808 = vmatpush.bf16.msra.mxu0 %v7449
    %7809 = vmatpush.bf16.msra.mxu0 %v7441
    %7810 = vmatpush.bf16.msra.mxu0 %v7433
    %7811 = vmatpush.bf16.msra.mxu0 %v7425
    %7812 = vmatpush.bf16.msra.mxu0 %v7417
    %7813 = vmatpush.bf16.msra.mxu0 %v7409
    %7814 = vmatpush.bf16.msra.mxu0 %v7401
    %7815 = vmatmul.bf16.gmra.mxu0 0
    %v7816 = vpop.f32.mrf.mxu0
    %v7817 = vadd.f32 0.0, %v7816
    %v7818 = vpop.f32.mrf.mxu0
    %7819 = vdwg.mxu0
    %7820 = vmatpush.bf16.msra.mxu0 %v7521
    %7821 = vmatpush.bf16.msra.mxu0 %v7513
    %7822 = vmatpush.bf16.msra.mxu0 %v7505
    %7823 = vmatpush.bf16.msra.mxu0 %v7497
    %7824 = vmatpush.bf16.msra.mxu0 %v7489
    %7825 = vmatpush.bf16.msra.mxu0 %v7481
    %7826 = vmatpush.bf16.msra.mxu0 %v7473
    %7827 = vmatpush.bf16.msra.mxu0 %v7465
    %7828 = vmatmul.bf16.gmra.mxu0 0
    %v7829 = vpop.f32.mrf.mxu0
    %v7830 = vadd.f32 %v7817, %v7829
    %v7831 = vpop.f32.mrf.mxu0
    %7832 = vdwg.mxu0
    %7833 = vmatpush.bf16.msra.mxu0 %v7458
    %7834 = vmatpush.bf16.msra.mxu0 %v7450
    %7835 = vmatpush.bf16.msra.mxu0 %v7442
    %7836 = vmatpush.bf16.msra.mxu0 %v7434
    %7837 = vmatpush.bf16.msra.mxu0 %v7426
    %7838 = vmatpush.bf16.msra.mxu0 %v7418
    %7839 = vmatpush.bf16.msra.mxu0 %v7410
    %7840 = vmatpush.bf16.msra.mxu0 %v7402
    %7841 = vmatmul.bf16.gmra.mxu0 0
    %v7842 = vpop.f32.mrf.mxu0
    %v7843 = vadd.f32 0.0, %v7842
    %v7844 = vpop.f32.mrf.mxu0
    %7845 = vdwg.mxu0
    %7846 = vmatpush.bf16.msra.mxu0 %v7522
    %7847 = vmatpush.bf16.msra.mxu0 %v7514
    %7848 = vmatpush.bf16.msra.mxu0 %v7506
    %7849 = vmatpush.bf16.msra.mxu0 %v7498
    %7850 = vmatpush.bf16.msra.mxu0 %v7490
    %7851 = vmatpush.bf16.msra.mxu0 %v7482
    %7852 = vmatpush.bf16.msra.mxu0 %v7474
    %7853 = vmatpush.bf16.msra.mxu0 %v7466
    %7854 = vmatmul.bf16.gmra.mxu0 0
    %v7855 = vpop.f32.mrf.mxu0
    %v7856 = vadd.f32 %v7843, %v7855
    %v7857 = vpop.f32.mrf.mxu0
    %7858 = vdwg.mxu0
    %v7859 = vadd.f32 %v6698, %v7674
    %v7860 = vadd.f32 %v6724, %v7700
    %v7861 = vadd.f32 %v6750, %v7726
    %v7862 = vadd.f32 %v6776, %v7752
    %v7863 = vadd.f32 %v6802, %v7778
    %v7864 = vadd.f32 %v6828, %v7804
    %v7865 = vadd.f32 %v6854, %v7830
    %v7866 = vadd.f32 %v6880, %v7856
    %v7867 = vxor.u32 %v7859, 2147483648
    %v7868 = vxor.u32 %v7860, 2147483648
    %v7869 = vmul.f32 %v7867, 1.442695
    %v7870 = vpow.pop %v7869
    %v7871 = vmul.f32 %v7868, 1.442695
    %v7872 = vpow.pop %v7871
    %v7873 = vadd.f32 %v7870, 1.0
    %v7874 = vadd.f32 %v7872, 1.0
    %v7875 = vrcp.pop %v7873
    %v7876 = vmul.f32 %v7873, %v7875
    %v7877 = vsub.f32 1.0, %v7876
    %v7878 = vmul.f32 %v7875, %v7877
    %v7879 = vadd.f32 %v7875, %v7878
    %vm7880 = vweird.f32 %v7873
    %vm7881 = vweird.f32 %v7875
    %vm7882 = vmor %vm7880, %vm7881
    %v7883 = vsel %vm7882, %v7875, %v7879
    %v7884 = vand.u32 2147483647, %v7873
    %vm7885 = vcmp.eq.f32.partialorder %v7884, 8.507059e+37
    %v7886 = vand.u32 %v7873, 2147483648
    %v7887 = vor.u32 1.1754944e-38, %v7886
    %v7888 = vsel %vm7885, %v7887, %v7883
    %v7889 = vmul.f32 1.0, %v7888
    %v7890 = vrcp.pop %v7874
    %v7891 = vmul.f32 %v7874, %v7890
    %v7892 = vsub.f32 1.0, %v7891
    %v7893 = vmul.f32 %v7890, %v7892
    %v7894 = vadd.f32 %v7890, %v7893
    %vm7895 = vweird.f32 %v7874
    %vm7896 = vweird.f32 %v7890
    %vm7897 = vmor %vm7895, %vm7896
    %v7898 = vsel %vm7897, %v7890, %v7894
    %v7899 = vand.u32 2147483647, %v7874
    %vm7900 = vcmp.eq.f32.partialorder %v7899, 8.507059e+37
    %v7901 = vand.u32 %v7874, 2147483648
    %v7902 = vor.u32 1.1754944e-38, %v7901
    %v7903 = vsel %vm7900, %v7902, %v7898
    %v7904 = vmul.f32 1.0, %v7903
    %v7905 = vxor.u32 %v7861, 2147483648
    %v7906 = vxor.u32 %v7862, 2147483648
    %v7907 = vmul.f32 %v7905, 1.442695
    %v7908 = vpow.pop %v7907
    %v7909 = vmul.f32 %v7906, 1.442695
    %v7910 = vpow.pop %v7909
    %v7911 = vadd.f32 %v7908, 1.0
    %v7912 = vadd.f32 %v7910, 1.0
    %v7913 = vrcp.pop %v7911
    %v7914 = vmul.f32 %v7911, %v7913
    %v7915 = vsub.f32 1.0, %v7914
    %v7916 = vmul.f32 %v7913, %v7915
    %v7917 = vadd.f32 %v7913, %v7916
    %vm7918 = vweird.f32 %v7911
    %vm7919 = vweird.f32 %v7913
    %vm7920 = vmor %vm7918, %vm7919
    %v7921 = vsel %vm7920, %v7913, %v7917
    %v7922 = vand.u32 2147483647, %v7911
    %vm7923 = vcmp.eq.f32.partialorder %v7922, 8.507059e+37
    %v7924 = vand.u32 %v7911, 2147483648
    %v7925 = vor.u32 1.1754944e-38, %v7924
    %v7926 = vsel %vm7923, %v7925, %v7921
    %v7927 = vmul.f32 1.0, %v7926
    %v7928 = vrcp.pop %v7912
    %v7929 = vmul.f32 %v7912, %v7928
    %v7930 = vsub.f32 1.0, %v7929
    %v7931 = vmul.f32 %v7928, %v7930
    %v7932 = vadd.f32 %v7928, %v7931
    %vm7933 = vweird.f32 %v7912
    %vm7934 = vweird.f32 %v7928
    %vm7935 = vmor %vm7933, %vm7934
    %v7936 = vsel %vm7935, %v7928, %v7932
    %v7937 = vand.u32 2147483647, %v7912
    %vm7938 = vcmp.eq.f32.partialorder %v7937, 8.507059e+37
    %v7939 = vand.u32 %v7912, 2147483648
    %v7940 = vor.u32 1.1754944e-38, %v7939
    %v7941 = vsel %vm7938, %v7940, %v7936
    %v7942 = vmul.f32 1.0, %v7941
    %v7943 = vtanh.pop %v7863
    %v7944 = vtanh.pop %v7864
    %v7945 = vxor.u32 %v7865, 2147483648
    %v7946 = vxor.u32 %v7866, 2147483648
    %v7947 = vmul.f32 %v7945, 1.442695
    %v7948 = vpow.pop %v7947
    %v7949 = vmul.f32 %v7946, 1.442695
    %v7950 = vpow.pop %v7949
    %v7951 = vadd.f32 %v7948, 1.0
    %v7952 = vadd.f32 %v7950, 1.0
    %v7953 = vrcp.pop %v7951
    %v7954 = vmul.f32 %v7951, %v7953
    %v7955 = vsub.f32 1.0, %v7954
    %v7956 = vmul.f32 %v7953, %v7955
    %v7957 = vadd.f32 %v7953, %v7956
    %vm7958 = vweird.f32 %v7951
    %vm7959 = vweird.f32 %v7953
    %vm7960 = vmor %vm7958, %vm7959
    %v7961 = vsel %vm7960, %v7953, %v7957
    %v7962 = vand.u32 2147483647, %v7951
    %vm7963 = vcmp.eq.f32.partialorder %v7962, 8.507059e+37
    %v7964 = vand.u32 %v7951, 2147483648
    %v7965 = vor.u32 1.1754944e-38, %v7964
    %v7966 = vsel %vm7963, %v7965, %v7961
    %v7967 = vmul.f32 1.0, %v7966
    %v7968 = vrcp.pop %v7952
    %v7969 = vmul.f32 %v7952, %v7968
    %v7970 = vsub.f32 1.0, %v7969
    %v7971 = vmul.f32 %v7968, %v7970
    %v7972 = vadd.f32 %v7968, %v7971
    %vm7973 = vweird.f32 %v7952
    %vm7974 = vweird.f32 %v7968
    %vm7975 = vmor %vm7973, %vm7974
    %v7976 = vsel %vm7975, %v7968, %v7972
    %v7977 = vand.u32 2147483647, %v7952
    %vm7978 = vcmp.eq.f32.partialorder %v7977, 8.507059e+37
    %v7979 = vand.u32 %v7952, 2147483648
    %v7980 = vor.u32 1.1754944e-38, %v7979
    %v7981 = vsel %vm7978, %v7980, %v7976
    %v7982 = vmul.f32 1.0, %v7981
    %v7983 = vmul.f32 %v7927, 0.0
    %v7984 = vmul.f32 %v7942, 0.0
    %v7985 = vmul.f32 %v7889, %v7943
    %v7986 = vmul.f32 %v7904, %v7944
    %v7987 = vadd.f32 %v7983, %v7985
    %v7988 = vadd.f32 %v7984, %v7986
    %v7989 = vtanh.pop %v7987
    %v7990 = vtanh.pop %v7988
    %v7991 = vmul.f32 %v7967, %v7989
    %v7992 = vmul.f32 %v7982, %v7990
    %v7993 = vpack.c.bf16 %v7991, %v7991
    %v7994 = vpack.c.bf16 %v7992, %v7992
    %7995 = vmatpush.bf16.msra.mxu0 %v7451
    %7996 = vmatpush.bf16.msra.mxu0 %v7443
    %7997 = vmatpush.bf16.msra.mxu0 %v7435
    %7998 = vmatpush.bf16.msra.mxu0 %v7427
    %7999 = vmatpush.bf16.msra.mxu0 %v7419
    %8000 = vmatpush.bf16.msra.mxu0 %v7411
    %8001 = vmatpush.bf16.msra.mxu0 %v7403
    %8002 = vmatpush.bf16.msra.mxu0 %v7395
    %8003 = vmatmul.bf16.gmra.mxu0 %v7993
    %v8004 = vpop.f32.mrf.mxu0
    %v8005 = vadd.f32 0.0, %v8004
    %v8006 = vpop.f32.mrf.mxu0
    %8007 = vdwg.mxu0
    %8008 = vmatpush.bf16.msra.mxu0 %v7515
    %8009 = vmatpush.bf16.msra.mxu0 %v7507
    %8010 = vmatpush.bf16.msra.mxu0 %v7499
    %8011 = vmatpush.bf16.msra.mxu0 %v7491
    %8012 = vmatpush.bf16.msra.mxu0 %v7483
    %8013 = vmatpush.bf16.msra.mxu0 %v7475
    %8014 = vmatpush.bf16.msra.mxu0 %v7467
    %8015 = vmatpush.bf16.msra.mxu0 %v7459
    %8016 = vmatmul.bf16.gmra.mxu0 %v7994
    %v8017 = vpop.f32.mrf.mxu0
    %v8018 = vadd.f32 %v8005, %v8017
    %v8019 = vpop.f32.mrf.mxu0
    %8020 = vdwg.mxu0
    %8021 = vmatpush.bf16.msra.mxu0 %v7452
    %8022 = vmatpush.bf16.msra.mxu0 %v7444
    %8023 = vmatpush.bf16.msra.mxu0 %v7436
    %8024 = vmatpush.bf16.msra.mxu0 %v7428
    %8025 = vmatpush.bf16.msra.mxu0 %v7420
    %8026 = vmatpush.bf16.msra.mxu0 %v7412
    %8027 = vmatpush.bf16.msra.mxu0 %v7404
    %8028 = vmatpush.bf16.msra.mxu0 %v7396
    %8029 = vmatmul.bf16.gmra.mxu0 %v7993
    %v8030 = vpop.f32.mrf.mxu0
    %v8031 = vadd.f32 0.0, %v8030
    %v8032 = vpop.f32.mrf.mxu0
    %8033 = vdwg.mxu0
    %8034 = vmatpush.bf16.msra.mxu0 %v7516
    %8035 = vmatpush.bf16.msra.mxu0 %v7508
    %8036 = vmatpush.bf16.msra.mxu0 %v7500
    %8037 = vmatpush.bf16.msra.mxu0 %v7492
    %8038 = vmatpush.bf16.msra.mxu0 %v7484
    %8039 = vmatpush.bf16.msra.mxu0 %v7476
    %8040 = vmatpush.bf16.msra.mxu0 %v7468
    %8041 = vmatpush.bf16.msra.mxu0 %v7460
    %8042 = vmatmul.bf16.gmra.mxu0 %v7994
    %v8043 = vpop.f32.mrf.mxu0
    %v8044 = vadd.f32 %v8031, %v8043
    %v8045 = vpop.f32.mrf.mxu0
    %8046 = vdwg.mxu0
    %8047 = vmatpush.bf16.msra.mxu0 %v7453
    %8048 = vmatpush.bf16.msra.mxu0 %v7445
    %8049 = vmatpush.bf16.msra.mxu0 %v7437
    %8050 = vmatpush.bf16.msra.mxu0 %v7429
    %8051 = vmatpush.bf16.msra.mxu0 %v7421
    %8052 = vmatpush.bf16.msra.mxu0 %v7413
    %8053 = vmatpush.bf16.msra.mxu0 %v7405
    %8054 = vmatpush.bf16.msra.mxu0 %v7397
    %8055 = vmatmul.bf16.gmra.mxu0 %v7993
    %v8056 = vpop.f32.mrf.mxu0
    %v8057 = vadd.f32 0.0, %v8056
    %v8058 = vpop.f32.mrf.mxu0
    %8059 = vdwg.mxu0
    %8060 = vmatpush.bf16.msra.mxu0 %v7517
    %8061 = vmatpush.bf16.msra.mxu0 %v7509
    %8062 = vmatpush.bf16.msra.mxu0 %v7501
    %8063 = vmatpush.bf16.msra.mxu0 %v7493
    %8064 = vmatpush.bf16.msra.mxu0 %v7485
    %8065 = vmatpush.bf16.msra.mxu0 %v7477
    %8066 = vmatpush.bf16.msra.mxu0 %v7469
    %8067 = vmatpush.bf16.msra.mxu0 %v7461
    %8068 = vmatmul.bf16.gmra.mxu0 %v7994
    %v8069 = vpop.f32.mrf.mxu0
    %v8070 = vadd.f32 %v8057, %v8069
    %v8071 = vpop.f32.mrf.mxu0
    %8072 = vdwg.mxu0
    %8073 = vmatpush.bf16.msra.mxu0 %v7454
    %8074 = vmatpush.bf16.msra.mxu0 %v7446
    %8075 = vmatpush.bf16.msra.mxu0 %v7438
    %8076 = vmatpush.bf16.msra.mxu0 %v7430
    %8077 = vmatpush.bf16.msra.mxu0 %v7422
    %8078 = vmatpush.bf16.msra.mxu0 %v7414
    %8079 = vmatpush.bf16.msra.mxu0 %v7406
    %8080 = vmatpush.bf16.msra.mxu0 %v7398
    %8081 = vmatmul.bf16.gmra.mxu0 %v7993
    %v8082 = vpop.f32.mrf.mxu0
    %v8083 = vadd.f32 0.0, %v8082
    %v8084 = vpop.f32.mrf.mxu0
    %8085 = vdwg.mxu0
    %8086 = vmatpush.bf16.msra.mxu0 %v7518
    %8087 = vmatpush.bf16.msra.mxu0 %v7510
    %8088 = vmatpush.bf16.msra.mxu0 %v7502
    %8089 = vmatpush.bf16.msra.mxu0 %v7494
    %8090 = vmatpush.bf16.msra.mxu0 %v7486
    %8091 = vmatpush.bf16.msra.mxu0 %v7478
    %8092 = vmatpush.bf16.msra.mxu0 %v7470
    %8093 = vmatpush.bf16.msra.mxu0 %v7462
    %8094 = vmatmul.bf16.gmra.mxu0 %v7994
    %v8095 = vpop.f32.mrf.mxu0
    %v8096 = vadd.f32 %v8083, %v8095
    %v8097 = vpop.f32.mrf.mxu0
    %8098 = vdwg.mxu0
    %8099 = vmatpush.bf16.msra.mxu0 %v7455
    %8100 = vmatpush.bf16.msra.mxu0 %v7447
    %8101 = vmatpush.bf16.msra.mxu0 %v7439
    %8102 = vmatpush.bf16.msra.mxu0 %v7431
    %8103 = vmatpush.bf16.msra.mxu0 %v7423
    %8104 = vmatpush.bf16.msra.mxu0 %v7415
    %8105 = vmatpush.bf16.msra.mxu0 %v7407
    %8106 = vmatpush.bf16.msra.mxu0 %v7399
    %8107 = vmatmul.bf16.gmra.mxu0 %v7993
    %v8108 = vpop.f32.mrf.mxu0
    %v8109 = vadd.f32 0.0, %v8108
    %v8110 = vpop.f32.mrf.mxu0
    %8111 = vdwg.mxu0
    %8112 = vmatpush.bf16.msra.mxu0 %v7519
    %8113 = vmatpush.bf16.msra.mxu0 %v7511
    %8114 = vmatpush.bf16.msra.mxu0 %v7503
    %8115 = vmatpush.bf16.msra.mxu0 %v7495
    %8116 = vmatpush.bf16.msra.mxu0 %v7487
    %8117 = vmatpush.bf16.msra.mxu0 %v7479
    %8118 = vmatpush.bf16.msra.mxu0 %v7471
    %8119 = vmatpush.bf16.msra.mxu0 %v7463
    %8120 = vmatmul.bf16.gmra.mxu0 %v7994
    %v8121 = vpop.f32.mrf.mxu0
    %v8122 = vadd.f32 %v8109, %v8121
    %v8123 = vpop.f32.mrf.mxu0
    %8124 = vdwg.mxu0
    %8125 = vmatpush.bf16.msra.mxu0 %v7456
    %8126 = vmatpush.bf16.msra.mxu0 %v7448
    %8127 = vmatpush.bf16.msra.mxu0 %v7440
    %8128 = vmatpush.bf16.msra.mxu0 %v7432
    %8129 = vmatpush.bf16.msra.mxu0 %v7424
    %8130 = vmatpush.bf16.msra.mxu0 %v7416
    %8131 = vmatpush.bf16.msra.mxu0 %v7408
    %8132 = vmatpush.bf16.msra.mxu0 %v7400
    %8133 = vmatmul.bf16.gmra.mxu0 %v7993
    %v8134 = vpop.f32.mrf.mxu0
    %v8135 = vadd.f32 0.0, %v8134
    %v8136 = vpop.f32.mrf.mxu0
    %8137 = vdwg.mxu0
    %8138 = vmatpush.bf16.msra.mxu0 %v7520
    %8139 = vmatpush.bf16.msra.mxu0 %v7512
    %8140 = vmatpush.bf16.msra.mxu0 %v7504
    %8141 = vmatpush.bf16.msra.mxu0 %v7496
    %8142 = vmatpush.bf16.msra.mxu0 %v7488
    %8143 = vmatpush.bf16.msra.mxu0 %v7480
    %8144 = vmatpush.bf16.msra.mxu0 %v7472
    %8145 = vmatpush.bf16.msra.mxu0 %v7464
    %8146 = vmatmul.bf16.gmra.mxu0 %v7994
    %v8147 = vpop.f32.mrf.mxu0
    %v8148 = vadd.f32 %v8135, %v8147
    %v8149 = vpop.f32.mrf.mxu0
    %8150 = vdwg.mxu0
    %8151 = vmatpush.bf16.msra.mxu0 %v7457
    %8152 = vmatpush.bf16.msra.mxu0 %v7449
    %8153 = vmatpush.bf16.msra.mxu0 %v7441
    %8154 = vmatpush.bf16.msra.mxu0 %v7433
    %8155 = vmatpush.bf16.msra.mxu0 %v7425
    %8156 = vmatpush.bf16.msra.mxu0 %v7417
    %8157 = vmatpush.bf16.msra.mxu0 %v7409
    %8158 = vmatpush.bf16.msra.mxu0 %v7401
    %8159 = vmatmul.bf16.gmra.mxu0 %v7993
    %v8160 = vpop.f32.mrf.mxu0
    %v8161 = vadd.f32 0.0, %v8160
    %v8162 = vpop.f32.mrf.mxu0
    %8163 = vdwg.mxu0
    %8164 = vmatpush.bf16.msra.mxu0 %v7521
    %8165 = vmatpush.bf16.msra.mxu0 %v7513
    %8166 = vmatpush.bf16.msra.mxu0 %v7505
    %8167 = vmatpush.bf16.msra.mxu0 %v7497
    %8168 = vmatpush.bf16.msra.mxu0 %v7489
    %8169 = vmatpush.bf16.msra.mxu0 %v7481
    %8170 = vmatpush.bf16.msra.mxu0 %v7473
    %8171 = vmatpush.bf16.msra.mxu0 %v7465
    %8172 = vmatmul.bf16.gmra.mxu0 %v7994
    %v8173 = vpop.f32.mrf.mxu0
    %v8174 = vadd.f32 %v8161, %v8173
    %v8175 = vpop.f32.mrf.mxu0
    %8176 = vdwg.mxu0
    %8177 = vmatpush.bf16.msra.mxu0 %v7458
    %8178 = vmatpush.bf16.msra.mxu0 %v7450
    %8179 = vmatpush.bf16.msra.mxu0 %v7442
    %8180 = vmatpush.bf16.msra.mxu0 %v7434
    %8181 = vmatpush.bf16.msra.mxu0 %v7426
    %8182 = vmatpush.bf16.msra.mxu0 %v7418
    %8183 = vmatpush.bf16.msra.mxu0 %v7410
    %8184 = vmatpush.bf16.msra.mxu0 %v7402
    %8185 = vmatmul.bf16.gmra.mxu0 %v7993
    %v8186 = vpop.f32.mrf.mxu0
    %v8187 = vadd.f32 0.0, %v8186
    %v8188 = vpop.f32.mrf.mxu0
    %8189 = vdwg.mxu0
    %8190 = vmatpush.bf16.msra.mxu0 %v7522
    %8191 = vmatpush.bf16.msra.mxu0 %v7514
    %8192 = vmatpush.bf16.msra.mxu0 %v7506
    %8193 = vmatpush.bf16.msra.mxu0 %v7498
    %8194 = vmatpush.bf16.msra.mxu0 %v7490
    %8195 = vmatpush.bf16.msra.mxu0 %v7482
    %8196 = vmatpush.bf16.msra.mxu0 %v7474
    %8197 = vmatpush.bf16.msra.mxu0 %v7466
    %8198 = vmatmul.bf16.gmra.mxu0 %v7994
    %v8199 = vpop.f32.mrf.mxu0
    %v8200 = vadd.f32 %v8187, %v8199
    %v8201 = vpop.f32.mrf.mxu0
    %8202 = vdwg.mxu0
    %v8211 = vrot.slane %v8018, 6
    %v8212 = vrot.slane %v8044, 6
    %v8213 = vrot.slane %v8070, 6
    %v8214 = vrot.slane %v8096, 6
    %v8215 = vrot.slane %v8122, 6
    %v8216 = vrot.slane %v8148, 6
    %v8217 = vrot.slane %v8174, 6
    %v8218 = vrot.slane %v8200, 6
    %v8227 = vadd.f32 %v6698, %v8211
    %v8228 = vadd.f32 %v6724, %v8212
    %v8229 = vadd.f32 %v6750, %v8213
    %v8230 = vadd.f32 %v6776, %v8214
    %v8231 = vadd.f32 %v6802, %v8215
    %v8232 = vadd.f32 %v6828, %v8216
    %v8233 = vadd.f32 %v6854, %v8217
    %v8234 = vadd.f32 %v6880, %v8218
    %v8235 = vxor.u32 %v8227, 2147483648
    %v8236 = vxor.u32 %v8228, 2147483648
    %v8237 = vmul.f32 %v8235, 1.442695
    %v8238 = vpow.pop %v8237
    %v8239 = vmul.f32 %v8236, 1.442695
    %v8240 = vpow.pop %v8239
    %v8241 = vadd.f32 %v8238, 1.0
    %v8242 = vadd.f32 %v8240, 1.0
    %v8243 = vrcp.pop %v8241
    %v8244 = vmul.f32 %v8241, %v8243
    %v8245 = vsub.f32 1.0, %v8244
    %v8246 = vmul.f32 %v8243, %v8245
    %v8247 = vadd.f32 %v8243, %v8246
    %vm8248 = vweird.f32 %v8241
    %vm8249 = vweird.f32 %v8243
    %vm8250 = vmor %vm8248, %vm8249
    %v8251 = vsel %vm8250, %v8243, %v8247
    %v8252 = vand.u32 2147483647, %v8241
    %vm8253 = vcmp.eq.f32.partialorder %v8252, 8.507059e+37
    %v8254 = vand.u32 %v8241, 2147483648
    %v8255 = vor.u32 1.1754944e-38, %v8254
    %v8256 = vsel %vm8253, %v8255, %v8251
    %v8257 = vmul.f32 1.0, %v8256
    %v8258 = vrcp.pop %v8242
    %v8259 = vmul.f32 %v8242, %v8258
    %v8260 = vsub.f32 1.0, %v8259
    %v8261 = vmul.f32 %v8258, %v8260
    %v8262 = vadd.f32 %v8258, %v8261
    %vm8263 = vweird.f32 %v8242
    %vm8264 = vweird.f32 %v8258
    %vm8265 = vmor %vm8263, %vm8264
    %v8266 = vsel %vm8265, %v8258, %v8262
    %v8267 = vand.u32 2147483647, %v8242
    %vm8268 = vcmp.eq.f32.partialorder %v8267, 8.507059e+37
    %v8269 = vand.u32 %v8242, 2147483648
    %v8270 = vor.u32 1.1754944e-38, %v8269
    %v8271 = vsel %vm8268, %v8270, %v8266
    %v8272 = vmul.f32 1.0, %v8271
    %v8273 = vxor.u32 %v8229, 2147483648
    %v8274 = vxor.u32 %v8230, 2147483648
    %v8275 = vmul.f32 %v8273, 1.442695
    %v8276 = vpow.pop %v8275
    %v8277 = vmul.f32 %v8274, 1.442695
    %v8278 = vpow.pop %v8277
    %v8279 = vadd.f32 %v8276, 1.0
    %v8280 = vadd.f32 %v8278, 1.0
    %v8281 = vrcp.pop %v8279
    %v8282 = vmul.f32 %v8279, %v8281
    %v8283 = vsub.f32 1.0, %v8282
    %v8284 = vmul.f32 %v8281, %v8283
    %v8285 = vadd.f32 %v8281, %v8284
    %vm8286 = vweird.f32 %v8279
    %vm8287 = vweird.f32 %v8281
    %vm8288 = vmor %vm8286, %vm8287
    %v8289 = vsel %vm8288, %v8281, %v8285
    %v8290 = vand.u32 2147483647, %v8279
    %vm8291 = vcmp.eq.f32.partialorder %v8290, 8.507059e+37
    %v8292 = vand.u32 %v8279, 2147483648
    %v8293 = vor.u32 1.1754944e-38, %v8292
    %v8294 = vsel %vm8291, %v8293, %v8289
    %v8295 = vmul.f32 1.0, %v8294
    %v8296 = vrcp.pop %v8280
    %v8297 = vmul.f32 %v8280, %v8296
    %v8298 = vsub.f32 1.0, %v8297
    %v8299 = vmul.f32 %v8296, %v8298
    %v8300 = vadd.f32 %v8296, %v8299
    %vm8301 = vweird.f32 %v8280
    %vm8302 = vweird.f32 %v8296
    %vm8303 = vmor %vm8301, %vm8302
    %v8304 = vsel %vm8303, %v8296, %v8300
    %v8305 = vand.u32 2147483647, %v8280
    %vm8306 = vcmp.eq.f32.partialorder %v8305, 8.507059e+37
    %v8307 = vand.u32 %v8280, 2147483648
    %v8308 = vor.u32 1.1754944e-38, %v8307
    %v8309 = vsel %vm8306, %v8308, %v8304
    %v8310 = vmul.f32 1.0, %v8309
    %v8311 = vtanh.pop %v8231
    %v8312 = vtanh.pop %v8232
    %v8313 = vxor.u32 %v8233, 2147483648
    %v8314 = vxor.u32 %v8234, 2147483648
    %v8315 = vmul.f32 %v8313, 1.442695
    %v8316 = vpow.pop %v8315
    %v8317 = vmul.f32 %v8314, 1.442695
    %v8318 = vpow.pop %v8317
    %v8319 = vadd.f32 %v8316, 1.0
    %v8320 = vadd.f32 %v8318, 1.0
    %v8321 = vrcp.pop %v8319
    %v8322 = vmul.f32 %v8319, %v8321
    %v8323 = vsub.f32 1.0, %v8322
    %v8324 = vmul.f32 %v8321, %v8323
    %v8325 = vadd.f32 %v8321, %v8324
    %vm8326 = vweird.f32 %v8319
    %vm8327 = vweird.f32 %v8321
    %vm8328 = vmor %vm8326, %vm8327
    %v8329 = vsel %vm8328, %v8321, %v8325
    %v8330 = vand.u32 2147483647, %v8319
    %vm8331 = vcmp.eq.f32.partialorder %v8330, 8.507059e+37
    %v8332 = vand.u32 %v8319, 2147483648
    %v8333 = vor.u32 1.1754944e-38, %v8332
    %v8334 = vsel %vm8331, %v8333, %v8329
    %v8335 = vmul.f32 1.0, %v8334
    %v8336 = vrcp.pop %v8320
    %v8337 = vmul.f32 %v8320, %v8336
    %v8338 = vsub.f32 1.0, %v8337
    %v8339 = vmul.f32 %v8336, %v8338
    %v8340 = vadd.f32 %v8336, %v8339
    %vm8341 = vweird.f32 %v8320
    %vm8342 = vweird.f32 %v8336
    %vm8343 = vmor %vm8341, %vm8342
    %v8344 = vsel %vm8343, %v8336, %v8340
    %v8345 = vand.u32 2147483647, %v8320
    %vm8346 = vcmp.eq.f32.partialorder %v8345, 8.507059e+37
    %v8347 = vand.u32 %v8320, 2147483648
    %v8348 = vor.u32 1.1754944e-38, %v8347
    %v8349 = vsel %vm8346, %v8348, %v8344
    %v8350 = vmul.f32 1.0, %v8349
    %v8353 = vrot.slane %v7987, 6
    %v8354 = vrot.slane %v7988, 6
    %v8357 = vmul.f32 %v8295, %v8353
    %v8358 = vmul.f32 %v8310, %v8354
    %v8359 = vmul.f32 %v8257, %v8311
    %v8360 = vmul.f32 %v8272, %v8312
    %v8361 = vadd.f32 %v8357, %v8359
    %v8362 = vadd.f32 %v8358, %v8360
    %v8363 = vtanh.pop %v8361
    %v8364 = vtanh.pop %v8362
    %v8365 = vmul.f32 %v8335, %v8363
    %v8366 = vmul.f32 %v8350, %v8364
    %v8367 = vpack.c.bf16 %v8365, %v8365
    %v8368 = vpack.c.bf16 %v8366, %v8366
    %v8371 = vrot.slane %v8367, 1
    %v8372 = vrot.slane %v8368, 1
    %8375 = vmatpush.bf16.msra.mxu0 %v7451
    %8376 = vmatpush.bf16.msra.mxu0 %v7443
    %8377 = vmatpush.bf16.msra.mxu0 %v7435
    %8378 = vmatpush.bf16.msra.mxu0 %v7427
    %8379 = vmatpush.bf16.msra.mxu0 %v7419
    %8380 = vmatpush.bf16.msra.mxu0 %v7411
    %8381 = vmatpush.bf16.msra.mxu0 %v7403
    %8382 = vmatpush.bf16.msra.mxu0 %v7395
    %8383 = vmatmul.bf16.gmra.mxu0 %v8371
    %v8384 = vpop.f32.mrf.mxu0
    %v8385 = vadd.f32 0.0, %v8384
    %v8386 = vpop.f32.mrf.mxu0
    %8387 = vdwg.mxu0
    %8388 = vmatpush.bf16.msra.mxu0 %v7515
    %8389 = vmatpush.bf16.msra.mxu0 %v7507
    %8390 = vmatpush.bf16.msra.mxu0 %v7499
    %8391 = vmatpush.bf16.msra.mxu0 %v7491
    %8392 = vmatpush.bf16.msra.mxu0 %v7483
    %8393 = vmatpush.bf16.msra.mxu0 %v7475
    %8394 = vmatpush.bf16.msra.mxu0 %v7467
    %8395 = vmatpush.bf16.msra.mxu0 %v7459
    %8396 = vmatmul.bf16.gmra.mxu0 %v8372
    %v8397 = vpop.f32.mrf.mxu0
    %v8398 = vadd.f32 %v8385, %v8397
    %v8399 = vpop.f32.mrf.mxu0
    %8400 = vdwg.mxu0
    %8401 = vmatpush.bf16.msra.mxu0 %v7452
    %8402 = vmatpush.bf16.msra.mxu0 %v7444
    %8403 = vmatpush.bf16.msra.mxu0 %v7436
    %8404 = vmatpush.bf16.msra.mxu0 %v7428
    %8405 = vmatpush.bf16.msra.mxu0 %v7420
    %8406 = vmatpush.bf16.msra.mxu0 %v7412
    %8407 = vmatpush.bf16.msra.mxu0 %v7404
    %8408 = vmatpush.bf16.msra.mxu0 %v7396
    %8409 = vmatmul.bf16.gmra.mxu0 %v8371
    %v8410 = vpop.f32.mrf.mxu0
    %v8411 = vadd.f32 0.0, %v8410
    %v8412 = vpop.f32.mrf.mxu0
    %8413 = vdwg.mxu0
    %8414 = vmatpush.bf16.msra.mxu0 %v7516
    %8415 = vmatpush.bf16.msra.mxu0 %v7508
    %8416 = vmatpush.bf16.msra.mxu0 %v7500
    %8417 = vmatpush.bf16.msra.mxu0 %v7492
    %8418 = vmatpush.bf16.msra.mxu0 %v7484
    %8419 = vmatpush.bf16.msra.mxu0 %v7476
    %8420 = vmatpush.bf16.msra.mxu0 %v7468
    %8421 = vmatpush.bf16.msra.mxu0 %v7460
    %8422 = vmatmul.bf16.gmra.mxu0 %v8372
    %v8423 = vpop.f32.mrf.mxu0
    %v8424 = vadd.f32 %v8411, %v8423
    %v8425 = vpop.f32.mrf.mxu0
    %8426 = vdwg.mxu0
    %8427 = vmatpush.bf16.msra.mxu0 %v7453
    %8428 = vmatpush.bf16.msra.mxu0 %v7445
    %8429 = vmatpush.bf16.msra.mxu0 %v7437
    %8430 = vmatpush.bf16.msra.mxu0 %v7429
    %8431 = vmatpush.bf16.msra.mxu0 %v7421
    %8432 = vmatpush.bf16.msra.mxu0 %v7413
    %8433 = vmatpush.bf16.msra.mxu0 %v7405
    %8434 = vmatpush.bf16.msra.mxu0 %v7397
    %8435 = vmatmul.bf16.gmra.mxu0 %v8371
    %v8436 = vpop.f32.mrf.mxu0
    %v8437 = vadd.f32 0.0, %v8436
    %v8438 = vpop.f32.mrf.mxu0
    %8439 = vdwg.mxu0
    %8440 = vmatpush.bf16.msra.mxu0 %v7517
    %8441 = vmatpush.bf16.msra.mxu0 %v7509
    %8442 = vmatpush.bf16.msra.mxu0 %v7501
    %8443 = vmatpush.bf16.msra.mxu0 %v7493
    %8444 = vmatpush.bf16.msra.mxu0 %v7485
    %8445 = vmatpush.bf16.msra.mxu0 %v7477
    %8446 = vmatpush.bf16.msra.mxu0 %v7469
    %8447 = vmatpush.bf16.msra.mxu0 %v7461
    %8448 = vmatmul.bf16.gmra.mxu0 %v8372
    %v8449 = vpop.f32.mrf.mxu0
    %v8450 = vadd.f32 %v8437, %v8449
    %v8451 = vpop.f32.mrf.mxu0
    %8452 = vdwg.mxu0
    %8453 = vmatpush.bf16.msra.mxu0 %v7454
    %8454 = vmatpush.bf16.msra.mxu0 %v7446
    %8455 = vmatpush.bf16.msra.mxu0 %v7438
    %8456 = vmatpush.bf16.msra.mxu0 %v7430
    %8457 = vmatpush.bf16.msra.mxu0 %v7422
    %8458 = vmatpush.bf16.msra.mxu0 %v7414
    %8459 = vmatpush.bf16.msra.mxu0 %v7406
    %8460 = vmatpush.bf16.msra.mxu0 %v7398
    %8461 = vmatmul.bf16.gmra.mxu0 %v8371
    %v8462 = vpop.f32.mrf.mxu0
    %v8463 = vadd.f32 0.0, %v8462
    %v8464 = vpop.f32.mrf.mxu0
    %8465 = vdwg.mxu0
    %8466 = vmatpush.bf16.msra.mxu0 %v7518
    %8467 = vmatpush.bf16.msra.mxu0 %v7510
    %8468 = vmatpush.bf16.msra.mxu0 %v7502
    %8469 = vmatpush.bf16.msra.mxu0 %v7494
    %8470 = vmatpush.bf16.msra.mxu0 %v7486
    %8471 = vmatpush.bf16.msra.mxu0 %v7478
    %8472 = vmatpush.bf16.msra.mxu0 %v7470
    %8473 = vmatpush.bf16.msra.mxu0 %v7462
    %8474 = vmatmul.bf16.gmra.mxu0 %v8372
    %v8475 = vpop.f32.mrf.mxu0
    %v8476 = vadd.f32 %v8463, %v8475
    %v8477 = vpop.f32.mrf.mxu0
    %8478 = vdwg.mxu0
    %8479 = vmatpush.bf16.msra.mxu0 %v7455
    %8480 = vmatpush.bf16.msra.mxu0 %v7447
    %8481 = vmatpush.bf16.msra.mxu0 %v7439
    %8482 = vmatpush.bf16.msra.mxu0 %v7431
    %8483 = vmatpush.bf16.msra.mxu0 %v7423
    %8484 = vmatpush.bf16.msra.mxu0 %v7415
    %8485 = vmatpush.bf16.msra.mxu0 %v7407
    %8486 = vmatpush.bf16.msra.mxu0 %v7399
    %8487 = vmatmul.bf16.gmra.mxu0 %v8371
    %v8488 = vpop.f32.mrf.mxu0
    %v8489 = vadd.f32 0.0, %v8488
    %v8490 = vpop.f32.mrf.mxu0
    %8491 = vdwg.mxu0
    %8492 = vmatpush.bf16.msra.mxu0 %v7519
    %8493 = vmatpush.bf16.msra.mxu0 %v7511
    %8494 = vmatpush.bf16.msra.mxu0 %v7503
    %8495 = vmatpush.bf16.msra.mxu0 %v7495
    %8496 = vmatpush.bf16.msra.mxu0 %v7487
    %8497 = vmatpush.bf16.msra.mxu0 %v7479
    %8498 = vmatpush.bf16.msra.mxu0 %v7471
    %8499 = vmatpush.bf16.msra.mxu0 %v7463
    %8500 = vmatmul.bf16.gmra.mxu0 %v8372
    %v8501 = vpop.f32.mrf.mxu0
    %v8502 = vadd.f32 %v8489, %v8501
    %v8503 = vpop.f32.mrf.mxu0
    %8504 = vdwg.mxu0
    %8505 = vmatpush.bf16.msra.mxu0 %v7456
    %8506 = vmatpush.bf16.msra.mxu0 %v7448
    %8507 = vmatpush.bf16.msra.mxu0 %v7440
    %8508 = vmatpush.bf16.msra.mxu0 %v7432
    %8509 = vmatpush.bf16.msra.mxu0 %v7424
    %8510 = vmatpush.bf16.msra.mxu0 %v7416
    %8511 = vmatpush.bf16.msra.mxu0 %v7408
    %8512 = vmatpush.bf16.msra.mxu0 %v7400
    %8513 = vmatmul.bf16.gmra.mxu0 %v8371
    %v8514 = vpop.f32.mrf.mxu0
    %v8515 = vadd.f32 0.0, %v8514
    %v8516 = vpop.f32.mrf.mxu0
    %8517 = vdwg.mxu0
    %8518 = vmatpush.bf16.msra.mxu0 %v7520
    %8519 = vmatpush.bf16.msra.mxu0 %v7512
    %8520 = vmatpush.bf16.msra.mxu0 %v7504
    %8521 = vmatpush.bf16.msra.mxu0 %v7496
    %8522 = vmatpush.bf16.msra.mxu0 %v7488
    %8523 = vmatpush.bf16.msra.mxu0 %v7480
    %8524 = vmatpush.bf16.msra.mxu0 %v7472
    %8525 = vmatpush.bf16.msra.mxu0 %v7464
    %8526 = vmatmul.bf16.gmra.mxu0 %v8372
    %v8527 = vpop.f32.mrf.mxu0
    %v8528 = vadd.f32 %v8515, %v8527
    %v8529 = vpop.f32.mrf.mxu0
    %8530 = vdwg.mxu0
    %8531 = vmatpush.bf16.msra.mxu0 %v7457
    %8532 = vmatpush.bf16.msra.mxu0 %v7449
    %8533 = vmatpush.bf16.msra.mxu0 %v7441
    %8534 = vmatpush.bf16.msra.mxu0 %v7433
    %8535 = vmatpush.bf16.msra.mxu0 %v7425
    %8536 = vmatpush.bf16.msra.mxu0 %v7417
    %8537 = vmatpush.bf16.msra.mxu0 %v7409
    %8538 = vmatpush.bf16.msra.mxu0 %v7401
    %8539 = vmatmul.bf16.gmra.mxu0 %v8371
    %v8540 = vpop.f32.mrf.mxu0
    %v8541 = vadd.f32 0.0, %v8540
    %v8542 = vpop.f32.mrf.mxu0
    %8543 = vdwg.mxu0
    %8544 = vmatpush.bf16.msra.mxu0 %v7521
    %8545 = vmatpush.bf16.msra.mxu0 %v7513
    %8546 = vmatpush.bf16.msra.mxu0 %v7505
    %8547 = vmatpush.bf16.msra.mxu0 %v7497
    %8548 = vmatpush.bf16.msra.mxu0 %v7489
    %8549 = vmatpush.bf16.msra.mxu0 %v7481
    %8550 = vmatpush.bf16.msra.mxu0 %v7473
    %8551 = vmatpush.bf16.msra.mxu0 %v7465
    %8552 = vmatmul.bf16.gmra.mxu0 %v8372
    %v8553 = vpop.f32.mrf.mxu0
    %v8554 = vadd.f32 %v8541, %v8553
    %v8555 = vpop.f32.mrf.mxu0
    %8556 = vdwg.mxu0
    %8557 = vmatpush.bf16.msra.mxu0 %v7458
    %8558 = vmatpush.bf16.msra.mxu0 %v7450
    %8559 = vmatpush.bf16.msra.mxu0 %v7442
    %8560 = vmatpush.bf16.msra.mxu0 %v7434
    %8561 = vmatpush.bf16.msra.mxu0 %v7426
    %8562 = vmatpush.bf16.msra.mxu0 %v7418
    %8563 = vmatpush.bf16.msra.mxu0 %v7410
    %8564 = vmatpush.bf16.msra.mxu0 %v7402
    %8565 = vmatmul.bf16.gmra.mxu0 %v8371
    %v8566 = vpop.f32.mrf.mxu0
    %v8567 = vadd.f32 0.0, %v8566
    %v8568 = vpop.f32.mrf.mxu0
    %8569 = vdwg.mxu0
    %8570 = vmatpush.bf16.msra.mxu0 %v7522
    %8571 = vmatpush.bf16.msra.mxu0 %v7514
    %8572 = vmatpush.bf16.msra.mxu0 %v7506
    %8573 = vmatpush.bf16.msra.mxu0 %v7498
    %8574 = vmatpush.bf16.msra.mxu0 %v7490
    %8575 = vmatpush.bf16.msra.mxu0 %v7482
    %8576 = vmatpush.bf16.msra.mxu0 %v7474
    %8577 = vmatpush.bf16.msra.mxu0 %v7466
    %8578 = vmatmul.bf16.gmra.mxu0 %v8372
    %v8579 = vpop.f32.mrf.mxu0
    %v8580 = vadd.f32 %v8567, %v8579
    %v8581 = vpop.f32.mrf.mxu0
    %8582 = vdwg.mxu0
    %v8591 = vrot.slane %v8398, 4
    %v8592 = vrot.slane %v8424, 4
    %v8593 = vrot.slane %v8450, 4
    %v8594 = vrot.slane %v8476, 4
    %v8595 = vrot.slane %v8502, 4
    %v8596 = vrot.slane %v8528, 4
    %v8597 = vrot.slane %v8554, 4
    %v8598 = vrot.slane %v8580, 4
    %v8607 = vadd.f32 %v6698, %v8591
    %v8608 = vadd.f32 %v6724, %v8592
    %v8609 = vadd.f32 %v6750, %v8593
    %v8610 = vadd.f32 %v6776, %v8594
    %v8611 = vadd.f32 %v6802, %v8595
    %v8612 = vadd.f32 %v6828, %v8596
    %v8613 = vadd.f32 %v6854, %v8597
    %v8614 = vadd.f32 %v6880, %v8598
    %v8615 = vxor.u32 %v8607, 2147483648
    %v8616 = vxor.u32 %v8608, 2147483648
    %v8617 = vmul.f32 %v8615, 1.442695
    %v8618 = vpow.pop %v8617
    %v8619 = vmul.f32 %v8616, 1.442695
    %v8620 = vpow.pop %v8619
    %v8621 = vadd.f32 %v8618, 1.0
    %v8622 = vadd.f32 %v8620, 1.0
    %v8623 = vrcp.pop %v8621
    %v8624 = vmul.f32 %v8621, %v8623
    %v8625 = vsub.f32 1.0, %v8624
    %v8626 = vmul.f32 %v8623, %v8625
    %v8627 = vadd.f32 %v8623, %v8626
    %vm8628 = vweird.f32 %v8621
    %vm8629 = vweird.f32 %v8623
    %vm8630 = vmor %vm8628, %vm8629
    %v8631 = vsel %vm8630, %v8623, %v8627
    %v8632 = vand.u32 2147483647, %v8621
    %vm8633 = vcmp.eq.f32.partialorder %v8632, 8.507059e+37
    %v8634 = vand.u32 %v8621, 2147483648
    %v8635 = vor.u32 1.1754944e-38, %v8634
    %v8636 = vsel %vm8633, %v8635, %v8631
    %v8637 = vmul.f32 1.0, %v8636
    %v8638 = vrcp.pop %v8622
    %v8639 = vmul.f32 %v8622, %v8638
    %v8640 = vsub.f32 1.0, %v8639
    %v8641 = vmul.f32 %v8638, %v8640
    %v8642 = vadd.f32 %v8638, %v8641
    %vm8643 = vweird.f32 %v8622
    %vm8644 = vweird.f32 %v8638
    %vm8645 = vmor %vm8643, %vm8644
    %v8646 = vsel %vm8645, %v8638, %v8642
    %v8647 = vand.u32 2147483647, %v8622
    %vm8648 = vcmp.eq.f32.partialorder %v8647, 8.507059e+37
    %v8649 = vand.u32 %v8622, 2147483648
    %v8650 = vor.u32 1.1754944e-38, %v8649
    %v8651 = vsel %vm8648, %v8650, %v8646
    %v8652 = vmul.f32 1.0, %v8651
    %v8653 = vxor.u32 %v8609, 2147483648
    %v8654 = vxor.u32 %v8610, 2147483648
    %v8655 = vmul.f32 %v8653, 1.442695
    %v8656 = vpow.pop %v8655
    %v8657 = vmul.f32 %v8654, 1.442695
    %v8658 = vpow.pop %v8657
    %v8659 = vadd.f32 %v8656, 1.0
    %v8660 = vadd.f32 %v8658, 1.0
    %v8661 = vrcp.pop %v8659
    %v8662 = vmul.f32 %v8659, %v8661
    %v8663 = vsub.f32 1.0, %v8662
    %v8664 = vmul.f32 %v8661, %v8663
    %v8665 = vadd.f32 %v8661, %v8664
    %vm8666 = vweird.f32 %v8659
    %vm8667 = vweird.f32 %v8661
    %vm8668 = vmor %vm8666, %vm8667
    %v8669 = vsel %vm8668, %v8661, %v8665
    %v8670 = vand.u32 2147483647, %v8659
    %vm8671 = vcmp.eq.f32.partialorder %v8670, 8.507059e+37
    %v8672 = vand.u32 %v8659, 2147483648
    %v8673 = vor.u32 1.1754944e-38, %v8672
    %v8674 = vsel %vm8671, %v8673, %v8669
    %v8675 = vmul.f32 1.0, %v8674
    %v8676 = vrcp.pop %v8660
    %v8677 = vmul.f32 %v8660, %v8676
    %v8678 = vsub.f32 1.0, %v8677
    %v8679 = vmul.f32 %v8676, %v8678
    %v8680 = vadd.f32 %v8676, %v8679
    %vm8681 = vweird.f32 %v8660
    %vm8682 = vweird.f32 %v8676
    %vm8683 = vmor %vm8681, %vm8682
    %v8684 = vsel %vm8683, %v8676, %v8680
    %v8685 = vand.u32 2147483647, %v8660
    %vm8686 = vcmp.eq.f32.partialorder %v8685, 8.507059e+37
    %v8687 = vand.u32 %v8660, 2147483648
    %v8688 = vor.u32 1.1754944e-38, %v8687
    %v8689 = vsel %vm8686, %v8688, %v8684
    %v8690 = vmul.f32 1.0, %v8689
    %v8691 = vtanh.pop %v8611
    %v8692 = vtanh.pop %v8612
    %v8693 = vxor.u32 %v8613, 2147483648
    %v8694 = vxor.u32 %v8614, 2147483648
    %v8695 = vmul.f32 %v8693, 1.442695
    %v8696 = vpow.pop %v8695
    %v8697 = vmul.f32 %v8694, 1.442695
    %v8698 = vpow.pop %v8697
    %v8699 = vadd.f32 %v8696, 1.0
    %v8700 = vadd.f32 %v8698, 1.0
    %v8701 = vrcp.pop %v8699
    %v8702 = vmul.f32 %v8699, %v8701
    %v8703 = vsub.f32 1.0, %v8702
    %v8704 = vmul.f32 %v8701, %v8703
    %v8705 = vadd.f32 %v8701, %v8704
    %vm8706 = vweird.f32 %v8699
    %vm8707 = vweird.f32 %v8701
    %vm8708 = vmor %vm8706, %vm8707
    %v8709 = vsel %vm8708, %v8701, %v8705
    %v8710 = vand.u32 2147483647, %v8699
    %vm8711 = vcmp.eq.f32.partialorder %v8710, 8.507059e+37
    %v8712 = vand.u32 %v8699, 2147483648
    %v8713 = vor.u32 1.1754944e-38, %v8712
    %v8714 = vsel %vm8711, %v8713, %v8709
    %v8715 = vmul.f32 1.0, %v8714
    %v8716 = vrcp.pop %v8700
    %v8717 = vmul.f32 %v8700, %v8716
    %v8718 = vsub.f32 1.0, %v8717
    %v8719 = vmul.f32 %v8716, %v8718
    %v8720 = vadd.f32 %v8716, %v8719
    %vm8721 = vweird.f32 %v8700
    %vm8722 = vweird.f32 %v8716
    %vm8723 = vmor %vm8721, %vm8722
    %v8724 = vsel %vm8723, %v8716, %v8720
    %v8725 = vand.u32 2147483647, %v8700
    %vm8726 = vcmp.eq.f32.partialorder %v8725, 8.507059e+37
    %v8727 = vand.u32 %v8700, 2147483648
    %v8728 = vor.u32 1.1754944e-38, %v8727
    %v8729 = vsel %vm8726, %v8728, %v8724
    %v8730 = vmul.f32 1.0, %v8729
    %v8733 = vrot.slane %v8361, 6
    %v8734 = vrot.slane %v8362, 6
    %v8737 = vmul.f32 %v8675, %v8733
    %v8738 = vmul.f32 %v8690, %v8734
    %v8739 = vmul.f32 %v8637, %v8691
    %v8740 = vmul.f32 %v8652, %v8692
    %v8741 = vadd.f32 %v8737, %v8739
    %v8742 = vadd.f32 %v8738, %v8740
    %v8743 = vtanh.pop %v8741
    %v8744 = vtanh.pop %v8742
    %v8745 = vmul.f32 %v8715, %v8743
    %v8746 = vmul.f32 %v8730, %v8744
    %v8747 = vpack.c.bf16 %v2420, %v2420
    %v8748 = vpack.c.bf16 %v2421, %v2421
    %8749 = vmatpush.bf16.msra.mxu0 %v3055
    %8750 = vmatpush.bf16.msra.mxu0 %v3047
    %8751 = vmatpush.bf16.msra.mxu0 %v3039
    %8752 = vmatpush.bf16.msra.mxu0 %v3031
    %8753 = vmatpush.bf16.msra.mxu0 %v3023
    %8754 = vmatpush.bf16.msra.mxu0 %v3015
    %8755 = vmatpush.bf16.msra.mxu0 %v3007
    %8756 = vmatpush.bf16.msra.mxu0 %v2999
    %8757 = vmatmul.bf16.gmra.mxu0 %v8747
    %v8758 = vpop.f32.mrf.mxu0
    %v8759 = vadd.f32 %v2599, %v8758
    %v8760 = vpop.f32.mrf.mxu0
    %8761 = vdwg.mxu0
    %8762 = vmatpush.bf16.msra.mxu0 %v3119
    %8763 = vmatpush.bf16.msra.mxu0 %v3111
    %8764 = vmatpush.bf16.msra.mxu0 %v3103
    %8765 = vmatpush.bf16.msra.mxu0 %v3095
    %8766 = vmatpush.bf16.msra.mxu0 %v3087
    %8767 = vmatpush.bf16.msra.mxu0 %v3079
    %8768 = vmatpush.bf16.msra.mxu0 %v3071
    %8769 = vmatpush.bf16.msra.mxu0 %v3063
    %8770 = vmatmul.bf16.gmra.mxu0 %v8748
    %v8771 = vpop.f32.mrf.mxu0
    %v8772 = vadd.f32 %v8759, %v8771
    %v8773 = vpop.f32.mrf.mxu0
    %8774 = vdwg.mxu0
    %8775 = vmatpush.bf16.msra.mxu0 %v3056
    %8776 = vmatpush.bf16.msra.mxu0 %v3048
    %8777 = vmatpush.bf16.msra.mxu0 %v3040
    %8778 = vmatpush.bf16.msra.mxu0 %v3032
    %8779 = vmatpush.bf16.msra.mxu0 %v3024
    %8780 = vmatpush.bf16.msra.mxu0 %v3016
    %8781 = vmatpush.bf16.msra.mxu0 %v3008
    %8782 = vmatpush.bf16.msra.mxu0 %v3000
    %8783 = vmatmul.bf16.gmra.mxu0 %v8747
    %v8784 = vpop.f32.mrf.mxu0
    %v8785 = vadd.f32 %v2600, %v8784
    %v8786 = vpop.f32.mrf.mxu0
    %8787 = vdwg.mxu0
    %8788 = vmatpush.bf16.msra.mxu0 %v3120
    %8789 = vmatpush.bf16.msra.mxu0 %v3112
    %8790 = vmatpush.bf16.msra.mxu0 %v3104
    %8791 = vmatpush.bf16.msra.mxu0 %v3096
    %8792 = vmatpush.bf16.msra.mxu0 %v3088
    %8793 = vmatpush.bf16.msra.mxu0 %v3080
    %8794 = vmatpush.bf16.msra.mxu0 %v3072
    %8795 = vmatpush.bf16.msra.mxu0 %v3064
    %8796 = vmatmul.bf16.gmra.mxu0 %v8748
    %v8797 = vpop.f32.mrf.mxu0
    %v8798 = vadd.f32 %v8785, %v8797
    %v8799 = vpop.f32.mrf.mxu0
    %8800 = vdwg.mxu0
    %8801 = vmatpush.bf16.msra.mxu0 %v3057
    %8802 = vmatpush.bf16.msra.mxu0 %v3049
    %8803 = vmatpush.bf16.msra.mxu0 %v3041
    %8804 = vmatpush.bf16.msra.mxu0 %v3033
    %8805 = vmatpush.bf16.msra.mxu0 %v3025
    %8806 = vmatpush.bf16.msra.mxu0 %v3017
    %8807 = vmatpush.bf16.msra.mxu0 %v3009
    %8808 = vmatpush.bf16.msra.mxu0 %v3001
    %8809 = vmatmul.bf16.gmra.mxu0 %v8747
    %v8810 = vpop.f32.mrf.mxu0
    %v8811 = vadd.f32 %v2601, %v8810
    %v8812 = vpop.f32.mrf.mxu0
    %8813 = vdwg.mxu0
    %8814 = vmatpush.bf16.msra.mxu0 %v3121
    %8815 = vmatpush.bf16.msra.mxu0 %v3113
    %8816 = vmatpush.bf16.msra.mxu0 %v3105
    %8817 = vmatpush.bf16.msra.mxu0 %v3097
    %8818 = vmatpush.bf16.msra.mxu0 %v3089
    %8819 = vmatpush.bf16.msra.mxu0 %v3081
    %8820 = vmatpush.bf16.msra.mxu0 %v3073
    %8821 = vmatpush.bf16.msra.mxu0 %v3065
    %8822 = vmatmul.bf16.gmra.mxu0 %v8748
    %v8823 = vpop.f32.mrf.mxu0
    %v8824 = vadd.f32 %v8811, %v8823
    %v8825 = vpop.f32.mrf.mxu0
    %8826 = vdwg.mxu0
    %8827 = vmatpush.bf16.msra.mxu0 %v3058
    %8828 = vmatpush.bf16.msra.mxu0 %v3050
    %8829 = vmatpush.bf16.msra.mxu0 %v3042
    %8830 = vmatpush.bf16.msra.mxu0 %v3034
    %8831 = vmatpush.bf16.msra.mxu0 %v3026
    %8832 = vmatpush.bf16.msra.mxu0 %v3018
    %8833 = vmatpush.bf16.msra.mxu0 %v3010
    %8834 = vmatpush.bf16.msra.mxu0 %v3002
    %8835 = vmatmul.bf16.gmra.mxu0 %v8747
    %v8836 = vpop.f32.mrf.mxu0
    %v8837 = vadd.f32 %v2602, %v8836
    %v8838 = vpop.f32.mrf.mxu0
    %8839 = vdwg.mxu0
    %8840 = vmatpush.bf16.msra.mxu0 %v3122
    %8841 = vmatpush.bf16.msra.mxu0 %v3114
    %8842 = vmatpush.bf16.msra.mxu0 %v3106
    %8843 = vmatpush.bf16.msra.mxu0 %v3098
    %8844 = vmatpush.bf16.msra.mxu0 %v3090
    %8845 = vmatpush.bf16.msra.mxu0 %v3082
    %8846 = vmatpush.bf16.msra.mxu0 %v3074
    %8847 = vmatpush.bf16.msra.mxu0 %v3066
    %8848 = vmatmul.bf16.gmra.mxu0 %v8748
    %v8849 = vpop.f32.mrf.mxu0
    %v8850 = vadd.f32 %v8837, %v8849
    %v8851 = vpop.f32.mrf.mxu0
    %8852 = vdwg.mxu0
    %8853 = vmatpush.bf16.msra.mxu0 %v3059
    %8854 = vmatpush.bf16.msra.mxu0 %v3051
    %8855 = vmatpush.bf16.msra.mxu0 %v3043
    %8856 = vmatpush.bf16.msra.mxu0 %v3035
    %8857 = vmatpush.bf16.msra.mxu0 %v3027
    %8858 = vmatpush.bf16.msra.mxu0 %v3019
    %8859 = vmatpush.bf16.msra.mxu0 %v3011
    %8860 = vmatpush.bf16.msra.mxu0 %v3003
    %8861 = vmatmul.bf16.gmra.mxu0 %v8747
    %v8862 = vpop.f32.mrf.mxu0
    %v8863 = vadd.f32 %v2603, %v8862
    %v8864 = vpop.f32.mrf.mxu0
    %8865 = vdwg.mxu0
    %8866 = vmatpush.bf16.msra.mxu0 %v3123
    %8867 = vmatpush.bf16.msra.mxu0 %v3115
    %8868 = vmatpush.bf16.msra.mxu0 %v3107
    %8869 = vmatpush.bf16.msra.mxu0 %v3099
    %8870 = vmatpush.bf16.msra.mxu0 %v3091
    %8871 = vmatpush.bf16.msra.mxu0 %v3083
    %8872 = vmatpush.bf16.msra.mxu0 %v3075
    %8873 = vmatpush.bf16.msra.mxu0 %v3067
    %8874 = vmatmul.bf16.gmra.mxu0 %v8748
    %v8875 = vpop.f32.mrf.mxu0
    %v8876 = vadd.f32 %v8863, %v8875
    %v8877 = vpop.f32.mrf.mxu0
    %8878 = vdwg.mxu0
    %8879 = vmatpush.bf16.msra.mxu0 %v3060
    %8880 = vmatpush.bf16.msra.mxu0 %v3052
    %8881 = vmatpush.bf16.msra.mxu0 %v3044
    %8882 = vmatpush.bf16.msra.mxu0 %v3036
    %8883 = vmatpush.bf16.msra.mxu0 %v3028
    %8884 = vmatpush.bf16.msra.mxu0 %v3020
    %8885 = vmatpush.bf16.msra.mxu0 %v3012
    %8886 = vmatpush.bf16.msra.mxu0 %v3004
    %8887 = vmatmul.bf16.gmra.mxu0 %v8747
    %v8888 = vpop.f32.mrf.mxu0
    %v8889 = vadd.f32 %v2604, %v8888
    %v8890 = vpop.f32.mrf.mxu0
    %8891 = vdwg.mxu0
    %8892 = vmatpush.bf16.msra.mxu0 %v3124
    %8893 = vmatpush.bf16.msra.mxu0 %v3116
    %8894 = vmatpush.bf16.msra.mxu0 %v3108
    %8895 = vmatpush.bf16.msra.mxu0 %v3100
    %8896 = vmatpush.bf16.msra.mxu0 %v3092
    %8897 = vmatpush.bf16.msra.mxu0 %v3084
    %8898 = vmatpush.bf16.msra.mxu0 %v3076
    %8899 = vmatpush.bf16.msra.mxu0 %v3068
    %8900 = vmatmul.bf16.gmra.mxu0 %v8748
    %v8901 = vpop.f32.mrf.mxu0
    %v8902 = vadd.f32 %v8889, %v8901
    %v8903 = vpop.f32.mrf.mxu0
    %8904 = vdwg.mxu0
    %8905 = vmatpush.bf16.msra.mxu0 %v3061
    %8906 = vmatpush.bf16.msra.mxu0 %v3053
    %8907 = vmatpush.bf16.msra.mxu0 %v3045
    %8908 = vmatpush.bf16.msra.mxu0 %v3037
    %8909 = vmatpush.bf16.msra.mxu0 %v3029
    %8910 = vmatpush.bf16.msra.mxu0 %v3021
    %8911 = vmatpush.bf16.msra.mxu0 %v3013
    %8912 = vmatpush.bf16.msra.mxu0 %v3005
    %8913 = vmatmul.bf16.gmra.mxu0 %v8747
    %v8914 = vpop.f32.mrf.mxu0
    %v8915 = vadd.f32 %v2605, %v8914
    %v8916 = vpop.f32.mrf.mxu0
    %8917 = vdwg.mxu0
    %8918 = vmatpush.bf16.msra.mxu0 %v3125
    %8919 = vmatpush.bf16.msra.mxu0 %v3117
    %8920 = vmatpush.bf16.msra.mxu0 %v3109
    %8921 = vmatpush.bf16.msra.mxu0 %v3101
    %8922 = vmatpush.bf16.msra.mxu0 %v3093
    %8923 = vmatpush.bf16.msra.mxu0 %v3085
    %8924 = vmatpush.bf16.msra.mxu0 %v3077
    %8925 = vmatpush.bf16.msra.mxu0 %v3069
    %8926 = vmatmul.bf16.gmra.mxu0 %v8748
    %v8927 = vpop.f32.mrf.mxu0
    %v8928 = vadd.f32 %v8915, %v8927
    %v8929 = vpop.f32.mrf.mxu0
    %8930 = vdwg.mxu0
    %8931 = vmatpush.bf16.msra.mxu0 %v3062
    %8932 = vmatpush.bf16.msra.mxu0 %v3054
    %8933 = vmatpush.bf16.msra.mxu0 %v3046
    %8934 = vmatpush.bf16.msra.mxu0 %v3038
    %8935 = vmatpush.bf16.msra.mxu0 %v3030
    %8936 = vmatpush.bf16.msra.mxu0 %v3022
    %8937 = vmatpush.bf16.msra.mxu0 %v3014
    %8938 = vmatpush.bf16.msra.mxu0 %v3006
    %8939 = vmatmul.bf16.gmra.mxu0 %v8747
    %v8940 = vpop.f32.mrf.mxu0
    %v8941 = vadd.f32 %v2606, %v8940
    %v8942 = vpop.f32.mrf.mxu0
    %8943 = vdwg.mxu0
    %8944 = vmatpush.bf16.msra.mxu0 %v3126
    %8945 = vmatpush.bf16.msra.mxu0 %v3118
    %8946 = vmatpush.bf16.msra.mxu0 %v3110
    %8947 = vmatpush.bf16.msra.mxu0 %v3102
    %8948 = vmatpush.bf16.msra.mxu0 %v3094
    %8949 = vmatpush.bf16.msra.mxu0 %v3086
    %8950 = vmatpush.bf16.msra.mxu0 %v3078
    %8951 = vmatpush.bf16.msra.mxu0 %v3070
    %8952 = vmatmul.bf16.gmra.mxu0 %v8748
    %v8953 = vpop.f32.mrf.mxu0
    %v8954 = vadd.f32 %v8941, %v8953
    %v8955 = vpop.f32.mrf.mxu0
    %8956 = vdwg.mxu0
    %v8957 = vadd.f32 %v8772, %v4254
    %v8958 = vadd.f32 %v8798, %v4280
    %v8959 = vadd.f32 %v8824, %v4306
    %v8960 = vadd.f32 %v8850, %v4332
    %v8961 = vadd.f32 %v8876, %v4358
    %v8962 = vadd.f32 %v8902, %v4384
    %v8963 = vadd.f32 %v8928, %v4410
    %v8964 = vadd.f32 %v8954, %v4436
    %v8965 = vxor.u32 %v8957, 2147483648
    %v8966 = vxor.u32 %v8958, 2147483648
    %v8967 = vmul.f32 %v8965, 1.442695
    %v8968 = vpow.pop %v8967
    %v8969 = vmul.f32 %v8966, 1.442695
    %v8970 = vpow.pop %v8969
    %v8971 = vadd.f32 %v8968, 1.0
    %v8972 = vadd.f32 %v8970, 1.0
    %v8973 = vrcp.pop %v8971
    %v8974 = vmul.f32 %v8971, %v8973
    %v8975 = vsub.f32 1.0, %v8974
    %v8976 = vmul.f32 %v8973, %v8975
    %v8977 = vadd.f32 %v8973, %v8976
    %vm8978 = vweird.f32 %v8971
    %vm8979 = vweird.f32 %v8973
    %vm8980 = vmor %vm8978, %vm8979
    %v8981 = vsel %vm8980, %v8973, %v8977
    %v8982 = vand.u32 2147483647, %v8971
    %vm8983 = vcmp.eq.f32.partialorder %v8982, 8.507059e+37
    %v8984 = vand.u32 %v8971, 2147483648
    %v8985 = vor.u32 1.1754944e-38, %v8984
    %v8986 = vsel %vm8983, %v8985, %v8981
    %v8987 = vmul.f32 1.0, %v8986
    %v8988 = vrcp.pop %v8972
    %v8989 = vmul.f32 %v8972, %v8988
    %v8990 = vsub.f32 1.0, %v8989
    %v8991 = vmul.f32 %v8988, %v8990
    %v8992 = vadd.f32 %v8988, %v8991
    %vm8993 = vweird.f32 %v8972
    %vm8994 = vweird.f32 %v8988
    %vm8995 = vmor %vm8993, %vm8994
    %v8996 = vsel %vm8995, %v8988, %v8992
    %v8997 = vand.u32 2147483647, %v8972
    %vm8998 = vcmp.eq.f32.partialorder %v8997, 8.507059e+37
    %v8999 = vand.u32 %v8972, 2147483648
    %v9000 = vor.u32 1.1754944e-38, %v8999
    %v9001 = vsel %vm8998, %v9000, %v8996
    %v9002 = vmul.f32 1.0, %v9001
    %v9003 = vxor.u32 %v8959, 2147483648
    %v9004 = vxor.u32 %v8960, 2147483648
    %v9005 = vmul.f32 %v9003, 1.442695
    %v9006 = vpow.pop %v9005
    %v9007 = vmul.f32 %v9004, 1.442695
    %v9008 = vpow.pop %v9007
    %v9009 = vadd.f32 %v9006, 1.0
    %v9010 = vadd.f32 %v9008, 1.0
    %v9011 = vrcp.pop %v9009
    %v9012 = vmul.f32 %v9009, %v9011
    %v9013 = vsub.f32 1.0, %v9012
    %v9014 = vmul.f32 %v9011, %v9013
    %v9015 = vadd.f32 %v9011, %v9014
    %vm9016 = vweird.f32 %v9009
    %vm9017 = vweird.f32 %v9011
    %vm9018 = vmor %vm9016, %vm9017
    %v9019 = vsel %vm9018, %v9011, %v9015
    %v9020 = vand.u32 2147483647, %v9009
    %vm9021 = vcmp.eq.f32.partialorder %v9020, 8.507059e+37
    %v9022 = vand.u32 %v9009, 2147483648
    %v9023 = vor.u32 1.1754944e-38, %v9022
    %v9024 = vsel %vm9021, %v9023, %v9019
    %v9025 = vmul.f32 1.0, %v9024
    %v9026 = vrcp.pop %v9010
    %v9027 = vmul.f32 %v9010, %v9026
    %v9028 = vsub.f32 1.0, %v9027
    %v9029 = vmul.f32 %v9026, %v9028
    %v9030 = vadd.f32 %v9026, %v9029
    %vm9031 = vweird.f32 %v9010
    %vm9032 = vweird.f32 %v9026
    %vm9033 = vmor %vm9031, %vm9032
    %v9034 = vsel %vm9033, %v9026, %v9030
    %v9035 = vand.u32 2147483647, %v9010
    %vm9036 = vcmp.eq.f32.partialorder %v9035, 8.507059e+37
    %v9037 = vand.u32 %v9010, 2147483648
    %v9038 = vor.u32 1.1754944e-38, %v9037
    %v9039 = vsel %vm9036, %v9038, %v9034
    %v9040 = vmul.f32 1.0, %v9039
    %v9041 = vtanh.pop %v8961
    %v9042 = vtanh.pop %v8962
    %v9043 = vxor.u32 %v8963, 2147483648
    %v9044 = vxor.u32 %v8964, 2147483648
    %v9045 = vmul.f32 %v9043, 1.442695
    %v9046 = vpow.pop %v9045
    %v9047 = vmul.f32 %v9044, 1.442695
    %v9048 = vpow.pop %v9047
    %v9049 = vadd.f32 %v9046, 1.0
    %v9050 = vadd.f32 %v9048, 1.0
    %v9051 = vrcp.pop %v9049
    %v9052 = vmul.f32 %v9049, %v9051
    %v9053 = vsub.f32 1.0, %v9052
    %v9054 = vmul.f32 %v9051, %v9053
    %v9055 = vadd.f32 %v9051, %v9054
    %vm9056 = vweird.f32 %v9049
    %vm9057 = vweird.f32 %v9051
    %vm9058 = vmor %vm9056, %vm9057
    %v9059 = vsel %vm9058, %v9051, %v9055
    %v9060 = vand.u32 2147483647, %v9049
    %vm9061 = vcmp.eq.f32.partialorder %v9060, 8.507059e+37
    %v9062 = vand.u32 %v9049, 2147483648
    %v9063 = vor.u32 1.1754944e-38, %v9062
    %v9064 = vsel %vm9061, %v9063, %v9059
    %v9065 = vmul.f32 1.0, %v9064
    %v9066 = vrcp.pop %v9050
    %v9067 = vmul.f32 %v9050, %v9066
    %v9068 = vsub.f32 1.0, %v9067
    %v9069 = vmul.f32 %v9066, %v9068
    %v9070 = vadd.f32 %v9066, %v9069
    %vm9071 = vweird.f32 %v9050
    %vm9072 = vweird.f32 %v9066
    %vm9073 = vmor %vm9071, %vm9072
    %v9074 = vsel %vm9073, %v9066, %v9070
    %v9075 = vand.u32 2147483647, %v9050
    %vm9076 = vcmp.eq.f32.partialorder %v9075, 8.507059e+37
    %v9077 = vand.u32 %v9050, 2147483648
    %v9078 = vor.u32 1.1754944e-38, %v9077
    %v9079 = vsel %vm9076, %v9078, %v9074
    %v9080 = vmul.f32 1.0, %v9079
    %v9081 = vmul.f32 %v9025, 0.0
    %v9082 = vmul.f32 %v9040, 0.0
    %v9083 = vmul.f32 %v8987, %v9041
    %v9084 = vmul.f32 %v9002, %v9042
    %v9085 = vadd.f32 %v9081, %v9083
    %v9086 = vadd.f32 %v9082, %v9084
    %v9087 = vtanh.pop %v9085
    %v9088 = vtanh.pop %v9086
    %v9089 = vmul.f32 %v9065, %v9087
    %v9090 = vmul.f32 %v9080, %v9088
    %v9091 = vpack.c.bf16 %v9089, %v9089
    %v9092 = vpack.c.bf16 %v9090, %v9090
    %9093 = vmatpush.bf16.msra.mxu0 %v4031
    %9094 = vmatpush.bf16.msra.mxu0 %v4023
    %9095 = vmatpush.bf16.msra.mxu0 %v4015
    %9096 = vmatpush.bf16.msra.mxu0 %v4007
    %9097 = vmatpush.bf16.msra.mxu0 %v3999
    %9098 = vmatpush.bf16.msra.mxu0 %v3991
    %9099 = vmatpush.bf16.msra.mxu0 %v3983
    %9100 = vmatpush.bf16.msra.mxu0 %v3975
    %9101 = vmatmul.bf16.gmra.mxu0 %v9091
    %v9102 = vpop.f32.mrf.mxu0
    %v9103 = vadd.f32 0.0, %v9102
    %v9104 = vpop.f32.mrf.mxu0
    %9105 = vdwg.mxu0
    %9106 = vmatpush.bf16.msra.mxu0 %v4095
    %9107 = vmatpush.bf16.msra.mxu0 %v4087
    %9108 = vmatpush.bf16.msra.mxu0 %v4079
    %9109 = vmatpush.bf16.msra.mxu0 %v4071
    %9110 = vmatpush.bf16.msra.mxu0 %v4063
    %9111 = vmatpush.bf16.msra.mxu0 %v4055
    %9112 = vmatpush.bf16.msra.mxu0 %v4047
    %9113 = vmatpush.bf16.msra.mxu0 %v4039
    %9114 = vmatmul.bf16.gmra.mxu0 %v9092
    %v9115 = vpop.f32.mrf.mxu0
    %v9116 = vadd.f32 %v9103, %v9115
    %v9117 = vpop.f32.mrf.mxu0
    %9118 = vdwg.mxu0
    %9119 = vmatpush.bf16.msra.mxu0 %v4032
    %9120 = vmatpush.bf16.msra.mxu0 %v4024
    %9121 = vmatpush.bf16.msra.mxu0 %v4016
    %9122 = vmatpush.bf16.msra.mxu0 %v4008
    %9123 = vmatpush.bf16.msra.mxu0 %v4000
    %9124 = vmatpush.bf16.msra.mxu0 %v3992
    %9125 = vmatpush.bf16.msra.mxu0 %v3984
    %9126 = vmatpush.bf16.msra.mxu0 %v3976
    %9127 = vmatmul.bf16.gmra.mxu0 %v9091
    %v9128 = vpop.f32.mrf.mxu0
    %v9129 = vadd.f32 0.0, %v9128
    %v9130 = vpop.f32.mrf.mxu0
    %9131 = vdwg.mxu0
    %9132 = vmatpush.bf16.msra.mxu0 %v4096
    %9133 = vmatpush.bf16.msra.mxu0 %v4088
    %9134 = vmatpush.bf16.msra.mxu0 %v4080
    %9135 = vmatpush.bf16.msra.mxu0 %v4072
    %9136 = vmatpush.bf16.msra.mxu0 %v4064
    %9137 = vmatpush.bf16.msra.mxu0 %v4056
    %9138 = vmatpush.bf16.msra.mxu0 %v4048
    %9139 = vmatpush.bf16.msra.mxu0 %v4040
    %9140 = vmatmul.bf16.gmra.mxu0 %v9092
    %v9141 = vpop.f32.mrf.mxu0
    %v9142 = vadd.f32 %v9129, %v9141
    %v9143 = vpop.f32.mrf.mxu0
    %9144 = vdwg.mxu0
    %9145 = vmatpush.bf16.msra.mxu0 %v4033
    %9146 = vmatpush.bf16.msra.mxu0 %v4025
    %9147 = vmatpush.bf16.msra.mxu0 %v4017
    %9148 = vmatpush.bf16.msra.mxu0 %v4009
    %9149 = vmatpush.bf16.msra.mxu0 %v4001
    %9150 = vmatpush.bf16.msra.mxu0 %v3993
    %9151 = vmatpush.bf16.msra.mxu0 %v3985
    %9152 = vmatpush.bf16.msra.mxu0 %v3977
    %9153 = vmatmul.bf16.gmra.mxu0 %v9091
    %v9154 = vpop.f32.mrf.mxu0
    %v9155 = vadd.f32 0.0, %v9154
    %v9156 = vpop.f32.mrf.mxu0
    %9157 = vdwg.mxu0
    %9158 = vmatpush.bf16.msra.mxu0 %v4097
    %9159 = vmatpush.bf16.msra.mxu0 %v4089
    %9160 = vmatpush.bf16.msra.mxu0 %v4081
    %9161 = vmatpush.bf16.msra.mxu0 %v4073
    %9162 = vmatpush.bf16.msra.mxu0 %v4065
    %9163 = vmatpush.bf16.msra.mxu0 %v4057
    %9164 = vmatpush.bf16.msra.mxu0 %v4049
    %9165 = vmatpush.bf16.msra.mxu0 %v4041
    %9166 = vmatmul.bf16.gmra.mxu0 %v9092
    %v9167 = vpop.f32.mrf.mxu0
    %v9168 = vadd.f32 %v9155, %v9167
    %v9169 = vpop.f32.mrf.mxu0
    %9170 = vdwg.mxu0
    %9171 = vmatpush.bf16.msra.mxu0 %v4034
    %9172 = vmatpush.bf16.msra.mxu0 %v4026
    %9173 = vmatpush.bf16.msra.mxu0 %v4018
    %9174 = vmatpush.bf16.msra.mxu0 %v4010
    %9175 = vmatpush.bf16.msra.mxu0 %v4002
    %9176 = vmatpush.bf16.msra.mxu0 %v3994
    %9177 = vmatpush.bf16.msra.mxu0 %v3986
    %9178 = vmatpush.bf16.msra.mxu0 %v3978
    %9179 = vmatmul.bf16.gmra.mxu0 %v9091
    %v9180 = vpop.f32.mrf.mxu0
    %v9181 = vadd.f32 0.0, %v9180
    %v9182 = vpop.f32.mrf.mxu0
    %9183 = vdwg.mxu0
    %9184 = vmatpush.bf16.msra.mxu0 %v4098
    %9185 = vmatpush.bf16.msra.mxu0 %v4090
    %9186 = vmatpush.bf16.msra.mxu0 %v4082
    %9187 = vmatpush.bf16.msra.mxu0 %v4074
    %9188 = vmatpush.bf16.msra.mxu0 %v4066
    %9189 = vmatpush.bf16.msra.mxu0 %v4058
    %9190 = vmatpush.bf16.msra.mxu0 %v4050
    %9191 = vmatpush.bf16.msra.mxu0 %v4042
    %9192 = vmatmul.bf16.gmra.mxu0 %v9092
    %v9193 = vpop.f32.mrf.mxu0
    %v9194 = vadd.f32 %v9181, %v9193
    %v9195 = vpop.f32.mrf.mxu0
    %9196 = vdwg.mxu0
    %9197 = vmatpush.bf16.msra.mxu0 %v4035
    %9198 = vmatpush.bf16.msra.mxu0 %v4027
    %9199 = vmatpush.bf16.msra.mxu0 %v4019
    %9200 = vmatpush.bf16.msra.mxu0 %v4011
    %9201 = vmatpush.bf16.msra.mxu0 %v4003
    %9202 = vmatpush.bf16.msra.mxu0 %v3995
    %9203 = vmatpush.bf16.msra.mxu0 %v3987
    %9204 = vmatpush.bf16.msra.mxu0 %v3979
    %9205 = vmatmul.bf16.gmra.mxu0 %v9091
    %v9206 = vpop.f32.mrf.mxu0
    %v9207 = vadd.f32 0.0, %v9206
    %v9208 = vpop.f32.mrf.mxu0
    %9209 = vdwg.mxu0
    %9210 = vmatpush.bf16.msra.mxu0 %v4099
    %9211 = vmatpush.bf16.msra.mxu0 %v4091
    %9212 = vmatpush.bf16.msra.mxu0 %v4083
    %9213 = vmatpush.bf16.msra.mxu0 %v4075
    %9214 = vmatpush.bf16.msra.mxu0 %v4067
    %9215 = vmatpush.bf16.msra.mxu0 %v4059
    %9216 = vmatpush.bf16.msra.mxu0 %v4051
    %9217 = vmatpush.bf16.msra.mxu0 %v4043
    %9218 = vmatmul.bf16.gmra.mxu0 %v9092
    %v9219 = vpop.f32.mrf.mxu0
    %v9220 = vadd.f32 %v9207, %v9219
    %v9221 = vpop.f32.mrf.mxu0
    %9222 = vdwg.mxu0
    %9223 = vmatpush.bf16.msra.mxu0 %v4036
    %9224 = vmatpush.bf16.msra.mxu0 %v4028
    %9225 = vmatpush.bf16.msra.mxu0 %v4020
    %9226 = vmatpush.bf16.msra.mxu0 %v4012
    %9227 = vmatpush.bf16.msra.mxu0 %v4004
    %9228 = vmatpush.bf16.msra.mxu0 %v3996
    %9229 = vmatpush.bf16.msra.mxu0 %v3988
    %9230 = vmatpush.bf16.msra.mxu0 %v3980
    %9231 = vmatmul.bf16.gmra.mxu0 %v9091
    %v9232 = vpop.f32.mrf.mxu0
    %v9233 = vadd.f32 0.0, %v9232
    %v9234 = vpop.f32.mrf.mxu0
    %9235 = vdwg.mxu0
    %9236 = vmatpush.bf16.msra.mxu0 %v4100
    %9237 = vmatpush.bf16.msra.mxu0 %v4092
    %9238 = vmatpush.bf16.msra.mxu0 %v4084
    %9239 = vmatpush.bf16.msra.mxu0 %v4076
    %9240 = vmatpush.bf16.msra.mxu0 %v4068
    %9241 = vmatpush.bf16.msra.mxu0 %v4060
    %9242 = vmatpush.bf16.msra.mxu0 %v4052
    %9243 = vmatpush.bf16.msra.mxu0 %v4044
    %9244 = vmatmul.bf16.gmra.mxu0 %v9092
    %v9245 = vpop.f32.mrf.mxu0
    %v9246 = vadd.f32 %v9233, %v9245
    %v9247 = vpop.f32.mrf.mxu0
    %9248 = vdwg.mxu0
    %9249 = vmatpush.bf16.msra.mxu0 %v4037
    %9250 = vmatpush.bf16.msra.mxu0 %v4029
    %9251 = vmatpush.bf16.msra.mxu0 %v4021
    %9252 = vmatpush.bf16.msra.mxu0 %v4013
    %9253 = vmatpush.bf16.msra.mxu0 %v4005
    %9254 = vmatpush.bf16.msra.mxu0 %v3997
    %9255 = vmatpush.bf16.msra.mxu0 %v3989
    %9256 = vmatpush.bf16.msra.mxu0 %v3981
    %9257 = vmatmul.bf16.gmra.mxu0 %v9091
    %v9258 = vpop.f32.mrf.mxu0
    %v9259 = vadd.f32 0.0, %v9258
    %v9260 = vpop.f32.mrf.mxu0
    %9261 = vdwg.mxu0
    %9262 = vmatpush.bf16.msra.mxu0 %v4101
    %9263 = vmatpush.bf16.msra.mxu0 %v4093
    %9264 = vmatpush.bf16.msra.mxu0 %v4085
    %9265 = vmatpush.bf16.msra.mxu0 %v4077
    %9266 = vmatpush.bf16.msra.mxu0 %v4069
    %9267 = vmatpush.bf16.msra.mxu0 %v4061
    %9268 = vmatpush.bf16.msra.mxu0 %v4053
    %9269 = vmatpush.bf16.msra.mxu0 %v4045
    %9270 = vmatmul.bf16.gmra.mxu0 %v9092
    %v9271 = vpop.f32.mrf.mxu0
    %v9272 = vadd.f32 %v9259, %v9271
    %v9273 = vpop.f32.mrf.mxu0
    %9274 = vdwg.mxu0
    %9275 = vmatpush.bf16.msra.mxu0 %v4038
    %9276 = vmatpush.bf16.msra.mxu0 %v4030
    %9277 = vmatpush.bf16.msra.mxu0 %v4022
    %9278 = vmatpush.bf16.msra.mxu0 %v4014
    %9279 = vmatpush.bf16.msra.mxu0 %v4006
    %9280 = vmatpush.bf16.msra.mxu0 %v3998
    %9281 = vmatpush.bf16.msra.mxu0 %v3990
    %9282 = vmatpush.bf16.msra.mxu0 %v3982
    %9283 = vmatmul.bf16.gmra.mxu0 %v9091
    %v9284 = vpop.f32.mrf.mxu0
    %v9285 = vadd.f32 0.0, %v9284
    %v9286 = vpop.f32.mrf.mxu0
    %9287 = vdwg.mxu0
    %9288 = vmatpush.bf16.msra.mxu0 %v4102
    %9289 = vmatpush.bf16.msra.mxu0 %v4094
    %9290 = vmatpush.bf16.msra.mxu0 %v4086
    %9291 = vmatpush.bf16.msra.mxu0 %v4078
    %9292 = vmatpush.bf16.msra.mxu0 %v4070
    %9293 = vmatpush.bf16.msra.mxu0 %v4062
    %9294 = vmatpush.bf16.msra.mxu0 %v4054
    %9295 = vmatpush.bf16.msra.mxu0 %v4046
    %9296 = vmatmul.bf16.gmra.mxu0 %v9092
    %v9297 = vpop.f32.mrf.mxu0
    %v9298 = vadd.f32 %v9285, %v9297
    %v9299 = vpop.f32.mrf.mxu0
    %9300 = vdwg.mxu0
    %v9309 = vrot.slane %v9116, 6
    %v9310 = vrot.slane %v9142, 6
    %v9311 = vrot.slane %v9168, 6
    %v9312 = vrot.slane %v9194, 6
    %v9313 = vrot.slane %v9220, 6
    %v9314 = vrot.slane %v9246, 6
    %v9315 = vrot.slane %v9272, 6
    %v9316 = vrot.slane %v9298, 6
    %v9325 = vadd.f32 %v8772, %v9309
    %v9326 = vadd.f32 %v8798, %v9310
    %v9327 = vadd.f32 %v8824, %v9311
    %v9328 = vadd.f32 %v8850, %v9312
    %v9329 = vadd.f32 %v8876, %v9313
    %v9330 = vadd.f32 %v8902, %v9314
    %v9331 = vadd.f32 %v8928, %v9315
    %v9332 = vadd.f32 %v8954, %v9316
    %v9333 = vxor.u32 %v9325, 2147483648
    %v9334 = vxor.u32 %v9326, 2147483648
    %v9335 = vmul.f32 %v9333, 1.442695
    %v9336 = vpow.pop %v9335
    %v9337 = vmul.f32 %v9334, 1.442695
    %v9338 = vpow.pop %v9337
    %v9339 = vadd.f32 %v9336, 1.0
    %v9340 = vadd.f32 %v9338, 1.0
    %v9341 = vrcp.pop %v9339
    %v9342 = vmul.f32 %v9339, %v9341
    %v9343 = vsub.f32 1.0, %v9342
    %v9344 = vmul.f32 %v9341, %v9343
    %v9345 = vadd.f32 %v9341, %v9344
    %vm9346 = vweird.f32 %v9339
    %vm9347 = vweird.f32 %v9341
    %vm9348 = vmor %vm9346, %vm9347
    %v9349 = vsel %vm9348, %v9341, %v9345
    %v9350 = vand.u32 2147483647, %v9339
    %vm9351 = vcmp.eq.f32.partialorder %v9350, 8.507059e+37
    %v9352 = vand.u32 %v9339, 2147483648
    %v9353 = vor.u32 1.1754944e-38, %v9352
    %v9354 = vsel %vm9351, %v9353, %v9349
    %v9355 = vmul.f32 1.0, %v9354
    %v9356 = vrcp.pop %v9340
    %v9357 = vmul.f32 %v9340, %v9356
    %v9358 = vsub.f32 1.0, %v9357
    %v9359 = vmul.f32 %v9356, %v9358
    %v9360 = vadd.f32 %v9356, %v9359
    %vm9361 = vweird.f32 %v9340
    %vm9362 = vweird.f32 %v9356
    %vm9363 = vmor %vm9361, %vm9362
    %v9364 = vsel %vm9363, %v9356, %v9360
    %v9365 = vand.u32 2147483647, %v9340
    %vm9366 = vcmp.eq.f32.partialorder %v9365, 8.507059e+37
    %v9367 = vand.u32 %v9340, 2147483648
    %v9368 = vor.u32 1.1754944e-38, %v9367
    %v9369 = vsel %vm9366, %v9368, %v9364
    %v9370 = vmul.f32 1.0, %v9369
    %v9371 = vxor.u32 %v9327, 2147483648
    %v9372 = vxor.u32 %v9328, 2147483648
    %v9373 = vmul.f32 %v9371, 1.442695
    %v9374 = vpow.pop %v9373
    %v9375 = vmul.f32 %v9372, 1.442695
    %v9376 = vpow.pop %v9375
    %v9377 = vadd.f32 %v9374, 1.0
    %v9378 = vadd.f32 %v9376, 1.0
    %v9379 = vrcp.pop %v9377
    %v9380 = vmul.f32 %v9377, %v9379
    %v9381 = vsub.f32 1.0, %v9380
    %v9382 = vmul.f32 %v9379, %v9381
    %v9383 = vadd.f32 %v9379, %v9382
    %vm9384 = vweird.f32 %v9377
    %vm9385 = vweird.f32 %v9379
    %vm9386 = vmor %vm9384, %vm9385
    %v9387 = vsel %vm9386, %v9379, %v9383
    %v9388 = vand.u32 2147483647, %v9377
    %vm9389 = vcmp.eq.f32.partialorder %v9388, 8.507059e+37
    %v9390 = vand.u32 %v9377, 2147483648
    %v9391 = vor.u32 1.1754944e-38, %v9390
    %v9392 = vsel %vm9389, %v9391, %v9387
    %v9393 = vmul.f32 1.0, %v9392
    %v9394 = vrcp.pop %v9378
    %v9395 = vmul.f32 %v9378, %v9394
    %v9396 = vsub.f32 1.0, %v9395
    %v9397 = vmul.f32 %v9394, %v9396
    %v9398 = vadd.f32 %v9394, %v9397
    %vm9399 = vweird.f32 %v9378
    %vm9400 = vweird.f32 %v9394
    %vm9401 = vmor %vm9399, %vm9400
    %v9402 = vsel %vm9401, %v9394, %v9398
    %v9403 = vand.u32 2147483647, %v9378
    %vm9404 = vcmp.eq.f32.partialorder %v9403, 8.507059e+37
    %v9405 = vand.u32 %v9378, 2147483648
    %v9406 = vor.u32 1.1754944e-38, %v9405
    %v9407 = vsel %vm9404, %v9406, %v9402
    %v9408 = vmul.f32 1.0, %v9407
    %v9409 = vtanh.pop %v9329
    %v9410 = vtanh.pop %v9330
    %v9411 = vxor.u32 %v9331, 2147483648
    %v9412 = vxor.u32 %v9332, 2147483648
    %v9413 = vmul.f32 %v9411, 1.442695
    %v9414 = vpow.pop %v9413
    %v9415 = vmul.f32 %v9412, 1.442695
    %v9416 = vpow.pop %v9415
    %v9417 = vadd.f32 %v9414, 1.0
    %v9418 = vadd.f32 %v9416, 1.0
    %v9419 = vrcp.pop %v9417
    %v9420 = vmul.f32 %v9417, %v9419
    %v9421 = vsub.f32 1.0, %v9420
    %v9422 = vmul.f32 %v9419, %v9421
    %v9423 = vadd.f32 %v9419, %v9422
    %vm9424 = vweird.f32 %v9417
    %vm9425 = vweird.f32 %v9419
    %vm9426 = vmor %vm9424, %vm9425
    %v9427 = vsel %vm9426, %v9419, %v9423
    %v9428 = vand.u32 2147483647, %v9417
    %vm9429 = vcmp.eq.f32.partialorder %v9428, 8.507059e+37
    %v9430 = vand.u32 %v9417, 2147483648
    %v9431 = vor.u32 1.1754944e-38, %v9430
    %v9432 = vsel %vm9429, %v9431, %v9427
    %v9433 = vmul.f32 1.0, %v9432
    %v9434 = vrcp.pop %v9418
    %v9435 = vmul.f32 %v9418, %v9434
    %v9436 = vsub.f32 1.0, %v9435
    %v9437 = vmul.f32 %v9434, %v9436
    %v9438 = vadd.f32 %v9434, %v9437
    %vm9439 = vweird.f32 %v9418
    %vm9440 = vweird.f32 %v9434
    %vm9441 = vmor %vm9439, %vm9440
    %v9442 = vsel %vm9441, %v9434, %v9438
    %v9443 = vand.u32 2147483647, %v9418
    %vm9444 = vcmp.eq.f32.partialorder %v9443, 8.507059e+37
    %v9445 = vand.u32 %v9418, 2147483648
    %v9446 = vor.u32 1.1754944e-38, %v9445
    %v9447 = vsel %vm9444, %v9446, %v9442
    %v9448 = vmul.f32 1.0, %v9447
    %v9451 = vrot.slane %v9085, 6
    %v9452 = vrot.slane %v9086, 6
    %v9455 = vmul.f32 %v9393, %v9451
    %v9456 = vmul.f32 %v9408, %v9452
    %v9457 = vmul.f32 %v9355, %v9409
    %v9458 = vmul.f32 %v9370, %v9410
    %v9459 = vadd.f32 %v9455, %v9457
    %v9460 = vadd.f32 %v9456, %v9458
    %v9461 = vtanh.pop %v9459
    %v9462 = vtanh.pop %v9460
    %v9463 = vmul.f32 %v9433, %v9461
    %v9464 = vmul.f32 %v9448, %v9462
    %v9467 = vrot.slane %v9463, 6
    %v9468 = vrot.slane %v9464, 6
    %v9472 = vpack.c.bf16 %v8745, %v8745
    %v9473 = vpack.c.bf16 %v8746, %v8746
    %v9474 = vpack.c.bf16 %v9467, %v9467
    %v9475 = vpack.c.bf16 %v9468, %v9468
    %v9476 = vpack.c.bf16 %v4958, %v4958
    %v9482 = vrot.slane %v9472, 2
    %v9483 = vrot.slane %v9473, 2
    %v9484 = vrot.slane %v9474, 2
    %v9485 = vrot.slane %v9475, 2
    %v9486 = vrot.slane %v9476, 2
    %9492 = vmatpush.bf16.msra.mxu0 %v5335
    %9493 = vmatpush.bf16.msra.mxu0 %v5333
    %9494 = vmatpush.bf16.msra.mxu0 %v5331
    %9495 = vmatpush.bf16.msra.mxu0 %v5329
    %9496 = vmatpush.bf16.msra.mxu0 %v5327
    %9497 = vmatpush.bf16.msra.mxu0 %v5325
    %9498 = vmatpush.bf16.msra.mxu0 %v5323
    %9499 = vmatpush.bf16.msra.mxu0 %v5321
    %9500 = vmatmul.bf16.gmra.mxu0 %v9482
    %v9501 = vpop.f32.mrf.mxu0
    %v9502 = vadd.f32 %v5077, %v9501
    %v9503 = vpop.f32.mrf.mxu0
    %9504 = vdwg.mxu0
    %9505 = vmatpush.bf16.msra.mxu0 %v5351
    %9506 = vmatpush.bf16.msra.mxu0 %v5349
    %9507 = vmatpush.bf16.msra.mxu0 %v5347
    %9508 = vmatpush.bf16.msra.mxu0 %v5345
    %9509 = vmatpush.bf16.msra.mxu0 %v5343
    %9510 = vmatpush.bf16.msra.mxu0 %v5341
    %9511 = vmatpush.bf16.msra.mxu0 %v5339
    %9512 = vmatpush.bf16.msra.mxu0 %v5337
    %9513 = vmatmul.bf16.gmra.mxu0 %v9483
    %v9514 = vpop.f32.mrf.mxu0
    %v9515 = vadd.f32 %v9502, %v9514
    %v9516 = vpop.f32.mrf.mxu0
    %9517 = vdwg.mxu0
    %9518 = vmatpush.bf16.msra.mxu0 %v5367
    %9519 = vmatpush.bf16.msra.mxu0 %v5365
    %9520 = vmatpush.bf16.msra.mxu0 %v5363
    %9521 = vmatpush.bf16.msra.mxu0 %v5361
    %9522 = vmatpush.bf16.msra.mxu0 %v5359
    %9523 = vmatpush.bf16.msra.mxu0 %v5357
    %9524 = vmatpush.bf16.msra.mxu0 %v5355
    %9525 = vmatpush.bf16.msra.mxu0 %v5353
    %9526 = vmatmul.bf16.gmra.mxu0 %v9484
    %v9527 = vpop.f32.mrf.mxu0
    %v9528 = vadd.f32 %v9515, %v9527
    %v9529 = vpop.f32.mrf.mxu0
    %9530 = vdwg.mxu0
    %9531 = vmatpush.bf16.msra.mxu0 %v5383
    %9532 = vmatpush.bf16.msra.mxu0 %v5381
    %9533 = vmatpush.bf16.msra.mxu0 %v5379
    %9534 = vmatpush.bf16.msra.mxu0 %v5377
    %9535 = vmatpush.bf16.msra.mxu0 %v5375
    %9536 = vmatpush.bf16.msra.mxu0 %v5373
    %9537 = vmatpush.bf16.msra.mxu0 %v5371
    %9538 = vmatpush.bf16.msra.mxu0 %v5369
    %9539 = vmatmul.bf16.gmra.mxu0 %v9485
    %v9540 = vpop.f32.mrf.mxu0
    %v9541 = vadd.f32 %v9528, %v9540
    %v9542 = vpop.f32.mrf.mxu0
    %9543 = vdwg.mxu0
    %9544 = vmatpush.bf16.msra.mxu0 %v5399
    %9545 = vmatpush.bf16.msra.mxu0 %v5397
    %9546 = vmatpush.bf16.msra.mxu0 %v5395
    %9547 = vmatpush.bf16.msra.mxu0 %v5393
    %9548 = vmatpush.bf16.msra.mxu0 %v5391
    %9549 = vmatpush.bf16.msra.mxu0 %v5389
    %9550 = vmatpush.bf16.msra.mxu0 %v5387
    %9551 = vmatpush.bf16.msra.mxu0 %v5385
    %9552 = vmatmul.bf16.gmra.mxu0 %v9486
    %v9553 = vpop.f32.mrf.mxu0
    %v9554 = vadd.f32 %v9541, %v9553
    %v9555 = vpop.f32.mrf.mxu0
    %9556 = vdwg.mxu0
    %9557 = vmatpush.bf16.msra.mxu0 %v5336
    %9558 = vmatpush.bf16.msra.mxu0 %v5334
    %9559 = vmatpush.bf16.msra.mxu0 %v5332
    %9560 = vmatpush.bf16.msra.mxu0 %v5330
    %9561 = vmatpush.bf16.msra.mxu0 %v5328
    %9562 = vmatpush.bf16.msra.mxu0 %v5326
    %9563 = vmatpush.bf16.msra.mxu0 %v5324
    %9564 = vmatpush.bf16.msra.mxu0 %v5322
    %9565 = vmatmul.bf16.gmra.mxu0 %v9482
    %v9566 = vpop.f32.mrf.mxu0
    %v9567 = vadd.f32 %v5078, %v9566
    %v9568 = vpop.f32.mrf.mxu0
    %9569 = vdwg.mxu0
    %9570 = vmatpush.bf16.msra.mxu0 %v5352
    %9571 = vmatpush.bf16.msra.mxu0 %v5350
    %9572 = vmatpush.bf16.msra.mxu0 %v5348
    %9573 = vmatpush.bf16.msra.mxu0 %v5346
    %9574 = vmatpush.bf16.msra.mxu0 %v5344
    %9575 = vmatpush.bf16.msra.mxu0 %v5342
    %9576 = vmatpush.bf16.msra.mxu0 %v5340
    %9577 = vmatpush.bf16.msra.mxu0 %v5338
    %9578 = vmatmul.bf16.gmra.mxu0 %v9483
    %v9579 = vpop.f32.mrf.mxu0
    %v9580 = vadd.f32 %v9567, %v9579
    %v9581 = vpop.f32.mrf.mxu0
    %9582 = vdwg.mxu0
    %9583 = vmatpush.bf16.msra.mxu0 %v5368
    %9584 = vmatpush.bf16.msra.mxu0 %v5366
    %9585 = vmatpush.bf16.msra.mxu0 %v5364
    %9586 = vmatpush.bf16.msra.mxu0 %v5362
    %9587 = vmatpush.bf16.msra.mxu0 %v5360
    %9588 = vmatpush.bf16.msra.mxu0 %v5358
    %9589 = vmatpush.bf16.msra.mxu0 %v5356
    %9590 = vmatpush.bf16.msra.mxu0 %v5354
    %9591 = vmatmul.bf16.gmra.mxu0 %v9484
    %v9592 = vpop.f32.mrf.mxu0
    %v9593 = vadd.f32 %v9580, %v9592
    %v9594 = vpop.f32.mrf.mxu0
    %9595 = vdwg.mxu0
    %9596 = vmatpush.bf16.msra.mxu0 %v5384
    %9597 = vmatpush.bf16.msra.mxu0 %v5382
    %9598 = vmatpush.bf16.msra.mxu0 %v5380
    %9599 = vmatpush.bf16.msra.mxu0 %v5378
    %9600 = vmatpush.bf16.msra.mxu0 %v5376
    %9601 = vmatpush.bf16.msra.mxu0 %v5374
    %9602 = vmatpush.bf16.msra.mxu0 %v5372
    %9603 = vmatpush.bf16.msra.mxu0 %v5370
    %9604 = vmatmul.bf16.gmra.mxu0 %v9485
    %v9605 = vpop.f32.mrf.mxu0
    %v9606 = vadd.f32 %v9593, %v9605
    %v9607 = vpop.f32.mrf.mxu0
    %9608 = vdwg.mxu0
    %9609 = vmatpush.bf16.msra.mxu0 %v5400
    %9610 = vmatpush.bf16.msra.mxu0 %v5398
    %9611 = vmatpush.bf16.msra.mxu0 %v5396
    %9612 = vmatpush.bf16.msra.mxu0 %v5394
    %9613 = vmatpush.bf16.msra.mxu0 %v5392
    %9614 = vmatpush.bf16.msra.mxu0 %v5390
    %9615 = vmatpush.bf16.msra.mxu0 %v5388
    %9616 = vmatpush.bf16.msra.mxu0 %v5386
    %9617 = vmatmul.bf16.gmra.mxu0 %v9486
    %v9618 = vpop.f32.mrf.mxu0
    %v9619 = vadd.f32 %v9606, %v9618
    %v9620 = vpop.f32.mrf.mxu0
    %9621 = vdwg.mxu0
    %vm9622 = vcmp.gt.f32.partialorder %v9554, 0.0
    %vm9623 = vcmp.gt.f32.partialorder %v9619, 0.0
    %v9624 = vmin.f32 %v9554, 0.0
    %v9625 = vmin.f32 %v9619, 0.0
    %v9626 = vmul.f32 %v9624, 1.442695
    %v9627 = vpow.pop %v9626
    %v9628 = vmul.f32 %v9625, 1.442695
    %v9629 = vpow.pop %v9628
    %v9630 = vsub.f32 %v9627, 1.0
    %v9631 = vsub.f32 %v9629, 1.0
    %v9632 = vsel %vm9622, %v9554, %v9630
    %v9633 = vsel %vm9623, %v9619, %v9631
    %v9634 = vpack.c.bf16 %v9632, %v9632
    %v9635 = vpack.c.bf16 %v9633, %v9633
    %9636 = vmatpush.bf16.msra.mxu0 %v5773
    %9637 = vmatpush.bf16.msra.mxu0 %v5771
    %9638 = vmatpush.bf16.msra.mxu0 %v5769
    %9639 = vmatpush.bf16.msra.mxu0 %v5767
    %9640 = vmatpush.bf16.msra.mxu0 %v5765
    %9641 = vmatpush.bf16.msra.mxu0 %v5763
    %9642 = vmatpush.bf16.msra.mxu0 %v5761
    %9643 = vmatpush.bf16.msra.mxu0 %v5759
    %9644 = vmatmul.bf16.gmra.mxu0 %v9634
    %v9645 = vpop.f32.mrf.mxu0
    %v9646 = vadd.f32 %v5659, %v9645
    %v9647 = vpop.f32.mrf.mxu0
    %9648 = vdwg.mxu0
    %9649 = vmatpush.bf16.msra.mxu0 %v5789
    %9650 = vmatpush.bf16.msra.mxu0 %v5787
    %9651 = vmatpush.bf16.msra.mxu0 %v5785
    %9652 = vmatpush.bf16.msra.mxu0 %v5783
    %9653 = vmatpush.bf16.msra.mxu0 %v5781
    %9654 = vmatpush.bf16.msra.mxu0 %v5779
    %9655 = vmatpush.bf16.msra.mxu0 %v5777
    %9656 = vmatpush.bf16.msra.mxu0 %v5775
    %9657 = vmatmul.bf16.gmra.mxu0 %v9635
    %v9658 = vpop.f32.mrf.mxu0
    %v9659 = vadd.f32 %v9646, %v9658
    %v9660 = vpop.f32.mrf.mxu0
    %9661 = vdwg.mxu0
    %9662 = vmatpush.bf16.msra.mxu0 %v5774
    %9663 = vmatpush.bf16.msra.mxu0 %v5772
    %9664 = vmatpush.bf16.msra.mxu0 %v5770
    %9665 = vmatpush.bf16.msra.mxu0 %v5768
    %9666 = vmatpush.bf16.msra.mxu0 %v5766
    %9667 = vmatpush.bf16.msra.mxu0 %v5764
    %9668 = vmatpush.bf16.msra.mxu0 %v5762
    %9669 = vmatpush.bf16.msra.mxu0 %v5760
    %9670 = vmatmul.bf16.gmra.mxu0 %v9634
    %v9671 = vpop.f32.mrf.mxu0
    %v9672 = vadd.f32 %v5660, %v9671
    %v9673 = vpop.f32.mrf.mxu0
    %9674 = vdwg.mxu0
    %9675 = vmatpush.bf16.msra.mxu0 %v5790
    %9676 = vmatpush.bf16.msra.mxu0 %v5788
    %9677 = vmatpush.bf16.msra.mxu0 %v5786
    %9678 = vmatpush.bf16.msra.mxu0 %v5784
    %9679 = vmatpush.bf16.msra.mxu0 %v5782
    %9680 = vmatpush.bf16.msra.mxu0 %v5780
    %9681 = vmatpush.bf16.msra.mxu0 %v5778
    %9682 = vmatpush.bf16.msra.mxu0 %v5776
    %9683 = vmatmul.bf16.gmra.mxu0 %v9635
    %v9684 = vpop.f32.mrf.mxu0
    %v9685 = vadd.f32 %v9672, %v9684
    %v9686 = vpop.f32.mrf.mxu0
    %9687 = vdwg.mxu0
    %vm9688 = vcmp.gt.f32.partialorder %v9659, 0.0
    %vm9689 = vcmp.gt.f32.partialorder %v9685, 0.0
    %v9690 = vmin.f32 %v9659, 0.0
    %v9691 = vmin.f32 %v9685, 0.0
    %v9692 = vmul.f32 %v9690, 1.442695
    %v9693 = vpow.pop %v9692
    %v9694 = vmul.f32 %v9691, 1.442695
    %v9695 = vpow.pop %v9694
    %v9696 = vsub.f32 %v9693, 1.0
    %v9697 = vsub.f32 %v9695, 1.0
    %v9698 = vsel %vm9688, %v9659, %v9696
    %v9699 = vsel %vm9689, %v9685, %v9697
    %v9700 = vpack.c.bf16 %v9698, %v9698
    %v9701 = vpack.c.bf16 %v9699, %v9699
    %v9702 = vld [vmem:[#allocation17] sm:$0xff]
    %v9703 = vld [vmem:[#allocation17 + $0x8] sm:$0xff]
    %v9704 = vld [vmem:[#allocation17 + $0x10] sm:$0xff]
    %v9705 = vld [vmem:[#allocation17 + $0x18] sm:$0xff]
    %v9706 = vld [vmem:[#allocation17 + $0x20] sm:$0xff]
    %v9707 = vld [vmem:[#allocation17 + $0x28] sm:$0xff]
    %v9708 = vld [vmem:[#allocation17 + $0x30] sm:$0xff]
    %v9709 = vld [vmem:[#allocation17 + $0x38] sm:$0xff]
    %v9710 = vld [vmem:[#allocation17 + $0x40] sm:$0xff]
    %v9711 = vld [vmem:[#allocation17 + $0x48] sm:$0xff]
    %v9712 = vld [vmem:[#allocation17 + $0x50] sm:$0xff]
    %v9713 = vld [vmem:[#allocation17 + $0x58] sm:$0xff]
    %v9714 = vld [vmem:[#allocation17 + $0x60] sm:$0xff]
    %v9715 = vld [vmem:[#allocation17 + $0x68] sm:$0xff]
    %v9716 = vld [vmem:[#allocation17 + $0x70] sm:$0xff]
    %v9717 = vld [vmem:[#allocation17 + $0x78] sm:$0xff]
    %v9718 = vld [vmem:[#allocation17 + $0x80] sm:$0xff]
    %v9719 = vld [vmem:[#allocation17 + $0x88] sm:$0xff]
    %v9720 = vld [vmem:[#allocation17 + $0x90] sm:$0xff]
    %v9721 = vld [vmem:[#allocation17 + $0x98] sm:$0xff]
    %v9722 = vld [vmem:[#allocation17 + $0xa0] sm:$0xff]
    %v9723 = vld [vmem:[#allocation17 + $0xa8] sm:$0xff]
    %v9724 = vld [vmem:[#allocation17 + $0xb0] sm:$0xff]
    %v9725 = vld [vmem:[#allocation17 + $0xb8] sm:$0xff]
    %v9726 = vld [vmem:[#allocation17 + $0xc0] sm:$0xff]
    %v9727 = vld [vmem:[#allocation17 + $0xc8] sm:$0xff]
    %v9728 = vld [vmem:[#allocation17 + $0xd0] sm:$0xff]
    %v9729 = vld [vmem:[#allocation17 + $0xd8] sm:$0xff]
    %v9730 = vld [vmem:[#allocation17 + $0xe0] sm:$0xff]
    %v9731 = vld [vmem:[#allocation17 + $0xe8] sm:$0xff]
    %v9732 = vld [vmem:[#allocation17 + $0xf0] sm:$0xff]
    %v9733 = vld [vmem:[#allocation17 + $0xf8] sm:$0xff]
    %v9734 = vld [vmem:[%s15] sm:$0x3]
    %v9736 = vperm.slane %v9734, 0
    %v9737 = vperm.slane %v9734, 1
    %v9772 = vunpack.c.l.b16 %v9702
    %v9773 = vunpack.c.h.b16 %v9702
    %v9774 = vunpack.c.l.b16 %v9703
    %v9775 = vunpack.c.h.b16 %v9703
    %v9776 = vunpack.c.l.b16 %v9704
    %v9777 = vunpack.c.h.b16 %v9704
    %v9778 = vunpack.c.l.b16 %v9705
    %v9779 = vunpack.c.h.b16 %v9705
    %v9780 = vunpack.c.l.b16 %v9706
    %v9781 = vunpack.c.h.b16 %v9706
    %v9782 = vunpack.c.l.b16 %v9707
    %v9783 = vunpack.c.h.b16 %v9707
    %v9784 = vunpack.c.l.b16 %v9708
    %v9785 = vunpack.c.h.b16 %v9708
    %v9786 = vunpack.c.l.b16 %v9709
    %v9787 = vunpack.c.h.b16 %v9709
    %v9788 = vunpack.c.l.b16 %v9710
    %v9789 = vunpack.c.h.b16 %v9710
    %v9790 = vunpack.c.l.b16 %v9711
    %v9791 = vunpack.c.h.b16 %v9711
    %v9792 = vunpack.c.l.b16 %v9712
    %v9793 = vunpack.c.h.b16 %v9712
    %v9794 = vunpack.c.l.b16 %v9713
    %v9795 = vunpack.c.h.b16 %v9713
    %v9796 = vunpack.c.l.b16 %v9714
    %v9797 = vunpack.c.h.b16 %v9714
    %v9798 = vunpack.c.l.b16 %v9715
    %v9799 = vunpack.c.h.b16 %v9715
    %v9800 = vunpack.c.l.b16 %v9716
    %v9801 = vunpack.c.h.b16 %v9716
    %v9802 = vunpack.c.l.b16 %v9717
    %v9803 = vunpack.c.h.b16 %v9717
    %v9804 = vunpack.c.l.b16 %v9718
    %v9805 = vunpack.c.h.b16 %v9718
    %v9806 = vunpack.c.l.b16 %v9719
    %v9807 = vunpack.c.h.b16 %v9719
    %v9808 = vunpack.c.l.b16 %v9720
    %v9809 = vunpack.c.h.b16 %v9720
    %v9810 = vunpack.c.l.b16 %v9721
    %v9811 = vunpack.c.h.b16 %v9721
    %v9812 = vunpack.c.l.b16 %v9722
    %v9813 = vunpack.c.h.b16 %v9722
    %v9814 = vunpack.c.l.b16 %v9723
    %v9815 = vunpack.c.h.b16 %v9723
    %v9816 = vunpack.c.l.b16 %v9724
    %v9817 = vunpack.c.h.b16 %v9724
    %v9818 = vunpack.c.l.b16 %v9725
    %v9819 = vunpack.c.h.b16 %v9725
    %v9820 = vunpack.c.l.b16 %v9726
    %v9821 = vunpack.c.h.b16 %v9726
    %v9822 = vunpack.c.l.b16 %v9727
    %v9823 = vunpack.c.h.b16 %v9727
    %v9824 = vunpack.c.l.b16 %v9728
    %v9825 = vunpack.c.h.b16 %v9728
    %v9826 = vunpack.c.l.b16 %v9729
    %v9827 = vunpack.c.h.b16 %v9729
    %v9828 = vunpack.c.l.b16 %v9730
    %v9829 = vunpack.c.h.b16 %v9730
    %v9830 = vunpack.c.l.b16 %v9731
    %v9831 = vunpack.c.h.b16 %v9731
    %v9832 = vunpack.c.l.b16 %v9732
    %v9833 = vunpack.c.h.b16 %v9732
    %v9834 = vunpack.c.l.b16 %v9733
    %v9835 = vunpack.c.h.b16 %v9733
    %v9836 = vpack.c.b16 %v9774, %v9772
    %v9837 = vpack.c.b16 %v9775, %v9773
    %v9838 = vpack.c.b16 %v9778, %v9776
    %v9839 = vpack.c.b16 %v9779, %v9777
    %v9840 = vpack.c.b16 %v9782, %v9780
    %v9841 = vpack.c.b16 %v9783, %v9781
    %v9842 = vpack.c.b16 %v9786, %v9784
    %v9843 = vpack.c.b16 %v9787, %v9785
    %v9844 = vpack.c.b16 %v9790, %v9788
    %v9845 = vpack.c.b16 %v9791, %v9789
    %v9846 = vpack.c.b16 %v9794, %v9792
    %v9847 = vpack.c.b16 %v9795, %v9793
    %v9848 = vpack.c.b16 %v9798, %v9796
    %v9849 = vpack.c.b16 %v9799, %v9797
    %v9850 = vpack.c.b16 %v9802, %v9800
    %v9851 = vpack.c.b16 %v9803, %v9801
    %v9852 = vpack.c.b16 %v9806, %v9804
    %v9853 = vpack.c.b16 %v9807, %v9805
    %v9854 = vpack.c.b16 %v9810, %v9808
    %v9855 = vpack.c.b16 %v9811, %v9809
    %v9856 = vpack.c.b16 %v9814, %v9812
    %v9857 = vpack.c.b16 %v9815, %v9813
    %v9858 = vpack.c.b16 %v9818, %v9816
    %v9859 = vpack.c.b16 %v9819, %v9817
    %v9860 = vpack.c.b16 %v9822, %v9820
    %v9861 = vpack.c.b16 %v9823, %v9821
    %v9862 = vpack.c.b16 %v9826, %v9824
    %v9863 = vpack.c.b16 %v9827, %v9825
    %v9864 = vpack.c.b16 %v9830, %v9828
    %v9865 = vpack.c.b16 %v9831, %v9829
    %v9866 = vpack.c.b16 %v9834, %v9832
    %v9867 = vpack.c.b16 %v9835, %v9833
    %9900 = vmatpush.bf16.msra.mxu0 %v9850
    %9901 = vmatpush.bf16.msra.mxu0 %v9848
    %9902 = vmatpush.bf16.msra.mxu0 %v9846
    %9903 = vmatpush.bf16.msra.mxu0 %v9844
    %9904 = vmatpush.bf16.msra.mxu0 %v9842
    %9905 = vmatpush.bf16.msra.mxu0 %v9840
    %9906 = vmatpush.bf16.msra.mxu0 %v9838
    %9907 = vmatpush.bf16.msra.mxu0 %v9836
    %9908 = vmatmul.bf16.gmra.mxu0 %v9700
    %v9909 = vpop.f32.mrf.mxu0
    %v9910 = vadd.f32 %v9736, %v9909
    %v9911 = vpop.f32.mrf.mxu0
    %9912 = vdwg.mxu0
    %9913 = vmatpush.bf16.msra.mxu0 %v9866
    %9914 = vmatpush.bf16.msra.mxu0 %v9864
    %9915 = vmatpush.bf16.msra.mxu0 %v9862
    %9916 = vmatpush.bf16.msra.mxu0 %v9860
    %9917 = vmatpush.bf16.msra.mxu0 %v9858
    %9918 = vmatpush.bf16.msra.mxu0 %v9856
    %9919 = vmatpush.bf16.msra.mxu0 %v9854
    %9920 = vmatpush.bf16.msra.mxu0 %v9852
    %9921 = vmatmul.bf16.gmra.mxu0 %v9701
    %v9922 = vpop.f32.mrf.mxu0
    %v9923 = vadd.f32 %v9910, %v9922
    %v9924 = vpop.f32.mrf.mxu0
    %9925 = vdwg.mxu0
    %9926 = vmatpush.bf16.msra.mxu0 %v9851
    %9927 = vmatpush.bf16.msra.mxu0 %v9849
    %9928 = vmatpush.bf16.msra.mxu0 %v9847
    %9929 = vmatpush.bf16.msra.mxu0 %v9845
    %9930 = vmatpush.bf16.msra.mxu0 %v9843
    %9931 = vmatpush.bf16.msra.mxu0 %v9841
    %9932 = vmatpush.bf16.msra.mxu0 %v9839
    %9933 = vmatpush.bf16.msra.mxu0 %v9837
    %9934 = vmatmul.bf16.gmra.mxu0 %v9700
    %v9935 = vpop.f32.mrf.mxu0
    %v9936 = vadd.f32 %v9737, %v9935
    %v9937 = vpop.f32.mrf.mxu0
    %9938 = vdwg.mxu0
    %9939 = vmatpush.bf16.msra.mxu0 %v9867
    %9940 = vmatpush.bf16.msra.mxu0 %v9865
    %9941 = vmatpush.bf16.msra.mxu0 %v9863
    %9942 = vmatpush.bf16.msra.mxu0 %v9861
    %9943 = vmatpush.bf16.msra.mxu0 %v9859
    %9944 = vmatpush.bf16.msra.mxu0 %v9857
    %9945 = vmatpush.bf16.msra.mxu0 %v9855
    %9946 = vmatpush.bf16.msra.mxu0 %v9853
    %9947 = vmatmul.bf16.gmra.mxu0 %v9701
    %v9948 = vpop.f32.mrf.mxu0
    %v9949 = vadd.f32 %v9936, %v9948
    %v9950 = vpop.f32.mrf.mxu0
    %9951 = vdwg.mxu0
    %vm9952 = vcmp.gt.f32.partialorder %v9923, 0.0
    %vm9953 = vcmp.gt.f32.partialorder %v9949, 0.0
    %v9954 = vmin.f32 %v9923, 0.0
    %v9955 = vmin.f32 %v9949, 0.0
    %v9956 = vmul.f32 %v9954, 1.442695
    %v9957 = vpow.pop %v9956
    %v9958 = vmul.f32 %v9955, 1.442695
    %v9959 = vpow.pop %v9958
    %v9960 = vsub.f32 %v9957, 1.0
    %v9961 = vsub.f32 %v9959, 1.0
    %v9962 = vsel %vm9952, %v9923, %v9960
    %v9963 = vsel %vm9953, %v9949, %v9961
    %v9964 = vpack.c.bf16 %v9962, %v9962
    %v9965 = vpack.c.bf16 %v9963, %v9963
    %v9966 = vld [vmem:[#allocation18] sm:$0xff]
    %v9967 = vld [vmem:[#allocation18 + $0x8] sm:$0xff]
    %v9968 = vld [vmem:[#allocation18 + $0x10] sm:$0xff]
    %v9969 = vld [vmem:[#allocation18 + $0x18] sm:$0xff]
    %v9970 = vld [vmem:[#allocation18 + $0x20] sm:$0xff]
    %v9971 = vld [vmem:[#allocation18 + $0x28] sm:$0xff]
    %v9972 = vld [vmem:[#allocation18 + $0x30] sm:$0xff]
    %v9973 = vld [vmem:[#allocation18 + $0x38] sm:$0xff]
    %v9974 = vld [vmem:[#allocation18 + $0x40] sm:$0xff]
    %v9975 = vld [vmem:[#allocation18 + $0x48] sm:$0xff]
    %v9976 = vld [vmem:[#allocation18 + $0x50] sm:$0xff]
    %v9977 = vld [vmem:[#allocation18 + $0x58] sm:$0xff]
    %v9978 = vld [vmem:[#allocation18 + $0x60] sm:$0xff]
    %v9979 = vld [vmem:[#allocation18 + $0x68] sm:$0xff]
    %v9980 = vld [vmem:[#allocation18 + $0x70] sm:$0xff]
    %v9981 = vld [vmem:[#allocation18 + $0x78] sm:$0xff]
    %v9982 = vld [vmem:[#allocation18 + $0x80] sm:$0xff]
    %v9983 = vld [vmem:[#allocation18 + $0x88] sm:$0xff]
    %v9984 = vld [vmem:[#allocation18 + $0x90] sm:$0xff]
    %v9985 = vld [vmem:[#allocation18 + $0x98] sm:$0xff]
    %v9986 = vld [vmem:[#allocation18 + $0xa0] sm:$0xff]
    %v9987 = vld [vmem:[#allocation18 + $0xa8] sm:$0xff]
    %v9988 = vld [vmem:[#allocation18 + $0xb0] sm:$0xff]
    %v9989 = vld [vmem:[#allocation18 + $0xb8] sm:$0xff]
    %v9990 = vld [vmem:[#allocation18 + $0xc0] sm:$0xff]
    %v9991 = vld [vmem:[#allocation18 + $0xc8] sm:$0xff]
    %v9992 = vld [vmem:[#allocation18 + $0xd0] sm:$0xff]
    %v9993 = vld [vmem:[#allocation18 + $0xd8] sm:$0xff]
    %v9994 = vld [vmem:[#allocation18 + $0xe0] sm:$0xff]
    %v9995 = vld [vmem:[#allocation18 + $0xe8] sm:$0xff]
    %v9996 = vld [vmem:[#allocation18 + $0xf0] sm:$0xff]
    %v9997 = vld [vmem:[#allocation18 + $0xf8] sm:$0xff]
    %v9998 = vld [vmem:[%s17] sm:$0x3]
    %v10000 = vperm.slane %v9998, 0
    %v10001 = vperm.slane %v9998, 1
    %v10036 = vunpack.c.l.b16 %v9966
    %v10037 = vunpack.c.h.b16 %v9966
    %v10038 = vunpack.c.l.b16 %v9967
    %v10039 = vunpack.c.h.b16 %v9967
    %v10040 = vunpack.c.l.b16 %v9968
    %v10041 = vunpack.c.h.b16 %v9968
    %v10042 = vunpack.c.l.b16 %v9969
    %v10043 = vunpack.c.h.b16 %v9969
    %v10044 = vunpack.c.l.b16 %v9970
    %v10045 = vunpack.c.h.b16 %v9970
    %v10046 = vunpack.c.l.b16 %v9971
    %v10047 = vunpack.c.h.b16 %v9971
    %v10048 = vunpack.c.l.b16 %v9972
    %v10049 = vunpack.c.h.b16 %v9972
    %v10050 = vunpack.c.l.b16 %v9973
    %v10051 = vunpack.c.h.b16 %v9973
    %v10052 = vunpack.c.l.b16 %v9974
    %v10053 = vunpack.c.h.b16 %v9974
    %v10054 = vunpack.c.l.b16 %v9975
    %v10055 = vunpack.c.h.b16 %v9975
    %v10056 = vunpack.c.l.b16 %v9976
    %v10057 = vunpack.c.h.b16 %v9976
    %v10058 = vunpack.c.l.b16 %v9977
    %v10059 = vunpack.c.h.b16 %v9977
    %v10060 = vunpack.c.l.b16 %v9978
    %v10061 = vunpack.c.h.b16 %v9978
    %v10062 = vunpack.c.l.b16 %v9979
    %v10063 = vunpack.c.h.b16 %v9979
    %v10064 = vunpack.c.l.b16 %v9980
    %v10065 = vunpack.c.h.b16 %v9980
    %v10066 = vunpack.c.l.b16 %v9981
    %v10067 = vunpack.c.h.b16 %v9981
    %v10068 = vunpack.c.l.b16 %v9982
    %v10069 = vunpack.c.h.b16 %v9982
    %v10070 = vunpack.c.l.b16 %v9983
    %v10071 = vunpack.c.h.b16 %v9983
    %v10072 = vunpack.c.l.b16 %v9984
    %v10073 = vunpack.c.h.b16 %v9984
    %v10074 = vunpack.c.l.b16 %v9985
    %v10075 = vunpack.c.h.b16 %v9985
    %v10076 = vunpack.c.l.b16 %v9986
    %v10077 = vunpack.c.h.b16 %v9986
    %v10078 = vunpack.c.l.b16 %v9987
    %v10079 = vunpack.c.h.b16 %v9987
    %v10080 = vunpack.c.l.b16 %v9988
    %v10081 = vunpack.c.h.b16 %v9988
    %v10082 = vunpack.c.l.b16 %v9989
    %v10083 = vunpack.c.h.b16 %v9989
    %v10084 = vunpack.c.l.b16 %v9990
    %v10085 = vunpack.c.h.b16 %v9990
    %v10086 = vunpack.c.l.b16 %v9991
    %v10087 = vunpack.c.h.b16 %v9991
    %v10088 = vunpack.c.l.b16 %v9992
    %v10089 = vunpack.c.h.b16 %v9992
    %v10090 = vunpack.c.l.b16 %v9993
    %v10091 = vunpack.c.h.b16 %v9993
    %v10092 = vunpack.c.l.b16 %v9994
    %v10093 = vunpack.c.h.b16 %v9994
    %v10094 = vunpack.c.l.b16 %v9995
    %v10095 = vunpack.c.h.b16 %v9995
    %v10096 = vunpack.c.l.b16 %v9996
    %v10097 = vunpack.c.h.b16 %v9996
    %v10098 = vunpack.c.l.b16 %v9997
    %v10099 = vunpack.c.h.b16 %v9997
    %v10100 = vpack.c.b16 %v10038, %v10036
    %v10101 = vpack.c.b16 %v10039, %v10037
    %v10102 = vpack.c.b16 %v10042, %v10040
    %v10103 = vpack.c.b16 %v10043, %v10041
    %v10104 = vpack.c.b16 %v10046, %v10044
    %v10105 = vpack.c.b16 %v10047, %v10045
    %v10106 = vpack.c.b16 %v10050, %v10048
    %v10107 = vpack.c.b16 %v10051, %v10049
    %v10108 = vpack.c.b16 %v10054, %v10052
    %v10109 = vpack.c.b16 %v10055, %v10053
    %v10110 = vpack.c.b16 %v10058, %v10056
    %v10111 = vpack.c.b16 %v10059, %v10057
    %v10112 = vpack.c.b16 %v10062, %v10060
    %v10113 = vpack.c.b16 %v10063, %v10061
    %v10114 = vpack.c.b16 %v10066, %v10064
    %v10115 = vpack.c.b16 %v10067, %v10065
    %v10116 = vpack.c.b16 %v10070, %v10068
    %v10117 = vpack.c.b16 %v10071, %v10069
    %v10118 = vpack.c.b16 %v10074, %v10072
    %v10119 = vpack.c.b16 %v10075, %v10073
    %v10120 = vpack.c.b16 %v10078, %v10076
    %v10121 = vpack.c.b16 %v10079, %v10077
    %v10122 = vpack.c.b16 %v10082, %v10080
    %v10123 = vpack.c.b16 %v10083, %v10081
    %v10124 = vpack.c.b16 %v10086, %v10084
    %v10125 = vpack.c.b16 %v10087, %v10085
    %v10126 = vpack.c.b16 %v10090, %v10088
    %v10127 = vpack.c.b16 %v10091, %v10089
    %v10128 = vpack.c.b16 %v10094, %v10092
    %v10129 = vpack.c.b16 %v10095, %v10093
    %v10130 = vpack.c.b16 %v10098, %v10096
    %v10131 = vpack.c.b16 %v10099, %v10097
    %10164 = vmatpush.bf16.msra.mxu0 %v10114
    %10165 = vmatpush.bf16.msra.mxu0 %v10112
    %10166 = vmatpush.bf16.msra.mxu0 %v10110
    %10167 = vmatpush.bf16.msra.mxu0 %v10108
    %10168 = vmatpush.bf16.msra.mxu0 %v10106
    %10169 = vmatpush.bf16.msra.mxu0 %v10104
    %10170 = vmatpush.bf16.msra.mxu0 %v10102
    %10171 = vmatpush.bf16.msra.mxu0 %v10100
    %10172 = vmatmul.bf16.gmra.mxu0 %v9964
    %v10173 = vpop.f32.mrf.mxu0
    %v10174 = vadd.f32 %v10000, %v10173
    %v10175 = vpop.f32.mrf.mxu0
    %10176 = vdwg.mxu0
    %10177 = vmatpush.bf16.msra.mxu0 %v10130
    %10178 = vmatpush.bf16.msra.mxu0 %v10128
    %10179 = vmatpush.bf16.msra.mxu0 %v10126
    %10180 = vmatpush.bf16.msra.mxu0 %v10124
    %10181 = vmatpush.bf16.msra.mxu0 %v10122
    %10182 = vmatpush.bf16.msra.mxu0 %v10120
    %10183 = vmatpush.bf16.msra.mxu0 %v10118
    %10184 = vmatpush.bf16.msra.mxu0 %v10116
    %10185 = vmatmul.bf16.gmra.mxu0 %v9965
    %v10186 = vpop.f32.mrf.mxu0
    %v10187 = vadd.f32 %v10174, %v10186
    %v10188 = vpop.f32.mrf.mxu0
    %10189 = vdwg.mxu0
    %10190 = vmatpush.bf16.msra.mxu0 %v10115
    %10191 = vmatpush.bf16.msra.mxu0 %v10113
    %10192 = vmatpush.bf16.msra.mxu0 %v10111
    %10193 = vmatpush.bf16.msra.mxu0 %v10109
    %10194 = vmatpush.bf16.msra.mxu0 %v10107
    %10195 = vmatpush.bf16.msra.mxu0 %v10105
    %10196 = vmatpush.bf16.msra.mxu0 %v10103
    %10197 = vmatpush.bf16.msra.mxu0 %v10101
    %10198 = vmatmul.bf16.gmra.mxu0 %v9964
    %v10199 = vpop.f32.mrf.mxu0
    %v10200 = vadd.f32 %v10001, %v10199
    %v10201 = vpop.f32.mrf.mxu0
    %10202 = vdwg.mxu0
    %10203 = vmatpush.bf16.msra.mxu0 %v10131
    %10204 = vmatpush.bf16.msra.mxu0 %v10129
    %10205 = vmatpush.bf16.msra.mxu0 %v10127
    %10206 = vmatpush.bf16.msra.mxu0 %v10125
    %10207 = vmatpush.bf16.msra.mxu0 %v10123
    %10208 = vmatpush.bf16.msra.mxu0 %v10121
    %10209 = vmatpush.bf16.msra.mxu0 %v10119
    %10210 = vmatpush.bf16.msra.mxu0 %v10117
    %10211 = vmatmul.bf16.gmra.mxu0 %v9965
    %v10212 = vpop.f32.mrf.mxu0
    %v10213 = vadd.f32 %v10200, %v10212
    %v10214 = vpop.f32.mrf.mxu0
    %10215 = vdwg.mxu0
    %vm10216 = vcmp.gt.f32.partialorder %v10187, 0.0
    %vm10217 = vcmp.gt.f32.partialorder %v10213, 0.0
    %v10218 = vmin.f32 %v10187, 0.0
    %v10219 = vmin.f32 %v10213, 0.0
    %v10220 = vmul.f32 %v10218, 1.442695
    %v10221 = vpow.pop %v10220
    %v10222 = vmul.f32 %v10219, 1.442695
    %v10223 = vpow.pop %v10222
    %v10224 = vsub.f32 %v10221, 1.0
    %v10225 = vsub.f32 %v10223, 1.0
    %v10226 = vsel %vm10216, %v10187, %v10224
    %v10227 = vsel %vm10217, %v10213, %v10225
    %v10228 = vpack.c.bf16 %v10226, %v10226
    %v10229 = vpack.c.bf16 %v10227, %v10227
    %v10230 = vld [vmem:[#allocation20] sm:$0xf]
    %v10231 = vld [vmem:[#allocation20 + $0x4] sm:$0xf]
    %v10232 = vld [vmem:[#allocation20 + $0x8] sm:$0xf]
    %v10233 = vld [vmem:[#allocation20 + $0xc] sm:$0xf]
    %v10234 = vld [vmem:[#allocation20 + $0x10] sm:$0xf]
    %v10235 = vld [vmem:[#allocation20 + $0x14] sm:$0xf]
    %v10236 = vld [vmem:[#allocation20 + $0x18] sm:$0xf]
    %v10237 = vld [vmem:[#allocation20 + $0x1c] sm:$0xf]
    %v10238 = vld [vmem:[#allocation20 + $0x20] sm:$0xf]
    %v10239 = vld [vmem:[#allocation20 + $0x24] sm:$0xf]
    %v10240 = vld [vmem:[#allocation20 + $0x28] sm:$0xf]
    %v10241 = vld [vmem:[#allocation20 + $0x2c] sm:$0xf]
    %v10242 = vld [vmem:[#allocation20 + $0x30] sm:$0xf]
    %v10243 = vld [vmem:[#allocation20 + $0x34] sm:$0xf]
    %v10244 = vld [vmem:[#allocation20 + $0x38] sm:$0xf]
    %v10245 = vld [vmem:[#allocation20 + $0x3c] sm:$0xf]
    %v10246 = vld [vmem:[#allocation20 + $0x40] sm:$0xf]
    %v10247 = vld [vmem:[#allocation20 + $0x44] sm:$0xf]
    %v10248 = vld [vmem:[#allocation20 + $0x48] sm:$0xf]
    %v10249 = vld [vmem:[#allocation20 + $0x4c] sm:$0xf]
    %v10250 = vld [vmem:[#allocation20 + $0x50] sm:$0xf]
    %v10251 = vld [vmem:[#allocation20 + $0x54] sm:$0xf]
    %v10252 = vld [vmem:[#allocation20 + $0x58] sm:$0xf]
    %v10253 = vld [vmem:[#allocation20 + $0x5c] sm:$0xf]
    %v10254 = vld [vmem:[#allocation20 + $0x60] sm:$0xf]
    %v10255 = vld [vmem:[#allocation20 + $0x64] sm:$0xf]
    %v10256 = vld [vmem:[#allocation20 + $0x68] sm:$0xf]
    %v10257 = vld [vmem:[#allocation20 + $0x6c] sm:$0xf]
    %v10258 = vld [vmem:[#allocation20 + $0x70] sm:$0xf]
    %v10259 = vld [vmem:[#allocation20 + $0x74] sm:$0xf]
    %v10260 = vld [vmem:[#allocation20 + $0x78] sm:$0xf]
    %v10261 = vld [vmem:[#allocation20 + $0x7c] sm:$0xf]
    %v10262 = vld [vmem:[%s19] sm:$0x1]
    %v10264 = vperm.slane %v10262, 0
    %v10298 = vunpack.c.l.b16 %v10230
    %v10299 = vunpack.c.l.b16 %v10231
    %v10300 = vunpack.c.l.b16 %v10232
    %v10301 = vunpack.c.l.b16 %v10233
    %v10302 = vunpack.c.l.b16 %v10234
    %v10303 = vunpack.c.l.b16 %v10235
    %v10304 = vunpack.c.l.b16 %v10236
    %v10305 = vunpack.c.l.b16 %v10237
    %v10306 = vunpack.c.l.b16 %v10238
    %v10307 = vunpack.c.l.b16 %v10239
    %v10308 = vunpack.c.l.b16 %v10240
    %v10309 = vunpack.c.l.b16 %v10241
    %v10310 = vunpack.c.l.b16 %v10242
    %v10311 = vunpack.c.l.b16 %v10243
    %v10312 = vunpack.c.l.b16 %v10244
    %v10313 = vunpack.c.l.b16 %v10245
    %v10314 = vunpack.c.l.b16 %v10246
    %v10315 = vunpack.c.l.b16 %v10247
    %v10316 = vunpack.c.l.b16 %v10248
    %v10317 = vunpack.c.l.b16 %v10249
    %v10318 = vunpack.c.l.b16 %v10250
    %v10319 = vunpack.c.l.b16 %v10251
    %v10320 = vunpack.c.l.b16 %v10252
    %v10321 = vunpack.c.l.b16 %v10253
    %v10322 = vunpack.c.l.b16 %v10254
    %v10323 = vunpack.c.l.b16 %v10255
    %v10324 = vunpack.c.l.b16 %v10256
    %v10325 = vunpack.c.l.b16 %v10257
    %v10326 = vunpack.c.l.b16 %v10258
    %v10327 = vunpack.c.l.b16 %v10259
    %v10328 = vunpack.c.l.b16 %v10260
    %v10329 = vunpack.c.l.b16 %v10261
    %v10330 = vpack.c.b16 %v10299, %v10298
    %v10331 = vpack.c.b16 %v10301, %v10300
    %v10332 = vpack.c.b16 %v10303, %v10302
    %v10333 = vpack.c.b16 %v10305, %v10304
    %v10334 = vpack.c.b16 %v10307, %v10306
    %v10335 = vpack.c.b16 %v10309, %v10308
    %v10336 = vpack.c.b16 %v10311, %v10310
    %v10337 = vpack.c.b16 %v10313, %v10312
    %v10338 = vpack.c.b16 %v10315, %v10314
    %v10339 = vpack.c.b16 %v10317, %v10316
    %v10340 = vpack.c.b16 %v10319, %v10318
    %v10341 = vpack.c.b16 %v10321, %v10320
    %v10342 = vpack.c.b16 %v10323, %v10322
    %v10343 = vpack.c.b16 %v10325, %v10324
    %v10344 = vpack.c.b16 %v10327, %v10326
    %v10345 = vpack.c.b16 %v10329, %v10328
    %10362 = vmatpush.bf16.msra.mxu0 %v10337
    %10363 = vmatpush.bf16.msra.mxu0 %v10336
    %10364 = vmatpush.bf16.msra.mxu0 %v10335
    %10365 = vmatpush.bf16.msra.mxu0 %v10334
    %10366 = vmatpush.bf16.msra.mxu0 %v10333
    %10367 = vmatpush.bf16.msra.mxu0 %v10332
    %10368 = vmatpush.bf16.msra.mxu0 %v10331
    %10369 = vmatpush.bf16.msra.mxu0 %v10330
    %10370 = vmatmul.bf16.gmra.mxu0 %v10228
    %v10371 = vpop.f32.mrf.mxu0
    %v10372 = vadd.f32 %v10264, %v10371
    %v10373 = vpop.f32.mrf.mxu0
    %10374 = vdwg.mxu0
    %10375 = vmatpush.bf16.msra.mxu0 %v10345
    %10376 = vmatpush.bf16.msra.mxu0 %v10344
    %10377 = vmatpush.bf16.msra.mxu0 %v10343
    %10378 = vmatpush.bf16.msra.mxu0 %v10342
    %10379 = vmatpush.bf16.msra.mxu0 %v10341
    %10380 = vmatpush.bf16.msra.mxu0 %v10340
    %10381 = vmatpush.bf16.msra.mxu0 %v10339
    %10382 = vmatpush.bf16.msra.mxu0 %v10338
    %10383 = vmatmul.bf16.gmra.mxu0 %v10229
    %v10384 = vpop.f32.mrf.mxu0
    %v10385 = vadd.f32 %v10372, %v10384
    %v10386 = vpop.f32.mrf.mxu0
    %10387 = vdwg.mxu0
    %10388 = vst [vmem:[%s28] sm:$0x3] %v10385
    // Predicated region
    $region150: #{forward.1} parent=1 // pred_check
      _
    $region151: #{forward.1} parent=1 // pred_check_branch
      %10390 = sbr.rel (0) target = $region153
    $region152: #{forward.1} parent=1 // pred_region
      _
    $region153: #{forward.1} parent=1 // pred_fallthru
      _
    // Predicated region
    $region154: #{forward.1} parent=1 // pred_check
      _
    $region155: #{forward.1} parent=1 // pred_check_branch
      %10392 = sbr.rel (0) target = $region157
    $region156: #{forward.1} parent=1 // pred_region
      _
    $region157: #{forward.1} parent=1 // pred_fallthru
      _
    %10393 = vsyncpa [#allocation8], 1
    %10394 = vsyncpa [#allocation10], 1
    %10395 = vsyncpa [#allocation13], 1
    %10396 = vsyncpa [#allocation16], 1
    %10397 = vsyncpa [#allocation19], 1
  %10398 = vsyncmov [#allocation6]
  %s10399 = vpop.sfrf %10398
  %p10400 = scmp.eq.s32.totalorder %s10399, 0
  %p10401 = pneg %p10400
  %10403 = shalt.err (%p10401)
  %s10404 = scalar_lea.sflag [#allocation6], 1
  %10405 = vsyncmov %s10404
  %s10406 = vpop.sfrf %10405
  %p10407 = scmp.eq.s32.totalorder %s10406, 0
  %p10408 = pneg %p10407
  %10410 = shalt.err (%p10408)
  %s10411 = scalar_lea.sflag [#allocation6], 2
  %10412 = vsyncmov %s10411
  %s10413 = vpop.sfrf %10412
  %p10414 = scmp.eq.s32.totalorder %s10413, 0
  %p10415 = pneg %p10414
  %10417 = shalt.err (%p10415)
  %s10418 = scalar_lea.sflag [#allocation6], 3
  %10419 = vsyncmov %s10418
  %s10420 = vpop.sfrf %10419
  %p10421 = scmp.eq.s32.totalorder %s10420, 0
  %p10422 = pneg %p10421
  %10424 = shalt.err (%p10422)

</llo_original>
